<compile_context>
chip_gen: v5e
topology: v5e:2x2
jax: 0.10.0
libtpu: 0.0.40
codegen_flags: <defaults>
</compile_context>

<pallas_src>
import functools

import jax
import jax.numpy as jnp
from jax.experimental import pallas as pl
from jax.experimental.pallas import tpu as pltpu

CONV3_OUT = 1024
CHUNK = 256  # conv3 output-channel chunk width (lanes)


def _relu(x):
    return jnp.maximum(x, 0.0)


def _mm_bf16(a, w_bf16, b_f32):
    # MXU matmul: bf16 inputs, f32 accumulation, f32 bias add.
    return jnp.dot(a.astype(jnp.bfloat16), w_bf16,
                   preferred_element_type=jnp.float32) + b_f32


# ----------------- pass 1: STN3d conv stack -> per-batch raw global max ---------------
def stn_conv_kernel(x_ref, sw1, sb1, sw2, sb2, sw3, gmax_ref):
    tile = pl.program_id(1)
    x = x_ref[0]                                          # (TILE, 2) f32

    @pl.when(tile == 0)
    def _():
        gmax_ref[...] = jnp.full(gmax_ref.shape, -jnp.inf, dtype=gmax_ref.dtype)

    # conv1 (2->64): K=2 broadcast FMAs on the VPU (skip the MXU).
    h = _relu(x[:, 0:1] * sw1[0:1, :] + x[:, 1:2] * sw1[1:2, :] + sb1[...])
    # conv2 (64->128): bf16 MXU, f32 accumulation.
    h = _relu(_mm_bf16(h, sw2[...], sb2[...]))            # (TILE, 128)
    hb = h.astype(jnp.bfloat16)

    # conv3 (128->1024): chunked over output channels; bias + relu deferred past the max.
    pmaxes = []
    for c in range(CONV3_OUT // CHUNK):
        sl = slice(c * CHUNK, (c + 1) * CHUNK)
        part = jnp.dot(hb, sw3[:, sl], preferred_element_type=jnp.float32)  # (TILE, CHUNK)
        pmaxes.append(jnp.max(part, axis=0, keepdims=True))                 # (1, CHUNK)
    tile_max = jnp.concatenate(pmaxes, axis=-1).reshape(1, 1, CONV3_OUT)

    gmax_ref[...] = jnp.maximum(gmax_ref[...], tile_max)  # running max over point tiles


# ---------- pass 2: apply transform (folded into conv1) + feat conv stack -> max -------
def feat_conv_kernel(x_ref, t_ref, fw1, fb1, fw2, fb2, fw3, gmax_ref, w1p_ref):
    tile = pl.program_id(1)
    x = x_ref[0]                                          # (TILE, 2)

    @pl.when(tile == 0)
    def _():
        # Fold the per-batch 2x2 transform into conv1: W1' = T @ W1 (once per batch).
        t = t_ref[0]                                      # (1, 4) = [t00, t01, t10, t11]
        row0 = t[:, 0:1] * fw1[0:1, :] + t[:, 1:2] * fw1[1:2, :]
        row1 = t[:, 2:3] * fw1[0:1, :] + t[:, 3:4] * fw1[1:2, :]
        w1p_ref[...] = jnp.concatenate([row0, row1], axis=0)          # (2, 64)
        gmax_ref[...] = jnp.full(gmax_ref.shape, -jnp.inf, dtype=gmax_ref.dtype)

    # conv1 on transformed points == x @ (T @ W1): K=2 broadcast FMAs on the VPU.
    h = _relu(x[:, 0:1] * w1p_ref[0:1, :] + x[:, 1:2] * w1p_ref[1:2, :] + fb1[...])
    h = _relu(_mm_bf16(h, fw2[...], fb2[...]))            # (TILE, 128)
    hb = h.astype(jnp.bfloat16)

    # conv3 (bn3, no relu): bias deferred past the max; chunked over output channels.
    pmaxes = []
    for c in range(CONV3_OUT // CHUNK):
        sl = slice(c * CHUNK, (c + 1) * CHUNK)
        part = jnp.dot(hb, fw3[:, sl], preferred_element_type=jnp.float32)
        pmaxes.append(jnp.max(part, axis=0, keepdims=True))
    tile_max = jnp.concatenate(pmaxes, axis=-1).reshape(1, 1, CONV3_OUT)

    gmax_ref[...] = jnp.maximum(gmax_ref[...], tile_max)


# ------------- batched FC chains (STN fc1-3 / classifier head), M = B -----------------
def fc_chain_kernel(g_ref, cb_ref, w1, b1, w2, b2, w3, b3, out_ref, *, relu_after_bias):
    g = g_ref[...] + cb_ref[...]                          # deferred conv3 bias (bn3 fold)
    if relu_after_bias:
        g = _relu(g)                                      # deferred relu (STN path only)
    g = _relu(_mm_bf16(g, w1[...], b1[...]))              # (B, 512)
    g = _relu(_mm_bf16(g, w2[...], b2[...]))              # (B, 256)
    out_ref[...] = _mm_bf16(g, w3[...], b3[...])          # (B, out)


# --------------------------------------- wrapper ---------------------------------------
def _round_up(x, m):
    return ((x + m - 1) // m) * m


def _pick_tile(n_points):
    # Big tiles amortize the ~0.35us per-grid-step overhead and improve MXU fill;
    # accept a candidate only if edge-padding waste stays <= 1/8 of the padded length.
    for t in (2048, 1024, 512, 256, 128):
        n_pad = _round_up(n_points, t)
        if (n_pad - n_points) * 8 <= n_pad:
            return t
    return 128


def _wspec(w):
    nd = w.ndim
    return pl.BlockSpec(w.shape, lambda b, i: (0,) * nd)   # constant -> VMEM-resident


def pointnet(x_ncw, params, *, n_out=2, tile=None):
    B, D, N = x_ncw.shape
    assert D == 2, "PointNet spec uses 2-d points"

    (sw1, sb1, sw2, sb2, sw3, sb3,
     sfw1, sfb1, sfw2, sfb2, sfw3, sfb3,
     fw1, fb1, fw2, fb2, fw3, fb3,
     hw1, hb1, hw2, hb2, hw3, hb3) = params

    # bf16 weights for MXU layers (K=2 VPU convs and all biases stay f32).
    bf = lambda w: w.astype(jnp.bfloat16)
    sw2b, sw3b = bf(sw2), bf(sw3)
    sfw1b, sfw2b, sfw3b = bf(sfw1), bf(sfw2), bf(sfw3)
    fw2b, fw3b = bf(fw2), bf(fw3)
    hw1b, hw2b, hw3b = bf(hw1), bf(hw2), bf(hw3)

    TILE = tile if tile is not None else _pick_tile(N)
    assert TILE % 8 == 0, "tile must be a multiple of 8 (ideally 128)"
    N_pad = _round_up(N, TILE)
    n_tiles = N_pad // TILE

    x = jnp.transpose(x_ncw, (0, 2, 1))                    # (B, N, 2): points x channels
    if N_pad != N:
        # Pad points axis with replicas of the last point: the global max is unchanged.
        x = jnp.pad(x, ((0, 0), (0, N_pad - N), (0, 0)), mode="edge")

    grid = (B, n_tiles)
    x_spec = pl.BlockSpec((1, TILE, D), lambda b, i: (b, i, 0))
    gmax_spec = pl.BlockSpec((1, 1, CONV3_OUT), lambda b, i: (b, 0, 0))
    cparams = pltpu.CompilerParams(
        dimension_semantics=("parallel", "arbitrary"),
        vmem_limit_bytes=32 * 1024 * 1024)

    # ---- pass 1: STN conv stack -> per-batch raw global max (B, 1, 1024) ----
    stn_w = [sw1, sb1, sw2b, sb2, sw3b]
    stn_gmax = pl.pallas_call(
        stn_conv_kernel,
        grid=grid,
        out_shape=jax.ShapeDtypeStruct((B, 1, CONV3_OUT), jnp.float32),
        in_specs=[x_spec] + [_wspec(w) for w in stn_w],
        out_specs=gmax_spec,
        compiler_params=cparams,
    )(x, *stn_w)

    # ---- STN FC stack, batched M=B: relu(g + b3) -> fc1 -> fc2 -> fc3 (+identity) ----
    t = pl.pallas_call(
        functools.partial(fc_chain_kernel, relu_after_bias=True),
        out_shape=jax.ShapeDtypeStruct((B, 4), jnp.float32),
    )(stn_gmax.reshape(B, CONV3_OUT), sb3, sfw1b, sfb1, sfw2b, sfb2, sfw3b, sfb3)

    # ---- pass 2: PointNetfeat conv stack with folded transform -> global max ----
    feat_w = [fw1, fb1, fw2b, fb2, fw3b]
    t_spec = pl.BlockSpec((1, 1, 4), lambda b, i: (b, 0, 0))
    feat_gmax = pl.pallas_call(
        feat_conv_kernel,
        grid=grid,
        out_shape=jax.ShapeDtypeStruct((B, 1, CONV3_OUT), jnp.float32),
        in_specs=[x_spec, t_spec] + [_wspec(w) for w in feat_w],
        out_specs=gmax_spec,
        scratch_shapes=[pltpu.VMEM((2, 64), jnp.float32)],
        compiler_params=cparams,
    )(x, t.reshape(B, 1, 4), *feat_w)

    # ---- classifier head, batched M=B: (g + b3) -> fc1 -> fc2 -> fc3 ----
    logits = pl.pallas_call(
        functools.partial(fc_chain_kernel, relu_after_bias=False),
        out_shape=jax.ShapeDtypeStruct((B, n_out), jnp.float32),
    )(feat_gmax.reshape(B, CONV3_OUT), fb3, hw1b, hb1, hw2b, hb2, hw3b, hb3)

    return logits


# ----------------------------- params / pure-JAX reference -----------------------------
def _linear_params(key, fan_in, fan_out):
    # PyTorch default init: U(-1/sqrt(fan_in), 1/sqrt(fan_in)) for weight & bias.
    kw, kb = jax.random.split(key)
    bound = 1.0 / (fan_in ** 0.5)
    W = jax.random.uniform(kw, (fan_in, fan_out), jnp.float32, -bound, bound)
    b = jax.random.uniform(kb, (1, fan_out), jnp.float32, -bound, bound)
    return W, b


def init_params(key, n_out=2):
    eps = 1e-5
    bn_scale = 1.0 / (1.0 + eps) ** 0.5      # eval-mode BN with default stats

    keys = jax.random.split(key, 12)
    sw1, sb1 = _linear_params(keys[0], 2, 64)
    sw2, sb2 = _linear_params(keys[1], 64, 128)
    sw3, sb3 = _linear_params(keys[2], 128, 1024)
    sfw1, sfb1 = _linear_params(keys[3], 1024, 512)
    sfw2, sfb2 = _linear_params(keys[4], 512, 256)
    sfw3, sfb3 = _linear_params(keys[5], 256, 4)
    fw1, fb1 = _linear_params(keys[6], 2, 64)
    fw2, fb2 = _linear_params(keys[7], 64, 128)
    fw3, fb3 = _linear_params(keys[8], 128, 1024)
    hw1, hb1 = _linear_params(keys[9], 1024, 512)
    hw2, hb2 = _linear_params(keys[10], 512, 256)
    hw3, hb3 = _linear_params(keys[11], 256, n_out)

    def fold(W, b):   # fold eval-mode BatchNorm into the preceding layer
        return W * bn_scale, b * bn_scale

    sw1, sb1 = fold(sw1, sb1); sw2, sb2 = fold(sw2, sb2); sw3, sb3 = fold(sw3, sb3)
    sfw1, sfb1 = fold(sfw1, sfb1); sfw2, sfb2 = fold(sfw2, sfb2)
    fw1, fb1 = fold(fw1, fb1); fw2, fb2 = fold(fw2, fb2); fw3, fb3 = fold(fw3, fb3)

    # fold STN3d's flattened 2x2 identity into fc3's bias
    sfb3 = sfb3 + jnp.array([[1.0, 0.0, 0.0, 1.0]], jnp.float32)

    return (sw1, sb1, sw2, sb2, sw3, sb3,
            sfw1, sfb1, sfw2, sfb2, sfw3, sfb3,
            fw1, fb1, fw2, fb2, fw3, fb3,
            hw1, hb1, hw2, hb2, hw3, hb3)


def _reference(x_ncw, params):
    # Pure-JAX forward mirroring the kernel's numerics (bf16 MXU weights, f32 acc),
    # written in the PyTorch op order (bias/relu before max, per-point transform).
    (sw1, sb1, sw2, sb2, sw3, sb3,
     sfw1, sfb1, sfw2, sfb2, sfw3, sfb3,
     fw1, fb1, fw2, fb2, fw3, fb3,
     hw1, hb1, hw2, hb2, hw3, hb3) = params

    def mmb(a, w, b):
        return jnp.dot(a.astype(jnp.bfloat16), w.astype(jnp.bfloat16),
                       preferred_element_type=jnp.float32) + b

    x = jnp.transpose(x_ncw, (0, 2, 1))                   # (B, N, 2)
    B, N, _ = x.shape
    xf = x.reshape(B * N, 2)

    # STN3d
    h = _relu(xf[:, 0:1] * sw1[0:1, :] + xf[:, 1:2] * sw1[1:2, :] + sb1)
    h = _relu(mmb(h, sw2, sb2))
    h = _relu(mmb(h, sw3, sb3))
    g = jnp.max(h.reshape(B, N, 1024), axis=1)
    g = _relu(mmb(g, sfw1, sfb1))
    g = _relu(mmb(g, sfw2, sfb2))
    t = mmb(g, sfw3, sfb3)                                # (B, 4), identity in bias

    # apply 2x2 transform
    x0, x1 = x[..., 0], x[..., 1]                         # (B, N)
    xt0 = x0 * t[:, 0:1] + x1 * t[:, 2:3]
    xt1 = x0 * t[:, 1:2] + x1 * t[:, 3:4]
    xt = jnp.stack([xt0, xt1], axis=-1).reshape(B * N, 2)

    # PointNetfeat
    h = _relu(xt[:, 0:1] * fw1[0:1, :] + xt[:, 1:2] * fw1[1:2, :] + fb1)
    h = _relu(mmb(h, fw2, fb2))
    h = mmb(h, fw3, fb3)
    g = jnp.max(h.reshape(B, N, 1024), axis=1)

    # head
    g = _relu(mmb(g, hw1, hb1))
    g = _relu(mmb(g, hw2, hb2))
    return mmb(g, hw3, hb3)


if __name__ == "__main__":
    key = jax.random.PRNGKey(0)
    kx, kp, kx2 = jax.random.split(key, 3)
    n_out = 2
    params = init_params(kp, n_out=n_out)
    fwd = jax.jit(pointnet, static_argnames=("n_out", "tile"))

    # small shape consistent with the module: (batch, channels=2, n_points)
    B, D, N = 2, 2, 16
    x = jax.random.normal(kx, (B, D, N), jnp.float32)     # NCW, same layout as torch Conv1d
    out = jax.block_until_ready(fwd(x, params, n_out=n_out))
    assert out.shape == (B, n_out)
    assert bool(jnp.all(jnp.isfinite(out)))
    ref = jax.block_until_ready(_reference(x, params))
    assert bool(jnp.allclose(out, ref, atol=5e-2, rtol=5e-2)), (out, ref)

    # second config: N not a multiple of the tile -> exercises the padded remainder path
    B2, N2 = 2, 300
    x2 = jax.random.normal(kx2, (B2, D, N2), jnp.float32)
    out2 = jax.block_until_ready(fwd(x2, params, n_out=n_out))
    ref2 = jax.block_until_ready(_reference(x2, params))
    assert out2.shape == (B2, n_out)
    assert bool(jnp.allclose(out2, ref2, atol=5e-2, rtol=5e-2)), (out2, ref2)

    print("KERNEL_OK")
</pallas_src>

<mosaic_0001>
module attributes {stable_mosaic.version = 11 : i64} {
  func.func @stn_conv_kernel(%arg0: i32, %arg1: i32, %arg2: memref<1x128x2xf32, #tpu.memory_space<vmem>>, %arg3: memref<2x64xf32, #tpu.memory_space<vmem>>, %arg4: memref<1x64xf32, #tpu.memory_space<vmem>>, %arg5: memref<64x128xbf16, #tpu.memory_space<vmem>>, %arg6: memref<1x128xf32, #tpu.memory_space<vmem>>, %arg7: memref<128x1024xbf16, #tpu.memory_space<vmem>>, %arg8: memref<1x1x1024xf32, #tpu.memory_space<vmem>>) attributes {dimension_semantics = [#tpu.dimension_semantics<parallel>, #tpu.dimension_semantics<arbitrary>], iteration_bounds = array<i64: 2, 1>, scalar_prefetch = 0 : i64, scratch_operands = 0 : i64, tpu.core_type = #tpu.core_type<tc>, window_params = [{transform_indices = @transform_0, window_bounds = array<i64: 1, 128, 2>}, {pipeline_mode = #tpu.pipeline_mode<synchronous>, transform_indices = @transform_1, window_bounds = array<i64: 2, 64>}, {pipeline_mode = #tpu.pipeline_mode<synchronous>, transform_indices = @transform_2, window_bounds = array<i64: 1, 64>}, {pipeline_mode = #tpu.pipeline_mode<synchronous>, transform_indices = @transform_3, window_bounds = array<i64: 64, 128>}, {pipeline_mode = #tpu.pipeline_mode<synchronous>, transform_indices = @transform_4, window_bounds = array<i64: 1, 128>}, {pipeline_mode = #tpu.pipeline_mode<synchronous>, transform_indices = @transform_5, window_bounds = array<i64: 128, 1024>}, {transform_indices = @transform_6, window_bounds = array<i64: 1, 1, 1024>}]} {
    %c0 = arith.constant 0 : index
    %c0_0 = arith.constant 0 : index
    %c0_1 = arith.constant 0 : index
    %0 = vector.load %arg2[%c0, %c0_0, %c0_1] : memref<1x128x2xf32, #tpu.memory_space<vmem>>, vector<1x128x2xf32>
    %1 = vector.shape_cast %0 : vector<1x128x2xf32> to vector<128x2xf32>
    %c0_i32 = arith.constant 0 : i32
    %2 = arith.cmpi eq, %arg1, %c0_i32 : i32
    %3 = arith.extui %2 : i1 to i32
    %c0_i32_2 = arith.constant 0 : i32
    %4 = arith.cmpi ne, %3, %c0_i32_2 : i32
    scf.if %4 {
      %cst_33 = arith.constant 0xFF800000 : f32
      %51 = vector.broadcast %cst_33 : f32 to vector<1x1x1024xf32>
      %c0_34 = arith.constant 0 : index
      %c0_35 = arith.constant 0 : index
      %c0_36 = arith.constant 0 : index
      %52 = vector.load %arg8[%c0_34, %c0_35, %c0_36] : memref<1x1x1024xf32, #tpu.memory_space<vmem>>, vector<1x1x1024xf32>
      tpu.vector_store %arg8[%c0_34, %c0_35, %c0_36], %51 {strides = array<i32>} : memref<1x1x1024xf32, #tpu.memory_space<vmem>>, vector<1x1x1024xf32>,
    } else {
    }
    %5 = vector.extract_strided_slice %1 {offsets = [0, 0], sizes = [128, 1], strides = [1, 1]} : vector<128x2xf32> to vector<128x1xf32>
    %c0_3 = arith.constant 0 : index
    %c0_4 = arith.constant 0 : index
    %6 = vector.load %arg3[%c0_3, %c0_4] : memref<2x64xf32, #tpu.memory_space<vmem>>, vector<1x64xf32>
    %7 = vector.broadcast %5 : vector<128x1xf32> to vector<128x64xf32>
    %8 = vector.broadcast %6 : vector<1x64xf32> to vector<128x64xf32>
    %9 = arith.mulf %7, %8 : vector<128x64xf32>
    %10 = vector.extract_strided_slice %1 {offsets = [0, 1], sizes = [128, 1], strides = [1, 1]} : vector<128x2xf32> to vector<128x1xf32>
    %c1 = arith.constant 1 : index
    %c0_5 = arith.constant 0 : index
    %11 = vector.load %arg3[%c1, %c0_5] : memref<2x64xf32, #tpu.memory_space<vmem>>, vector<1x64xf32>
    %12 = vector.broadcast %10 : vector<128x1xf32> to vector<128x64xf32>
    %13 = vector.broadcast %11 : vector<1x64xf32> to vector<128x64xf32>
    %14 = arith.mulf %12, %13 : vector<128x64xf32>
    %15 = arith.addf %9, %14 : vector<128x64xf32>
    %c0_6 = arith.constant 0 : index
    %c0_7 = arith.constant 0 : index
    %16 = vector.load %arg4[%c0_6, %c0_7] : memref<1x64xf32, #tpu.memory_space<vmem>>, vector<1x64xf32>
    %17 = vector.broadcast %16 : vector<1x64xf32> to vector<128x64xf32>
    %18 = arith.addf %15, %17 : vector<128x64xf32>
    %cst = arith.constant 0.000000e+00 : f32
    %19 = vector.broadcast %cst : f32 to vector<128x64xf32>
    %20 = arith.maximumf %18, %19 : vector<128x64xf32>
    %c0_8 = arith.constant 0 : index
    %c0_9 = arith.constant 0 : index
    %21 = vector.load %arg5[%c0_8, %c0_9] : memref<64x128xbf16, #tpu.memory_space<vmem>>, vector<64x128xbf16>
    %c0_10 = arith.constant 0 : index
    %c0_11 = arith.constant 0 : index
    %22 = vector.load %arg6[%c0_10, %c0_11] : memref<1x128xf32, #tpu.memory_space<vmem>>, vector<1x128xf32>
    %23 = arith.truncf %20 : vector<128x64xf32> to vector<128x64xbf16>
    %cst_12 = arith.constant dense<0.000000e+00> : vector<128x128xf32>
    %24 = tpu.matmul %23, %21, %cst_12 {dimension_numbers = #tpu.dot_dimension_numbers<[1], [0], [0], [1], [0, 0, 1, 1], [], []>} : vector<128x64xbf16>, vector<64x128xbf16>, vector<128x128xf32> -> vector<128x128xf32>
    %25 = vector.broadcast %22 : vector<1x128xf32> to vector<128x128xf32>
    %26 = arith.addf %24, %25 : vector<128x128xf32>
    %cst_13 = arith.constant 0.000000e+00 : f32
    %27 = vector.broadcast %cst_13 : f32 to vector<128x128xf32>
    %28 = arith.maximumf %26, %27 : vector<128x128xf32>
    %29 = arith.truncf %28 : vector<128x128xf32> to vector<128x128xbf16>
    %c0_14 = arith.constant 0 : index
    %c0_15 = arith.constant 0 : index
    %30 = vector.load %arg7[%c0_14, %c0_15] : memref<128x1024xbf16, #tpu.memory_space<vmem>>, vector<128x256xbf16>
    %cst_16 = arith.constant dense<0.000000e+00> : vector<128x256xf32>
    %31 = tpu.matmul %29, %30, %cst_16 {dimension_numbers = #tpu.dot_dimension_numbers<[1], [0], [0], [1], [0, 0, 1, 1], [], []>} : vector<128x128xbf16>, vector<128x256xbf16>, vector<128x256xf32> -> vector<128x256xf32>
    %cst_17 = arith.constant dense<0xFF800000> : vector<256xf32>
    %32 = vector.multi_reduction <maximumf>, %31, %cst_17 [0] : vector<128x256xf32> to vector<256xf32>
    %33 = vector.shape_cast %32 : vector<256xf32> to vector<1x256xf32>
    %c0_18 = arith.constant 0 : index
    %c256 = arith.constant 256 : index
    %34 = vector.load %arg7[%c0_18, %c256] : memref<128x1024xbf16, #tpu.memory_space<vmem>>, vector<128x256xbf16>
    %cst_19 = arith.constant dense<0.000000e+00> : vector<128x256xf32>
    %35 = tpu.matmul %29, %34, %cst_19 {dimension_numbers = #tpu.dot_dimension_numbers<[1], [0], [0], [1], [0, 0, 1, 1], [], []>} : vector<128x128xbf16>, vector<128x256xbf16>, vector<128x256xf32> -> vector<128x256xf32>
    %cst_20 = arith.constant dense<0xFF800000> : vector<256xf32>
    %36 = vector.multi_reduction <maximumf>, %35, %cst_20 [0] : vector<128x256xf32> to vector<256xf32>
    %37 = vector.shape_cast %36 : vector<256xf32> to vector<1x256xf32>
    %c0_21 = arith.constant 0 : index
    %c512 = arith.constant 512 : index
    %38 = vector.load %arg7[%c0_21, %c512] : memref<128x1024xbf16, #tpu.memory_space<vmem>>, vector<128x256xbf16>
    %cst_22 = arith.constant dense<0.000000e+00> : vector<128x256xf32>
    %39 = tpu.matmul %29, %38, %cst_22 {dimension_numbers = #tpu.dot_dimension_numbers<[1], [0], [0], [1], [0, 0, 1, 1], [], []>} : vector<128x128xbf16>, vector<128x256xbf16>, vector<128x256xf32> -> vector<128x256xf32>
    %cst_23 = arith.constant dense<0xFF800000> : vector<256xf32>
    %40 = vector.multi_reduction <maximumf>, %39, %cst_23 [0] : vector<128x256xf32> to vector<256xf32>
    %41 = vector.shape_cast %40 : vector<256xf32> to vector<1x256xf32>
    %c0_24 = arith.constant 0 : index
    %c768 = arith.constant 768 : index
    %42 = vector.load %arg7[%c0_24, %c768] : memref<128x1024xbf16, #tpu.memory_space<vmem>>, vector<128x256xbf16>
    %cst_25 = arith.constant dense<0.000000e+00> : vector<128x256xf32>
    %43 = tpu.matmul %29, %42, %cst_25 {dimension_numbers = #tpu.dot_dimension_numbers<[1], [0], [0], [1], [0, 0, 1, 1], [], []>} : vector<128x128xbf16>, vector<128x256xbf16>, vector<128x256xf32> -> vector<128x256xf32>
    %cst_26 = arith.constant dense<0xFF800000> : vector<256xf32>
    %44 = vector.multi_reduction <maximumf>, %43, %cst_26 [0] : vector<128x256xf32> to vector<256xf32>
    %45 = vector.shape_cast %44 : vector<256xf32> to vector<1x256xf32>
    %46 = tpu.concatenate %33, %37, %41, %45 in 1 : vector<1x256xf32>, vector<1x256xf32>, vector<1x256xf32>, vector<1x256xf32> -> vector<1x1024xf32>
    %47 = vector.shape_cast %46 : vector<1x1024xf32> to vector<1x1x1024xf32>
    %c0_27 = arith.constant 0 : index
    %c0_28 = arith.constant 0 : index
    %c0_29 = arith.constant 0 : index
    %48 = vector.load %arg8[%c0_27, %c0_28, %c0_29] : memref<1x1x1024xf32, #tpu.memory_space<vmem>>, vector<1x1x1024xf32>
    %49 = arith.maximumf %48, %47 : vector<1x1x1024xf32>
    %c0_30 = arith.constant 0 : index
    %c0_31 = arith.constant 0 : index
    %c0_32 = arith.constant 0 : index
    %50 = vector.load %arg8[%c0_30, %c0_31, %c0_32] : memref<1x1x1024xf32, #tpu.memory_space<vmem>>, vector<1x1x1024xf32>
    tpu.vector_store %arg8[%c0_30, %c0_31, %c0_32], %49 {strides = array<i32>} : memref<1x1x1024xf32, #tpu.memory_space<vmem>>, vector<1x1x1024xf32>,
    return
  }
  func.func @transform_0(%arg0: i32, %arg1: i32) -> (i32, i32, i32) {
    %c0_i32 = arith.constant 0 : i32
    %c0_i32_0 = arith.constant 0 : i32
    return %arg0, %arg1, %c0_i32 : i32, i32, i32
  }
  func.func @transform_1(%arg0: i32, %arg1: i32) -> (i32, i32) {
    %c0_i32 = arith.constant 0 : i32
    %c0_i32_0 = arith.constant 0 : i32
    %c0_i32_1 = arith.constant 0 : i32
    return %c0_i32, %c0_i32_0 : i32, i32
  }
  func.func @transform_2(%arg0: i32, %arg1: i32) -> (i32, i32) {
    %c0_i32 = arith.constant 0 : i32
    %c0_i32_0 = arith.constant 0 : i32
    %c0_i32_1 = arith.constant 0 : i32
    return %c0_i32, %c0_i32_0 : i32, i32
  }
  func.func @transform_3(%arg0: i32, %arg1: i32) -> (i32, i32) {
    %c0_i32 = arith.constant 0 : i32
    %c0_i32_0 = arith.constant 0 : i32
    %c0_i32_1 = arith.constant 0 : i32
    return %c0_i32, %c0_i32_0 : i32, i32
  }
  func.func @transform_4(%arg0: i32, %arg1: i32) -> (i32, i32) {
    %c0_i32 = arith.constant 0 : i32
    %c0_i32_0 = arith.constant 0 : i32
    %c0_i32_1 = arith.constant 0 : i32
    return %c0_i32, %c0_i32_0 : i32, i32
  }
  func.func @transform_5(%arg0: i32, %arg1: i32) -> (i32, i32) {
    %c0_i32 = arith.constant 0 : i32
    %c0_i32_0 = arith.constant 0 : i32
    %c0_i32_1 = arith.constant 0 : i32
    return %c0_i32, %c0_i32_0 : i32, i32
  }
  func.func @transform_6(%arg0: i32, %arg1: i32) -> (i32, i32, i32) {
    %c0_i32 = arith.constant 0 : i32
    %c0_i32_0 = arith.constant 0 : i32
    %c0_i32_1 = arith.constant 0 : i32
    return %arg0, %c0_i32, %c0_i32_0 : i32, i32, i32
  }
}

module attributes {stable_mosaic.version = 11 : i64} {
  func.func @fc_chain_kernel(%arg0: memref<2x1024xf32, #tpu.memory_space<vmem>>, %arg1: memref<1x1024xf32, #tpu.memory_space<vmem>>, %arg2: memref<1024x512xbf16, #tpu.memory_space<vmem>>, %arg3: memref<1x512xf32, #tpu.memory_space<vmem>>, %arg4: memref<512x256xbf16, #tpu.memory_space<vmem>>, %arg5: memref<1x256xf32, #tpu.memory_space<vmem>>, %arg6: memref<256x4xbf16, #tpu.memory_space<vmem>>, %arg7: memref<1x4xf32, #tpu.memory_space<vmem>>, %arg8: memref<2x4xf32, #tpu.memory_space<vmem>>) attributes {dimension_semantics = [], scalar_prefetch = 0 : i64, scratch_operands = 0 : i64, tpu.core_type = #tpu.core_type<tc>} {
    %c0 = arith.constant 0 : index
    %c0_0 = arith.constant 0 : index
    %0 = vector.load %arg0[%c0, %c0_0] : memref<2x1024xf32, #tpu.memory_space<vmem>>, vector<2x1024xf32>
    %c0_1 = arith.constant 0 : index
    %c0_2 = arith.constant 0 : index
    %1 = vector.load %arg1[%c0_1, %c0_2] : memref<1x1024xf32, #tpu.memory_space<vmem>>, vector<1x1024xf32>
    %2 = vector.broadcast %1 : vector<1x1024xf32> to vector<2x1024xf32>
    %3 = arith.addf %0, %2 : vector<2x1024xf32>
    %cst = arith.constant 0.000000e+00 : f32
    %4 = vector.broadcast %cst : f32 to vector<2x1024xf32>
    %5 = arith.maximumf %3, %4 : vector<2x1024xf32>
    %c0_3 = arith.constant 0 : index
    %c0_4 = arith.constant 0 : index
    %6 = vector.load %arg2[%c0_3, %c0_4] : memref<1024x512xbf16, #tpu.memory_space<vmem>>, vector<1024x512xbf16>
    %c0_5 = arith.constant 0 : index
    %c0_6 = arith.constant 0 : index
    %7 = vector.load %arg3[%c0_5, %c0_6] : memref<1x512xf32, #tpu.memory_space<vmem>>, vector<1x512xf32>
    %8 = arith.truncf %5 : vector<2x1024xf32> to vector<2x1024xbf16>
    %cst_7 = arith.constant dense<0.000000e+00> : vector<2x512xf32>
    %9 = tpu.matmul %8, %6, %cst_7 {dimension_numbers = #tpu.dot_dimension_numbers<[1], [0], [0], [1], [0, 0, 1, 1], [], []>} : vector<2x1024xbf16>, vector<1024x512xbf16>, vector<2x512xf32> -> vector<2x512xf32>
    %10 = vector.broadcast %7 : vector<1x512xf32> to vector<2x512xf32>
    %11 = arith.addf %9, %10 : vector<2x512xf32>
    %cst_8 = arith.constant 0.000000e+00 : f32
    %12 = vector.broadcast %cst_8 : f32 to vector<2x512xf32>
    %13 = arith.maximumf %11, %12 : vector<2x512xf32>
    %c0_9 = arith.constant 0 : index
    %c0_10 = arith.constant 0 : index
    %14 = vector.load %arg4[%c0_9, %c0_10] : memref<512x256xbf16, #tpu.memory_space<vmem>>, vector<512x256xbf16>
    %c0_11 = arith.constant 0 : index
    %c0_12 = arith.constant 0 : index
    %15 = vector.load %arg5[%c0_11, %c0_12] : memref<1x256xf32, #tpu.memory_space<vmem>>, vector<1x256xf32>
    %16 = arith.truncf %13 : vector<2x512xf32> to vector<2x512xbf16>
    %cst_13 = arith.constant dense<0.000000e+00> : vector<2x256xf32>
    %17 = tpu.matmul %16, %14, %cst_13 {dimension_numbers = #tpu.dot_dimension_numbers<[1], [0], [0], [1], [0, 0, 1, 1], [], []>} : vector<2x512xbf16>, vector<512x256xbf16>, vector<2x256xf32> -> vector<2x256xf32>
    %18 = vector.broadcast %15 : vector<1x256xf32> to vector<2x256xf32>
    %19 = arith.addf %17, %18 : vector<2x256xf32>
    %cst_14 = arith.constant 0.000000e+00 : f32
    %20 = vector.broadcast %cst_14 : f32 to vector<2x256xf32>
    %21 = arith.maximumf %19, %20 : vector<2x256xf32>
    %c0_15 = arith.constant 0 : index
    %c0_16 = arith.constant 0 : index
    %22 = vector.load %arg6[%c0_15, %c0_16] : memref<256x4xbf16, #tpu.memory_space<vmem>>, vector<256x4xbf16>
    %c0_17 = arith.constant 0 : index
    %c0_18 = arith.constant 0 : index
    %23 = vector.load %arg7[%c0_17, %c0_18] : memref<1x4xf32, #tpu.memory_space<vmem>>, vector<1x4xf32>
    %24 = arith.truncf %21 : vector<2x256xf32> to vector<2x256xbf16>
    %cst_19 = arith.constant dense<0.000000e+00> : vector<2x4xf32>
    %25 = tpu.matmul %24, %22, %cst_19 {dimension_numbers = #tpu.dot_dimension_numbers<[1], [0], [0], [1], [0, 0, 1, 1], [], []>} : vector<2x256xbf16>, vector<256x4xbf16>, vector<2x4xf32> -> vector<2x4xf32>
    %26 = vector.broadcast %23 : vector<1x4xf32> to vector<2x4xf32>
    %27 = arith.addf %25, %26 : vector<2x4xf32>
    %c0_20 = arith.constant 0 : index
    %c0_21 = arith.constant 0 : index
    %28 = vector.load %arg8[%c0_20, %c0_21] : memref<2x4xf32, #tpu.memory_space<vmem>>, vector<2x4xf32>
    tpu.vector_store %arg8[%c0_20, %c0_21], %27 {strides = array<i32>} : memref<2x4xf32, #tpu.memory_space<vmem>>, vector<2x4xf32>,
    return
  }
}

module attributes {stable_mosaic.version = 11 : i64} {
  func.func @feat_conv_kernel(%arg0: i32, %arg1: i32, %arg2: memref<1x128x2xf32, #tpu.memory_space<vmem>>, %arg3: memref<1x1x4xf32, #tpu.memory_space<vmem>>, %arg4: memref<2x64xf32, #tpu.memory_space<vmem>>, %arg5: memref<1x64xf32, #tpu.memory_space<vmem>>, %arg6: memref<64x128xbf16, #tpu.memory_space<vmem>>, %arg7: memref<1x128xf32, #tpu.memory_space<vmem>>, %arg8: memref<128x1024xbf16, #tpu.memory_space<vmem>>, %arg9: memref<1x1x1024xf32, #tpu.memory_space<vmem>>, %arg10: memref<2x64xf32, #tpu.memory_space<vmem>>) attributes {dimension_semantics = [#tpu.dimension_semantics<parallel>, #tpu.dimension_semantics<arbitrary>], iteration_bounds = array<i64: 2, 1>, scalar_prefetch = 0 : i64, scratch_operands = 1 : i64, tpu.core_type = #tpu.core_type<tc>, window_params = [{transform_indices = @transform_0, window_bounds = array<i64: 1, 128, 2>}, {transform_indices = @transform_1, window_bounds = array<i64: 1, 1, 4>}, {pipeline_mode = #tpu.pipeline_mode<synchronous>, transform_indices = @transform_2, window_bounds = array<i64: 2, 64>}, {pipeline_mode = #tpu.pipeline_mode<synchronous>, transform_indices = @transform_3, window_bounds = array<i64: 1, 64>}, {pipeline_mode = #tpu.pipeline_mode<synchronous>, transform_indices = @transform_4, window_bounds = array<i64: 64, 128>}, {pipeline_mode = #tpu.pipeline_mode<synchronous>, transform_indices = @transform_5, window_bounds = array<i64: 1, 128>}, {pipeline_mode = #tpu.pipeline_mode<synchronous>, transform_indices = @transform_6, window_bounds = array<i64: 128, 1024>}, {transform_indices = @transform_7, window_bounds = array<i64: 1, 1, 1024>}]} {
    %c0 = arith.constant 0 : index
    %c0_0 = arith.constant 0 : index
    %c0_1 = arith.constant 0 : index
    %0 = vector.load %arg2[%c0, %c0_0, %c0_1] : memref<1x128x2xf32, #tpu.memory_space<vmem>>, vector<1x128x2xf32>
    %1 = vector.shape_cast %0 : vector<1x128x2xf32> to vector<128x2xf32>
    %c0_i32 = arith.constant 0 : i32
    %2 = arith.cmpi eq, %arg1, %c0_i32 : i32
    %3 = arith.extui %2 : i1 to i32
    %c0_i32_2 = arith.constant 0 : i32
    %4 = arith.cmpi ne, %3, %c0_i32_2 : i32
    scf.if %4 {
      %c0_33 = arith.constant 0 : index
      %c0_34 = arith.constant 0 : index
      %c0_35 = arith.constant 0 : index
      %51 = vector.load %arg3[%c0_33, %c0_34, %c0_35] : memref<1x1x4xf32, #tpu.memory_space<vmem>>, vector<1x1x4xf32>
      %52 = vector.shape_cast %51 : vector<1x1x4xf32> to vector<1x4xf32>
      %53 = vector.extract_strided_slice %52 {offsets = [0, 0], sizes = [1, 1], strides = [1, 1]} : vector<1x4xf32> to vector<1x1xf32>
      %c0_36 = arith.constant 0 : index
      %c0_37 = arith.constant 0 : index
      %54 = vector.load %arg4[%c0_36, %c0_37] : memref<2x64xf32, #tpu.memory_space<vmem>>, vector<1x64xf32>
      %55 = vector.broadcast %53 : vector<1x1xf32> to vector<1x64xf32>
      %56 = arith.mulf %55, %54 : vector<1x64xf32>
      %57 = vector.extract_strided_slice %52 {offsets = [0, 1], sizes = [1, 1], strides = [1, 1]} : vector<1x4xf32> to vector<1x1xf32>
      %c1_38 = arith.constant 1 : index
      %c0_39 = arith.constant 0 : index
      %58 = vector.load %arg4[%c1_38, %c0_39] : memref<2x64xf32, #tpu.memory_space<vmem>>, vector<1x64xf32>
      %59 = vector.broadcast %57 : vector<1x1xf32> to vector<1x64xf32>
      %60 = arith.mulf %59, %58 : vector<1x64xf32>
      %61 = arith.addf %56, %60 : vector<1x64xf32>
      %62 = vector.extract_strided_slice %52 {offsets = [0, 2], sizes = [1, 1], strides = [1, 1]} : vector<1x4xf32> to vector<1x1xf32>
      %c0_40 = arith.constant 0 : index
      %c0_41 = arith.constant 0 : index
      %63 = vector.load %arg4[%c0_40, %c0_41] : memref<2x64xf32, #tpu.memory_space<vmem>>, vector<1x64xf32>
      %64 = vector.broadcast %62 : vector<1x1xf32> to vector<1x64xf32>
      %65 = arith.mulf %64, %63 : vector<1x64xf32>
      %66 = vector.extract_strided_slice %52 {offsets = [0, 3], sizes = [1, 1], strides = [1, 1]} : vector<1x4xf32> to vector<1x1xf32>
      %c1_42 = arith.constant 1 : index
      %c0_43 = arith.constant 0 : index
      %67 = vector.load %arg4[%c1_42, %c0_43] : memref<2x64xf32, #tpu.memory_space<vmem>>, vector<1x64xf32>
      %68 = vector.broadcast %66 : vector<1x1xf32> to vector<1x64xf32>
      %69 = arith.mulf %68, %67 : vector<1x64xf32>
      %70 = arith.addf %65, %69 : vector<1x64xf32>
      %71 = tpu.concatenate %61, %70 in 0 : vector<1x64xf32>, vector<1x64xf32> -> vector<2x64xf32>
      %c0_44 = arith.constant 0 : index
      %c0_45 = arith.constant 0 : index
      %72 = vector.load %arg10[%c0_44, %c0_45] : memref<2x64xf32, #tpu.memory_space<vmem>>, vector<2x64xf32>
      tpu.vector_store %arg10[%c0_44, %c0_45], %71 {strides = array<i32>} : memref<2x64xf32, #tpu.memory_space<vmem>>, vector<2x64xf32>,
      %cst_46 = arith.constant 0xFF800000 : f32
      %73 = vector.broadcast %cst_46 : f32 to vector<1x1x1024xf32>
      %c0_47 = arith.constant 0 : index
      %c0_48 = arith.constant 0 : index
      %c0_49 = arith.constant 0 : index
      %74 = vector.load %arg9[%c0_47, %c0_48, %c0_49] : memref<1x1x1024xf32, #tpu.memory_space<vmem>>, vector<1x1x1024xf32>
      tpu.vector_store %arg9[%c0_47, %c0_48, %c0_49], %73 {strides = array<i32>} : memref<1x1x1024xf32, #tpu.memory_space<vmem>>, vector<1x1x1024xf32>,
    } else {
    }
    %5 = vector.extract_strided_slice %1 {offsets = [0, 0], sizes = [128, 1], strides = [1, 1]} : vector<128x2xf32> to vector<128x1xf32>
    %c0_3 = arith.constant 0 : index
    %c0_4 = arith.constant 0 : index
    %6 = vector.load %arg10[%c0_3, %c0_4] : memref<2x64xf32, #tpu.memory_space<vmem>>, vector<1x64xf32>
    %7 = vector.broadcast %5 : vector<128x1xf32> to vector<128x64xf32>
    %8 = vector.broadcast %6 : vector<1x64xf32> to vector<128x64xf32>
    %9 = arith.mulf %7, %8 : vector<128x64xf32>
    %10 = vector.extract_strided_slice %1 {offsets = [0, 1], sizes = [128, 1], strides = [1, 1]} : vector<128x2xf32> to vector<128x1xf32>
    %c1 = arith.constant 1 : index
    %c0_5 = arith.constant 0 : index
    %11 = vector.load %arg10[%c1, %c0_5] : memref<2x64xf32, #tpu.memory_space<vmem>>, vector<1x64xf32>
    %12 = vector.broadcast %10 : vector<128x1xf32> to vector<128x64xf32>
    %13 = vector.broadcast %11 : vector<1x64xf32> to vector<128x64xf32>
    %14 = arith.mulf %12, %13 : vector<128x64xf32>
    %15 = arith.addf %9, %14 : vector<128x64xf32>
    %c0_6 = arith.constant 0 : index
    %c0_7 = arith.constant 0 : index
    %16 = vector.load %arg5[%c0_6, %c0_7] : memref<1x64xf32, #tpu.memory_space<vmem>>, vector<1x64xf32>
    %17 = vector.broadcast %16 : vector<1x64xf32> to vector<128x64xf32>
    %18 = arith.addf %15, %17 : vector<128x64xf32>
    %cst = arith.constant 0.000000e+00 : f32
    %19 = vector.broadcast %cst : f32 to vector<128x64xf32>
    %20 = arith.maximumf %18, %19 : vector<128x64xf32>
    %c0_8 = arith.constant 0 : index
    %c0_9 = arith.constant 0 : index
    %21 = vector.load %arg6[%c0_8, %c0_9] : memref<64x128xbf16, #tpu.memory_space<vmem>>, vector<64x128xbf16>
    %c0_10 = arith.constant 0 : index
    %c0_11 = arith.constant 0 : index
    %22 = vector.load %arg7[%c0_10, %c0_11] : memref<1x128xf32, #tpu.memory_space<vmem>>, vector<1x128xf32>
    %23 = arith.truncf %20 : vector<128x64xf32> to vector<128x64xbf16>
    %cst_12 = arith.constant dense<0.000000e+00> : vector<128x128xf32>
    %24 = tpu.matmul %23, %21, %cst_12 {dimension_numbers = #tpu.dot_dimension_numbers<[1], [0], [0], [1], [0, 0, 1, 1], [], []>} : vector<128x64xbf16>, vector<64x128xbf16>, vector<128x128xf32> -> vector<128x128xf32>
    %25 = vector.broadcast %22 : vector<1x128xf32> to vector<128x128xf32>
    %26 = arith.addf %24, %25 : vector<128x128xf32>
    %cst_13 = arith.constant 0.000000e+00 : f32
    %27 = vector.broadcast %cst_13 : f32 to vector<128x128xf32>
    %28 = arith.maximumf %26, %27 : vector<128x128xf32>
    %29 = arith.truncf %28 : vector<128x128xf32> to vector<128x128xbf16>
    %c0_14 = arith.constant 0 : index
    %c0_15 = arith.constant 0 : index
    %30 = vector.load %arg8[%c0_14, %c0_15] : memref<128x1024xbf16, #tpu.memory_space<vmem>>, vector<128x256xbf16>
    %cst_16 = arith.constant dense<0.000000e+00> : vector<128x256xf32>
    %31 = tpu.matmul %29, %30, %cst_16 {dimension_numbers = #tpu.dot_dimension_numbers<[1], [0], [0], [1], [0, 0, 1, 1], [], []>} : vector<128x128xbf16>, vector<128x256xbf16>, vector<128x256xf32> -> vector<128x256xf32>
    %cst_17 = arith.constant dense<0xFF800000> : vector<256xf32>
    %32 = vector.multi_reduction <maximumf>, %31, %cst_17 [0] : vector<128x256xf32> to vector<256xf32>
    %33 = vector.shape_cast %32 : vector<256xf32> to vector<1x256xf32>
    %c0_18 = arith.constant 0 : index
    %c256 = arith.constant 256 : index
    %34 = vector.load %arg8[%c0_18, %c256] : memref<128x1024xbf16, #tpu.memory_space<vmem>>, vector<128x256xbf16>
    %cst_19 = arith.constant dense<0.000000e+00> : vector<128x256xf32>
    %35 = tpu.matmul %29, %34, %cst_19 {dimension_numbers = #tpu.dot_dimension_numbers<[1], [0], [0], [1], [0, 0, 1, 1], [], []>} : vector<128x128xbf16>, vector<128x256xbf16>, vector<128x256xf32> -> vector<128x256xf32>
    %cst_20 = arith.constant dense<0xFF800000> : vector<256xf32>
    %36 = vector.multi_reduction <maximumf>, %35, %cst_20 [0] : vector<128x256xf32> to vector<256xf32>
    %37 = vector.shape_cast %36 : vector<256xf32> to vector<1x256xf32>
    %c0_21 = arith.constant 0 : index
    %c512 = arith.constant 512 : index
    %38 = vector.load %arg8[%c0_21, %c512] : memref<128x1024xbf16, #tpu.memory_space<vmem>>, vector<128x256xbf16>
    %cst_22 = arith.constant dense<0.000000e+00> : vector<128x256xf32>
    %39 = tpu.matmul %29, %38, %cst_22 {dimension_numbers = #tpu.dot_dimension_numbers<[1], [0], [0], [1], [0, 0, 1, 1], [], []>} : vector<128x128xbf16>, vector<128x256xbf16>, vector<128x256xf32> -> vector<128x256xf32>
    %cst_23 = arith.constant dense<0xFF800000> : vector<256xf32>
    %40 = vector.multi_reduction <maximumf>, %39, %cst_23 [0] : vector<128x256xf32> to vector<256xf32>
    %41 = vector.shape_cast %40 : vector<256xf32> to vector<1x256xf32>
    %c0_24 = arith.constant 0 : index
    %c768 = arith.constant 768 : index
    %42 = vector.load %arg8[%c0_24, %c768] : memref<128x1024xbf16, #tpu.memory_space<vmem>>, vector<128x256xbf16>
    %cst_25 = arith.constant dense<0.000000e+00> : vector<128x256xf32>
    %43 = tpu.matmul %29, %42, %cst_25 {dimension_numbers = #tpu.dot_dimension_numbers<[1], [0], [0], [1], [0, 0, 1, 1], [], []>} : vector<128x128xbf16>, vector<128x256xbf16>, vector<128x256xf32> -> vector<128x256xf32>
    %cst_26 = arith.constant dense<0xFF800000> : vector<256xf32>
    %44 = vector.multi_reduction <maximumf>, %43, %cst_26 [0] : vector<128x256xf32> to vector<256xf32>
    %45 = vector.shape_cast %44 : vector<256xf32> to vector<1x256xf32>
    %46 = tpu.concatenate %33, %37, %41, %45 in 1 : vector<1x256xf32>, vector<1x256xf32>, vector<1x256xf32>, vector<1x256xf32> -> vector<1x1024xf32>
    %47 = vector.shape_cast %46 : vector<1x1024xf32> to vector<1x1x1024xf32>
    %c0_27 = arith.constant 0 : index
    %c0_28 = arith.constant 0 : index
    %c0_29 = arith.constant 0 : index
    %48 = vector.load %arg9[%c0_27, %c0_28, %c0_29] : memref<1x1x1024xf32, #tpu.memory_space<vmem>>, vector<1x1x1024xf32>
    %49 = arith.maximumf %48, %47 : vector<1x1x1024xf32>
    %c0_30 = arith.constant 0 : index
    %c0_31 = arith.constant 0 : index
    %c0_32 = arith.constant 0 : index
    %50 = vector.load %arg9[%c0_30, %c0_31, %c0_32] : memref<1x1x1024xf32, #tpu.memory_space<vmem>>, vector<1x1x1024xf32>
    tpu.vector_store %arg9[%c0_30, %c0_31, %c0_32], %49 {strides = array<i32>} : memref<1x1x1024xf32, #tpu.memory_space<vmem>>, vector<1x1x1024xf32>,
    return
  }
  func.func @transform_0(%arg0: i32, %arg1: i32) -> (i32, i32, i32) {
    %c0_i32 = arith.constant 0 : i32
    %c0_i32_0 = arith.constant 0 : i32
    return %arg0, %arg1, %c0_i32 : i32, i32, i32
  }
  func.func @transform_1(%arg0: i32, %arg1: i32) -> (i32, i32, i32) {
    %c0_i32 = arith.constant 0 : i32
    %c0_i32_0 = arith.constant 0 : i32
    %c0_i32_1 = arith.constant 0 : i32
    return %arg0, %c0_i32, %c0_i32_0 : i32, i32, i32
  }
  func.func @transform_2(%arg0: i32, %arg1: i32) -> (i32, i32) {
    %c0_i32 = arith.constant 0 : i32
    %c0_i32_0 = arith.constant 0 : i32
    %c0_i32_1 = arith.constant 0 : i32
    return %c0_i32, %c0_i32_0 : i32, i32
  }
  func.func @transform_3(%arg0: i32, %arg1: i32) -> (i32, i32) {
    %c0_i32 = arith.constant 0 : i32
    %c0_i32_0 = arith.constant 0 : i32
    %c0_i32_1 = arith.constant 0 : i32
    return %c0_i32, %c0_i32_0 : i32, i32
  }
  func.func @transform_4(%arg0: i32, %arg1: i32) -> (i32, i32) {
    %c0_i32 = arith.constant 0 : i32
    %c0_i32_0 = arith.constant 0 : i32
    %c0_i32_1 = arith.constant 0 : i32
    return %c0_i32, %c0_i32_0 : i32, i32
  }
  func.func @transform_5(%arg0: i32, %arg1: i32) -> (i32, i32) {
    %c0_i32 = arith.constant 0 : i32
    %c0_i32_0 = arith.constant 0 : i32
    %c0_i32_1 = arith.constant 0 : i32
    return %c0_i32, %c0_i32_0 : i32, i32
  }
  func.func @transform_6(%arg0: i32, %arg1: i32) -> (i32, i32) {
    %c0_i32 = arith.constant 0 : i32
    %c0_i32_0 = arith.constant 0 : i32
    %c0_i32_1 = arith.constant 0 : i32
    return %c0_i32, %c0_i32_0 : i32, i32
  }
  func.func @transform_7(%arg0: i32, %arg1: i32) -> (i32, i32, i32) {
    %c0_i32 = arith.constant 0 : i32
    %c0_i32_0 = arith.constant 0 : i32
    %c0_i32_1 = arith.constant 0 : i32
    return %arg0, %c0_i32, %c0_i32_0 : i32, i32, i32
  }
}

module attributes {stable_mosaic.version = 11 : i64} {
  func.func @fc_chain_kernel(%arg0: memref<2x1024xf32, #tpu.memory_space<vmem>>, %arg1: memref<1x1024xf32, #tpu.memory_space<vmem>>, %arg2: memref<1024x512xbf16, #tpu.memory_space<vmem>>, %arg3: memref<1x512xf32, #tpu.memory_space<vmem>>, %arg4: memref<512x256xbf16, #tpu.memory_space<vmem>>, %arg5: memref<1x256xf32, #tpu.memory_space<vmem>>, %arg6: memref<256x2xbf16, #tpu.memory_space<vmem>>, %arg7: memref<1x2xf32, #tpu.memory_space<vmem>>, %arg8: memref<2x2xf32, #tpu.memory_space<vmem>>) attributes {dimension_semantics = [], scalar_prefetch = 0 : i64, scratch_operands = 0 : i64, tpu.core_type = #tpu.core_type<tc>} {
    %c0 = arith.constant 0 : index
    %c0_0 = arith.constant 0 : index
    %0 = vector.load %arg0[%c0, %c0_0] : memref<2x1024xf32, #tpu.memory_space<vmem>>, vector<2x1024xf32>
    %c0_1 = arith.constant 0 : index
    %c0_2 = arith.constant 0 : index
    %1 = vector.load %arg1[%c0_1, %c0_2] : memref<1x1024xf32, #tpu.memory_space<vmem>>, vector<1x1024xf32>
    %2 = vector.broadcast %1 : vector<1x1024xf32> to vector<2x1024xf32>
    %3 = arith.addf %0, %2 : vector<2x1024xf32>
    %c0_3 = arith.constant 0 : index
    %c0_4 = arith.constant 0 : index
    %4 = vector.load %arg2[%c0_3, %c0_4] : memref<1024x512xbf16, #tpu.memory_space<vmem>>, vector<1024x512xbf16>
    %c0_5 = arith.constant 0 : index
    %c0_6 = arith.constant 0 : index
    %5 = vector.load %arg3[%c0_5, %c0_6] : memref<1x512xf32, #tpu.memory_space<vmem>>, vector<1x512xf32>
    %6 = arith.truncf %3 : vector<2x1024xf32> to vector<2x1024xbf16>
    %cst = arith.constant dense<0.000000e+00> : vector<2x512xf32>
    %7 = tpu.matmul %6, %4, %cst {dimension_numbers = #tpu.dot_dimension_numbers<[1], [0], [0], [1], [0, 0, 1, 1], [], []>} : vector<2x1024xbf16>, vector<1024x512xbf16>, vector<2x512xf32> -> vector<2x512xf32>
    %8 = vector.broadcast %5 : vector<1x512xf32> to vector<2x512xf32>
    %9 = arith.addf %7, %8 : vector<2x512xf32>
    %cst_7 = arith.constant 0.000000e+00 : f32
    %10 = vector.broadcast %cst_7 : f32 to vector<2x512xf32>
    %11 = arith.maximumf %9, %10 : vector<2x512xf32>
    %c0_8 = arith.constant 0 : index
    %c0_9 = arith.constant 0 : index
    %12 = vector.load %arg4[%c0_8, %c0_9] : memref<512x256xbf16, #tpu.memory_space<vmem>>, vector<512x256xbf16>
    %c0_10 = arith.constant 0 : index
    %c0_11 = arith.constant 0 : index
    %13 = vector.load %arg5[%c0_10, %c0_11] : memref<1x256xf32, #tpu.memory_space<vmem>>, vector<1x256xf32>
    %14 = arith.truncf %11 : vector<2x512xf32> to vector<2x512xbf16>
    %cst_12 = arith.constant dense<0.000000e+00> : vector<2x256xf32>
    %15 = tpu.matmul %14, %12, %cst_12 {dimension_numbers = #tpu.dot_dimension_numbers<[1], [0], [0], [1], [0, 0, 1, 1], [], []>} : vector<2x512xbf16>, vector<512x256xbf16>, vector<2x256xf32> -> vector<2x256xf32>
    %16 = vector.broadcast %13 : vector<1x256xf32> to vector<2x256xf32>
    %17 = arith.addf %15, %16 : vector<2x256xf32>
    %cst_13 = arith.constant 0.000000e+00 : f32
    %18 = vector.broadcast %cst_13 : f32 to vector<2x256xf32>
    %19 = arith.maximumf %17, %18 : vector<2x256xf32>
    %c0_14 = arith.constant 0 : index
    %c0_15 = arith.constant 0 : index
    %20 = vector.load %arg6[%c0_14, %c0_15] : memref<256x2xbf16, #tpu.memory_space<vmem>>, vector<256x2xbf16>
    %c0_16 = arith.constant 0 : index
    %c0_17 = arith.constant 0 : index
    %21 = vector.load %arg7[%c0_16, %c0_17] : memref<1x2xf32, #tpu.memory_space<vmem>>, vector<1x2xf32>
    %22 = arith.truncf %19 : vector<2x256xf32> to vector<2x256xbf16>
    %cst_18 = arith.constant dense<0.000000e+00> : vector<2x2xf32>
    %23 = tpu.matmul %22, %20, %cst_18 {dimension_numbers = #tpu.dot_dimension_numbers<[1], [0], [0], [1], [0, 0, 1, 1], [], []>} : vector<2x256xbf16>, vector<256x2xbf16>, vector<2x2xf32> -> vector<2x2xf32>
    %24 = vector.broadcast %21 : vector<1x2xf32> to vector<2x2xf32>
    %25 = arith.addf %23, %24 : vector<2x2xf32>
    %c0_19 = arith.constant 0 : index
    %c0_20 = arith.constant 0 : index
    %26 = vector.load %arg8[%c0_19, %c0_20] : memref<2x2xf32, #tpu.memory_space<vmem>>, vector<2x2xf32>
    tpu.vector_store %arg8[%c0_19, %c0_20], %25 {strides = array<i32>} : memref<2x2xf32, #tpu.memory_space<vmem>>, vector<2x2xf32>,
    return
  }
}

</mosaic_0001>

<llo_original>
// kernel: pointnet.4
$region0: #{pointnet.4}
  #allocation0 [shape = 'u32[]', space=smem, size = 0x4, offset = 0x4, fixed_abs, tag = 'smem constant byte address 0x4 - core index']
  #allocation1 [shape = 'u32[72,128]{1,0:T(1,128)}', space=vmem, size = 0x9000, scoped, tag = 'internal scratch']
  %s0 = inlined_call_operand.vmem [shape: f32[2,128,2], index: 0, kind: input, shape index: {}]
  %s1 = inlined_call_operand.hbm [shape: f32[2,64], index: 1, kind: input, shape index: {}]
  %s2 = inlined_call_operand.hbm [shape: f32[1,64], index: 2, kind: input, shape index: {}]
  %s3 = inlined_call_operand.vmem [shape: bf16[64,128], index: 3, kind: input, shape index: {}]
  %s4 = inlined_call_operand.hbm [shape: f32[1,128], index: 4, kind: input, shape index: {}]
  %s5 = inlined_call_operand.vmem [shape: bf16[128,1024], index: 5, kind: input, shape index: {}]
  %s6 = inlined_call_operand.vmem [shape: f32[2,1,1024], index: 6, kind: output, shape index: {}]
  %s7 = sld [smem:[#allocation0]]
  $region73: #{pointnet.4} parent=0
    _
  %s9 = ssub.s32 1, %s7
  %s10 = scalar_select 0, %s9, %s7
  $region1: #{pointnet.4} parent=0
    #allocation2 [shape = 'u8[1024]{0}', space=vmem, size = 0x400, scoped, tag = 'input window, operand 1, single buffered']
    #allocation3 [shape = 's32[2]{0}', space=sflag, size = 0x8, scoped, tag = 'scoped memory for pointnet.4']
    #allocation4 [shape = 'u8[512]{0}', space=vmem, size = 0x400, scoped, tag = 'input window, operand 2, single buffered']
    #allocation5 [shape = 's32[1]{0}', space=sflag, size = 0x4, scoped, tag = 'scoped memory for pointnet.4']
    #allocation6 [shape = 'u8[512]{0}', space=vmem, size = 0x400, scoped, tag = 'input window, operand 4, single buffered']
    %11 = vsyncpa [#allocation3], 0
    %12 = vsyncpa [#allocation5], 0
    loop: start=0, step=1, limit=4
    $region2: #{pointnet.4} parent=1 // loop_pre_header
      _
    $region3: #{pointnet.4} parent=1 // loop_header
      %s14 = sphi 0, %s18
      %p15 = scmp.ge.s32.totalorder %s14, 4
      %s21 = sphi 0, %s33
      %s22 = sphi 0, %s29
      %s23 = sphi 0, %s21
      %s24 = sphi 0, %s22
      %s25 = sphi 0, %s23
      %s26 = sphi 0, %s24
      %s38 = sphi 0, %s40
      %s41 = sphi 0, %s38
      %s42 = sphi 0, %s41
      %s58 = sphi 0, %s42
      %s62 = sphi 0, %s62
      %s64 = sphi 0, %s62
      %s65 = sphi 0, %s64
      %s79 = sphi 0, %s65
      %s83 = sphi 0, %s83
      %s85 = sphi 0, %s83
      %s86 = sphi 0, %s85
      %s100 = sphi 0, %s86
      %s104 = sphi 0, %s104
      %s106 = sphi 0, %s104
      %s107 = sphi 0, %s106
      %s121 = sphi 0, %s107
      %s125 = sphi 0, %s125
      %s127 = sphi 0, %s125
      %s128 = sphi 0, %s127
      %s142 = sphi 0, %s128
      %s146 = sphi 0, %s146
      %s148 = sphi 0, %s146
      %s149 = sphi 0, %s148
      %s163 = sphi 0, %s149
      %s169 = sphi 0, %s171
      %s172 = sphi 0, %s169
      %s173 = sphi 0, %s172
      %s189 = sphi 0, %s173
    $region4: #{pointnet.4} parent=1 // loop_header_branch
      %17 = sbr.rel (%p15) target = $region8
    $region5: #{pointnet.4} parent=1 // loop_body
      %s19 = ssub.s32 %s14, 1
      %s20 = ssub.s32 %s14, 2
      %s27 = sadd.s32 1, %s22
      %p28 = scmp.ge.s32.totalorder %s27, 1
      %s29 = scalar_select %p28, 0, %s27
      %s30 = sadd.s32 1, %s21
      %s31 = scalar_select %p28, %s30, %s21
      %p32 = scmp.ge.s32.totalorder %s31, 2
      %s33 = scalar_select %p32, 0, %s31
      %s34 = ssub.s32 %s21, %s33
      %s35 = ssub.s32 %s22, %s29
      %s36 = sor.u32 %s34, %s35
      %p37 = scmp.eq.s32.totalorder %s36, 0
      %s39 = sadd.s32 %s38, 1
      %s40 = scalar_select %p37, %s38, %s39
      %p43 = pneg %p37
      %p44 = scmp.eq.s32.totalorder %s14, 1
      %p45 = por %p43, %p44
      %p46 = scmp.ne.s32.totalorder %s38, %s41
      %p47 = scmp.eq.s32.totalorder %s14, 0
      %p48 = por %p46, %p47
      %p49 = scmp.ne.s32.totalorder %s38, %s41
      %p50 = scmp.eq.s32.totalorder %s19, 1
      %p51 = por %p49, %p50
      %p52 = scmp.ne.s32.totalorder %s41, %s42
      %p53 = scmp.eq.s32.totalorder %s19, 0
      %p54 = por %p52, %p53
      %p55 = scmp.ne.s32.totalorder %s41, %s42
      %p56 = scmp.eq.s32.totalorder %s20, 1
      %p57 = por %p55, %p56
      %p59 = scmp.ne.s32.totalorder %s42, %s58
      %p60 = scmp.eq.s32.totalorder %s20, 0
      %p61 = por %p59, %p60
      %s63 = sadd.s32 %s62, 1
      %p66 = scmp.eq.s32.totalorder %s14, 1
      %p67 = scmp.ne.s32.totalorder %s62, %s64
      %p68 = scmp.eq.s32.totalorder %s14, 0
      %p69 = por %p67, %p68
      %p70 = scmp.ne.s32.totalorder %s62, %s64
      %p71 = scmp.eq.s32.totalorder %s19, 1
      %p72 = por %p70, %p71
      %p73 = scmp.ne.s32.totalorder %s64, %s65
      %p74 = scmp.eq.s32.totalorder %s19, 0
      %p75 = por %p73, %p74
      %p76 = scmp.ne.s32.totalorder %s64, %s65
      %p77 = scmp.eq.s32.totalorder %s20, 1
      %p78 = por %p76, %p77
      %p80 = scmp.ne.s32.totalorder %s65, %s79
      %p81 = scmp.eq.s32.totalorder %s20, 0
      %p82 = por %p80, %p81
      %s84 = sadd.s32 %s83, 1
      %p87 = scmp.eq.s32.totalorder %s14, 1
      %p88 = scmp.ne.s32.totalorder %s83, %s85
      %p89 = scmp.eq.s32.totalorder %s14, 0
      %p90 = por %p88, %p89
      %p91 = scmp.ne.s32.totalorder %s83, %s85
      %p92 = scmp.eq.s32.totalorder %s19, 1
      %p93 = por %p91, %p92
      %p94 = scmp.ne.s32.totalorder %s85, %s86
      %p95 = scmp.eq.s32.totalorder %s19, 0
      %p96 = por %p94, %p95
      %p97 = scmp.ne.s32.totalorder %s85, %s86
      %p98 = scmp.eq.s32.totalorder %s20, 1
      %p99 = por %p97, %p98
      %p101 = scmp.ne.s32.totalorder %s86, %s100
      %p102 = scmp.eq.s32.totalorder %s20, 0
      %p103 = por %p101, %p102
      %s105 = sadd.s32 %s104, 1
      %p108 = scmp.eq.s32.totalorder %s14, 1
      %p109 = scmp.ne.s32.totalorder %s104, %s106
      %p110 = scmp.eq.s32.totalorder %s14, 0
      %p111 = por %p109, %p110
      %p112 = scmp.ne.s32.totalorder %s104, %s106
      %p113 = scmp.eq.s32.totalorder %s19, 1
      %p114 = por %p112, %p113
      %p115 = scmp.ne.s32.totalorder %s106, %s107
      %p116 = scmp.eq.s32.totalorder %s19, 0
      %p117 = por %p115, %p116
      %p118 = scmp.ne.s32.totalorder %s106, %s107
      %p119 = scmp.eq.s32.totalorder %s20, 1
      %p120 = por %p118, %p119
      %p122 = scmp.ne.s32.totalorder %s107, %s121
      %p123 = scmp.eq.s32.totalorder %s20, 0
      %p124 = por %p122, %p123
      %s126 = sadd.s32 %s125, 1
      %p129 = scmp.eq.s32.totalorder %s14, 1
      %p130 = scmp.ne.s32.totalorder %s125, %s127
      %p131 = scmp.eq.s32.totalorder %s14, 0
      %p132 = por %p130, %p131
      %p133 = scmp.ne.s32.totalorder %s125, %s127
      %p134 = scmp.eq.s32.totalorder %s19, 1
      %p135 = por %p133, %p134
      %p136 = scmp.ne.s32.totalorder %s127, %s128
      %p137 = scmp.eq.s32.totalorder %s19, 0
      %p138 = por %p136, %p137
      %p139 = scmp.ne.s32.totalorder %s127, %s128
      %p140 = scmp.eq.s32.totalorder %s20, 1
      %p141 = por %p139, %p140
      %p143 = scmp.ne.s32.totalorder %s128, %s142
      %p144 = scmp.eq.s32.totalorder %s20, 0
      %p145 = por %p143, %p144
      %s147 = sadd.s32 %s146, 1
      %p150 = scmp.eq.s32.totalorder %s14, 1
      %p151 = scmp.ne.s32.totalorder %s146, %s148
      %p152 = scmp.eq.s32.totalorder %s14, 0
      %p153 = por %p151, %p152
      %p154 = scmp.ne.s32.totalorder %s146, %s148
      %p155 = scmp.eq.s32.totalorder %s19, 1
      %p156 = por %p154, %p155
      %p157 = scmp.ne.s32.totalorder %s148, %s149
      %p158 = scmp.eq.s32.totalorder %s19, 0
      %p159 = por %p157, %p158
      %p160 = scmp.ne.s32.totalorder %s148, %s149
      %p161 = scmp.eq.s32.totalorder %s20, 1
      %p162 = por %p160, %p161
      %p164 = scmp.ne.s32.totalorder %s149, %s163
      %p165 = scmp.eq.s32.totalorder %s20, 0
      %p166 = por %p164, %p165
      %s167 = ssub.s32 %s21, %s33
      %p168 = scmp.eq.s32.totalorder %s167, 0
      %s170 = sadd.s32 %s169, 1
      %s171 = scalar_select %p168, %s169, %s170
      %p174 = pneg %p168
      %p175 = scmp.eq.s32.totalorder %s14, 1
      %p176 = por %p174, %p175
      %p177 = scmp.ne.s32.totalorder %s169, %s172
      %p178 = scmp.eq.s32.totalorder %s14, 0
      %p179 = por %p177, %p178
      %p180 = scmp.ne.s32.totalorder %s169, %s172
      %p181 = scmp.eq.s32.totalorder %s19, 1
      %p182 = por %p180, %p181
      %p183 = scmp.ne.s32.totalorder %s172, %s173
      %p184 = scmp.eq.s32.totalorder %s19, 0
      %p185 = por %p183, %p184
      %p186 = scmp.ne.s32.totalorder %s172, %s173
      %p187 = scmp.eq.s32.totalorder %s20, 1
      %p188 = por %p186, %p187
      %p190 = scmp.ne.s32.totalorder %s173, %s189
      %p191 = scmp.eq.s32.totalorder %s20, 0
      %p192 = por %p190, %p191
      %p193 = scmp.le.s32.totalorder 1, %s14
      %p194 = scmp.lt.s32.totalorder %s14, 3
      %p195 = pnand %p193, %p194
      %p196 = pneg %p195
      // Predicated region
      $region9: #{pointnet.4} parent=5 // pred_check
        _
      $region10: #{pointnet.4} parent=5 // pred_check_branch
        %198 = sbr.rel (%p195) target = $region12
      $region11: #{pointnet.4} parent=5 // pred_region
        %s199 = ssub.s32 %s14, 1
        // Predicated region
        $region13: #{pointnet.4} parent=11 // pred_check
          %p200 = pneg %p75
        $region14: #{pointnet.4} parent=11 // pred_check_branch
          %202 = sbr.rel (%p200) target = $region16
        $region15: #{pointnet.4} parent=11 // pred_region
          %204 = vsyncadd [#allocation3], 0
          %s206 = sshll.u32 %s1, 4
          %s207 = int_to_ptr.hbm [resolvable:$true] %s206
          %s208 = sshll.u32 [#allocation2], 4
          %s209 = int_to_ptr.vmem [resolvable:$true] %s208
          %211 = dma.hbm_to_vmem [thread:$0]  %s207, 32, %s209, [#allocation3]
        $region16: #{pointnet.4} parent=11 // pred_fallthru
          _
        // Predicated region
        $region17: #{pointnet.4} parent=11 // pred_check
          %p212 = pneg %p96
        $region18: #{pointnet.4} parent=11 // pred_check_branch
          %214 = sbr.rel (%p212) target = $region20
        $region19: #{pointnet.4} parent=11 // pred_region
          %216 = vsyncadd [#allocation5], 0
          %s218 = sshll.u32 %s2, 4
          %s219 = int_to_ptr.hbm [resolvable:$true] %s218
          %s220 = sshll.u32 [#allocation4], 4
          %s221 = int_to_ptr.vmem [resolvable:$true] %s220
          %223 = dma.hbm_to_vmem [thread:$0]  %s219, 16, %s221, [#allocation5]
        $region20: #{pointnet.4} parent=11 // pred_fallthru
          _
        // Predicated region
        $region21: #{pointnet.4} parent=11 // pred_check
          %p224 = pneg %p117
        $region22: #{pointnet.4} parent=11 // pred_check_branch
          %226 = sbr.rel (%p224) target = $region24
        $region23: #{pointnet.4} parent=11 // pred_region
          _
        $region24: #{pointnet.4} parent=11 // pred_fallthru
          _
        // Predicated region
        $region25: #{pointnet.4} parent=11 // pred_check
          %p227 = pneg %p138
        $region26: #{pointnet.4} parent=11 // pred_check_branch
          %229 = sbr.rel (%p227) target = $region28
        $region27: #{pointnet.4} parent=11 // pred_region
          %231 = vsyncadd [#allocation5], 0
          %s233 = sshll.u32 %s4, 4
          %s234 = int_to_ptr.hbm [resolvable:$true] %s233
          %s235 = sshll.u32 [#allocation6], 4
          %s236 = int_to_ptr.vmem [resolvable:$true] %s235
          %238 = dma.hbm_to_vmem [thread:$0]  %s234, 16, %s236, [#allocation5]
        $region28: #{pointnet.4} parent=11 // pred_fallthru
          _
        // Predicated region
        $region29: #{pointnet.4} parent=11 // pred_check
          %p239 = pneg %p159
        $region30: #{pointnet.4} parent=11 // pred_check_branch
          %241 = sbr.rel (%p239) target = $region32
        $region31: #{pointnet.4} parent=11 // pred_region
          _
        $region32: #{pointnet.4} parent=11 // pred_fallthru
          _
      $region12: #{pointnet.4} parent=5 // pred_fallthru
        _
      %p242 = scmp.lt.s32.totalorder %s14, 2
      // Predicated region
      $region33: #{pointnet.4} parent=5 // pred_check
        %p243 = pneg %p242
      $region34: #{pointnet.4} parent=5 // pred_check_branch
        %245 = sbr.rel (%p243) target = $region36
      $region35: #{pointnet.4} parent=5 // pred_region
        // Predicated region
        $region37: #{pointnet.4} parent=35 // pred_check
          %p246 = pneg %p48
        $region38: #{pointnet.4} parent=35 // pred_check_branch
          %248 = sbr.rel (%p246) target = $region40
        $region39: #{pointnet.4} parent=35 // pred_region
          %s249 = smul.u32 16, %s22
          %p250 = scmp.lt.s32.totalorder %s21, 1
          %s251 = scalar_select %p250, %s21, 1
          %p252 = scmp.lt.s32.totalorder %s249, 15
          %s253 = scalar_select %p252, %s249, 15
          %s254 = smul.addr %s251, 16
          %s255 = sadd.s32 %s253, %s254
          %s256 = smul.addr %s255, 8
          %s257 = scalar_lea.vmem %s0, %s256
          %s258 = smul.u32 16, %s22
        $region40: #{pointnet.4} parent=35 // pred_fallthru
          _
      $region36: #{pointnet.4} parent=5 // pred_fallthru
        _
      %p259 = scmp.le.s32.totalorder 1, %s14
      %p260 = scmp.lt.s32.totalorder %s14, 3
      %p261 = pnand %p259, %p260
      %p262 = pneg %p261
      // Predicated region
      $region41: #{pointnet.4} parent=5 // pred_check
        _
      $region42: #{pointnet.4} parent=5 // pred_check_branch
        %264 = sbr.rel (%p261) target = $region44
      $region43: #{pointnet.4} parent=5 // pred_region
        %s265 = ssub.s32 %s14, 1
        // Predicated region
        $region45: #{pointnet.4} parent=43 // pred_check
          %p266 = pneg %p75
        $region46: #{pointnet.4} parent=43 // pred_check_branch
          %268 = sbr.rel (%p266) target = $region48
        $region47: #{pointnet.4} parent=43 // pred_region
          %270 = dma.done [#allocation3], 32
        $region48: #{pointnet.4} parent=43 // pred_fallthru
          _
        // Predicated region
        $region49: #{pointnet.4} parent=43 // pred_check
          %p271 = pneg %p96
        $region50: #{pointnet.4} parent=43 // pred_check_branch
          %273 = sbr.rel (%p271) target = $region52
        $region51: #{pointnet.4} parent=43 // pred_region
          %275 = dma.done [#allocation5], 16
        $region52: #{pointnet.4} parent=43 // pred_fallthru
          _
        // Predicated region
        $region53: #{pointnet.4} parent=43 // pred_check
          %p276 = pneg %p138
        $region54: #{pointnet.4} parent=43 // pred_check_branch
          %278 = sbr.rel (%p276) target = $region56
        $region55: #{pointnet.4} parent=43 // pred_region
          %280 = dma.done [#allocation5], 16
        $region56: #{pointnet.4} parent=43 // pred_fallthru
          _
        %s281 = smul.u32 16, %s24
        %p282 = scmp.lt.s32.totalorder %s23, 1
        %s283 = scalar_select %p282, %s23, 1
        %p284 = scmp.lt.s32.totalorder %s281, 15
        %s285 = scalar_select %p284, %s281, 15
        %s286 = smul.addr %s283, 16
        %s287 = sadd.s32 %s285, %s286
        %s288 = smul.addr %s287, 8
        %s289 = scalar_lea.vmem %s0, %s288
        %p290 = pneg %p54
        %p291 = pneg %p51
        %p292 = pneg %p75
        %p293 = pneg %p72
        %p294 = pneg %p96
        %p295 = pneg %p93
        %p296 = pneg %p117
        %p297 = pneg %p114
        %p298 = pneg %p138
        %p299 = pneg %p135
        %p300 = pneg %p159
        %p301 = pneg %p156
        %p302 = pneg %p185
        %p303 = pneg %p182
        %p304 = scmp.lt.s32.totalorder %s23, 1
        %s305 = scalar_select %p304, %s23, 1
        %s306 = smul.addr %s305, 8
        %s307 = scalar_lea.vmem %s6, %s306
        %s308 = smul.u32 16, %s24
        %p309 = scmp.lt.s32.totalorder %s23, 1
        %s310 = scalar_select %p309, %s23, 1
        %p311 = scmp.lt.s32.totalorder %s308, 15
        %s312 = scalar_select %p311, %s308, 15
        %s313 = smul.addr %s310, 16
        %s314 = sadd.s32 %s312, %s313
        %s315 = smul.addr %s314, 8
        %s316 = scalar_lea.vmem %s0, %s315
        %s317 = smul.u32 16, %s24
        %p318 = scmp.lt.s32.totalorder %s23, 1
        %s319 = scalar_select %p318, %s23, 1
        %s320 = smul.addr %s319, 8
        %s321 = scalar_lea.vmem %s6, %s320
        %v323 = vld [vmem:[%s316] sm:$0xff]
        %v324 = vld [vmem:[%s316 + $0x8] sm:$0xff]
        %v325 = vld [vmem:[%s316 + $0x10] sm:$0xff]
        %v326 = vld [vmem:[%s316 + $0x18] sm:$0xff]
        %v327 = vld [vmem:[%s316 + $0x20] sm:$0xff]
        %v328 = vld [vmem:[%s316 + $0x28] sm:$0xff]
        %v329 = vld [vmem:[%s316 + $0x30] sm:$0xff]
        %v330 = vld [vmem:[%s316 + $0x38] sm:$0xff]
        %v331 = vld [vmem:[%s316 + $0x40] sm:$0xff]
        %v332 = vld [vmem:[%s316 + $0x48] sm:$0xff]
        %v333 = vld [vmem:[%s316 + $0x50] sm:$0xff]
        %v334 = vld [vmem:[%s316 + $0x58] sm:$0xff]
        %v335 = vld [vmem:[%s316 + $0x60] sm:$0xff]
        %v336 = vld [vmem:[%s316 + $0x68] sm:$0xff]
        %v337 = vld [vmem:[%s316 + $0x70] sm:$0xff]
        %v338 = vld [vmem:[%s316 + $0x78] sm:$0xff]
        %p339 = scmp.eq.s32.totalorder %s24, 0
        // Predicated region
        $region57: #{pointnet.4} parent=43 // pred_check
          %p340 = pneg %p339
        $region58: #{pointnet.4} parent=43 // pred_check_branch
          %342 = sbr.rel (%p340) target = $region60
        $region59: #{pointnet.4} parent=43 // pred_region
          %343 = vst [vmem:[%s321] sm:$0xff] -inf
        $region60: #{pointnet.4} parent=43 // pred_fallthru
          _
        %v344 = vld [vmem:[#allocation2] sm:$0x1]
        %346 = vset.pattern.permute.xlu0 0
        %347 = vperm.xlu0 %346, %v323
        %v348 = vpop.permute.xlu0 %347
        %351 = vset.pattern.permute.xlu0 0
        %352 = vperm.xlu0 %351, %v324
        %v353 = vpop.permute.xlu0 %352
        %356 = vset.pattern.permute.xlu0 0
        %357 = vperm.xlu0 %356, %v325
        %v358 = vpop.permute.xlu0 %357
        %361 = vset.pattern.permute.xlu0 0
        %362 = vperm.xlu0 %361, %v326
        %v363 = vpop.permute.xlu0 %362
        %366 = vset.pattern.permute.xlu0 0
        %367 = vperm.xlu0 %366, %v327
        %v368 = vpop.permute.xlu0 %367
        %371 = vset.pattern.permute.xlu0 0
        %372 = vperm.xlu0 %371, %v328
        %v373 = vpop.permute.xlu0 %372
        %376 = vset.pattern.permute.xlu0 0
        %377 = vperm.xlu0 %376, %v329
        %v378 = vpop.permute.xlu0 %377
        %381 = vset.pattern.permute.xlu0 0
        %382 = vperm.xlu0 %381, %v330
        %v383 = vpop.permute.xlu0 %382
        %386 = vset.pattern.permute.xlu0 0
        %387 = vperm.xlu0 %386, %v331
        %v388 = vpop.permute.xlu0 %387
        %391 = vset.pattern.permute.xlu0 0
        %392 = vperm.xlu0 %391, %v332
        %v393 = vpop.permute.xlu0 %392
        %396 = vset.pattern.permute.xlu0 0
        %397 = vperm.xlu0 %396, %v333
        %v398 = vpop.permute.xlu0 %397
        %401 = vset.pattern.permute.xlu0 0
        %402 = vperm.xlu0 %401, %v334
        %v403 = vpop.permute.xlu0 %402
        %406 = vset.pattern.permute.xlu0 0
        %407 = vperm.xlu0 %406, %v335
        %v408 = vpop.permute.xlu0 %407
        %411 = vset.pattern.permute.xlu0 0
        %412 = vperm.xlu0 %411, %v336
        %v413 = vpop.permute.xlu0 %412
        %416 = vset.pattern.permute.xlu0 0
        %417 = vperm.xlu0 %416, %v337
        %v418 = vpop.permute.xlu0 %417
        %421 = vset.pattern.permute.xlu0 0
        %422 = vperm.xlu0 %421, %v338
        %v423 = vpop.permute.xlu0 %422
        %v425 = vperm.slane %v344, 0
        %v426 = vmul.f32 %v348, %v425
        %v427 = vmul.f32 %v353, %v425
        %v428 = vmul.f32 %v358, %v425
        %v429 = vmul.f32 %v363, %v425
        %v430 = vmul.f32 %v368, %v425
        %v431 = vmul.f32 %v373, %v425
        %v432 = vmul.f32 %v378, %v425
        %v433 = vmul.f32 %v383, %v425
        %v434 = vmul.f32 %v388, %v425
        %v435 = vmul.f32 %v393, %v425
        %v436 = vmul.f32 %v398, %v425
        %v437 = vmul.f32 %v403, %v425
        %v438 = vmul.f32 %v408, %v425
        %v439 = vmul.f32 %v413, %v425
        %v440 = vmul.f32 %v418, %v425
        %v441 = vmul.f32 %v423, %v425
        %v442 = vld [vmem:[#allocation2 + $0x1] sm:$0x1]
        %443 = vset.pattern.permute.xlu0 1
        %444 = vperm.xlu0 %443, %v323
        %v445 = vpop.permute.xlu0 %444
        %447 = vset.pattern.permute.xlu0 1
        %448 = vperm.xlu0 %447, %v324
        %v449 = vpop.permute.xlu0 %448
        %451 = vset.pattern.permute.xlu0 1
        %452 = vperm.xlu0 %451, %v325
        %v453 = vpop.permute.xlu0 %452
        %455 = vset.pattern.permute.xlu0 1
        %456 = vperm.xlu0 %455, %v326
        %v457 = vpop.permute.xlu0 %456
        %459 = vset.pattern.permute.xlu0 1
        %460 = vperm.xlu0 %459, %v327
        %v461 = vpop.permute.xlu0 %460
        %463 = vset.pattern.permute.xlu0 1
        %464 = vperm.xlu0 %463, %v328
        %v465 = vpop.permute.xlu0 %464
        %467 = vset.pattern.permute.xlu0 1
        %468 = vperm.xlu0 %467, %v329
        %v469 = vpop.permute.xlu0 %468
        %471 = vset.pattern.permute.xlu0 1
        %472 = vperm.xlu0 %471, %v330
        %v473 = vpop.permute.xlu0 %472
        %475 = vset.pattern.permute.xlu0 1
        %476 = vperm.xlu0 %475, %v331
        %v477 = vpop.permute.xlu0 %476
        %479 = vset.pattern.permute.xlu0 1
        %480 = vperm.xlu0 %479, %v332
        %v481 = vpop.permute.xlu0 %480
        %483 = vset.pattern.permute.xlu0 1
        %484 = vperm.xlu0 %483, %v333
        %v485 = vpop.permute.xlu0 %484
        %487 = vset.pattern.permute.xlu0 1
        %488 = vperm.xlu0 %487, %v334
        %v489 = vpop.permute.xlu0 %488
        %491 = vset.pattern.permute.xlu0 1
        %492 = vperm.xlu0 %491, %v335
        %v493 = vpop.permute.xlu0 %492
        %495 = vset.pattern.permute.xlu0 1
        %496 = vperm.xlu0 %495, %v336
        %v497 = vpop.permute.xlu0 %496
        %499 = vset.pattern.permute.xlu0 1
        %500 = vperm.xlu0 %499, %v337
        %v501 = vpop.permute.xlu0 %500
        %503 = vset.pattern.permute.xlu0 1
        %504 = vperm.xlu0 %503, %v338
        %v505 = vpop.permute.xlu0 %504
        %v507 = vperm.slane %v442, 0
        %v508 = vmul.f32 %v445, %v507
        %v509 = vmul.f32 %v449, %v507
        %v510 = vmul.f32 %v453, %v507
        %v511 = vmul.f32 %v457, %v507
        %v512 = vmul.f32 %v461, %v507
        %v513 = vmul.f32 %v465, %v507
        %v514 = vmul.f32 %v469, %v507
        %v515 = vmul.f32 %v473, %v507
        %v516 = vmul.f32 %v477, %v507
        %v517 = vmul.f32 %v481, %v507
        %v518 = vmul.f32 %v485, %v507
        %v519 = vmul.f32 %v489, %v507
        %v520 = vmul.f32 %v493, %v507
        %v521 = vmul.f32 %v497, %v507
        %v522 = vmul.f32 %v501, %v507
        %v523 = vmul.f32 %v505, %v507
        %v524 = vadd.f32 %v426, %v508
        %v525 = vadd.f32 %v427, %v509
        %v526 = vadd.f32 %v428, %v510
        %v527 = vadd.f32 %v429, %v511
        %v528 = vadd.f32 %v430, %v512
        %v529 = vadd.f32 %v431, %v513
        %v530 = vadd.f32 %v432, %v514
        %v531 = vadd.f32 %v433, %v515
        %v532 = vadd.f32 %v434, %v516
        %v533 = vadd.f32 %v435, %v517
        %v534 = vadd.f32 %v436, %v518
        %v535 = vadd.f32 %v437, %v519
        %v536 = vadd.f32 %v438, %v520
        %v537 = vadd.f32 %v439, %v521
        %v538 = vadd.f32 %v440, %v522
        %v539 = vadd.f32 %v441, %v523
        %v540 = vld [vmem:[#allocation4] sm:$0x1]
        %v542 = vperm.slane %v540, 0
        %v544 = vadd.f32 %v524, %v542
        %v545 = vadd.f32 %v525, %v542
        %v546 = vadd.f32 %v526, %v542
        %v547 = vadd.f32 %v527, %v542
        %v548 = vadd.f32 %v528, %v542
        %v549 = vadd.f32 %v529, %v542
        %v550 = vadd.f32 %v530, %v542
        %v551 = vadd.f32 %v531, %v542
        %v552 = vadd.f32 %v532, %v542
        %v553 = vadd.f32 %v533, %v542
        %v554 = vadd.f32 %v534, %v542
        %v555 = vadd.f32 %v535, %v542
        %v556 = vadd.f32 %v536, %v542
        %v557 = vadd.f32 %v537, %v542
        %v558 = vadd.f32 %v538, %v542
        %v559 = vadd.f32 %v539, %v542
        %v560 = vmax.f32 %v544, 0.0
        %v561 = vmax.f32 %v545, 0.0
        %v562 = vmax.f32 %v546, 0.0
        %v563 = vmax.f32 %v547, 0.0
        %v564 = vmax.f32 %v548, 0.0
        %v565 = vmax.f32 %v549, 0.0
        %v566 = vmax.f32 %v550, 0.0
        %v567 = vmax.f32 %v551, 0.0
        %v568 = vmax.f32 %v552, 0.0
        %v569 = vmax.f32 %v553, 0.0
        %v570 = vmax.f32 %v554, 0.0
        %v571 = vmax.f32 %v555, 0.0
        %v572 = vmax.f32 %v556, 0.0
        %v573 = vmax.f32 %v557, 0.0
        %v574 = vmax.f32 %v558, 0.0
        %v575 = vmax.f32 %v559, 0.0
        %v576 = vld [vmem:[%s3] sm:$0xf]
        %v577 = vld [vmem:[%s3 + $0x4] sm:$0xf]
        %v578 = vld [vmem:[%s3 + $0x8] sm:$0xf]
        %v579 = vld [vmem:[%s3 + $0xc] sm:$0xf]
        %v580 = vld [vmem:[%s3 + $0x10] sm:$0xf]
        %v581 = vld [vmem:[%s3 + $0x14] sm:$0xf]
        %v582 = vld [vmem:[%s3 + $0x18] sm:$0xf]
        %v583 = vld [vmem:[%s3 + $0x1c] sm:$0xf]
        %v584 = vld [vmem:[#allocation6] sm:$0x1]
        %v585 = vpack.c.bf16 %v561, %v560
        %v586 = vpack.c.bf16 %v563, %v562
        %v587 = vpack.c.bf16 %v565, %v564
        %v588 = vpack.c.bf16 %v567, %v566
        %v589 = vpack.c.bf16 %v569, %v568
        %v590 = vpack.c.bf16 %v571, %v570
        %v591 = vpack.c.bf16 %v573, %v572
        %v592 = vpack.c.bf16 %v575, %v574
        %v594 = vperm.slane %v584, 0
        %v604 = vunpack.c.l.b16 %v576
        %v605 = vunpack.c.l.b16 %v577
        %v606 = vunpack.c.l.b16 %v578
        %v607 = vunpack.c.l.b16 %v579
        %v608 = vunpack.c.l.b16 %v580
        %v609 = vunpack.c.l.b16 %v581
        %v610 = vunpack.c.l.b16 %v582
        %v611 = vunpack.c.l.b16 %v583
        %v612 = vpack.c.b16 %v605, %v604
        %v613 = vpack.c.b16 %v607, %v606
        %v614 = vpack.c.b16 %v609, %v608
        %v615 = vpack.c.b16 %v611, %v610
        %vm620 = vcmask 523264
        %v622 = vsel %vm620, %v585, 0
        %v625 = vsel %vm620, %v586, 0
        %v628 = vsel %vm620, %v587, 0
        %v631 = vsel %vm620, %v588, 0
        %v634 = vsel %vm620, %v589, 0
        %v637 = vsel %vm620, %v590, 0
        %v640 = vsel %vm620, %v591, 0
        %v643 = vsel %vm620, %v592, 0
        %645 = vmatpush.bf16.msra.mxu0 0
        %646 = vmatpush.bf16.msra.mxu0 0
        %647 = vmatpush.bf16.msra.mxu0 0
        %648 = vmatpush.bf16.msra.mxu0 0
        %649 = vmatpush.bf16.msra.mxu0 %v615
        %650 = vmatpush.bf16.msra.mxu0 %v614
        %651 = vmatpush.bf16.msra.mxu0 %v613
        %652 = vmatpush.bf16.msra.mxu0 %v612
        %653 = vmatmul.bf16.gmra.mxu0 %v622
        %v654 = vpop.f32.mrf.mxu0
        %v655 = vadd.f32 %v594, %v654
        %v656 = vpop.f32.mrf.mxu0
        %v657 = vadd.f32 %v594, %v656
        %658 = vmatmul.bf16.gmra.mxu0 %v625
        %v659 = vpop.f32.mrf.mxu0
        %v660 = vadd.f32 %v594, %v659
        %v661 = vpop.f32.mrf.mxu0
        %v662 = vadd.f32 %v594, %v661
        %663 = vmatmul.bf16.gmra.mxu0 %v628
        %v664 = vpop.f32.mrf.mxu0
        %v665 = vadd.f32 %v594, %v664
        %v666 = vpop.f32.mrf.mxu0
        %v667 = vadd.f32 %v594, %v666
        %668 = vmatmul.bf16.gmra.mxu0 %v631
        %v669 = vpop.f32.mrf.mxu0
        %v670 = vadd.f32 %v594, %v669
        %v671 = vpop.f32.mrf.mxu0
        %v672 = vadd.f32 %v594, %v671
        %673 = vmatmul.bf16.gmra.mxu0 %v634
        %v674 = vpop.f32.mrf.mxu0
        %v675 = vadd.f32 %v594, %v674
        %v676 = vpop.f32.mrf.mxu0
        %v677 = vadd.f32 %v594, %v676
        %678 = vmatmul.bf16.gmra.mxu0 %v637
        %v679 = vpop.f32.mrf.mxu0
        %v680 = vadd.f32 %v594, %v679
        %v681 = vpop.f32.mrf.mxu0
        %v682 = vadd.f32 %v594, %v681
        %683 = vmatmul.bf16.gmra.mxu0 %v640
        %v684 = vpop.f32.mrf.mxu0
        %v685 = vadd.f32 %v594, %v684
        %v686 = vpop.f32.mrf.mxu0
        %v687 = vadd.f32 %v594, %v686
        %688 = vmatmul.bf16.gmra.mxu0 %v643
        %v689 = vpop.f32.mrf.mxu0
        %v690 = vadd.f32 %v594, %v689
        %v691 = vpop.f32.mrf.mxu0
        %v692 = vadd.f32 %v594, %v691
        %693 = vdwg.mxu0
        %v694 = vmax.f32 %v655, 0.0
        %v695 = vmax.f32 %v657, 0.0
        %v696 = vmax.f32 %v660, 0.0
        %v697 = vmax.f32 %v662, 0.0
        %v698 = vmax.f32 %v665, 0.0
        %v699 = vmax.f32 %v667, 0.0
        %v700 = vmax.f32 %v670, 0.0
        %v701 = vmax.f32 %v672, 0.0
        %v702 = vmax.f32 %v675, 0.0
        %v703 = vmax.f32 %v677, 0.0
        %v704 = vmax.f32 %v680, 0.0
        %v705 = vmax.f32 %v682, 0.0
        %v706 = vmax.f32 %v685, 0.0
        %v707 = vmax.f32 %v687, 0.0
        %v708 = vmax.f32 %v690, 0.0
        %v709 = vmax.f32 %v692, 0.0
        %v710 = vpack.c.bf16 %v695, %v694
        %v711 = vpack.c.bf16 %v697, %v696
        %v712 = vpack.c.bf16 %v699, %v698
        %v713 = vpack.c.bf16 %v701, %v700
        %v714 = vpack.c.bf16 %v703, %v702
        %v715 = vpack.c.bf16 %v705, %v704
        %v716 = vpack.c.bf16 %v707, %v706
        %v717 = vpack.c.bf16 %v709, %v708
        %v718 = vld [vmem:[%s5] sm:$0xff]
        %v719 = vld [vmem:[%s5 + $0x20] sm:$0xff]
        %v720 = vld [vmem:[%s5 + $0x40] sm:$0xff]
        %v721 = vld [vmem:[%s5 + $0x60] sm:$0xff]
        %v722 = vld [vmem:[%s5 + $0x80] sm:$0xff]
        %v723 = vld [vmem:[%s5 + $0xa0] sm:$0xff]
        %v724 = vld [vmem:[%s5 + $0xc0] sm:$0xff]
        %v725 = vld [vmem:[%s5 + $0xe0] sm:$0xff]
        %v726 = vld [vmem:[%s5 + $0x100] sm:$0xff]
        %v727 = vld [vmem:[%s5 + $0x120] sm:$0xff]
        %v728 = vld [vmem:[%s5 + $0x140] sm:$0xff]
        %v729 = vld [vmem:[%s5 + $0x160] sm:$0xff]
        %v730 = vld [vmem:[%s5 + $0x180] sm:$0xff]
        %v731 = vld [vmem:[%s5 + $0x1a0] sm:$0xff]
        %v732 = vld [vmem:[%s5 + $0x1c0] sm:$0xff]
        %v733 = vld [vmem:[%s5 + $0x1e0] sm:$0xff]
        %v750 = vunpack.c.l.b16 %v718
        %v751 = vunpack.c.h.b16 %v718
        %v752 = vunpack.c.l.b16 %v719
        %v753 = vunpack.c.h.b16 %v719
        %v754 = vunpack.c.l.b16 %v720
        %v755 = vunpack.c.h.b16 %v720
        %v756 = vunpack.c.l.b16 %v721
        %v757 = vunpack.c.h.b16 %v721
        %v758 = vunpack.c.l.b16 %v722
        %v759 = vunpack.c.h.b16 %v722
        %v760 = vunpack.c.l.b16 %v723
        %v761 = vunpack.c.h.b16 %v723
        %v762 = vunpack.c.l.b16 %v724
        %v763 = vunpack.c.h.b16 %v724
        %v764 = vunpack.c.l.b16 %v725
        %v765 = vunpack.c.h.b16 %v725
        %v766 = vunpack.c.l.b16 %v726
        %v767 = vunpack.c.h.b16 %v726
        %v768 = vunpack.c.l.b16 %v727
        %v769 = vunpack.c.h.b16 %v727
        %v770 = vunpack.c.l.b16 %v728
        %v771 = vunpack.c.h.b16 %v728
        %v772 = vunpack.c.l.b16 %v729
        %v773 = vunpack.c.h.b16 %v729
        %v774 = vunpack.c.l.b16 %v730
        %v775 = vunpack.c.h.b16 %v730
        %v776 = vunpack.c.l.b16 %v731
        %v777 = vunpack.c.h.b16 %v731
        %v778 = vunpack.c.l.b16 %v732
        %v779 = vunpack.c.h.b16 %v732
        %v780 = vunpack.c.l.b16 %v733
        %v781 = vunpack.c.h.b16 %v733
        %v782 = vpack.c.b16 %v752, %v750
        %v783 = vpack.c.b16 %v753, %v751
        %v784 = vpack.c.b16 %v756, %v754
        %v785 = vpack.c.b16 %v757, %v755
        %v786 = vpack.c.b16 %v760, %v758
        %v787 = vpack.c.b16 %v761, %v759
        %v788 = vpack.c.b16 %v764, %v762
        %v789 = vpack.c.b16 %v765, %v763
        %v790 = vpack.c.b16 %v768, %v766
        %v791 = vpack.c.b16 %v769, %v767
        %v792 = vpack.c.b16 %v772, %v770
        %v793 = vpack.c.b16 %v773, %v771
        %v794 = vpack.c.b16 %v776, %v774
        %v795 = vpack.c.b16 %v777, %v775
        %v796 = vpack.c.b16 %v780, %v778
        %v797 = vpack.c.b16 %v781, %v779
        %814 = vmatpush.bf16.msra.mxu0 %v796
        %815 = vmatpush.bf16.msra.mxu0 %v794
        %816 = vmatpush.bf16.msra.mxu0 %v792
        %817 = vmatpush.bf16.msra.mxu0 %v790
        %818 = vmatpush.bf16.msra.mxu0 %v788
        %819 = vmatpush.bf16.msra.mxu0 %v786
        %820 = vmatpush.bf16.msra.mxu0 %v784
        %821 = vmatpush.bf16.msra.mxu0 %v782
        %822 = vmatmul.bf16.gmra.mxu0 %v710
        %v823 = vpop.f32.mrf.mxu0
        %v824 = vadd.f32 0.0, %v823
        %v825 = vpop.f32.mrf.mxu0
        %v826 = vadd.f32 0.0, %v825
        %827 = vmatmul.bf16.gmra.mxu0 %v711
        %v828 = vpop.f32.mrf.mxu0
        %v829 = vadd.f32 0.0, %v828
        %v830 = vpop.f32.mrf.mxu0
        %v831 = vadd.f32 0.0, %v830
        %832 = vmatmul.bf16.gmra.mxu0 %v712
        %v833 = vpop.f32.mrf.mxu0
        %v834 = vadd.f32 0.0, %v833
        %v835 = vpop.f32.mrf.mxu0
        %v836 = vadd.f32 0.0, %v835
        %837 = vmatmul.bf16.gmra.mxu0 %v713
        %v838 = vpop.f32.mrf.mxu0
        %v839 = vadd.f32 0.0, %v838
        %v840 = vpop.f32.mrf.mxu0
        %v841 = vadd.f32 0.0, %v840
        %842 = vmatmul.bf16.gmra.mxu0 %v714
        %v843 = vpop.f32.mrf.mxu0
        %v844 = vadd.f32 0.0, %v843
        %v845 = vpop.f32.mrf.mxu0
        %v846 = vadd.f32 0.0, %v845
        %847 = vmatmul.bf16.gmra.mxu0 %v715
        %v848 = vpop.f32.mrf.mxu0
        %v849 = vadd.f32 0.0, %v848
        %v850 = vpop.f32.mrf.mxu0
        %v851 = vadd.f32 0.0, %v850
        %852 = vmatmul.bf16.gmra.mxu0 %v716
        %v853 = vpop.f32.mrf.mxu0
        %v854 = vadd.f32 0.0, %v853
        %v855 = vpop.f32.mrf.mxu0
        %v856 = vadd.f32 0.0, %v855
        %857 = vmatmul.bf16.gmra.mxu0 %v717
        %v858 = vpop.f32.mrf.mxu0
        %v859 = vadd.f32 0.0, %v858
        %v860 = vpop.f32.mrf.mxu0
        %v861 = vadd.f32 0.0, %v860
        %862 = vdwg.mxu0
        %863 = vmatpush.bf16.msra.mxu0 %v797
        %864 = vmatpush.bf16.msra.mxu0 %v795
        %865 = vmatpush.bf16.msra.mxu0 %v793
        %866 = vmatpush.bf16.msra.mxu0 %v791
        %867 = vmatpush.bf16.msra.mxu0 %v789
        %868 = vmatpush.bf16.msra.mxu0 %v787
        %869 = vmatpush.bf16.msra.mxu0 %v785
        %870 = vmatpush.bf16.msra.mxu0 %v783
        %871 = vmatmul.bf16.gmra.mxu0 %v710
        %v872 = vpop.f32.mrf.mxu0
        %v873 = vadd.f32 0.0, %v872
        %v874 = vpop.f32.mrf.mxu0
        %v875 = vadd.f32 0.0, %v874
        %876 = vmatmul.bf16.gmra.mxu0 %v711
        %v877 = vpop.f32.mrf.mxu0
        %v878 = vadd.f32 0.0, %v877
        %v879 = vpop.f32.mrf.mxu0
        %v880 = vadd.f32 0.0, %v879
        %881 = vmatmul.bf16.gmra.mxu0 %v712
        %v882 = vpop.f32.mrf.mxu0
        %v883 = vadd.f32 0.0, %v882
        %v884 = vpop.f32.mrf.mxu0
        %v885 = vadd.f32 0.0, %v884
        %886 = vmatmul.bf16.gmra.mxu0 %v713
        %v887 = vpop.f32.mrf.mxu0
        %v888 = vadd.f32 0.0, %v887
        %v889 = vpop.f32.mrf.mxu0
        %v890 = vadd.f32 0.0, %v889
        %891 = vmatmul.bf16.gmra.mxu0 %v714
        %v892 = vpop.f32.mrf.mxu0
        %v893 = vadd.f32 0.0, %v892
        %v894 = vpop.f32.mrf.mxu0
        %v895 = vadd.f32 0.0, %v894
        %896 = vmatmul.bf16.gmra.mxu0 %v715
        %v897 = vpop.f32.mrf.mxu0
        %v898 = vadd.f32 0.0, %v897
        %v899 = vpop.f32.mrf.mxu0
        %v900 = vadd.f32 0.0, %v899
        %901 = vmatmul.bf16.gmra.mxu0 %v716
        %v902 = vpop.f32.mrf.mxu0
        %v903 = vadd.f32 0.0, %v902
        %v904 = vpop.f32.mrf.mxu0
        %v905 = vadd.f32 0.0, %v904
        %906 = vmatmul.bf16.gmra.mxu0 %v717
        %v907 = vpop.f32.mrf.mxu0
        %v908 = vadd.f32 0.0, %v907
        %v909 = vpop.f32.mrf.mxu0
        %v910 = vadd.f32 0.0, %v909
        %911 = vdwg.mxu0
        %v912 = vmax.f32 %v824, %v829
        %v913 = vmax.f32 %v826, %v831
        %v914 = vmax.f32 %v912, %v834
        %v915 = vmax.f32 %v913, %v836
        %v916 = vmax.f32 %v914, %v839
        %v917 = vmax.f32 %v915, %v841
        %v918 = vmax.f32 %v916, %v844
        %v919 = vmax.f32 %v917, %v846
        %v920 = vmax.f32 %v918, %v849
        %v921 = vmax.f32 %v919, %v851
        %v922 = vmax.f32 %v920, %v854
        %v923 = vmax.f32 %v921, %v856
        %v924 = vmax.f32 %v922, %v859
        %v925 = vmax.f32 %v923, %v861
        %v926 = vmax.f32 %v924, %v925
        %v927 = vrot.slane %v926, 4
        %v928 = vmax.f32 %v926, %v927
        %v929 = vrot.slane %v928, 2
        %v930 = vmax.f32 %v928, %v929
        %v931 = vrot.slane %v930, 1
        %v932 = vmax.f32 %v930, %v931
        %v933 = vmax.f32 %v873, %v878
        %v934 = vmax.f32 %v875, %v880
        %v935 = vmax.f32 %v933, %v883
        %v936 = vmax.f32 %v934, %v885
        %v937 = vmax.f32 %v935, %v888
        %v938 = vmax.f32 %v936, %v890
        %v939 = vmax.f32 %v937, %v893
        %v940 = vmax.f32 %v938, %v895
        %v941 = vmax.f32 %v939, %v898
        %v942 = vmax.f32 %v940, %v900
        %v943 = vmax.f32 %v941, %v903
        %v944 = vmax.f32 %v942, %v905
        %v945 = vmax.f32 %v943, %v908
        %v946 = vmax.f32 %v944, %v910
        %v947 = vmax.f32 %v945, %v946
        %v948 = vrot.slane %v947, 4
        %v949 = vmax.f32 %v947, %v948
        %v950 = vrot.slane %v949, 2
        %v951 = vmax.f32 %v949, %v950
        %v952 = vrot.slane %v951, 1
        %v953 = vmax.f32 %v951, %v952
        %v954 = vld [vmem:[%s5 + $0x8] sm:$0xff]
        %v955 = vld [vmem:[%s5 + $0x28] sm:$0xff]
        %v956 = vld [vmem:[%s5 + $0x48] sm:$0xff]
        %v957 = vld [vmem:[%s5 + $0x68] sm:$0xff]
        %v958 = vld [vmem:[%s5 + $0x88] sm:$0xff]
        %v959 = vld [vmem:[%s5 + $0xa8] sm:$0xff]
        %v960 = vld [vmem:[%s5 + $0xc8] sm:$0xff]
        %v961 = vld [vmem:[%s5 + $0xe8] sm:$0xff]
        %v962 = vld [vmem:[%s5 + $0x108] sm:$0xff]
        %v963 = vld [vmem:[%s5 + $0x128] sm:$0xff]
        %v964 = vld [vmem:[%s5 + $0x148] sm:$0xff]
        %v965 = vld [vmem:[%s5 + $0x168] sm:$0xff]
        %v966 = vld [vmem:[%s5 + $0x188] sm:$0xff]
        %v967 = vld [vmem:[%s5 + $0x1a8] sm:$0xff]
        %v968 = vld [vmem:[%s5 + $0x1c8] sm:$0xff]
        %v969 = vld [vmem:[%s5 + $0x1e8] sm:$0xff]
        %v986 = vunpack.c.l.b16 %v954
        %v987 = vunpack.c.h.b16 %v954
        %v988 = vunpack.c.l.b16 %v955
        %v989 = vunpack.c.h.b16 %v955
        %v990 = vunpack.c.l.b16 %v956
        %v991 = vunpack.c.h.b16 %v956
        %v992 = vunpack.c.l.b16 %v957
        %v993 = vunpack.c.h.b16 %v957
        %v994 = vunpack.c.l.b16 %v958
        %v995 = vunpack.c.h.b16 %v958
        %v996 = vunpack.c.l.b16 %v959
        %v997 = vunpack.c.h.b16 %v959
        %v998 = vunpack.c.l.b16 %v960
        %v999 = vunpack.c.h.b16 %v960
        %v1000 = vunpack.c.l.b16 %v961
        %v1001 = vunpack.c.h.b16 %v961
        %v1002 = vunpack.c.l.b16 %v962
        %v1003 = vunpack.c.h.b16 %v962
        %v1004 = vunpack.c.l.b16 %v963
        %v1005 = vunpack.c.h.b16 %v963
        %v1006 = vunpack.c.l.b16 %v964
        %v1007 = vunpack.c.h.b16 %v964
        %v1008 = vunpack.c.l.b16 %v965
        %v1009 = vunpack.c.h.b16 %v965
        %v1010 = vunpack.c.l.b16 %v966
        %v1011 = vunpack.c.h.b16 %v966
        %v1012 = vunpack.c.l.b16 %v967
        %v1013 = vunpack.c.h.b16 %v967
        %v1014 = vunpack.c.l.b16 %v968
        %v1015 = vunpack.c.h.b16 %v968
        %v1016 = vunpack.c.l.b16 %v969
        %v1017 = vunpack.c.h.b16 %v969
        %v1018 = vpack.c.b16 %v988, %v986
        %v1019 = vpack.c.b16 %v989, %v987
        %v1020 = vpack.c.b16 %v992, %v990
        %v1021 = vpack.c.b16 %v993, %v991
        %v1022 = vpack.c.b16 %v996, %v994
        %v1023 = vpack.c.b16 %v997, %v995
        %v1024 = vpack.c.b16 %v1000, %v998
        %v1025 = vpack.c.b16 %v1001, %v999
        %v1026 = vpack.c.b16 %v1004, %v1002
        %v1027 = vpack.c.b16 %v1005, %v1003
        %v1028 = vpack.c.b16 %v1008, %v1006
        %v1029 = vpack.c.b16 %v1009, %v1007
        %v1030 = vpack.c.b16 %v1012, %v1010
        %v1031 = vpack.c.b16 %v1013, %v1011
        %v1032 = vpack.c.b16 %v1016, %v1014
        %v1033 = vpack.c.b16 %v1017, %v1015
        %1050 = vmatpush.bf16.msra.mxu0 %v1032
        %1051 = vmatpush.bf16.msra.mxu0 %v1030
        %1052 = vmatpush.bf16.msra.mxu0 %v1028
        %1053 = vmatpush.bf16.msra.mxu0 %v1026
        %1054 = vmatpush.bf16.msra.mxu0 %v1024
        %1055 = vmatpush.bf16.msra.mxu0 %v1022
        %1056 = vmatpush.bf16.msra.mxu0 %v1020
        %1057 = vmatpush.bf16.msra.mxu0 %v1018
        %1058 = vmatmul.bf16.gmra.mxu0 %v710
        %v1059 = vpop.f32.mrf.mxu0
        %v1060 = vadd.f32 0.0, %v1059
        %v1061 = vpop.f32.mrf.mxu0
        %v1062 = vadd.f32 0.0, %v1061
        %1063 = vmatmul.bf16.gmra.mxu0 %v711
        %v1064 = vpop.f32.mrf.mxu0
        %v1065 = vadd.f32 0.0, %v1064
        %v1066 = vpop.f32.mrf.mxu0
        %v1067 = vadd.f32 0.0, %v1066
        %1068 = vmatmul.bf16.gmra.mxu0 %v712
        %v1069 = vpop.f32.mrf.mxu0
        %v1070 = vadd.f32 0.0, %v1069
        %v1071 = vpop.f32.mrf.mxu0
        %v1072 = vadd.f32 0.0, %v1071
        %1073 = vmatmul.bf16.gmra.mxu0 %v713
        %v1074 = vpop.f32.mrf.mxu0
        %v1075 = vadd.f32 0.0, %v1074
        %v1076 = vpop.f32.mrf.mxu0
        %v1077 = vadd.f32 0.0, %v1076
        %1078 = vmatmul.bf16.gmra.mxu0 %v714
        %v1079 = vpop.f32.mrf.mxu0
        %v1080 = vadd.f32 0.0, %v1079
        %v1081 = vpop.f32.mrf.mxu0
        %v1082 = vadd.f32 0.0, %v1081
        %1083 = vmatmul.bf16.gmra.mxu0 %v715
        %v1084 = vpop.f32.mrf.mxu0
        %v1085 = vadd.f32 0.0, %v1084
        %v1086 = vpop.f32.mrf.mxu0
        %v1087 = vadd.f32 0.0, %v1086
        %1088 = vmatmul.bf16.gmra.mxu0 %v716
        %v1089 = vpop.f32.mrf.mxu0
        %v1090 = vadd.f32 0.0, %v1089
        %v1091 = vpop.f32.mrf.mxu0
        %v1092 = vadd.f32 0.0, %v1091
        %1093 = vmatmul.bf16.gmra.mxu0 %v717
        %v1094 = vpop.f32.mrf.mxu0
        %v1095 = vadd.f32 0.0, %v1094
        %v1096 = vpop.f32.mrf.mxu0
        %v1097 = vadd.f32 0.0, %v1096
        %1098 = vdwg.mxu0
        %1099 = vmatpush.bf16.msra.mxu0 %v1033
        %1100 = vmatpush.bf16.msra.mxu0 %v1031
        %1101 = vmatpush.bf16.msra.mxu0 %v1029
        %1102 = vmatpush.bf16.msra.mxu0 %v1027
        %1103 = vmatpush.bf16.msra.mxu0 %v1025
        %1104 = vmatpush.bf16.msra.mxu0 %v1023
        %1105 = vmatpush.bf16.msra.mxu0 %v1021
        %1106 = vmatpush.bf16.msra.mxu0 %v1019
        %1107 = vmatmul.bf16.gmra.mxu0 %v710
        %v1108 = vpop.f32.mrf.mxu0
        %v1109 = vadd.f32 0.0, %v1108
        %v1110 = vpop.f32.mrf.mxu0
        %v1111 = vadd.f32 0.0, %v1110
        %1112 = vmatmul.bf16.gmra.mxu0 %v711
        %v1113 = vpop.f32.mrf.mxu0
        %v1114 = vadd.f32 0.0, %v1113
        %v1115 = vpop.f32.mrf.mxu0
        %v1116 = vadd.f32 0.0, %v1115
        %1117 = vmatmul.bf16.gmra.mxu0 %v712
        %v1118 = vpop.f32.mrf.mxu0
        %v1119 = vadd.f32 0.0, %v1118
        %v1120 = vpop.f32.mrf.mxu0
        %v1121 = vadd.f32 0.0, %v1120
        %1122 = vmatmul.bf16.gmra.mxu0 %v713
        %v1123 = vpop.f32.mrf.mxu0
        %v1124 = vadd.f32 0.0, %v1123
        %v1125 = vpop.f32.mrf.mxu0
        %v1126 = vadd.f32 0.0, %v1125
        %1127 = vmatmul.bf16.gmra.mxu0 %v714
        %v1128 = vpop.f32.mrf.mxu0
        %v1129 = vadd.f32 0.0, %v1128
        %v1130 = vpop.f32.mrf.mxu0
        %v1131 = vadd.f32 0.0, %v1130
        %1132 = vmatmul.bf16.gmra.mxu0 %v715
        %v1133 = vpop.f32.mrf.mxu0
        %v1134 = vadd.f32 0.0, %v1133
        %v1135 = vpop.f32.mrf.mxu0
        %v1136 = vadd.f32 0.0, %v1135
        %1137 = vmatmul.bf16.gmra.mxu0 %v716
        %v1138 = vpop.f32.mrf.mxu0
        %v1139 = vadd.f32 0.0, %v1138
        %v1140 = vpop.f32.mrf.mxu0
        %v1141 = vadd.f32 0.0, %v1140
        %1142 = vmatmul.bf16.gmra.mxu0 %v717
        %v1143 = vpop.f32.mrf.mxu0
        %v1144 = vadd.f32 0.0, %v1143
        %v1145 = vpop.f32.mrf.mxu0
        %v1146 = vadd.f32 0.0, %v1145
        %1147 = vdwg.mxu0
        %v1148 = vmax.f32 %v1060, %v1065
        %v1149 = vmax.f32 %v1062, %v1067
        %v1150 = vmax.f32 %v1148, %v1070
        %v1151 = vmax.f32 %v1149, %v1072
        %v1152 = vmax.f32 %v1150, %v1075
        %v1153 = vmax.f32 %v1151, %v1077
        %v1154 = vmax.f32 %v1152, %v1080
        %v1155 = vmax.f32 %v1153, %v1082
        %v1156 = vmax.f32 %v1154, %v1085
        %v1157 = vmax.f32 %v1155, %v1087
        %v1158 = vmax.f32 %v1156, %v1090
        %v1159 = vmax.f32 %v1157, %v1092
        %v1160 = vmax.f32 %v1158, %v1095
        %v1161 = vmax.f32 %v1159, %v1097
        %v1162 = vmax.f32 %v1160, %v1161
        %v1163 = vrot.slane %v1162, 4
        %v1164 = vmax.f32 %v1162, %v1163
        %v1165 = vrot.slane %v1164, 2
        %v1166 = vmax.f32 %v1164, %v1165
        %v1167 = vrot.slane %v1166, 1
        %v1168 = vmax.f32 %v1166, %v1167
        %v1169 = vmax.f32 %v1109, %v1114
        %v1170 = vmax.f32 %v1111, %v1116
        %v1171 = vmax.f32 %v1169, %v1119
        %v1172 = vmax.f32 %v1170, %v1121
        %v1173 = vmax.f32 %v1171, %v1124
        %v1174 = vmax.f32 %v1172, %v1126
        %v1175 = vmax.f32 %v1173, %v1129
        %v1176 = vmax.f32 %v1174, %v1131
        %v1177 = vmax.f32 %v1175, %v1134
        %v1178 = vmax.f32 %v1176, %v1136
        %v1179 = vmax.f32 %v1177, %v1139
        %v1180 = vmax.f32 %v1178, %v1141
        %v1181 = vmax.f32 %v1179, %v1144
        %v1182 = vmax.f32 %v1180, %v1146
        %v1183 = vmax.f32 %v1181, %v1182
        %v1184 = vrot.slane %v1183, 4
        %v1185 = vmax.f32 %v1183, %v1184
        %v1186 = vrot.slane %v1185, 2
        %v1187 = vmax.f32 %v1185, %v1186
        %v1188 = vrot.slane %v1187, 1
        %v1189 = vmax.f32 %v1187, %v1188
        %v1190 = vld [vmem:[%s5 + $0x10] sm:$0xff]
        %v1191 = vld [vmem:[%s5 + $0x30] sm:$0xff]
        %v1192 = vld [vmem:[%s5 + $0x50] sm:$0xff]
        %v1193 = vld [vmem:[%s5 + $0x70] sm:$0xff]
        %v1194 = vld [vmem:[%s5 + $0x90] sm:$0xff]
        %v1195 = vld [vmem:[%s5 + $0xb0] sm:$0xff]
        %v1196 = vld [vmem:[%s5 + $0xd0] sm:$0xff]
        %v1197 = vld [vmem:[%s5 + $0xf0] sm:$0xff]
        %v1198 = vld [vmem:[%s5 + $0x110] sm:$0xff]
        %v1199 = vld [vmem:[%s5 + $0x130] sm:$0xff]
        %v1200 = vld [vmem:[%s5 + $0x150] sm:$0xff]
        %v1201 = vld [vmem:[%s5 + $0x170] sm:$0xff]
        %v1202 = vld [vmem:[%s5 + $0x190] sm:$0xff]
        %v1203 = vld [vmem:[%s5 + $0x1b0] sm:$0xff]
        %v1204 = vld [vmem:[%s5 + $0x1d0] sm:$0xff]
        %v1205 = vld [vmem:[%s5 + $0x1f0] sm:$0xff]
        %v1222 = vunpack.c.l.b16 %v1190
        %v1223 = vunpack.c.h.b16 %v1190
        %v1224 = vunpack.c.l.b16 %v1191
        %v1225 = vunpack.c.h.b16 %v1191
        %v1226 = vunpack.c.l.b16 %v1192
        %v1227 = vunpack.c.h.b16 %v1192
        %v1228 = vunpack.c.l.b16 %v1193
        %v1229 = vunpack.c.h.b16 %v1193
        %v1230 = vunpack.c.l.b16 %v1194
        %v1231 = vunpack.c.h.b16 %v1194
        %v1232 = vunpack.c.l.b16 %v1195
        %v1233 = vunpack.c.h.b16 %v1195
        %v1234 = vunpack.c.l.b16 %v1196
        %v1235 = vunpack.c.h.b16 %v1196
        %v1236 = vunpack.c.l.b16 %v1197
        %v1237 = vunpack.c.h.b16 %v1197
        %v1238 = vunpack.c.l.b16 %v1198
        %v1239 = vunpack.c.h.b16 %v1198
        %v1240 = vunpack.c.l.b16 %v1199
        %v1241 = vunpack.c.h.b16 %v1199
        %v1242 = vunpack.c.l.b16 %v1200
        %v1243 = vunpack.c.h.b16 %v1200
        %v1244 = vunpack.c.l.b16 %v1201
        %v1245 = vunpack.c.h.b16 %v1201
        %v1246 = vunpack.c.l.b16 %v1202
        %v1247 = vunpack.c.h.b16 %v1202
        %v1248 = vunpack.c.l.b16 %v1203
        %v1249 = vunpack.c.h.b16 %v1203
        %v1250 = vunpack.c.l.b16 %v1204
        %v1251 = vunpack.c.h.b16 %v1204
        %v1252 = vunpack.c.l.b16 %v1205
        %v1253 = vunpack.c.h.b16 %v1205
        %v1254 = vpack.c.b16 %v1224, %v1222
        %v1255 = vpack.c.b16 %v1225, %v1223
        %v1256 = vpack.c.b16 %v1228, %v1226
        %v1257 = vpack.c.b16 %v1229, %v1227
        %v1258 = vpack.c.b16 %v1232, %v1230
        %v1259 = vpack.c.b16 %v1233, %v1231
        %v1260 = vpack.c.b16 %v1236, %v1234
        %v1261 = vpack.c.b16 %v1237, %v1235
        %v1262 = vpack.c.b16 %v1240, %v1238
        %v1263 = vpack.c.b16 %v1241, %v1239
        %v1264 = vpack.c.b16 %v1244, %v1242
        %v1265 = vpack.c.b16 %v1245, %v1243
        %v1266 = vpack.c.b16 %v1248, %v1246
        %v1267 = vpack.c.b16 %v1249, %v1247
        %v1268 = vpack.c.b16 %v1252, %v1250
        %v1269 = vpack.c.b16 %v1253, %v1251
        %1286 = vmatpush.bf16.msra.mxu0 %v1268
        %1287 = vmatpush.bf16.msra.mxu0 %v1266
        %1288 = vmatpush.bf16.msra.mxu0 %v1264
        %1289 = vmatpush.bf16.msra.mxu0 %v1262
        %1290 = vmatpush.bf16.msra.mxu0 %v1260
        %1291 = vmatpush.bf16.msra.mxu0 %v1258
        %1292 = vmatpush.bf16.msra.mxu0 %v1256
        %1293 = vmatpush.bf16.msra.mxu0 %v1254
        %1294 = vmatmul.bf16.gmra.mxu0 %v710
        %v1295 = vpop.f32.mrf.mxu0
        %v1296 = vadd.f32 0.0, %v1295
        %v1297 = vpop.f32.mrf.mxu0
        %v1298 = vadd.f32 0.0, %v1297
        %1299 = vmatmul.bf16.gmra.mxu0 %v711
        %v1300 = vpop.f32.mrf.mxu0
        %v1301 = vadd.f32 0.0, %v1300
        %v1302 = vpop.f32.mrf.mxu0
        %v1303 = vadd.f32 0.0, %v1302
        %1304 = vmatmul.bf16.gmra.mxu0 %v712
        %v1305 = vpop.f32.mrf.mxu0
        %v1306 = vadd.f32 0.0, %v1305
        %v1307 = vpop.f32.mrf.mxu0
        %v1308 = vadd.f32 0.0, %v1307
        %1309 = vmatmul.bf16.gmra.mxu0 %v713
        %v1310 = vpop.f32.mrf.mxu0
        %v1311 = vadd.f32 0.0, %v1310
        %v1312 = vpop.f32.mrf.mxu0
        %v1313 = vadd.f32 0.0, %v1312
        %1314 = vmatmul.bf16.gmra.mxu0 %v714
        %v1315 = vpop.f32.mrf.mxu0
        %v1316 = vadd.f32 0.0, %v1315
        %v1317 = vpop.f32.mrf.mxu0
        %v1318 = vadd.f32 0.0, %v1317
        %1319 = vmatmul.bf16.gmra.mxu0 %v715
        %v1320 = vpop.f32.mrf.mxu0
        %v1321 = vadd.f32 0.0, %v1320
        %v1322 = vpop.f32.mrf.mxu0
        %v1323 = vadd.f32 0.0, %v1322
        %1324 = vmatmul.bf16.gmra.mxu0 %v716
        %v1325 = vpop.f32.mrf.mxu0
        %v1326 = vadd.f32 0.0, %v1325
        %v1327 = vpop.f32.mrf.mxu0
        %v1328 = vadd.f32 0.0, %v1327
        %1329 = vmatmul.bf16.gmra.mxu0 %v717
        %v1330 = vpop.f32.mrf.mxu0
        %v1331 = vadd.f32 0.0, %v1330
        %v1332 = vpop.f32.mrf.mxu0
        %v1333 = vadd.f32 0.0, %v1332
        %1334 = vdwg.mxu0
        %1335 = vmatpush.bf16.msra.mxu0 %v1269
        %1336 = vmatpush.bf16.msra.mxu0 %v1267
        %1337 = vmatpush.bf16.msra.mxu0 %v1265
        %1338 = vmatpush.bf16.msra.mxu0 %v1263
        %1339 = vmatpush.bf16.msra.mxu0 %v1261
        %1340 = vmatpush.bf16.msra.mxu0 %v1259
        %1341 = vmatpush.bf16.msra.mxu0 %v1257
        %1342 = vmatpush.bf16.msra.mxu0 %v1255
        %1343 = vmatmul.bf16.gmra.mxu0 %v710
        %v1344 = vpop.f32.mrf.mxu0
        %v1345 = vadd.f32 0.0, %v1344
        %v1346 = vpop.f32.mrf.mxu0
        %v1347 = vadd.f32 0.0, %v1346
        %1348 = vmatmul.bf16.gmra.mxu0 %v711
        %v1349 = vpop.f32.mrf.mxu0
        %v1350 = vadd.f32 0.0, %v1349
        %v1351 = vpop.f32.mrf.mxu0
        %v1352 = vadd.f32 0.0, %v1351
        %1353 = vmatmul.bf16.gmra.mxu0 %v712
        %v1354 = vpop.f32.mrf.mxu0
        %v1355 = vadd.f32 0.0, %v1354
        %v1356 = vpop.f32.mrf.mxu0
        %v1357 = vadd.f32 0.0, %v1356
        %1358 = vmatmul.bf16.gmra.mxu0 %v713
        %v1359 = vpop.f32.mrf.mxu0
        %v1360 = vadd.f32 0.0, %v1359
        %v1361 = vpop.f32.mrf.mxu0
        %v1362 = vadd.f32 0.0, %v1361
        %1363 = vmatmul.bf16.gmra.mxu0 %v714
        %v1364 = vpop.f32.mrf.mxu0
        %v1365 = vadd.f32 0.0, %v1364
        %v1366 = vpop.f32.mrf.mxu0
        %v1367 = vadd.f32 0.0, %v1366
        %1368 = vmatmul.bf16.gmra.mxu0 %v715
        %v1369 = vpop.f32.mrf.mxu0
        %v1370 = vadd.f32 0.0, %v1369
        %v1371 = vpop.f32.mrf.mxu0
        %v1372 = vadd.f32 0.0, %v1371
        %1373 = vmatmul.bf16.gmra.mxu0 %v716
        %v1374 = vpop.f32.mrf.mxu0
        %v1375 = vadd.f32 0.0, %v1374
        %v1376 = vpop.f32.mrf.mxu0
        %v1377 = vadd.f32 0.0, %v1376
        %1378 = vmatmul.bf16.gmra.mxu0 %v717
        %v1379 = vpop.f32.mrf.mxu0
        %v1380 = vadd.f32 0.0, %v1379
        %v1381 = vpop.f32.mrf.mxu0
        %v1382 = vadd.f32 0.0, %v1381
        %1383 = vdwg.mxu0
        %v1384 = vmax.f32 %v1296, %v1301
        %v1385 = vmax.f32 %v1298, %v1303
        %v1386 = vmax.f32 %v1384, %v1306
        %v1387 = vmax.f32 %v1385, %v1308
        %v1388 = vmax.f32 %v1386, %v1311
        %v1389 = vmax.f32 %v1387, %v1313
        %v1390 = vmax.f32 %v1388, %v1316
        %v1391 = vmax.f32 %v1389, %v1318
        %v1392 = vmax.f32 %v1390, %v1321
        %v1393 = vmax.f32 %v1391, %v1323
        %v1394 = vmax.f32 %v1392, %v1326
        %v1395 = vmax.f32 %v1393, %v1328
        %v1396 = vmax.f32 %v1394, %v1331
        %v1397 = vmax.f32 %v1395, %v1333
        %v1398 = vmax.f32 %v1396, %v1397
        %v1399 = vrot.slane %v1398, 4
        %v1400 = vmax.f32 %v1398, %v1399
        %v1401 = vrot.slane %v1400, 2
        %v1402 = vmax.f32 %v1400, %v1401
        %v1403 = vrot.slane %v1402, 1
        %v1404 = vmax.f32 %v1402, %v1403
        %v1405 = vmax.f32 %v1345, %v1350
        %v1406 = vmax.f32 %v1347, %v1352
        %v1407 = vmax.f32 %v1405, %v1355
        %v1408 = vmax.f32 %v1406, %v1357
        %v1409 = vmax.f32 %v1407, %v1360
        %v1410 = vmax.f32 %v1408, %v1362
        %v1411 = vmax.f32 %v1409, %v1365
        %v1412 = vmax.f32 %v1410, %v1367
        %v1413 = vmax.f32 %v1411, %v1370
        %v1414 = vmax.f32 %v1412, %v1372
        %v1415 = vmax.f32 %v1413, %v1375
        %v1416 = vmax.f32 %v1414, %v1377
        %v1417 = vmax.f32 %v1415, %v1380
        %v1418 = vmax.f32 %v1416, %v1382
        %v1419 = vmax.f32 %v1417, %v1418
        %v1420 = vrot.slane %v1419, 4
        %v1421 = vmax.f32 %v1419, %v1420
        %v1422 = vrot.slane %v1421, 2
        %v1423 = vmax.f32 %v1421, %v1422
        %v1424 = vrot.slane %v1423, 1
        %v1425 = vmax.f32 %v1423, %v1424
        %v1426 = vld [vmem:[%s5 + $0x18] sm:$0xff]
        %v1427 = vld [vmem:[%s5 + $0x38] sm:$0xff]
        %v1428 = vld [vmem:[%s5 + $0x58] sm:$0xff]
        %v1429 = vld [vmem:[%s5 + $0x78] sm:$0xff]
        %v1430 = vld [vmem:[%s5 + $0x98] sm:$0xff]
        %v1431 = vld [vmem:[%s5 + $0xb8] sm:$0xff]
        %v1432 = vld [vmem:[%s5 + $0xd8] sm:$0xff]
        %v1433 = vld [vmem:[%s5 + $0xf8] sm:$0xff]
        %v1434 = vld [vmem:[%s5 + $0x118] sm:$0xff]
        %v1435 = vld [vmem:[%s5 + $0x138] sm:$0xff]
        %v1436 = vld [vmem:[%s5 + $0x158] sm:$0xff]
        %v1437 = vld [vmem:[%s5 + $0x178] sm:$0xff]
        %v1438 = vld [vmem:[%s5 + $0x198] sm:$0xff]
        %v1439 = vld [vmem:[%s5 + $0x1b8] sm:$0xff]
        %v1440 = vld [vmem:[%s5 + $0x1d8] sm:$0xff]
        %v1441 = vld [vmem:[%s5 + $0x1f8] sm:$0xff]
        %v1458 = vunpack.c.l.b16 %v1426
        %v1459 = vunpack.c.h.b16 %v1426
        %v1460 = vunpack.c.l.b16 %v1427
        %v1461 = vunpack.c.h.b16 %v1427
        %v1462 = vunpack.c.l.b16 %v1428
        %v1463 = vunpack.c.h.b16 %v1428
        %v1464 = vunpack.c.l.b16 %v1429
        %v1465 = vunpack.c.h.b16 %v1429
        %v1466 = vunpack.c.l.b16 %v1430
        %v1467 = vunpack.c.h.b16 %v1430
        %v1468 = vunpack.c.l.b16 %v1431
        %v1469 = vunpack.c.h.b16 %v1431
        %v1470 = vunpack.c.l.b16 %v1432
        %v1471 = vunpack.c.h.b16 %v1432
        %v1472 = vunpack.c.l.b16 %v1433
        %v1473 = vunpack.c.h.b16 %v1433
        %v1474 = vunpack.c.l.b16 %v1434
        %v1475 = vunpack.c.h.b16 %v1434
        %v1476 = vunpack.c.l.b16 %v1435
        %v1477 = vunpack.c.h.b16 %v1435
        %v1478 = vunpack.c.l.b16 %v1436
        %v1479 = vunpack.c.h.b16 %v1436
        %v1480 = vunpack.c.l.b16 %v1437
        %v1481 = vunpack.c.h.b16 %v1437
        %v1482 = vunpack.c.l.b16 %v1438
        %v1483 = vunpack.c.h.b16 %v1438
        %v1484 = vunpack.c.l.b16 %v1439
        %v1485 = vunpack.c.h.b16 %v1439
        %v1486 = vunpack.c.l.b16 %v1440
        %v1487 = vunpack.c.h.b16 %v1440
        %v1488 = vunpack.c.l.b16 %v1441
        %v1489 = vunpack.c.h.b16 %v1441
        %v1490 = vpack.c.b16 %v1460, %v1458
        %v1491 = vpack.c.b16 %v1461, %v1459
        %v1492 = vpack.c.b16 %v1464, %v1462
        %v1493 = vpack.c.b16 %v1465, %v1463
        %v1494 = vpack.c.b16 %v1468, %v1466
        %v1495 = vpack.c.b16 %v1469, %v1467
        %v1496 = vpack.c.b16 %v1472, %v1470
        %v1497 = vpack.c.b16 %v1473, %v1471
        %v1498 = vpack.c.b16 %v1476, %v1474
        %v1499 = vpack.c.b16 %v1477, %v1475
        %v1500 = vpack.c.b16 %v1480, %v1478
        %v1501 = vpack.c.b16 %v1481, %v1479
        %v1502 = vpack.c.b16 %v1484, %v1482
        %v1503 = vpack.c.b16 %v1485, %v1483
        %v1504 = vpack.c.b16 %v1488, %v1486
        %v1505 = vpack.c.b16 %v1489, %v1487
        %1522 = vmatpush.bf16.msra.mxu0 %v1504
        %1523 = vmatpush.bf16.msra.mxu0 %v1502
        %1524 = vmatpush.bf16.msra.mxu0 %v1500
        %1525 = vmatpush.bf16.msra.mxu0 %v1498
        %1526 = vmatpush.bf16.msra.mxu0 %v1496
        %1527 = vmatpush.bf16.msra.mxu0 %v1494
        %1528 = vmatpush.bf16.msra.mxu0 %v1492
        %1529 = vmatpush.bf16.msra.mxu0 %v1490
        %1530 = vmatmul.bf16.gmra.mxu0 %v710
        %v1531 = vpop.f32.mrf.mxu0
        %v1532 = vadd.f32 0.0, %v1531
        %v1533 = vpop.f32.mrf.mxu0
        %v1534 = vadd.f32 0.0, %v1533
        %1535 = vmatmul.bf16.gmra.mxu0 %v711
        %v1536 = vpop.f32.mrf.mxu0
        %v1537 = vadd.f32 0.0, %v1536
        %v1538 = vpop.f32.mrf.mxu0
        %v1539 = vadd.f32 0.0, %v1538
        %1540 = vmatmul.bf16.gmra.mxu0 %v712
        %v1541 = vpop.f32.mrf.mxu0
        %v1542 = vadd.f32 0.0, %v1541
        %v1543 = vpop.f32.mrf.mxu0
        %v1544 = vadd.f32 0.0, %v1543
        %1545 = vmatmul.bf16.gmra.mxu0 %v713
        %v1546 = vpop.f32.mrf.mxu0
        %v1547 = vadd.f32 0.0, %v1546
        %v1548 = vpop.f32.mrf.mxu0
        %v1549 = vadd.f32 0.0, %v1548
        %1550 = vmatmul.bf16.gmra.mxu0 %v714
        %v1551 = vpop.f32.mrf.mxu0
        %v1552 = vadd.f32 0.0, %v1551
        %v1553 = vpop.f32.mrf.mxu0
        %v1554 = vadd.f32 0.0, %v1553
        %1555 = vmatmul.bf16.gmra.mxu0 %v715
        %v1556 = vpop.f32.mrf.mxu0
        %v1557 = vadd.f32 0.0, %v1556
        %v1558 = vpop.f32.mrf.mxu0
        %v1559 = vadd.f32 0.0, %v1558
        %1560 = vmatmul.bf16.gmra.mxu0 %v716
        %v1561 = vpop.f32.mrf.mxu0
        %v1562 = vadd.f32 0.0, %v1561
        %v1563 = vpop.f32.mrf.mxu0
        %v1564 = vadd.f32 0.0, %v1563
        %1565 = vmatmul.bf16.gmra.mxu0 %v717
        %v1566 = vpop.f32.mrf.mxu0
        %v1567 = vadd.f32 0.0, %v1566
        %v1568 = vpop.f32.mrf.mxu0
        %v1569 = vadd.f32 0.0, %v1568
        %1570 = vdwg.mxu0
        %1571 = vmatpush.bf16.msra.mxu0 %v1505
        %1572 = vmatpush.bf16.msra.mxu0 %v1503
        %1573 = vmatpush.bf16.msra.mxu0 %v1501
        %1574 = vmatpush.bf16.msra.mxu0 %v1499
        %1575 = vmatpush.bf16.msra.mxu0 %v1497
        %1576 = vmatpush.bf16.msra.mxu0 %v1495
        %1577 = vmatpush.bf16.msra.mxu0 %v1493
        %1578 = vmatpush.bf16.msra.mxu0 %v1491
        %1579 = vmatmul.bf16.gmra.mxu0 %v710
        %v1580 = vpop.f32.mrf.mxu0
        %v1581 = vadd.f32 0.0, %v1580
        %v1582 = vpop.f32.mrf.mxu0
        %v1583 = vadd.f32 0.0, %v1582
        %1584 = vmatmul.bf16.gmra.mxu0 %v711
        %v1585 = vpop.f32.mrf.mxu0
        %v1586 = vadd.f32 0.0, %v1585
        %v1587 = vpop.f32.mrf.mxu0
        %v1588 = vadd.f32 0.0, %v1587
        %1589 = vmatmul.bf16.gmra.mxu0 %v712
        %v1590 = vpop.f32.mrf.mxu0
        %v1591 = vadd.f32 0.0, %v1590
        %v1592 = vpop.f32.mrf.mxu0
        %v1593 = vadd.f32 0.0, %v1592
        %1594 = vmatmul.bf16.gmra.mxu0 %v713
        %v1595 = vpop.f32.mrf.mxu0
        %v1596 = vadd.f32 0.0, %v1595
        %v1597 = vpop.f32.mrf.mxu0
        %v1598 = vadd.f32 0.0, %v1597
        %1599 = vmatmul.bf16.gmra.mxu0 %v714
        %v1600 = vpop.f32.mrf.mxu0
        %v1601 = vadd.f32 0.0, %v1600
        %v1602 = vpop.f32.mrf.mxu0
        %v1603 = vadd.f32 0.0, %v1602
        %1604 = vmatmul.bf16.gmra.mxu0 %v715
        %v1605 = vpop.f32.mrf.mxu0
        %v1606 = vadd.f32 0.0, %v1605
        %v1607 = vpop.f32.mrf.mxu0
        %v1608 = vadd.f32 0.0, %v1607
        %1609 = vmatmul.bf16.gmra.mxu0 %v716
        %v1610 = vpop.f32.mrf.mxu0
        %v1611 = vadd.f32 0.0, %v1610
        %v1612 = vpop.f32.mrf.mxu0
        %v1613 = vadd.f32 0.0, %v1612
        %1614 = vmatmul.bf16.gmra.mxu0 %v717
        %v1615 = vpop.f32.mrf.mxu0
        %v1616 = vadd.f32 0.0, %v1615
        %v1617 = vpop.f32.mrf.mxu0
        %v1618 = vadd.f32 0.0, %v1617
        %1619 = vdwg.mxu0
        %v1620 = vmax.f32 %v1532, %v1537
        %v1621 = vmax.f32 %v1534, %v1539
        %v1622 = vmax.f32 %v1620, %v1542
        %v1623 = vmax.f32 %v1621, %v1544
        %v1624 = vmax.f32 %v1622, %v1547
        %v1625 = vmax.f32 %v1623, %v1549
        %v1626 = vmax.f32 %v1624, %v1552
        %v1627 = vmax.f32 %v1625, %v1554
        %v1628 = vmax.f32 %v1626, %v1557
        %v1629 = vmax.f32 %v1627, %v1559
        %v1630 = vmax.f32 %v1628, %v1562
        %v1631 = vmax.f32 %v1629, %v1564
        %v1632 = vmax.f32 %v1630, %v1567
        %v1633 = vmax.f32 %v1631, %v1569
        %v1634 = vmax.f32 %v1632, %v1633
        %v1635 = vrot.slane %v1634, 4
        %v1636 = vmax.f32 %v1634, %v1635
        %v1637 = vrot.slane %v1636, 2
        %v1638 = vmax.f32 %v1636, %v1637
        %v1639 = vrot.slane %v1638, 1
        %v1640 = vmax.f32 %v1638, %v1639
        %v1641 = vmax.f32 %v1581, %v1586
        %v1642 = vmax.f32 %v1583, %v1588
        %v1643 = vmax.f32 %v1641, %v1591
        %v1644 = vmax.f32 %v1642, %v1593
        %v1645 = vmax.f32 %v1643, %v1596
        %v1646 = vmax.f32 %v1644, %v1598
        %v1647 = vmax.f32 %v1645, %v1601
        %v1648 = vmax.f32 %v1646, %v1603
        %v1649 = vmax.f32 %v1647, %v1606
        %v1650 = vmax.f32 %v1648, %v1608
        %v1651 = vmax.f32 %v1649, %v1611
        %v1652 = vmax.f32 %v1650, %v1613
        %v1653 = vmax.f32 %v1651, %v1616
        %v1654 = vmax.f32 %v1652, %v1618
        %v1655 = vmax.f32 %v1653, %v1654
        %v1656 = vrot.slane %v1655, 4
        %v1657 = vmax.f32 %v1655, %v1656
        %v1658 = vrot.slane %v1657, 2
        %v1659 = vmax.f32 %v1657, %v1658
        %v1660 = vrot.slane %v1659, 1
        %v1661 = vmax.f32 %v1659, %v1660
        %v1662 = vld [vmem:[%s321] sm:$0xff]
        %v1671 = vrot.slane %v953, 7
        %v1672 = vrot.slane %v1168, 6
        %v1673 = vrot.slane %v1189, 5
        %v1674 = vrot.slane %v1404, 4
        %v1675 = vrot.slane %v1425, 3
        %v1676 = vrot.slane %v1640, 2
        %v1677 = vrot.slane %v1661, 1
        %vm1678 = vcmask 1040384
        %v1679 = vsel %vm1678, %v932, %v1671
        %vm1680 = vcmask 1042434
        %v1681 = vsel %vm1680, %v1672, %v1673
        %vm1682 = vcmask 1041408
        %v1683 = vsel %vm1682, %v1679, %v1681
        %vm1684 = vcmask 1044484
        %v1685 = vsel %vm1684, %v1674, %v1675
        %vm1686 = vcmask 1046534
        %v1687 = vsel %vm1686, %v1676, %v1677
        %vm1688 = vcmask 1045508
        %v1689 = vsel %vm1688, %v1685, %v1687
        %vm1690 = vcmask 1043456
        %v1691 = vsel %vm1690, %v1683, %v1689
        %v1693 = vmax.f32 %v1662, %v1691
        %1694 = vst [vmem:[%s321] sm:$0xff] %v1693
        %p1695 = scmp.lt.s32.totalorder %s23, 1
        %s1696 = scalar_select %p1695, %s23, 1
        %s1697 = smul.addr %s1696, 8
        %s1698 = scalar_lea.vmem %s6, %s1697
        // Predicated region
        $region61: #{pointnet.4} parent=43 // pred_check
          %p1699 = pneg %p182
        $region62: #{pointnet.4} parent=43 // pred_check_branch
          %1701 = sbr.rel (%p1699) target = $region64
        $region63: #{pointnet.4} parent=43 // pred_region
          _
        $region64: #{pointnet.4} parent=43 // pred_fallthru
          _
      $region44: #{pointnet.4} parent=5 // pred_fallthru
        _
      %p1702 = scmp.le.s32.totalorder 2, %s14
      // Predicated region
      $region65: #{pointnet.4} parent=5 // pred_check
        %p1703 = pneg %p1702
      $region66: #{pointnet.4} parent=5 // pred_check_branch
        %1705 = sbr.rel (%p1703) target = $region68
      $region67: #{pointnet.4} parent=5 // pred_region
        %s1706 = ssub.s32 %s14, 2
        // Predicated region
        $region69: #{pointnet.4} parent=67 // pred_check
          %p1707 = pneg %p188
        $region70: #{pointnet.4} parent=67 // pred_check_branch
          %1709 = sbr.rel (%p1707) target = $region72
        $region71: #{pointnet.4} parent=67 // pred_region
          %p1710 = scmp.lt.s32.totalorder %s25, 1
          %s1711 = scalar_select %p1710, %s25, 1
          %s1712 = smul.addr %s1711, 8
          %s1713 = scalar_lea.vmem %s6, %s1712
        $region72: #{pointnet.4} parent=67 // pred_fallthru
          _
      $region68: #{pointnet.4} parent=5 // pred_fallthru
        _
    $region6: #{pointnet.4} parent=1 // loop_footer
      %s18 = sadd.s32 1, %s14
    $region7: #{pointnet.4} parent=1 // loop_footer_branch
      %13 = sbr.rel target = $region3
    $region8: #{pointnet.4} parent=1 // loop_exit
      _
    %1714 = vsyncpa [#allocation3], 1
    %s1715 = scalar_lea.sflag [#allocation3], 1
    %1716 = vsyncpa %s1715, 1
    %1717 = vsyncpa [#allocation5], 1

// kernel: pointnet.6
$region0: #{pointnet.6}
  #allocation0 [shape = 'u32[]', space=smem, size = 0x4, offset = 0x4, fixed_abs, tag = 'smem constant byte address 0x4 - core index']
  #allocation1 [shape = 'u32[72,128]{1,0:T(1,128)}', space=vmem, size = 0x9000, scoped, tag = 'internal scratch']
  #allocation2 [shape = 'f32[2,64]{1,0:T(2,128)}', space=vmem, size = 0x400, scoped, tag = 'scratch operand']
  %s0 = inlined_call_operand.vmem [shape: f32[2,128,2], index: 0, kind: input, shape index: {}]
  %s1 = inlined_call_operand.vmem [shape: f32[2,1,4], index: 1, kind: input, shape index: {}]
  %s2 = inlined_call_operand.vmem [shape: f32[2,64], index: 2, kind: input, shape index: {}]
  %s3 = inlined_call_operand.vmem [shape: f32[1,64], index: 3, kind: input, shape index: {}]
  %s4 = inlined_call_operand.vmem [shape: bf16[64,128], index: 4, kind: input, shape index: {}]
  %s5 = inlined_call_operand.vmem [shape: f32[1,128], index: 5, kind: input, shape index: {}]
  %s6 = inlined_call_operand.vmem [shape: bf16[128,1024], index: 6, kind: input, shape index: {}]
  %s7 = inlined_call_operand.vmem [shape: f32[2,1,1024], index: 7, kind: output, shape index: {}]
  %s8 = sld [smem:[#allocation0]]
  $region65: #{pointnet.6} parent=0
    _
  %s10 = ssub.s32 1, %s8
  %s11 = scalar_select 0, %s10, %s8
  loop: start=0, step=1, limit=4
  $region2: #{pointnet.6} parent=0 // loop_pre_header
    _
  $region3: #{pointnet.6} parent=0 // loop_header
    %s13 = sphi 0, %s17
    %p14 = scmp.ge.s32.totalorder %s13, 4
    %s20 = sphi 0, %s32
    %s21 = sphi 0, %s28
    %s22 = sphi 0, %s20
    %s23 = sphi 0, %s21
    %s24 = sphi 0, %s22
    %s25 = sphi 0, %s23
    %s37 = sphi 0, %s39
    %s40 = sphi 0, %s37
    %s41 = sphi 0, %s40
    %s57 = sphi 0, %s41
    %s63 = sphi 0, %s65
    %s66 = sphi 0, %s63
    %s67 = sphi 0, %s66
    %s83 = sphi 0, %s67
    %s87 = sphi 0, %s87
    %s89 = sphi 0, %s87
    %s90 = sphi 0, %s89
    %s104 = sphi 0, %s90
    %s108 = sphi 0, %s108
    %s110 = sphi 0, %s108
    %s111 = sphi 0, %s110
    %s125 = sphi 0, %s111
    %s129 = sphi 0, %s129
    %s131 = sphi 0, %s129
    %s132 = sphi 0, %s131
    %s146 = sphi 0, %s132
    %s150 = sphi 0, %s150
    %s152 = sphi 0, %s150
    %s153 = sphi 0, %s152
    %s167 = sphi 0, %s153
    %s171 = sphi 0, %s171
    %s173 = sphi 0, %s171
    %s174 = sphi 0, %s173
    %s188 = sphi 0, %s174
    %s194 = sphi 0, %s196
    %s197 = sphi 0, %s194
    %s198 = sphi 0, %s197
    %s214 = sphi 0, %s198
  $region4: #{pointnet.6} parent=0 // loop_header_branch
    %16 = sbr.rel (%p14) target = $region8
  $region5: #{pointnet.6} parent=0 // loop_body
    %s18 = ssub.s32 %s13, 1
    %s19 = ssub.s32 %s13, 2
    %s26 = sadd.s32 1, %s21
    %p27 = scmp.ge.s32.totalorder %s26, 1
    %s28 = scalar_select %p27, 0, %s26
    %s29 = sadd.s32 1, %s20
    %s30 = scalar_select %p27, %s29, %s20
    %p31 = scmp.ge.s32.totalorder %s30, 2
    %s32 = scalar_select %p31, 0, %s30
    %s33 = ssub.s32 %s20, %s32
    %s34 = ssub.s32 %s21, %s28
    %s35 = sor.u32 %s33, %s34
    %p36 = scmp.eq.s32.totalorder %s35, 0
    %s38 = sadd.s32 %s37, 1
    %s39 = scalar_select %p36, %s37, %s38
    %p42 = pneg %p36
    %p43 = scmp.eq.s32.totalorder %s13, 1
    %p44 = por %p42, %p43
    %p45 = scmp.ne.s32.totalorder %s37, %s40
    %p46 = scmp.eq.s32.totalorder %s13, 0
    %p47 = por %p45, %p46
    %p48 = scmp.ne.s32.totalorder %s37, %s40
    %p49 = scmp.eq.s32.totalorder %s18, 1
    %p50 = por %p48, %p49
    %p51 = scmp.ne.s32.totalorder %s40, %s41
    %p52 = scmp.eq.s32.totalorder %s18, 0
    %p53 = por %p51, %p52
    %p54 = scmp.ne.s32.totalorder %s40, %s41
    %p55 = scmp.eq.s32.totalorder %s19, 1
    %p56 = por %p54, %p55
    %p58 = scmp.ne.s32.totalorder %s41, %s57
    %p59 = scmp.eq.s32.totalorder %s19, 0
    %p60 = por %p58, %p59
    %s61 = ssub.s32 %s20, %s32
    %p62 = scmp.eq.s32.totalorder %s61, 0
    %s64 = sadd.s32 %s63, 1
    %s65 = scalar_select %p62, %s63, %s64
    %p68 = pneg %p62
    %p69 = scmp.eq.s32.totalorder %s13, 1
    %p70 = por %p68, %p69
    %p71 = scmp.ne.s32.totalorder %s63, %s66
    %p72 = scmp.eq.s32.totalorder %s13, 0
    %p73 = por %p71, %p72
    %p74 = scmp.ne.s32.totalorder %s63, %s66
    %p75 = scmp.eq.s32.totalorder %s18, 1
    %p76 = por %p74, %p75
    %p77 = scmp.ne.s32.totalorder %s66, %s67
    %p78 = scmp.eq.s32.totalorder %s18, 0
    %p79 = por %p77, %p78
    %p80 = scmp.ne.s32.totalorder %s66, %s67
    %p81 = scmp.eq.s32.totalorder %s19, 1
    %p82 = por %p80, %p81
    %p84 = scmp.ne.s32.totalorder %s67, %s83
    %p85 = scmp.eq.s32.totalorder %s19, 0
    %p86 = por %p84, %p85
    %s88 = sadd.s32 %s87, 1
    %p91 = scmp.eq.s32.totalorder %s13, 1
    %p92 = scmp.ne.s32.totalorder %s87, %s89
    %p93 = scmp.eq.s32.totalorder %s13, 0
    %p94 = por %p92, %p93
    %p95 = scmp.ne.s32.totalorder %s87, %s89
    %p96 = scmp.eq.s32.totalorder %s18, 1
    %p97 = por %p95, %p96
    %p98 = scmp.ne.s32.totalorder %s89, %s90
    %p99 = scmp.eq.s32.totalorder %s18, 0
    %p100 = por %p98, %p99
    %p101 = scmp.ne.s32.totalorder %s89, %s90
    %p102 = scmp.eq.s32.totalorder %s19, 1
    %p103 = por %p101, %p102
    %p105 = scmp.ne.s32.totalorder %s90, %s104
    %p106 = scmp.eq.s32.totalorder %s19, 0
    %p107 = por %p105, %p106
    %s109 = sadd.s32 %s108, 1
    %p112 = scmp.eq.s32.totalorder %s13, 1
    %p113 = scmp.ne.s32.totalorder %s108, %s110
    %p114 = scmp.eq.s32.totalorder %s13, 0
    %p115 = por %p113, %p114
    %p116 = scmp.ne.s32.totalorder %s108, %s110
    %p117 = scmp.eq.s32.totalorder %s18, 1
    %p118 = por %p116, %p117
    %p119 = scmp.ne.s32.totalorder %s110, %s111
    %p120 = scmp.eq.s32.totalorder %s18, 0
    %p121 = por %p119, %p120
    %p122 = scmp.ne.s32.totalorder %s110, %s111
    %p123 = scmp.eq.s32.totalorder %s19, 1
    %p124 = por %p122, %p123
    %p126 = scmp.ne.s32.totalorder %s111, %s125
    %p127 = scmp.eq.s32.totalorder %s19, 0
    %p128 = por %p126, %p127
    %s130 = sadd.s32 %s129, 1
    %p133 = scmp.eq.s32.totalorder %s13, 1
    %p134 = scmp.ne.s32.totalorder %s129, %s131
    %p135 = scmp.eq.s32.totalorder %s13, 0
    %p136 = por %p134, %p135
    %p137 = scmp.ne.s32.totalorder %s129, %s131
    %p138 = scmp.eq.s32.totalorder %s18, 1
    %p139 = por %p137, %p138
    %p140 = scmp.ne.s32.totalorder %s131, %s132
    %p141 = scmp.eq.s32.totalorder %s18, 0
    %p142 = por %p140, %p141
    %p143 = scmp.ne.s32.totalorder %s131, %s132
    %p144 = scmp.eq.s32.totalorder %s19, 1
    %p145 = por %p143, %p144
    %p147 = scmp.ne.s32.totalorder %s132, %s146
    %p148 = scmp.eq.s32.totalorder %s19, 0
    %p149 = por %p147, %p148
    %s151 = sadd.s32 %s150, 1
    %p154 = scmp.eq.s32.totalorder %s13, 1
    %p155 = scmp.ne.s32.totalorder %s150, %s152
    %p156 = scmp.eq.s32.totalorder %s13, 0
    %p157 = por %p155, %p156
    %p158 = scmp.ne.s32.totalorder %s150, %s152
    %p159 = scmp.eq.s32.totalorder %s18, 1
    %p160 = por %p158, %p159
    %p161 = scmp.ne.s32.totalorder %s152, %s153
    %p162 = scmp.eq.s32.totalorder %s18, 0
    %p163 = por %p161, %p162
    %p164 = scmp.ne.s32.totalorder %s152, %s153
    %p165 = scmp.eq.s32.totalorder %s19, 1
    %p166 = por %p164, %p165
    %p168 = scmp.ne.s32.totalorder %s153, %s167
    %p169 = scmp.eq.s32.totalorder %s19, 0
    %p170 = por %p168, %p169
    %s172 = sadd.s32 %s171, 1
    %p175 = scmp.eq.s32.totalorder %s13, 1
    %p176 = scmp.ne.s32.totalorder %s171, %s173
    %p177 = scmp.eq.s32.totalorder %s13, 0
    %p178 = por %p176, %p177
    %p179 = scmp.ne.s32.totalorder %s171, %s173
    %p180 = scmp.eq.s32.totalorder %s18, 1
    %p181 = por %p179, %p180
    %p182 = scmp.ne.s32.totalorder %s173, %s174
    %p183 = scmp.eq.s32.totalorder %s18, 0
    %p184 = por %p182, %p183
    %p185 = scmp.ne.s32.totalorder %s173, %s174
    %p186 = scmp.eq.s32.totalorder %s19, 1
    %p187 = por %p185, %p186
    %p189 = scmp.ne.s32.totalorder %s174, %s188
    %p190 = scmp.eq.s32.totalorder %s19, 0
    %p191 = por %p189, %p190
    %s192 = ssub.s32 %s20, %s32
    %p193 = scmp.eq.s32.totalorder %s192, 0
    %s195 = sadd.s32 %s194, 1
    %s196 = scalar_select %p193, %s194, %s195
    %p199 = pneg %p193
    %p200 = scmp.eq.s32.totalorder %s13, 1
    %p201 = por %p199, %p200
    %p202 = scmp.ne.s32.totalorder %s194, %s197
    %p203 = scmp.eq.s32.totalorder %s13, 0
    %p204 = por %p202, %p203
    %p205 = scmp.ne.s32.totalorder %s194, %s197
    %p206 = scmp.eq.s32.totalorder %s18, 1
    %p207 = por %p205, %p206
    %p208 = scmp.ne.s32.totalorder %s197, %s198
    %p209 = scmp.eq.s32.totalorder %s18, 0
    %p210 = por %p208, %p209
    %p211 = scmp.ne.s32.totalorder %s197, %s198
    %p212 = scmp.eq.s32.totalorder %s19, 1
    %p213 = por %p211, %p212
    %p215 = scmp.ne.s32.totalorder %s198, %s214
    %p216 = scmp.eq.s32.totalorder %s19, 0
    %p217 = por %p215, %p216
    %p218 = scmp.le.s32.totalorder 1, %s13
    %p219 = scmp.lt.s32.totalorder %s13, 3
    %p220 = pnand %p218, %p219
    %p221 = pneg %p220
    // Predicated region
    $region9: #{pointnet.6} parent=5 // pred_check
      _
    $region10: #{pointnet.6} parent=5 // pred_check_branch
      %223 = sbr.rel (%p220) target = $region12
    $region11: #{pointnet.6} parent=5 // pred_region
      %s224 = ssub.s32 %s13, 1
      // Predicated region
      $region13: #{pointnet.6} parent=11 // pred_check
        %p225 = pneg %p100
      $region14: #{pointnet.6} parent=11 // pred_check_branch
        %227 = sbr.rel (%p225) target = $region16
      $region15: #{pointnet.6} parent=11 // pred_region
        _
      $region16: #{pointnet.6} parent=11 // pred_fallthru
        _
      // Predicated region
      $region17: #{pointnet.6} parent=11 // pred_check
        %p228 = pneg %p121
      $region18: #{pointnet.6} parent=11 // pred_check_branch
        %230 = sbr.rel (%p228) target = $region20
      $region19: #{pointnet.6} parent=11 // pred_region
        _
      $region20: #{pointnet.6} parent=11 // pred_fallthru
        _
      // Predicated region
      $region21: #{pointnet.6} parent=11 // pred_check
        %p231 = pneg %p142
      $region22: #{pointnet.6} parent=11 // pred_check_branch
        %233 = sbr.rel (%p231) target = $region24
      $region23: #{pointnet.6} parent=11 // pred_region
        _
      $region24: #{pointnet.6} parent=11 // pred_fallthru
        _
      // Predicated region
      $region25: #{pointnet.6} parent=11 // pred_check
        %p234 = pneg %p163
      $region26: #{pointnet.6} parent=11 // pred_check_branch
        %236 = sbr.rel (%p234) target = $region28
      $region27: #{pointnet.6} parent=11 // pred_region
        _
      $region28: #{pointnet.6} parent=11 // pred_fallthru
        _
      // Predicated region
      $region29: #{pointnet.6} parent=11 // pred_check
        %p237 = pneg %p184
      $region30: #{pointnet.6} parent=11 // pred_check_branch
        %239 = sbr.rel (%p237) target = $region32
      $region31: #{pointnet.6} parent=11 // pred_region
        _
      $region32: #{pointnet.6} parent=11 // pred_fallthru
        _
    $region12: #{pointnet.6} parent=5 // pred_fallthru
      _
    %p240 = scmp.lt.s32.totalorder %s13, 2
    // Predicated region
    $region33: #{pointnet.6} parent=5 // pred_check
      %p241 = pneg %p240
    $region34: #{pointnet.6} parent=5 // pred_check_branch
      %243 = sbr.rel (%p241) target = $region36
    $region35: #{pointnet.6} parent=5 // pred_region
      // Predicated region
      $region37: #{pointnet.6} parent=35 // pred_check
        %p244 = pneg %p47
      $region38: #{pointnet.6} parent=35 // pred_check_branch
        %246 = sbr.rel (%p244) target = $region40
      $region39: #{pointnet.6} parent=35 // pred_region
        %s247 = smul.u32 16, %s21
        %p248 = scmp.lt.s32.totalorder %s20, 1
        %s249 = scalar_select %p248, %s20, 1
        %p250 = scmp.lt.s32.totalorder %s247, 15
        %s251 = scalar_select %p250, %s247, 15
        %s252 = smul.addr %s249, 16
        %s253 = sadd.s32 %s251, %s252
        %s254 = smul.addr %s253, 8
        %s255 = scalar_lea.vmem %s0, %s254
        %s256 = smul.u32 16, %s21
      $region40: #{pointnet.6} parent=35 // pred_fallthru
        _
      // Predicated region
      $region41: #{pointnet.6} parent=35 // pred_check
        %p257 = pneg %p73
      $region42: #{pointnet.6} parent=35 // pred_check_branch
        %259 = sbr.rel (%p257) target = $region44
      $region43: #{pointnet.6} parent=35 // pred_region
        %p260 = scmp.lt.s32.totalorder %s20, 1
        %s261 = scalar_select %p260, %s20, 1
        %s262 = scalar_lea.vmem %s1, %s261
      $region44: #{pointnet.6} parent=35 // pred_fallthru
        _
    $region36: #{pointnet.6} parent=5 // pred_fallthru
      _
    %p263 = scmp.le.s32.totalorder 1, %s13
    %p264 = scmp.lt.s32.totalorder %s13, 3
    %p265 = pnand %p263, %p264
    %p266 = pneg %p265
    // Predicated region
    $region45: #{pointnet.6} parent=5 // pred_check
      _
    $region46: #{pointnet.6} parent=5 // pred_check_branch
      %268 = sbr.rel (%p265) target = $region48
    $region47: #{pointnet.6} parent=5 // pred_region
      %s269 = ssub.s32 %s13, 1
      %s270 = smul.u32 16, %s23
      %p271 = scmp.lt.s32.totalorder %s22, 1
      %s272 = scalar_select %p271, %s22, 1
      %p273 = scmp.lt.s32.totalorder %s270, 15
      %s274 = scalar_select %p273, %s270, 15
      %s275 = smul.addr %s272, 16
      %s276 = sadd.s32 %s274, %s275
      %s277 = smul.addr %s276, 8
      %s278 = scalar_lea.vmem %s0, %s277
      %p279 = pneg %p53
      %p280 = pneg %p50
      %p281 = scmp.lt.s32.totalorder %s22, 1
      %s282 = scalar_select %p281, %s22, 1
      %s283 = scalar_lea.vmem %s1, %s282
      %p284 = pneg %p79
      %p285 = pneg %p76
      %p286 = pneg %p100
      %p287 = pneg %p97
      %p288 = pneg %p121
      %p289 = pneg %p118
      %p290 = pneg %p142
      %p291 = pneg %p139
      %p292 = pneg %p163
      %p293 = pneg %p160
      %p294 = pneg %p184
      %p295 = pneg %p181
      %p296 = pneg %p210
      %p297 = pneg %p207
      %p298 = scmp.lt.s32.totalorder %s22, 1
      %s299 = scalar_select %p298, %s22, 1
      %s300 = smul.addr %s299, 8
      %s301 = scalar_lea.vmem %s7, %s300
      %s302 = smul.u32 16, %s23
      %p303 = scmp.lt.s32.totalorder %s22, 1
      %s304 = scalar_select %p303, %s22, 1
      %p305 = scmp.lt.s32.totalorder %s302, 15
      %s306 = scalar_select %p305, %s302, 15
      %s307 = smul.addr %s304, 16
      %s308 = sadd.s32 %s306, %s307
      %s309 = smul.addr %s308, 8
      %s310 = scalar_lea.vmem %s0, %s309
      %s311 = smul.u32 16, %s23
      %p312 = scmp.lt.s32.totalorder %s22, 1
      %s313 = scalar_select %p312, %s22, 1
      %s314 = scalar_lea.vmem %s1, %s313
      %p315 = scmp.lt.s32.totalorder %s22, 1
      %s316 = scalar_select %p315, %s22, 1
      %s317 = smul.addr %s316, 8
      %s318 = scalar_lea.vmem %s7, %s317
      %v320 = vld [vmem:[%s310] sm:$0xff]
      %v321 = vld [vmem:[%s310 + $0x8] sm:$0xff]
      %v322 = vld [vmem:[%s310 + $0x10] sm:$0xff]
      %v323 = vld [vmem:[%s310 + $0x18] sm:$0xff]
      %v324 = vld [vmem:[%s310 + $0x20] sm:$0xff]
      %v325 = vld [vmem:[%s310 + $0x28] sm:$0xff]
      %v326 = vld [vmem:[%s310 + $0x30] sm:$0xff]
      %v327 = vld [vmem:[%s310 + $0x38] sm:$0xff]
      %v328 = vld [vmem:[%s310 + $0x40] sm:$0xff]
      %v329 = vld [vmem:[%s310 + $0x48] sm:$0xff]
      %v330 = vld [vmem:[%s310 + $0x50] sm:$0xff]
      %v331 = vld [vmem:[%s310 + $0x58] sm:$0xff]
      %v332 = vld [vmem:[%s310 + $0x60] sm:$0xff]
      %v333 = vld [vmem:[%s310 + $0x68] sm:$0xff]
      %v334 = vld [vmem:[%s310 + $0x70] sm:$0xff]
      %v335 = vld [vmem:[%s310 + $0x78] sm:$0xff]
      %p336 = scmp.eq.s32.totalorder %s23, 0
      // Predicated region
      $region49: #{pointnet.6} parent=47 // pred_check
        %p337 = pneg %p336
      $region50: #{pointnet.6} parent=47 // pred_check_branch
        %339 = sbr.rel (%p337) target = $region52
      $region51: #{pointnet.6} parent=47 // pred_region
        %v340 = vld [vmem:[%s314] sm:$0x1]
        %v341 = vld [vmem:[%s2] sm:$0x1]
        %343 = vset.pattern.permute.xlu0 0
        %344 = vperm.xlu0 %343, %v340
        %v345 = vpop.permute.xlu0 %344
        %v347 = vperm.slane %v345, 0
        %v348 = vmul.f32 %v347, %v341
        %v349 = vld [vmem:[%s2 + $0x1] sm:$0x1]
        %350 = vset.pattern.permute.xlu0 1
        %351 = vperm.xlu0 %350, %v340
        %v352 = vpop.permute.xlu0 %351
        %v354 = vperm.slane %v352, 0
        %v355 = vmul.f32 %v354, %v349
        %v356 = vadd.f32 %v348, %v355
        %357 = vset.pattern.permute.xlu0 2
        %358 = vperm.xlu0 %357, %v340
        %v359 = vpop.permute.xlu0 %358
        %v361 = vperm.slane %v359, 0
        %v362 = vmul.f32 %v361, %v341
        %363 = vset.pattern.permute.xlu0 3
        %364 = vperm.xlu0 %363, %v340
        %v365 = vpop.permute.xlu0 %364
        %v367 = vperm.slane %v365, 0
        %v368 = vmul.f32 %v367, %v349
        %v369 = vadd.f32 %v362, %v368
        %v371 = vrot.slane %v369, 7
        %vm373 = vcmask 1040384
        %v374 = vsel %vm373, %v356, %v371
        %vm375 = vcmask 517120
        %376 = vst.msk [vmem:[#allocation2] sm:$0x3] %vm375, %v374
        %377 = vst [vmem:[%s318] sm:$0xff] -inf
      $region52: #{pointnet.6} parent=47 // pred_fallthru
        _
      %v378 = vld [vmem:[#allocation2] sm:$0x1]
      %380 = vset.pattern.permute.xlu0 0
      %381 = vperm.xlu0 %380, %v320
      %v382 = vpop.permute.xlu0 %381
      %385 = vset.pattern.permute.xlu0 0
      %386 = vperm.xlu0 %385, %v321
      %v387 = vpop.permute.xlu0 %386
      %390 = vset.pattern.permute.xlu0 0
      %391 = vperm.xlu0 %390, %v322
      %v392 = vpop.permute.xlu0 %391
      %395 = vset.pattern.permute.xlu0 0
      %396 = vperm.xlu0 %395, %v323
      %v397 = vpop.permute.xlu0 %396
      %400 = vset.pattern.permute.xlu0 0
      %401 = vperm.xlu0 %400, %v324
      %v402 = vpop.permute.xlu0 %401
      %405 = vset.pattern.permute.xlu0 0
      %406 = vperm.xlu0 %405, %v325
      %v407 = vpop.permute.xlu0 %406
      %410 = vset.pattern.permute.xlu0 0
      %411 = vperm.xlu0 %410, %v326
      %v412 = vpop.permute.xlu0 %411
      %415 = vset.pattern.permute.xlu0 0
      %416 = vperm.xlu0 %415, %v327
      %v417 = vpop.permute.xlu0 %416
      %420 = vset.pattern.permute.xlu0 0
      %421 = vperm.xlu0 %420, %v328
      %v422 = vpop.permute.xlu0 %421
      %425 = vset.pattern.permute.xlu0 0
      %426 = vperm.xlu0 %425, %v329
      %v427 = vpop.permute.xlu0 %426
      %430 = vset.pattern.permute.xlu0 0
      %431 = vperm.xlu0 %430, %v330
      %v432 = vpop.permute.xlu0 %431
      %435 = vset.pattern.permute.xlu0 0
      %436 = vperm.xlu0 %435, %v331
      %v437 = vpop.permute.xlu0 %436
      %440 = vset.pattern.permute.xlu0 0
      %441 = vperm.xlu0 %440, %v332
      %v442 = vpop.permute.xlu0 %441
      %445 = vset.pattern.permute.xlu0 0
      %446 = vperm.xlu0 %445, %v333
      %v447 = vpop.permute.xlu0 %446
      %450 = vset.pattern.permute.xlu0 0
      %451 = vperm.xlu0 %450, %v334
      %v452 = vpop.permute.xlu0 %451
      %455 = vset.pattern.permute.xlu0 0
      %456 = vperm.xlu0 %455, %v335
      %v457 = vpop.permute.xlu0 %456
      %v459 = vperm.slane %v378, 0
      %v460 = vmul.f32 %v382, %v459
      %v461 = vmul.f32 %v387, %v459
      %v462 = vmul.f32 %v392, %v459
      %v463 = vmul.f32 %v397, %v459
      %v464 = vmul.f32 %v402, %v459
      %v465 = vmul.f32 %v407, %v459
      %v466 = vmul.f32 %v412, %v459
      %v467 = vmul.f32 %v417, %v459
      %v468 = vmul.f32 %v422, %v459
      %v469 = vmul.f32 %v427, %v459
      %v470 = vmul.f32 %v432, %v459
      %v471 = vmul.f32 %v437, %v459
      %v472 = vmul.f32 %v442, %v459
      %v473 = vmul.f32 %v447, %v459
      %v474 = vmul.f32 %v452, %v459
      %v475 = vmul.f32 %v457, %v459
      %v476 = vld [vmem:[#allocation2 + $0x1] sm:$0x1]
      %477 = vset.pattern.permute.xlu0 1
      %478 = vperm.xlu0 %477, %v320
      %v479 = vpop.permute.xlu0 %478
      %481 = vset.pattern.permute.xlu0 1
      %482 = vperm.xlu0 %481, %v321
      %v483 = vpop.permute.xlu0 %482
      %485 = vset.pattern.permute.xlu0 1
      %486 = vperm.xlu0 %485, %v322
      %v487 = vpop.permute.xlu0 %486
      %489 = vset.pattern.permute.xlu0 1
      %490 = vperm.xlu0 %489, %v323
      %v491 = vpop.permute.xlu0 %490
      %493 = vset.pattern.permute.xlu0 1
      %494 = vperm.xlu0 %493, %v324
      %v495 = vpop.permute.xlu0 %494
      %497 = vset.pattern.permute.xlu0 1
      %498 = vperm.xlu0 %497, %v325
      %v499 = vpop.permute.xlu0 %498
      %501 = vset.pattern.permute.xlu0 1
      %502 = vperm.xlu0 %501, %v326
      %v503 = vpop.permute.xlu0 %502
      %505 = vset.pattern.permute.xlu0 1
      %506 = vperm.xlu0 %505, %v327
      %v507 = vpop.permute.xlu0 %506
      %509 = vset.pattern.permute.xlu0 1
      %510 = vperm.xlu0 %509, %v328
      %v511 = vpop.permute.xlu0 %510
      %513 = vset.pattern.permute.xlu0 1
      %514 = vperm.xlu0 %513, %v329
      %v515 = vpop.permute.xlu0 %514
      %517 = vset.pattern.permute.xlu0 1
      %518 = vperm.xlu0 %517, %v330
      %v519 = vpop.permute.xlu0 %518
      %521 = vset.pattern.permute.xlu0 1
      %522 = vperm.xlu0 %521, %v331
      %v523 = vpop.permute.xlu0 %522
      %525 = vset.pattern.permute.xlu0 1
      %526 = vperm.xlu0 %525, %v332
      %v527 = vpop.permute.xlu0 %526
      %529 = vset.pattern.permute.xlu0 1
      %530 = vperm.xlu0 %529, %v333
      %v531 = vpop.permute.xlu0 %530
      %533 = vset.pattern.permute.xlu0 1
      %534 = vperm.xlu0 %533, %v334
      %v535 = vpop.permute.xlu0 %534
      %537 = vset.pattern.permute.xlu0 1
      %538 = vperm.xlu0 %537, %v335
      %v539 = vpop.permute.xlu0 %538
      %v541 = vperm.slane %v476, 0
      %v542 = vmul.f32 %v479, %v541
      %v543 = vmul.f32 %v483, %v541
      %v544 = vmul.f32 %v487, %v541
      %v545 = vmul.f32 %v491, %v541
      %v546 = vmul.f32 %v495, %v541
      %v547 = vmul.f32 %v499, %v541
      %v548 = vmul.f32 %v503, %v541
      %v549 = vmul.f32 %v507, %v541
      %v550 = vmul.f32 %v511, %v541
      %v551 = vmul.f32 %v515, %v541
      %v552 = vmul.f32 %v519, %v541
      %v553 = vmul.f32 %v523, %v541
      %v554 = vmul.f32 %v527, %v541
      %v555 = vmul.f32 %v531, %v541
      %v556 = vmul.f32 %v535, %v541
      %v557 = vmul.f32 %v539, %v541
      %v558 = vadd.f32 %v460, %v542
      %v559 = vadd.f32 %v461, %v543
      %v560 = vadd.f32 %v462, %v544
      %v561 = vadd.f32 %v463, %v545
      %v562 = vadd.f32 %v464, %v546
      %v563 = vadd.f32 %v465, %v547
      %v564 = vadd.f32 %v466, %v548
      %v565 = vadd.f32 %v467, %v549
      %v566 = vadd.f32 %v468, %v550
      %v567 = vadd.f32 %v469, %v551
      %v568 = vadd.f32 %v470, %v552
      %v569 = vadd.f32 %v471, %v553
      %v570 = vadd.f32 %v472, %v554
      %v571 = vadd.f32 %v473, %v555
      %v572 = vadd.f32 %v474, %v556
      %v573 = vadd.f32 %v475, %v557
      %v574 = vld [vmem:[%s3] sm:$0x1]
      %v576 = vperm.slane %v574, 0
      %v578 = vadd.f32 %v558, %v576
      %v579 = vadd.f32 %v559, %v576
      %v580 = vadd.f32 %v560, %v576
      %v581 = vadd.f32 %v561, %v576
      %v582 = vadd.f32 %v562, %v576
      %v583 = vadd.f32 %v563, %v576
      %v584 = vadd.f32 %v564, %v576
      %v585 = vadd.f32 %v565, %v576
      %v586 = vadd.f32 %v566, %v576
      %v587 = vadd.f32 %v567, %v576
      %v588 = vadd.f32 %v568, %v576
      %v589 = vadd.f32 %v569, %v576
      %v590 = vadd.f32 %v570, %v576
      %v591 = vadd.f32 %v571, %v576
      %v592 = vadd.f32 %v572, %v576
      %v593 = vadd.f32 %v573, %v576
      %v594 = vmax.f32 %v578, 0.0
      %v595 = vmax.f32 %v579, 0.0
      %v596 = vmax.f32 %v580, 0.0
      %v597 = vmax.f32 %v581, 0.0
      %v598 = vmax.f32 %v582, 0.0
      %v599 = vmax.f32 %v583, 0.0
      %v600 = vmax.f32 %v584, 0.0
      %v601 = vmax.f32 %v585, 0.0
      %v602 = vmax.f32 %v586, 0.0
      %v603 = vmax.f32 %v587, 0.0
      %v604 = vmax.f32 %v588, 0.0
      %v605 = vmax.f32 %v589, 0.0
      %v606 = vmax.f32 %v590, 0.0
      %v607 = vmax.f32 %v591, 0.0
      %v608 = vmax.f32 %v592, 0.0
      %v609 = vmax.f32 %v593, 0.0
      %v610 = vld [vmem:[%s4] sm:$0xf]
      %v611 = vld [vmem:[%s4 + $0x4] sm:$0xf]
      %v612 = vld [vmem:[%s4 + $0x8] sm:$0xf]
      %v613 = vld [vmem:[%s4 + $0xc] sm:$0xf]
      %v614 = vld [vmem:[%s4 + $0x10] sm:$0xf]
      %v615 = vld [vmem:[%s4 + $0x14] sm:$0xf]
      %v616 = vld [vmem:[%s4 + $0x18] sm:$0xf]
      %v617 = vld [vmem:[%s4 + $0x1c] sm:$0xf]
      %v618 = vld [vmem:[%s5] sm:$0x1]
      %v619 = vpack.c.bf16 %v595, %v594
      %v620 = vpack.c.bf16 %v597, %v596
      %v621 = vpack.c.bf16 %v599, %v598
      %v622 = vpack.c.bf16 %v601, %v600
      %v623 = vpack.c.bf16 %v603, %v602
      %v624 = vpack.c.bf16 %v605, %v604
      %v625 = vpack.c.bf16 %v607, %v606
      %v626 = vpack.c.bf16 %v609, %v608
      %v628 = vperm.slane %v618, 0
      %v638 = vunpack.c.l.b16 %v610
      %v639 = vunpack.c.l.b16 %v611
      %v640 = vunpack.c.l.b16 %v612
      %v641 = vunpack.c.l.b16 %v613
      %v642 = vunpack.c.l.b16 %v614
      %v643 = vunpack.c.l.b16 %v615
      %v644 = vunpack.c.l.b16 %v616
      %v645 = vunpack.c.l.b16 %v617
      %v646 = vpack.c.b16 %v639, %v638
      %v647 = vpack.c.b16 %v641, %v640
      %v648 = vpack.c.b16 %v643, %v642
      %v649 = vpack.c.b16 %v645, %v644
      %vm654 = vcmask 523264
      %v656 = vsel %vm654, %v619, 0
      %v659 = vsel %vm654, %v620, 0
      %v662 = vsel %vm654, %v621, 0
      %v665 = vsel %vm654, %v622, 0
      %v668 = vsel %vm654, %v623, 0
      %v671 = vsel %vm654, %v624, 0
      %v674 = vsel %vm654, %v625, 0
      %v677 = vsel %vm654, %v626, 0
      %679 = vmatpush.bf16.msra.mxu0 0
      %680 = vmatpush.bf16.msra.mxu0 0
      %681 = vmatpush.bf16.msra.mxu0 0
      %682 = vmatpush.bf16.msra.mxu0 0
      %683 = vmatpush.bf16.msra.mxu0 %v649
      %684 = vmatpush.bf16.msra.mxu0 %v648
      %685 = vmatpush.bf16.msra.mxu0 %v647
      %686 = vmatpush.bf16.msra.mxu0 %v646
      %687 = vmatmul.bf16.gmra.mxu0 %v656
      %v688 = vpop.f32.mrf.mxu0
      %v689 = vadd.f32 %v628, %v688
      %v690 = vpop.f32.mrf.mxu0
      %v691 = vadd.f32 %v628, %v690
      %692 = vmatmul.bf16.gmra.mxu0 %v659
      %v693 = vpop.f32.mrf.mxu0
      %v694 = vadd.f32 %v628, %v693
      %v695 = vpop.f32.mrf.mxu0
      %v696 = vadd.f32 %v628, %v695
      %697 = vmatmul.bf16.gmra.mxu0 %v662
      %v698 = vpop.f32.mrf.mxu0
      %v699 = vadd.f32 %v628, %v698
      %v700 = vpop.f32.mrf.mxu0
      %v701 = vadd.f32 %v628, %v700
      %702 = vmatmul.bf16.gmra.mxu0 %v665
      %v703 = vpop.f32.mrf.mxu0
      %v704 = vadd.f32 %v628, %v703
      %v705 = vpop.f32.mrf.mxu0
      %v706 = vadd.f32 %v628, %v705
      %707 = vmatmul.bf16.gmra.mxu0 %v668
      %v708 = vpop.f32.mrf.mxu0
      %v709 = vadd.f32 %v628, %v708
      %v710 = vpop.f32.mrf.mxu0
      %v711 = vadd.f32 %v628, %v710
      %712 = vmatmul.bf16.gmra.mxu0 %v671
      %v713 = vpop.f32.mrf.mxu0
      %v714 = vadd.f32 %v628, %v713
      %v715 = vpop.f32.mrf.mxu0
      %v716 = vadd.f32 %v628, %v715
      %717 = vmatmul.bf16.gmra.mxu0 %v674
      %v718 = vpop.f32.mrf.mxu0
      %v719 = vadd.f32 %v628, %v718
      %v720 = vpop.f32.mrf.mxu0
      %v721 = vadd.f32 %v628, %v720
      %722 = vmatmul.bf16.gmra.mxu0 %v677
      %v723 = vpop.f32.mrf.mxu0
      %v724 = vadd.f32 %v628, %v723
      %v725 = vpop.f32.mrf.mxu0
      %v726 = vadd.f32 %v628, %v725
      %727 = vdwg.mxu0
      %v728 = vmax.f32 %v689, 0.0
      %v729 = vmax.f32 %v691, 0.0
      %v730 = vmax.f32 %v694, 0.0
      %v731 = vmax.f32 %v696, 0.0
      %v732 = vmax.f32 %v699, 0.0
      %v733 = vmax.f32 %v701, 0.0
      %v734 = vmax.f32 %v704, 0.0
      %v735 = vmax.f32 %v706, 0.0
      %v736 = vmax.f32 %v709, 0.0
      %v737 = vmax.f32 %v711, 0.0
      %v738 = vmax.f32 %v714, 0.0
      %v739 = vmax.f32 %v716, 0.0
      %v740 = vmax.f32 %v719, 0.0
      %v741 = vmax.f32 %v721, 0.0
      %v742 = vmax.f32 %v724, 0.0
      %v743 = vmax.f32 %v726, 0.0
      %v744 = vpack.c.bf16 %v729, %v728
      %v745 = vpack.c.bf16 %v731, %v730
      %v746 = vpack.c.bf16 %v733, %v732
      %v747 = vpack.c.bf16 %v735, %v734
      %v748 = vpack.c.bf16 %v737, %v736
      %v749 = vpack.c.bf16 %v739, %v738
      %v750 = vpack.c.bf16 %v741, %v740
      %v751 = vpack.c.bf16 %v743, %v742
      %v752 = vld [vmem:[%s6] sm:$0xff]
      %v753 = vld [vmem:[%s6 + $0x20] sm:$0xff]
      %v754 = vld [vmem:[%s6 + $0x40] sm:$0xff]
      %v755 = vld [vmem:[%s6 + $0x60] sm:$0xff]
      %v756 = vld [vmem:[%s6 + $0x80] sm:$0xff]
      %v757 = vld [vmem:[%s6 + $0xa0] sm:$0xff]
      %v758 = vld [vmem:[%s6 + $0xc0] sm:$0xff]
      %v759 = vld [vmem:[%s6 + $0xe0] sm:$0xff]
      %v760 = vld [vmem:[%s6 + $0x100] sm:$0xff]
      %v761 = vld [vmem:[%s6 + $0x120] sm:$0xff]
      %v762 = vld [vmem:[%s6 + $0x140] sm:$0xff]
      %v763 = vld [vmem:[%s6 + $0x160] sm:$0xff]
      %v764 = vld [vmem:[%s6 + $0x180] sm:$0xff]
      %v765 = vld [vmem:[%s6 + $0x1a0] sm:$0xff]
      %v766 = vld [vmem:[%s6 + $0x1c0] sm:$0xff]
      %v767 = vld [vmem:[%s6 + $0x1e0] sm:$0xff]
      %v784 = vunpack.c.l.b16 %v752
      %v785 = vunpack.c.h.b16 %v752
      %v786 = vunpack.c.l.b16 %v753
      %v787 = vunpack.c.h.b16 %v753
      %v788 = vunpack.c.l.b16 %v754
      %v789 = vunpack.c.h.b16 %v754
      %v790 = vunpack.c.l.b16 %v755
      %v791 = vunpack.c.h.b16 %v755
      %v792 = vunpack.c.l.b16 %v756
      %v793 = vunpack.c.h.b16 %v756
      %v794 = vunpack.c.l.b16 %v757
      %v795 = vunpack.c.h.b16 %v757
      %v796 = vunpack.c.l.b16 %v758
      %v797 = vunpack.c.h.b16 %v758
      %v798 = vunpack.c.l.b16 %v759
      %v799 = vunpack.c.h.b16 %v759
      %v800 = vunpack.c.l.b16 %v760
      %v801 = vunpack.c.h.b16 %v760
      %v802 = vunpack.c.l.b16 %v761
      %v803 = vunpack.c.h.b16 %v761
      %v804 = vunpack.c.l.b16 %v762
      %v805 = vunpack.c.h.b16 %v762
      %v806 = vunpack.c.l.b16 %v763
      %v807 = vunpack.c.h.b16 %v763
      %v808 = vunpack.c.l.b16 %v764
      %v809 = vunpack.c.h.b16 %v764
      %v810 = vunpack.c.l.b16 %v765
      %v811 = vunpack.c.h.b16 %v765
      %v812 = vunpack.c.l.b16 %v766
      %v813 = vunpack.c.h.b16 %v766
      %v814 = vunpack.c.l.b16 %v767
      %v815 = vunpack.c.h.b16 %v767
      %v816 = vpack.c.b16 %v786, %v784
      %v817 = vpack.c.b16 %v787, %v785
      %v818 = vpack.c.b16 %v790, %v788
      %v819 = vpack.c.b16 %v791, %v789
      %v820 = vpack.c.b16 %v794, %v792
      %v821 = vpack.c.b16 %v795, %v793
      %v822 = vpack.c.b16 %v798, %v796
      %v823 = vpack.c.b16 %v799, %v797
      %v824 = vpack.c.b16 %v802, %v800
      %v825 = vpack.c.b16 %v803, %v801
      %v826 = vpack.c.b16 %v806, %v804
      %v827 = vpack.c.b16 %v807, %v805
      %v828 = vpack.c.b16 %v810, %v808
      %v829 = vpack.c.b16 %v811, %v809
      %v830 = vpack.c.b16 %v814, %v812
      %v831 = vpack.c.b16 %v815, %v813
      %848 = vmatpush.bf16.msra.mxu0 %v830
      %849 = vmatpush.bf16.msra.mxu0 %v828
      %850 = vmatpush.bf16.msra.mxu0 %v826
      %851 = vmatpush.bf16.msra.mxu0 %v824
      %852 = vmatpush.bf16.msra.mxu0 %v822
      %853 = vmatpush.bf16.msra.mxu0 %v820
      %854 = vmatpush.bf16.msra.mxu0 %v818
      %855 = vmatpush.bf16.msra.mxu0 %v816
      %856 = vmatmul.bf16.gmra.mxu0 %v744
      %v857 = vpop.f32.mrf.mxu0
      %v858 = vadd.f32 0.0, %v857
      %v859 = vpop.f32.mrf.mxu0
      %v860 = vadd.f32 0.0, %v859
      %861 = vmatmul.bf16.gmra.mxu0 %v745
      %v862 = vpop.f32.mrf.mxu0
      %v863 = vadd.f32 0.0, %v862
      %v864 = vpop.f32.mrf.mxu0
      %v865 = vadd.f32 0.0, %v864
      %866 = vmatmul.bf16.gmra.mxu0 %v746
      %v867 = vpop.f32.mrf.mxu0
      %v868 = vadd.f32 0.0, %v867
      %v869 = vpop.f32.mrf.mxu0
      %v870 = vadd.f32 0.0, %v869
      %871 = vmatmul.bf16.gmra.mxu0 %v747
      %v872 = vpop.f32.mrf.mxu0
      %v873 = vadd.f32 0.0, %v872
      %v874 = vpop.f32.mrf.mxu0
      %v875 = vadd.f32 0.0, %v874
      %876 = vmatmul.bf16.gmra.mxu0 %v748
      %v877 = vpop.f32.mrf.mxu0
      %v878 = vadd.f32 0.0, %v877
      %v879 = vpop.f32.mrf.mxu0
      %v880 = vadd.f32 0.0, %v879
      %881 = vmatmul.bf16.gmra.mxu0 %v749
      %v882 = vpop.f32.mrf.mxu0
      %v883 = vadd.f32 0.0, %v882
      %v884 = vpop.f32.mrf.mxu0
      %v885 = vadd.f32 0.0, %v884
      %886 = vmatmul.bf16.gmra.mxu0 %v750
      %v887 = vpop.f32.mrf.mxu0
      %v888 = vadd.f32 0.0, %v887
      %v889 = vpop.f32.mrf.mxu0
      %v890 = vadd.f32 0.0, %v889
      %891 = vmatmul.bf16.gmra.mxu0 %v751
      %v892 = vpop.f32.mrf.mxu0
      %v893 = vadd.f32 0.0, %v892
      %v894 = vpop.f32.mrf.mxu0
      %v895 = vadd.f32 0.0, %v894
      %896 = vdwg.mxu0
      %897 = vmatpush.bf16.msra.mxu0 %v831
      %898 = vmatpush.bf16.msra.mxu0 %v829
      %899 = vmatpush.bf16.msra.mxu0 %v827
      %900 = vmatpush.bf16.msra.mxu0 %v825
      %901 = vmatpush.bf16.msra.mxu0 %v823
      %902 = vmatpush.bf16.msra.mxu0 %v821
      %903 = vmatpush.bf16.msra.mxu0 %v819
      %904 = vmatpush.bf16.msra.mxu0 %v817
      %905 = vmatmul.bf16.gmra.mxu0 %v744
      %v906 = vpop.f32.mrf.mxu0
      %v907 = vadd.f32 0.0, %v906
      %v908 = vpop.f32.mrf.mxu0
      %v909 = vadd.f32 0.0, %v908
      %910 = vmatmul.bf16.gmra.mxu0 %v745
      %v911 = vpop.f32.mrf.mxu0
      %v912 = vadd.f32 0.0, %v911
      %v913 = vpop.f32.mrf.mxu0
      %v914 = vadd.f32 0.0, %v913
      %915 = vmatmul.bf16.gmra.mxu0 %v746
      %v916 = vpop.f32.mrf.mxu0
      %v917 = vadd.f32 0.0, %v916
      %v918 = vpop.f32.mrf.mxu0
      %v919 = vadd.f32 0.0, %v918
      %920 = vmatmul.bf16.gmra.mxu0 %v747
      %v921 = vpop.f32.mrf.mxu0
      %v922 = vadd.f32 0.0, %v921
      %v923 = vpop.f32.mrf.mxu0
      %v924 = vadd.f32 0.0, %v923
      %925 = vmatmul.bf16.gmra.mxu0 %v748
      %v926 = vpop.f32.mrf.mxu0
      %v927 = vadd.f32 0.0, %v926
      %v928 = vpop.f32.mrf.mxu0
      %v929 = vadd.f32 0.0, %v928
      %930 = vmatmul.bf16.gmra.mxu0 %v749
      %v931 = vpop.f32.mrf.mxu0
      %v932 = vadd.f32 0.0, %v931
      %v933 = vpop.f32.mrf.mxu0
      %v934 = vadd.f32 0.0, %v933
      %935 = vmatmul.bf16.gmra.mxu0 %v750
      %v936 = vpop.f32.mrf.mxu0
      %v937 = vadd.f32 0.0, %v936
      %v938 = vpop.f32.mrf.mxu0
      %v939 = vadd.f32 0.0, %v938
      %940 = vmatmul.bf16.gmra.mxu0 %v751
      %v941 = vpop.f32.mrf.mxu0
      %v942 = vadd.f32 0.0, %v941
      %v943 = vpop.f32.mrf.mxu0
      %v944 = vadd.f32 0.0, %v943
      %945 = vdwg.mxu0
      %v946 = vmax.f32 %v858, %v863
      %v947 = vmax.f32 %v860, %v865
      %v948 = vmax.f32 %v946, %v868
      %v949 = vmax.f32 %v947, %v870
      %v950 = vmax.f32 %v948, %v873
      %v951 = vmax.f32 %v949, %v875
      %v952 = vmax.f32 %v950, %v878
      %v953 = vmax.f32 %v951, %v880
      %v954 = vmax.f32 %v952, %v883
      %v955 = vmax.f32 %v953, %v885
      %v956 = vmax.f32 %v954, %v888
      %v957 = vmax.f32 %v955, %v890
      %v958 = vmax.f32 %v956, %v893
      %v959 = vmax.f32 %v957, %v895
      %v960 = vmax.f32 %v958, %v959
      %v961 = vrot.slane %v960, 4
      %v962 = vmax.f32 %v960, %v961
      %v963 = vrot.slane %v962, 2
      %v964 = vmax.f32 %v962, %v963
      %v965 = vrot.slane %v964, 1
      %v966 = vmax.f32 %v964, %v965
      %v967 = vmax.f32 %v907, %v912
      %v968 = vmax.f32 %v909, %v914
      %v969 = vmax.f32 %v967, %v917
      %v970 = vmax.f32 %v968, %v919
      %v971 = vmax.f32 %v969, %v922
      %v972 = vmax.f32 %v970, %v924
      %v973 = vmax.f32 %v971, %v927
      %v974 = vmax.f32 %v972, %v929
      %v975 = vmax.f32 %v973, %v932
      %v976 = vmax.f32 %v974, %v934
      %v977 = vmax.f32 %v975, %v937
      %v978 = vmax.f32 %v976, %v939
      %v979 = vmax.f32 %v977, %v942
      %v980 = vmax.f32 %v978, %v944
      %v981 = vmax.f32 %v979, %v980
      %v982 = vrot.slane %v981, 4
      %v983 = vmax.f32 %v981, %v982
      %v984 = vrot.slane %v983, 2
      %v985 = vmax.f32 %v983, %v984
      %v986 = vrot.slane %v985, 1
      %v987 = vmax.f32 %v985, %v986
      %v988 = vld [vmem:[%s6 + $0x8] sm:$0xff]
      %v989 = vld [vmem:[%s6 + $0x28] sm:$0xff]
      %v990 = vld [vmem:[%s6 + $0x48] sm:$0xff]
      %v991 = vld [vmem:[%s6 + $0x68] sm:$0xff]
      %v992 = vld [vmem:[%s6 + $0x88] sm:$0xff]
      %v993 = vld [vmem:[%s6 + $0xa8] sm:$0xff]
      %v994 = vld [vmem:[%s6 + $0xc8] sm:$0xff]
      %v995 = vld [vmem:[%s6 + $0xe8] sm:$0xff]
      %v996 = vld [vmem:[%s6 + $0x108] sm:$0xff]
      %v997 = vld [vmem:[%s6 + $0x128] sm:$0xff]
      %v998 = vld [vmem:[%s6 + $0x148] sm:$0xff]
      %v999 = vld [vmem:[%s6 + $0x168] sm:$0xff]
      %v1000 = vld [vmem:[%s6 + $0x188] sm:$0xff]
      %v1001 = vld [vmem:[%s6 + $0x1a8] sm:$0xff]
      %v1002 = vld [vmem:[%s6 + $0x1c8] sm:$0xff]
      %v1003 = vld [vmem:[%s6 + $0x1e8] sm:$0xff]
      %v1020 = vunpack.c.l.b16 %v988
      %v1021 = vunpack.c.h.b16 %v988
      %v1022 = vunpack.c.l.b16 %v989
      %v1023 = vunpack.c.h.b16 %v989
      %v1024 = vunpack.c.l.b16 %v990
      %v1025 = vunpack.c.h.b16 %v990
      %v1026 = vunpack.c.l.b16 %v991
      %v1027 = vunpack.c.h.b16 %v991
      %v1028 = vunpack.c.l.b16 %v992
      %v1029 = vunpack.c.h.b16 %v992
      %v1030 = vunpack.c.l.b16 %v993
      %v1031 = vunpack.c.h.b16 %v993
      %v1032 = vunpack.c.l.b16 %v994
      %v1033 = vunpack.c.h.b16 %v994
      %v1034 = vunpack.c.l.b16 %v995
      %v1035 = vunpack.c.h.b16 %v995
      %v1036 = vunpack.c.l.b16 %v996
      %v1037 = vunpack.c.h.b16 %v996
      %v1038 = vunpack.c.l.b16 %v997
      %v1039 = vunpack.c.h.b16 %v997
      %v1040 = vunpack.c.l.b16 %v998
      %v1041 = vunpack.c.h.b16 %v998
      %v1042 = vunpack.c.l.b16 %v999
      %v1043 = vunpack.c.h.b16 %v999
      %v1044 = vunpack.c.l.b16 %v1000
      %v1045 = vunpack.c.h.b16 %v1000
      %v1046 = vunpack.c.l.b16 %v1001
      %v1047 = vunpack.c.h.b16 %v1001
      %v1048 = vunpack.c.l.b16 %v1002
      %v1049 = vunpack.c.h.b16 %v1002
      %v1050 = vunpack.c.l.b16 %v1003
      %v1051 = vunpack.c.h.b16 %v1003
      %v1052 = vpack.c.b16 %v1022, %v1020
      %v1053 = vpack.c.b16 %v1023, %v1021
      %v1054 = vpack.c.b16 %v1026, %v1024
      %v1055 = vpack.c.b16 %v1027, %v1025
      %v1056 = vpack.c.b16 %v1030, %v1028
      %v1057 = vpack.c.b16 %v1031, %v1029
      %v1058 = vpack.c.b16 %v1034, %v1032
      %v1059 = vpack.c.b16 %v1035, %v1033
      %v1060 = vpack.c.b16 %v1038, %v1036
      %v1061 = vpack.c.b16 %v1039, %v1037
      %v1062 = vpack.c.b16 %v1042, %v1040
      %v1063 = vpack.c.b16 %v1043, %v1041
      %v1064 = vpack.c.b16 %v1046, %v1044
      %v1065 = vpack.c.b16 %v1047, %v1045
      %v1066 = vpack.c.b16 %v1050, %v1048
      %v1067 = vpack.c.b16 %v1051, %v1049
      %1084 = vmatpush.bf16.msra.mxu0 %v1066
      %1085 = vmatpush.bf16.msra.mxu0 %v1064
      %1086 = vmatpush.bf16.msra.mxu0 %v1062
      %1087 = vmatpush.bf16.msra.mxu0 %v1060
      %1088 = vmatpush.bf16.msra.mxu0 %v1058
      %1089 = vmatpush.bf16.msra.mxu0 %v1056
      %1090 = vmatpush.bf16.msra.mxu0 %v1054
      %1091 = vmatpush.bf16.msra.mxu0 %v1052
      %1092 = vmatmul.bf16.gmra.mxu0 %v744
      %v1093 = vpop.f32.mrf.mxu0
      %v1094 = vadd.f32 0.0, %v1093
      %v1095 = vpop.f32.mrf.mxu0
      %v1096 = vadd.f32 0.0, %v1095
      %1097 = vmatmul.bf16.gmra.mxu0 %v745
      %v1098 = vpop.f32.mrf.mxu0
      %v1099 = vadd.f32 0.0, %v1098
      %v1100 = vpop.f32.mrf.mxu0
      %v1101 = vadd.f32 0.0, %v1100
      %1102 = vmatmul.bf16.gmra.mxu0 %v746
      %v1103 = vpop.f32.mrf.mxu0
      %v1104 = vadd.f32 0.0, %v1103
      %v1105 = vpop.f32.mrf.mxu0
      %v1106 = vadd.f32 0.0, %v1105
      %1107 = vmatmul.bf16.gmra.mxu0 %v747
      %v1108 = vpop.f32.mrf.mxu0
      %v1109 = vadd.f32 0.0, %v1108
      %v1110 = vpop.f32.mrf.mxu0
      %v1111 = vadd.f32 0.0, %v1110
      %1112 = vmatmul.bf16.gmra.mxu0 %v748
      %v1113 = vpop.f32.mrf.mxu0
      %v1114 = vadd.f32 0.0, %v1113
      %v1115 = vpop.f32.mrf.mxu0
      %v1116 = vadd.f32 0.0, %v1115
      %1117 = vmatmul.bf16.gmra.mxu0 %v749
      %v1118 = vpop.f32.mrf.mxu0
      %v1119 = vadd.f32 0.0, %v1118
      %v1120 = vpop.f32.mrf.mxu0
      %v1121 = vadd.f32 0.0, %v1120
      %1122 = vmatmul.bf16.gmra.mxu0 %v750
      %v1123 = vpop.f32.mrf.mxu0
      %v1124 = vadd.f32 0.0, %v1123
      %v1125 = vpop.f32.mrf.mxu0
      %v1126 = vadd.f32 0.0, %v1125
      %1127 = vmatmul.bf16.gmra.mxu0 %v751
      %v1128 = vpop.f32.mrf.mxu0
      %v1129 = vadd.f32 0.0, %v1128
      %v1130 = vpop.f32.mrf.mxu0
      %v1131 = vadd.f32 0.0, %v1130
      %1132 = vdwg.mxu0
      %1133 = vmatpush.bf16.msra.mxu0 %v1067
      %1134 = vmatpush.bf16.msra.mxu0 %v1065
      %1135 = vmatpush.bf16.msra.mxu0 %v1063
      %1136 = vmatpush.bf16.msra.mxu0 %v1061
      %1137 = vmatpush.bf16.msra.mxu0 %v1059
      %1138 = vmatpush.bf16.msra.mxu0 %v1057
      %1139 = vmatpush.bf16.msra.mxu0 %v1055
      %1140 = vmatpush.bf16.msra.mxu0 %v1053
      %1141 = vmatmul.bf16.gmra.mxu0 %v744
      %v1142 = vpop.f32.mrf.mxu0
      %v1143 = vadd.f32 0.0, %v1142
      %v1144 = vpop.f32.mrf.mxu0
      %v1145 = vadd.f32 0.0, %v1144
      %1146 = vmatmul.bf16.gmra.mxu0 %v745
      %v1147 = vpop.f32.mrf.mxu0
      %v1148 = vadd.f32 0.0, %v1147
      %v1149 = vpop.f32.mrf.mxu0
      %v1150 = vadd.f32 0.0, %v1149
      %1151 = vmatmul.bf16.gmra.mxu0 %v746
      %v1152 = vpop.f32.mrf.mxu0
      %v1153 = vadd.f32 0.0, %v1152
      %v1154 = vpop.f32.mrf.mxu0
      %v1155 = vadd.f32 0.0, %v1154
      %1156 = vmatmul.bf16.gmra.mxu0 %v747
      %v1157 = vpop.f32.mrf.mxu0
      %v1158 = vadd.f32 0.0, %v1157
      %v1159 = vpop.f32.mrf.mxu0
      %v1160 = vadd.f32 0.0, %v1159
      %1161 = vmatmul.bf16.gmra.mxu0 %v748
      %v1162 = vpop.f32.mrf.mxu0
      %v1163 = vadd.f32 0.0, %v1162
      %v1164 = vpop.f32.mrf.mxu0
      %v1165 = vadd.f32 0.0, %v1164
      %1166 = vmatmul.bf16.gmra.mxu0 %v749
      %v1167 = vpop.f32.mrf.mxu0
      %v1168 = vadd.f32 0.0, %v1167
      %v1169 = vpop.f32.mrf.mxu0
      %v1170 = vadd.f32 0.0, %v1169
      %1171 = vmatmul.bf16.gmra.mxu0 %v750
      %v1172 = vpop.f32.mrf.mxu0
      %v1173 = vadd.f32 0.0, %v1172
      %v1174 = vpop.f32.mrf.mxu0
      %v1175 = vadd.f32 0.0, %v1174
      %1176 = vmatmul.bf16.gmra.mxu0 %v751
      %v1177 = vpop.f32.mrf.mxu0
      %v1178 = vadd.f32 0.0, %v1177
      %v1179 = vpop.f32.mrf.mxu0
      %v1180 = vadd.f32 0.0, %v1179
      %1181 = vdwg.mxu0
      %v1182 = vmax.f32 %v1094, %v1099
      %v1183 = vmax.f32 %v1096, %v1101
      %v1184 = vmax.f32 %v1182, %v1104
      %v1185 = vmax.f32 %v1183, %v1106
      %v1186 = vmax.f32 %v1184, %v1109
      %v1187 = vmax.f32 %v1185, %v1111
      %v1188 = vmax.f32 %v1186, %v1114
      %v1189 = vmax.f32 %v1187, %v1116
      %v1190 = vmax.f32 %v1188, %v1119
      %v1191 = vmax.f32 %v1189, %v1121
      %v1192 = vmax.f32 %v1190, %v1124
      %v1193 = vmax.f32 %v1191, %v1126
      %v1194 = vmax.f32 %v1192, %v1129
      %v1195 = vmax.f32 %v1193, %v1131
      %v1196 = vmax.f32 %v1194, %v1195
      %v1197 = vrot.slane %v1196, 4
      %v1198 = vmax.f32 %v1196, %v1197
      %v1199 = vrot.slane %v1198, 2
      %v1200 = vmax.f32 %v1198, %v1199
      %v1201 = vrot.slane %v1200, 1
      %v1202 = vmax.f32 %v1200, %v1201
      %v1203 = vmax.f32 %v1143, %v1148
      %v1204 = vmax.f32 %v1145, %v1150
      %v1205 = vmax.f32 %v1203, %v1153
      %v1206 = vmax.f32 %v1204, %v1155
      %v1207 = vmax.f32 %v1205, %v1158
      %v1208 = vmax.f32 %v1206, %v1160
      %v1209 = vmax.f32 %v1207, %v1163
      %v1210 = vmax.f32 %v1208, %v1165
      %v1211 = vmax.f32 %v1209, %v1168
      %v1212 = vmax.f32 %v1210, %v1170
      %v1213 = vmax.f32 %v1211, %v1173
      %v1214 = vmax.f32 %v1212, %v1175
      %v1215 = vmax.f32 %v1213, %v1178
      %v1216 = vmax.f32 %v1214, %v1180
      %v1217 = vmax.f32 %v1215, %v1216
      %v1218 = vrot.slane %v1217, 4
      %v1219 = vmax.f32 %v1217, %v1218
      %v1220 = vrot.slane %v1219, 2
      %v1221 = vmax.f32 %v1219, %v1220
      %v1222 = vrot.slane %v1221, 1
      %v1223 = vmax.f32 %v1221, %v1222
      %v1224 = vld [vmem:[%s6 + $0x10] sm:$0xff]
      %v1225 = vld [vmem:[%s6 + $0x30] sm:$0xff]
      %v1226 = vld [vmem:[%s6 + $0x50] sm:$0xff]
      %v1227 = vld [vmem:[%s6 + $0x70] sm:$0xff]
      %v1228 = vld [vmem:[%s6 + $0x90] sm:$0xff]
      %v1229 = vld [vmem:[%s6 + $0xb0] sm:$0xff]
      %v1230 = vld [vmem:[%s6 + $0xd0] sm:$0xff]
      %v1231 = vld [vmem:[%s6 + $0xf0] sm:$0xff]
      %v1232 = vld [vmem:[%s6 + $0x110] sm:$0xff]
      %v1233 = vld [vmem:[%s6 + $0x130] sm:$0xff]
      %v1234 = vld [vmem:[%s6 + $0x150] sm:$0xff]
      %v1235 = vld [vmem:[%s6 + $0x170] sm:$0xff]
      %v1236 = vld [vmem:[%s6 + $0x190] sm:$0xff]
      %v1237 = vld [vmem:[%s6 + $0x1b0] sm:$0xff]
      %v1238 = vld [vmem:[%s6 + $0x1d0] sm:$0xff]
      %v1239 = vld [vmem:[%s6 + $0x1f0] sm:$0xff]
      %v1256 = vunpack.c.l.b16 %v1224
      %v1257 = vunpack.c.h.b16 %v1224
      %v1258 = vunpack.c.l.b16 %v1225
      %v1259 = vunpack.c.h.b16 %v1225
      %v1260 = vunpack.c.l.b16 %v1226
      %v1261 = vunpack.c.h.b16 %v1226
      %v1262 = vunpack.c.l.b16 %v1227
      %v1263 = vunpack.c.h.b16 %v1227
      %v1264 = vunpack.c.l.b16 %v1228
      %v1265 = vunpack.c.h.b16 %v1228
      %v1266 = vunpack.c.l.b16 %v1229
      %v1267 = vunpack.c.h.b16 %v1229
      %v1268 = vunpack.c.l.b16 %v1230
      %v1269 = vunpack.c.h.b16 %v1230
      %v1270 = vunpack.c.l.b16 %v1231
      %v1271 = vunpack.c.h.b16 %v1231
      %v1272 = vunpack.c.l.b16 %v1232
      %v1273 = vunpack.c.h.b16 %v1232
      %v1274 = vunpack.c.l.b16 %v1233
      %v1275 = vunpack.c.h.b16 %v1233
      %v1276 = vunpack.c.l.b16 %v1234
      %v1277 = vunpack.c.h.b16 %v1234
      %v1278 = vunpack.c.l.b16 %v1235
      %v1279 = vunpack.c.h.b16 %v1235
      %v1280 = vunpack.c.l.b16 %v1236
      %v1281 = vunpack.c.h.b16 %v1236
      %v1282 = vunpack.c.l.b16 %v1237
      %v1283 = vunpack.c.h.b16 %v1237
      %v1284 = vunpack.c.l.b16 %v1238
      %v1285 = vunpack.c.h.b16 %v1238
      %v1286 = vunpack.c.l.b16 %v1239
      %v1287 = vunpack.c.h.b16 %v1239
      %v1288 = vpack.c.b16 %v1258, %v1256
      %v1289 = vpack.c.b16 %v1259, %v1257
      %v1290 = vpack.c.b16 %v1262, %v1260
      %v1291 = vpack.c.b16 %v1263, %v1261
      %v1292 = vpack.c.b16 %v1266, %v1264
      %v1293 = vpack.c.b16 %v1267, %v1265
      %v1294 = vpack.c.b16 %v1270, %v1268
      %v1295 = vpack.c.b16 %v1271, %v1269
      %v1296 = vpack.c.b16 %v1274, %v1272
      %v1297 = vpack.c.b16 %v1275, %v1273
      %v1298 = vpack.c.b16 %v1278, %v1276
      %v1299 = vpack.c.b16 %v1279, %v1277
      %v1300 = vpack.c.b16 %v1282, %v1280
      %v1301 = vpack.c.b16 %v1283, %v1281
      %v1302 = vpack.c.b16 %v1286, %v1284
      %v1303 = vpack.c.b16 %v1287, %v1285
      %1320 = vmatpush.bf16.msra.mxu0 %v1302
      %1321 = vmatpush.bf16.msra.mxu0 %v1300
      %1322 = vmatpush.bf16.msra.mxu0 %v1298
      %1323 = vmatpush.bf16.msra.mxu0 %v1296
      %1324 = vmatpush.bf16.msra.mxu0 %v1294
      %1325 = vmatpush.bf16.msra.mxu0 %v1292
      %1326 = vmatpush.bf16.msra.mxu0 %v1290
      %1327 = vmatpush.bf16.msra.mxu0 %v1288
      %1328 = vmatmul.bf16.gmra.mxu0 %v744
      %v1329 = vpop.f32.mrf.mxu0
      %v1330 = vadd.f32 0.0, %v1329
      %v1331 = vpop.f32.mrf.mxu0
      %v1332 = vadd.f32 0.0, %v1331
      %1333 = vmatmul.bf16.gmra.mxu0 %v745
      %v1334 = vpop.f32.mrf.mxu0
      %v1335 = vadd.f32 0.0, %v1334
      %v1336 = vpop.f32.mrf.mxu0
      %v1337 = vadd.f32 0.0, %v1336
      %1338 = vmatmul.bf16.gmra.mxu0 %v746
      %v1339 = vpop.f32.mrf.mxu0
      %v1340 = vadd.f32 0.0, %v1339
      %v1341 = vpop.f32.mrf.mxu0
      %v1342 = vadd.f32 0.0, %v1341
      %1343 = vmatmul.bf16.gmra.mxu0 %v747
      %v1344 = vpop.f32.mrf.mxu0
      %v1345 = vadd.f32 0.0, %v1344
      %v1346 = vpop.f32.mrf.mxu0
      %v1347 = vadd.f32 0.0, %v1346
      %1348 = vmatmul.bf16.gmra.mxu0 %v748
      %v1349 = vpop.f32.mrf.mxu0
      %v1350 = vadd.f32 0.0, %v1349
      %v1351 = vpop.f32.mrf.mxu0
      %v1352 = vadd.f32 0.0, %v1351
      %1353 = vmatmul.bf16.gmra.mxu0 %v749
      %v1354 = vpop.f32.mrf.mxu0
      %v1355 = vadd.f32 0.0, %v1354
      %v1356 = vpop.f32.mrf.mxu0
      %v1357 = vadd.f32 0.0, %v1356
      %1358 = vmatmul.bf16.gmra.mxu0 %v750
      %v1359 = vpop.f32.mrf.mxu0
      %v1360 = vadd.f32 0.0, %v1359
      %v1361 = vpop.f32.mrf.mxu0
      %v1362 = vadd.f32 0.0, %v1361
      %1363 = vmatmul.bf16.gmra.mxu0 %v751
      %v1364 = vpop.f32.mrf.mxu0
      %v1365 = vadd.f32 0.0, %v1364
      %v1366 = vpop.f32.mrf.mxu0
      %v1367 = vadd.f32 0.0, %v1366
      %1368 = vdwg.mxu0
      %1369 = vmatpush.bf16.msra.mxu0 %v1303
      %1370 = vmatpush.bf16.msra.mxu0 %v1301
      %1371 = vmatpush.bf16.msra.mxu0 %v1299
      %1372 = vmatpush.bf16.msra.mxu0 %v1297
      %1373 = vmatpush.bf16.msra.mxu0 %v1295
      %1374 = vmatpush.bf16.msra.mxu0 %v1293
      %1375 = vmatpush.bf16.msra.mxu0 %v1291
      %1376 = vmatpush.bf16.msra.mxu0 %v1289
      %1377 = vmatmul.bf16.gmra.mxu0 %v744
      %v1378 = vpop.f32.mrf.mxu0
      %v1379 = vadd.f32 0.0, %v1378
      %v1380 = vpop.f32.mrf.mxu0
      %v1381 = vadd.f32 0.0, %v1380
      %1382 = vmatmul.bf16.gmra.mxu0 %v745
      %v1383 = vpop.f32.mrf.mxu0
      %v1384 = vadd.f32 0.0, %v1383
      %v1385 = vpop.f32.mrf.mxu0
      %v1386 = vadd.f32 0.0, %v1385
      %1387 = vmatmul.bf16.gmra.mxu0 %v746
      %v1388 = vpop.f32.mrf.mxu0
      %v1389 = vadd.f32 0.0, %v1388
      %v1390 = vpop.f32.mrf.mxu0
      %v1391 = vadd.f32 0.0, %v1390
      %1392 = vmatmul.bf16.gmra.mxu0 %v747
      %v1393 = vpop.f32.mrf.mxu0
      %v1394 = vadd.f32 0.0, %v1393
      %v1395 = vpop.f32.mrf.mxu0
      %v1396 = vadd.f32 0.0, %v1395
      %1397 = vmatmul.bf16.gmra.mxu0 %v748
      %v1398 = vpop.f32.mrf.mxu0
      %v1399 = vadd.f32 0.0, %v1398
      %v1400 = vpop.f32.mrf.mxu0
      %v1401 = vadd.f32 0.0, %v1400
      %1402 = vmatmul.bf16.gmra.mxu0 %v749
      %v1403 = vpop.f32.mrf.mxu0
      %v1404 = vadd.f32 0.0, %v1403
      %v1405 = vpop.f32.mrf.mxu0
      %v1406 = vadd.f32 0.0, %v1405
      %1407 = vmatmul.bf16.gmra.mxu0 %v750
      %v1408 = vpop.f32.mrf.mxu0
      %v1409 = vadd.f32 0.0, %v1408
      %v1410 = vpop.f32.mrf.mxu0
      %v1411 = vadd.f32 0.0, %v1410
      %1412 = vmatmul.bf16.gmra.mxu0 %v751
      %v1413 = vpop.f32.mrf.mxu0
      %v1414 = vadd.f32 0.0, %v1413
      %v1415 = vpop.f32.mrf.mxu0
      %v1416 = vadd.f32 0.0, %v1415
      %1417 = vdwg.mxu0
      %v1418 = vmax.f32 %v1330, %v1335
      %v1419 = vmax.f32 %v1332, %v1337
      %v1420 = vmax.f32 %v1418, %v1340
      %v1421 = vmax.f32 %v1419, %v1342
      %v1422 = vmax.f32 %v1420, %v1345
      %v1423 = vmax.f32 %v1421, %v1347
      %v1424 = vmax.f32 %v1422, %v1350
      %v1425 = vmax.f32 %v1423, %v1352
      %v1426 = vmax.f32 %v1424, %v1355
      %v1427 = vmax.f32 %v1425, %v1357
      %v1428 = vmax.f32 %v1426, %v1360
      %v1429 = vmax.f32 %v1427, %v1362
      %v1430 = vmax.f32 %v1428, %v1365
      %v1431 = vmax.f32 %v1429, %v1367
      %v1432 = vmax.f32 %v1430, %v1431
      %v1433 = vrot.slane %v1432, 4
      %v1434 = vmax.f32 %v1432, %v1433
      %v1435 = vrot.slane %v1434, 2
      %v1436 = vmax.f32 %v1434, %v1435
      %v1437 = vrot.slane %v1436, 1
      %v1438 = vmax.f32 %v1436, %v1437
      %v1439 = vmax.f32 %v1379, %v1384
      %v1440 = vmax.f32 %v1381, %v1386
      %v1441 = vmax.f32 %v1439, %v1389
      %v1442 = vmax.f32 %v1440, %v1391
      %v1443 = vmax.f32 %v1441, %v1394
      %v1444 = vmax.f32 %v1442, %v1396
      %v1445 = vmax.f32 %v1443, %v1399
      %v1446 = vmax.f32 %v1444, %v1401
      %v1447 = vmax.f32 %v1445, %v1404
      %v1448 = vmax.f32 %v1446, %v1406
      %v1449 = vmax.f32 %v1447, %v1409
      %v1450 = vmax.f32 %v1448, %v1411
      %v1451 = vmax.f32 %v1449, %v1414
      %v1452 = vmax.f32 %v1450, %v1416
      %v1453 = vmax.f32 %v1451, %v1452
      %v1454 = vrot.slane %v1453, 4
      %v1455 = vmax.f32 %v1453, %v1454
      %v1456 = vrot.slane %v1455, 2
      %v1457 = vmax.f32 %v1455, %v1456
      %v1458 = vrot.slane %v1457, 1
      %v1459 = vmax.f32 %v1457, %v1458
      %v1460 = vld [vmem:[%s6 + $0x18] sm:$0xff]
      %v1461 = vld [vmem:[%s6 + $0x38] sm:$0xff]
      %v1462 = vld [vmem:[%s6 + $0x58] sm:$0xff]
      %v1463 = vld [vmem:[%s6 + $0x78] sm:$0xff]
      %v1464 = vld [vmem:[%s6 + $0x98] sm:$0xff]
      %v1465 = vld [vmem:[%s6 + $0xb8] sm:$0xff]
      %v1466 = vld [vmem:[%s6 + $0xd8] sm:$0xff]
      %v1467 = vld [vmem:[%s6 + $0xf8] sm:$0xff]
      %v1468 = vld [vmem:[%s6 + $0x118] sm:$0xff]
      %v1469 = vld [vmem:[%s6 + $0x138] sm:$0xff]
      %v1470 = vld [vmem:[%s6 + $0x158] sm:$0xff]
      %v1471 = vld [vmem:[%s6 + $0x178] sm:$0xff]
      %v1472 = vld [vmem:[%s6 + $0x198] sm:$0xff]
      %v1473 = vld [vmem:[%s6 + $0x1b8] sm:$0xff]
      %v1474 = vld [vmem:[%s6 + $0x1d8] sm:$0xff]
      %v1475 = vld [vmem:[%s6 + $0x1f8] sm:$0xff]
      %v1492 = vunpack.c.l.b16 %v1460
      %v1493 = vunpack.c.h.b16 %v1460
      %v1494 = vunpack.c.l.b16 %v1461
      %v1495 = vunpack.c.h.b16 %v1461
      %v1496 = vunpack.c.l.b16 %v1462
      %v1497 = vunpack.c.h.b16 %v1462
      %v1498 = vunpack.c.l.b16 %v1463
      %v1499 = vunpack.c.h.b16 %v1463
      %v1500 = vunpack.c.l.b16 %v1464
      %v1501 = vunpack.c.h.b16 %v1464
      %v1502 = vunpack.c.l.b16 %v1465
      %v1503 = vunpack.c.h.b16 %v1465
      %v1504 = vunpack.c.l.b16 %v1466
      %v1505 = vunpack.c.h.b16 %v1466
      %v1506 = vunpack.c.l.b16 %v1467
      %v1507 = vunpack.c.h.b16 %v1467
      %v1508 = vunpack.c.l.b16 %v1468
      %v1509 = vunpack.c.h.b16 %v1468
      %v1510 = vunpack.c.l.b16 %v1469
      %v1511 = vunpack.c.h.b16 %v1469
      %v1512 = vunpack.c.l.b16 %v1470
      %v1513 = vunpack.c.h.b16 %v1470
      %v1514 = vunpack.c.l.b16 %v1471
      %v1515 = vunpack.c.h.b16 %v1471
      %v1516 = vunpack.c.l.b16 %v1472
      %v1517 = vunpack.c.h.b16 %v1472
      %v1518 = vunpack.c.l.b16 %v1473
      %v1519 = vunpack.c.h.b16 %v1473
      %v1520 = vunpack.c.l.b16 %v1474
      %v1521 = vunpack.c.h.b16 %v1474
      %v1522 = vunpack.c.l.b16 %v1475
      %v1523 = vunpack.c.h.b16 %v1475
      %v1524 = vpack.c.b16 %v1494, %v1492
      %v1525 = vpack.c.b16 %v1495, %v1493
      %v1526 = vpack.c.b16 %v1498, %v1496
      %v1527 = vpack.c.b16 %v1499, %v1497
      %v1528 = vpack.c.b16 %v1502, %v1500
      %v1529 = vpack.c.b16 %v1503, %v1501
      %v1530 = vpack.c.b16 %v1506, %v1504
      %v1531 = vpack.c.b16 %v1507, %v1505
      %v1532 = vpack.c.b16 %v1510, %v1508
      %v1533 = vpack.c.b16 %v1511, %v1509
      %v1534 = vpack.c.b16 %v1514, %v1512
      %v1535 = vpack.c.b16 %v1515, %v1513
      %v1536 = vpack.c.b16 %v1518, %v1516
      %v1537 = vpack.c.b16 %v1519, %v1517
      %v1538 = vpack.c.b16 %v1522, %v1520
      %v1539 = vpack.c.b16 %v1523, %v1521
      %1556 = vmatpush.bf16.msra.mxu0 %v1538
      %1557 = vmatpush.bf16.msra.mxu0 %v1536
      %1558 = vmatpush.bf16.msra.mxu0 %v1534
      %1559 = vmatpush.bf16.msra.mxu0 %v1532
      %1560 = vmatpush.bf16.msra.mxu0 %v1530
      %1561 = vmatpush.bf16.msra.mxu0 %v1528
      %1562 = vmatpush.bf16.msra.mxu0 %v1526
      %1563 = vmatpush.bf16.msra.mxu0 %v1524
      %1564 = vmatmul.bf16.gmra.mxu0 %v744
      %v1565 = vpop.f32.mrf.mxu0
      %v1566 = vadd.f32 0.0, %v1565
      %v1567 = vpop.f32.mrf.mxu0
      %v1568 = vadd.f32 0.0, %v1567
      %1569 = vmatmul.bf16.gmra.mxu0 %v745
      %v1570 = vpop.f32.mrf.mxu0
      %v1571 = vadd.f32 0.0, %v1570
      %v1572 = vpop.f32.mrf.mxu0
      %v1573 = vadd.f32 0.0, %v1572
      %1574 = vmatmul.bf16.gmra.mxu0 %v746
      %v1575 = vpop.f32.mrf.mxu0
      %v1576 = vadd.f32 0.0, %v1575
      %v1577 = vpop.f32.mrf.mxu0
      %v1578 = vadd.f32 0.0, %v1577
      %1579 = vmatmul.bf16.gmra.mxu0 %v747
      %v1580 = vpop.f32.mrf.mxu0
      %v1581 = vadd.f32 0.0, %v1580
      %v1582 = vpop.f32.mrf.mxu0
      %v1583 = vadd.f32 0.0, %v1582
      %1584 = vmatmul.bf16.gmra.mxu0 %v748
      %v1585 = vpop.f32.mrf.mxu0
      %v1586 = vadd.f32 0.0, %v1585
      %v1587 = vpop.f32.mrf.mxu0
      %v1588 = vadd.f32 0.0, %v1587
      %1589 = vmatmul.bf16.gmra.mxu0 %v749
      %v1590 = vpop.f32.mrf.mxu0
      %v1591 = vadd.f32 0.0, %v1590
      %v1592 = vpop.f32.mrf.mxu0
      %v1593 = vadd.f32 0.0, %v1592
      %1594 = vmatmul.bf16.gmra.mxu0 %v750
      %v1595 = vpop.f32.mrf.mxu0
      %v1596 = vadd.f32 0.0, %v1595
      %v1597 = vpop.f32.mrf.mxu0
      %v1598 = vadd.f32 0.0, %v1597
      %1599 = vmatmul.bf16.gmra.mxu0 %v751
      %v1600 = vpop.f32.mrf.mxu0
      %v1601 = vadd.f32 0.0, %v1600
      %v1602 = vpop.f32.mrf.mxu0
      %v1603 = vadd.f32 0.0, %v1602
      %1604 = vdwg.mxu0
      %1605 = vmatpush.bf16.msra.mxu0 %v1539
      %1606 = vmatpush.bf16.msra.mxu0 %v1537
      %1607 = vmatpush.bf16.msra.mxu0 %v1535
      %1608 = vmatpush.bf16.msra.mxu0 %v1533
      %1609 = vmatpush.bf16.msra.mxu0 %v1531
      %1610 = vmatpush.bf16.msra.mxu0 %v1529
      %1611 = vmatpush.bf16.msra.mxu0 %v1527
      %1612 = vmatpush.bf16.msra.mxu0 %v1525
      %1613 = vmatmul.bf16.gmra.mxu0 %v744
      %v1614 = vpop.f32.mrf.mxu0
      %v1615 = vadd.f32 0.0, %v1614
      %v1616 = vpop.f32.mrf.mxu0
      %v1617 = vadd.f32 0.0, %v1616
      %1618 = vmatmul.bf16.gmra.mxu0 %v745
      %v1619 = vpop.f32.mrf.mxu0
      %v1620 = vadd.f32 0.0, %v1619
      %v1621 = vpop.f32.mrf.mxu0
      %v1622 = vadd.f32 0.0, %v1621
      %1623 = vmatmul.bf16.gmra.mxu0 %v746
      %v1624 = vpop.f32.mrf.mxu0
      %v1625 = vadd.f32 0.0, %v1624
      %v1626 = vpop.f32.mrf.mxu0
      %v1627 = vadd.f32 0.0, %v1626
      %1628 = vmatmul.bf16.gmra.mxu0 %v747
      %v1629 = vpop.f32.mrf.mxu0
      %v1630 = vadd.f32 0.0, %v1629
      %v1631 = vpop.f32.mrf.mxu0
      %v1632 = vadd.f32 0.0, %v1631
      %1633 = vmatmul.bf16.gmra.mxu0 %v748
      %v1634 = vpop.f32.mrf.mxu0
      %v1635 = vadd.f32 0.0, %v1634
      %v1636 = vpop.f32.mrf.mxu0
      %v1637 = vadd.f32 0.0, %v1636
      %1638 = vmatmul.bf16.gmra.mxu0 %v749
      %v1639 = vpop.f32.mrf.mxu0
      %v1640 = vadd.f32 0.0, %v1639
      %v1641 = vpop.f32.mrf.mxu0
      %v1642 = vadd.f32 0.0, %v1641
      %1643 = vmatmul.bf16.gmra.mxu0 %v750
      %v1644 = vpop.f32.mrf.mxu0
      %v1645 = vadd.f32 0.0, %v1644
      %v1646 = vpop.f32.mrf.mxu0
      %v1647 = vadd.f32 0.0, %v1646
      %1648 = vmatmul.bf16.gmra.mxu0 %v751
      %v1649 = vpop.f32.mrf.mxu0
      %v1650 = vadd.f32 0.0, %v1649
      %v1651 = vpop.f32.mrf.mxu0
      %v1652 = vadd.f32 0.0, %v1651
      %1653 = vdwg.mxu0
      %v1654 = vmax.f32 %v1566, %v1571
      %v1655 = vmax.f32 %v1568, %v1573
      %v1656 = vmax.f32 %v1654, %v1576
      %v1657 = vmax.f32 %v1655, %v1578
      %v1658 = vmax.f32 %v1656, %v1581
      %v1659 = vmax.f32 %v1657, %v1583
      %v1660 = vmax.f32 %v1658, %v1586
      %v1661 = vmax.f32 %v1659, %v1588
      %v1662 = vmax.f32 %v1660, %v1591
      %v1663 = vmax.f32 %v1661, %v1593
      %v1664 = vmax.f32 %v1662, %v1596
      %v1665 = vmax.f32 %v1663, %v1598
      %v1666 = vmax.f32 %v1664, %v1601
      %v1667 = vmax.f32 %v1665, %v1603
      %v1668 = vmax.f32 %v1666, %v1667
      %v1669 = vrot.slane %v1668, 4
      %v1670 = vmax.f32 %v1668, %v1669
      %v1671 = vrot.slane %v1670, 2
      %v1672 = vmax.f32 %v1670, %v1671
      %v1673 = vrot.slane %v1672, 1
      %v1674 = vmax.f32 %v1672, %v1673
      %v1675 = vmax.f32 %v1615, %v1620
      %v1676 = vmax.f32 %v1617, %v1622
      %v1677 = vmax.f32 %v1675, %v1625
      %v1678 = vmax.f32 %v1676, %v1627
      %v1679 = vmax.f32 %v1677, %v1630
      %v1680 = vmax.f32 %v1678, %v1632
      %v1681 = vmax.f32 %v1679, %v1635
      %v1682 = vmax.f32 %v1680, %v1637
      %v1683 = vmax.f32 %v1681, %v1640
      %v1684 = vmax.f32 %v1682, %v1642
      %v1685 = vmax.f32 %v1683, %v1645
      %v1686 = vmax.f32 %v1684, %v1647
      %v1687 = vmax.f32 %v1685, %v1650
      %v1688 = vmax.f32 %v1686, %v1652
      %v1689 = vmax.f32 %v1687, %v1688
      %v1690 = vrot.slane %v1689, 4
      %v1691 = vmax.f32 %v1689, %v1690
      %v1692 = vrot.slane %v1691, 2
      %v1693 = vmax.f32 %v1691, %v1692
      %v1694 = vrot.slane %v1693, 1
      %v1695 = vmax.f32 %v1693, %v1694
      %v1696 = vld [vmem:[%s318] sm:$0xff]
      %v1705 = vrot.slane %v987, 7
      %v1706 = vrot.slane %v1202, 6
      %v1707 = vrot.slane %v1223, 5
      %v1708 = vrot.slane %v1438, 4
      %v1709 = vrot.slane %v1459, 3
      %v1710 = vrot.slane %v1674, 2
      %v1711 = vrot.slane %v1695, 1
      %vm1712 = vcmask 1040384
      %v1713 = vsel %vm1712, %v966, %v1705
      %vm1714 = vcmask 1042434
      %v1715 = vsel %vm1714, %v1706, %v1707
      %vm1716 = vcmask 1041408
      %v1717 = vsel %vm1716, %v1713, %v1715
      %vm1718 = vcmask 1044484
      %v1719 = vsel %vm1718, %v1708, %v1709
      %vm1720 = vcmask 1046534
      %v1721 = vsel %vm1720, %v1710, %v1711
      %vm1722 = vcmask 1045508
      %v1723 = vsel %vm1722, %v1719, %v1721
      %vm1724 = vcmask 1043456
      %v1725 = vsel %vm1724, %v1717, %v1723
      %v1727 = vmax.f32 %v1696, %v1725
      %1728 = vst [vmem:[%s318] sm:$0xff] %v1727
      %p1729 = scmp.lt.s32.totalorder %s22, 1
      %s1730 = scalar_select %p1729, %s22, 1
      %s1731 = smul.addr %s1730, 8
      %s1732 = scalar_lea.vmem %s7, %s1731
      // Predicated region
      $region53: #{pointnet.6} parent=47 // pred_check
        %p1733 = pneg %p207
      $region54: #{pointnet.6} parent=47 // pred_check_branch
        %1735 = sbr.rel (%p1733) target = $region56
      $region55: #{pointnet.6} parent=47 // pred_region
        _
      $region56: #{pointnet.6} parent=47 // pred_fallthru
        _
    $region48: #{pointnet.6} parent=5 // pred_fallthru
      _
    %p1736 = scmp.le.s32.totalorder 2, %s13
    // Predicated region
    $region57: #{pointnet.6} parent=5 // pred_check
      %p1737 = pneg %p1736
    $region58: #{pointnet.6} parent=5 // pred_check_branch
      %1739 = sbr.rel (%p1737) target = $region60
    $region59: #{pointnet.6} parent=5 // pred_region
      %s1740 = ssub.s32 %s13, 2
      // Predicated region
      $region61: #{pointnet.6} parent=59 // pred_check
        %p1741 = pneg %p213
      $region62: #{pointnet.6} parent=59 // pred_check_branch
        %1743 = sbr.rel (%p1741) target = $region64
      $region63: #{pointnet.6} parent=59 // pred_region
        %p1744 = scmp.lt.s32.totalorder %s24, 1
        %s1745 = scalar_select %p1744, %s24, 1
        %s1746 = smul.addr %s1745, 8
        %s1747 = scalar_lea.vmem %s7, %s1746
      $region64: #{pointnet.6} parent=59 // pred_fallthru
        _
    $region60: #{pointnet.6} parent=5 // pred_fallthru
      _
  $region6: #{pointnet.6} parent=0 // loop_footer
    %s17 = sadd.s32 1, %s13
  $region7: #{pointnet.6} parent=0 // loop_footer_branch
    %12 = sbr.rel target = $region3
  $region8: #{pointnet.6} parent=0 // loop_exit
    _

// kernel: pointnet.5
$region0: #{pointnet.5}
  #allocation0 [shape = 'u32[]', space=smem, size = 0x4, offset = 0x4, fixed_abs, tag = 'smem constant byte address 0x4 - core index']
  #allocation1 [shape = 'u32[72,128]{1,0:T(1,128)}', space=vmem, size = 0x9000, scoped, tag = 'internal scratch']
  %s0 = inlined_call_operand.vmem [shape: f32[2,1024], index: 0, kind: input, shape index: {}]
  %s1 = inlined_call_operand.vmem [shape: f32[1,1024], index: 1, kind: input, shape index: {}]
  %s2 = inlined_call_operand.vmem [shape: bf16[1024,512], index: 2, kind: input, shape index: {}]
  %s3 = inlined_call_operand.vmem [shape: f32[1,512], index: 3, kind: input, shape index: {}]
  %s4 = inlined_call_operand.vmem [shape: bf16[512,256], index: 4, kind: input, shape index: {}]
  %s5 = inlined_call_operand.vmem [shape: f32[1,256], index: 5, kind: input, shape index: {}]
  %s6 = inlined_call_operand.vmem [shape: bf16[256,4], index: 6, kind: input, shape index: {}]
  %s7 = inlined_call_operand.vmem [shape: f32[1,4], index: 7, kind: input, shape index: {}]
  %s8 = inlined_call_operand.vmem [shape: f32[2,4], index: 8, kind: output, shape index: {}]
  %s9 = sld [smem:[#allocation0]]
  $region42: #{pointnet.5} parent=0
    _
  %s11 = ssub.s32 1, %s9
  %s12 = scalar_select 0, %s11, %s9
  // Predicated region
  $region2: #{pointnet.5} parent=0 // pred_check
    _
  $region3: #{pointnet.5} parent=0 // pred_check_branch
    %14 = sbr.rel (0) target = $region5
  $region4: #{pointnet.5} parent=0 // pred_region
    _
  $region5: #{pointnet.5} parent=0 // pred_fallthru
    _
  // Predicated region
  $region6: #{pointnet.5} parent=0 // pred_check
    _
  $region7: #{pointnet.5} parent=0 // pred_check_branch
    %16 = sbr.rel (0) target = $region9
  $region8: #{pointnet.5} parent=0 // pred_region
    _
  $region9: #{pointnet.5} parent=0 // pred_fallthru
    _
  // Predicated region
  $region10: #{pointnet.5} parent=0 // pred_check
    _
  $region11: #{pointnet.5} parent=0 // pred_check_branch
    %18 = sbr.rel (0) target = $region13
  $region12: #{pointnet.5} parent=0 // pred_region
    _
  $region13: #{pointnet.5} parent=0 // pred_fallthru
    _
  // Predicated region
  $region14: #{pointnet.5} parent=0 // pred_check
    _
  $region15: #{pointnet.5} parent=0 // pred_check_branch
    %20 = sbr.rel (0) target = $region17
  $region16: #{pointnet.5} parent=0 // pred_region
    _
  $region17: #{pointnet.5} parent=0 // pred_fallthru
    _
  // Predicated region
  $region18: #{pointnet.5} parent=0 // pred_check
    _
  $region19: #{pointnet.5} parent=0 // pred_check_branch
    %22 = sbr.rel (0) target = $region21
  $region20: #{pointnet.5} parent=0 // pred_region
    _
  $region21: #{pointnet.5} parent=0 // pred_fallthru
    _
  // Predicated region
  $region22: #{pointnet.5} parent=0 // pred_check
    _
  $region23: #{pointnet.5} parent=0 // pred_check_branch
    %24 = sbr.rel (0) target = $region25
  $region24: #{pointnet.5} parent=0 // pred_region
    _
  $region25: #{pointnet.5} parent=0 // pred_fallthru
    _
  // Predicated region
  $region26: #{pointnet.5} parent=0 // pred_check
    _
  $region27: #{pointnet.5} parent=0 // pred_check_branch
    %26 = sbr.rel (0) target = $region29
  $region28: #{pointnet.5} parent=0 // pred_region
    _
  $region29: #{pointnet.5} parent=0 // pred_fallthru
    _
  // Predicated region
  $region30: #{pointnet.5} parent=0 // pred_check
    _
  $region31: #{pointnet.5} parent=0 // pred_check_branch
    %28 = sbr.rel (0) target = $region33
  $region32: #{pointnet.5} parent=0 // pred_region
    _
  $region33: #{pointnet.5} parent=0 // pred_fallthru
    _
  %v29 = vld [vmem:[%s0] sm:$0xff]
  %v30 = vld [vmem:[%s0 + $0x8] sm:$0xff]
  %v31 = vld [vmem:[%s1] sm:$0xff]
  %v33 = vperm.slane %v31, 0
  %v34 = vperm.slane %v31, 1
  %v35 = vperm.slane %v31, 2
  %v36 = vperm.slane %v31, 3
  %v37 = vperm.slane %v31, 4
  %v38 = vperm.slane %v31, 5
  %v39 = vperm.slane %v31, 6
  %v40 = vperm.slane %v31, 7
  %v41 = vrot.slane %v34, 6
  %v42 = vrot.slane %v35, 4
  %v43 = vrot.slane %v36, 2
  %v44 = vrot.slane %v38, 6
  %v45 = vrot.slane %v39, 4
  %v46 = vrot.slane %v40, 2
  %vm47 = vcmask 1041408
  %v48 = vsel %vm47, %v33, %v41
  %vm49 = vcmask 1045508
  %v50 = vsel %vm49, %v42, %v43
  %vm51 = vcmask 1043456
  %v52 = vsel %vm51, %v48, %v50
  %v53 = vsel %vm47, %v37, %v44
  %v54 = vsel %vm49, %v45, %v46
  %v55 = vsel %vm51, %v53, %v54
  %v58 = vadd.f32 %v29, %v52
  %v59 = vadd.f32 %v30, %v55
  %v60 = vmax.f32 %v58, 0.0
  %v61 = vmax.f32 %v59, 0.0
  %v62 = vld [vmem:[%s2] sm:$0xff]
  %v63 = vld [vmem:[%s2 + $0x8] sm:$0xff]
  %v64 = vld [vmem:[%s2 + $0x10] sm:$0xff]
  %v65 = vld [vmem:[%s2 + $0x18] sm:$0xff]
  %v66 = vld [vmem:[%s2 + $0x20] sm:$0xff]
  %v67 = vld [vmem:[%s2 + $0x28] sm:$0xff]
  %v68 = vld [vmem:[%s2 + $0x30] sm:$0xff]
  %v69 = vld [vmem:[%s2 + $0x38] sm:$0xff]
  %v70 = vld [vmem:[%s2 + $0x40] sm:$0xff]
  %v71 = vld [vmem:[%s2 + $0x48] sm:$0xff]
  %v72 = vld [vmem:[%s2 + $0x50] sm:$0xff]
  %v73 = vld [vmem:[%s2 + $0x58] sm:$0xff]
  %v74 = vld [vmem:[%s2 + $0x60] sm:$0xff]
  %v75 = vld [vmem:[%s2 + $0x68] sm:$0xff]
  %v76 = vld [vmem:[%s2 + $0x70] sm:$0xff]
  %v77 = vld [vmem:[%s2 + $0x78] sm:$0xff]
  %v78 = vld [vmem:[%s2 + $0x80] sm:$0xff]
  %v79 = vld [vmem:[%s2 + $0x88] sm:$0xff]
  %v80 = vld [vmem:[%s2 + $0x90] sm:$0xff]
  %v81 = vld [vmem:[%s2 + $0x98] sm:$0xff]
  %v82 = vld [vmem:[%s2 + $0xa0] sm:$0xff]
  %v83 = vld [vmem:[%s2 + $0xa8] sm:$0xff]
  %v84 = vld [vmem:[%s2 + $0xb0] sm:$0xff]
  %v85 = vld [vmem:[%s2 + $0xb8] sm:$0xff]
  %v86 = vld [vmem:[%s2 + $0xc0] sm:$0xff]
  %v87 = vld [vmem:[%s2 + $0xc8] sm:$0xff]
  %v88 = vld [vmem:[%s2 + $0xd0] sm:$0xff]
  %v89 = vld [vmem:[%s2 + $0xd8] sm:$0xff]
  %v90 = vld [vmem:[%s2 + $0xe0] sm:$0xff]
  %v91 = vld [vmem:[%s2 + $0xe8] sm:$0xff]
  %v92 = vld [vmem:[%s2 + $0xf0] sm:$0xff]
  %v93 = vld [vmem:[%s2 + $0xf8] sm:$0xff]
  %v94 = vld [vmem:[%s2 + $0x100] sm:$0xff]
  %v95 = vld [vmem:[%s2 + $0x108] sm:$0xff]
  %v96 = vld [vmem:[%s2 + $0x110] sm:$0xff]
  %v97 = vld [vmem:[%s2 + $0x118] sm:$0xff]
  %v98 = vld [vmem:[%s2 + $0x120] sm:$0xff]
  %v99 = vld [vmem:[%s2 + $0x128] sm:$0xff]
  %v100 = vld [vmem:[%s2 + $0x130] sm:$0xff]
  %v101 = vld [vmem:[%s2 + $0x138] sm:$0xff]
  %v102 = vld [vmem:[%s2 + $0x140] sm:$0xff]
  %v103 = vld [vmem:[%s2 + $0x148] sm:$0xff]
  %v104 = vld [vmem:[%s2 + $0x150] sm:$0xff]
  %v105 = vld [vmem:[%s2 + $0x158] sm:$0xff]
  %v106 = vld [vmem:[%s2 + $0x160] sm:$0xff]
  %v107 = vld [vmem:[%s2 + $0x168] sm:$0xff]
  %v108 = vld [vmem:[%s2 + $0x170] sm:$0xff]
  %v109 = vld [vmem:[%s2 + $0x178] sm:$0xff]
  %v110 = vld [vmem:[%s2 + $0x180] sm:$0xff]
  %v111 = vld [vmem:[%s2 + $0x188] sm:$0xff]
  %v112 = vld [vmem:[%s2 + $0x190] sm:$0xff]
  %v113 = vld [vmem:[%s2 + $0x198] sm:$0xff]
  %v114 = vld [vmem:[%s2 + $0x1a0] sm:$0xff]
  %v115 = vld [vmem:[%s2 + $0x1a8] sm:$0xff]
  %v116 = vld [vmem:[%s2 + $0x1b0] sm:$0xff]
  %v117 = vld [vmem:[%s2 + $0x1b8] sm:$0xff]
  %v118 = vld [vmem:[%s2 + $0x1c0] sm:$0xff]
  %v119 = vld [vmem:[%s2 + $0x1c8] sm:$0xff]
  %v120 = vld [vmem:[%s2 + $0x1d0] sm:$0xff]
  %v121 = vld [vmem:[%s2 + $0x1d8] sm:$0xff]
  %v122 = vld [vmem:[%s2 + $0x1e0] sm:$0xff]
  %v123 = vld [vmem:[%s2 + $0x1e8] sm:$0xff]
  %v124 = vld [vmem:[%s2 + $0x1f0] sm:$0xff]
  %v125 = vld [vmem:[%s2 + $0x1f8] sm:$0xff]
  %v126 = vld [vmem:[%s2 + $0x200] sm:$0xff]
  %v127 = vld [vmem:[%s2 + $0x208] sm:$0xff]
  %v128 = vld [vmem:[%s2 + $0x210] sm:$0xff]
  %v129 = vld [vmem:[%s2 + $0x218] sm:$0xff]
  %v130 = vld [vmem:[%s2 + $0x220] sm:$0xff]
  %v131 = vld [vmem:[%s2 + $0x228] sm:$0xff]
  %v132 = vld [vmem:[%s2 + $0x230] sm:$0xff]
  %v133 = vld [vmem:[%s2 + $0x238] sm:$0xff]
  %v134 = vld [vmem:[%s2 + $0x240] sm:$0xff]
  %v135 = vld [vmem:[%s2 + $0x248] sm:$0xff]
  %v136 = vld [vmem:[%s2 + $0x250] sm:$0xff]
  %v137 = vld [vmem:[%s2 + $0x258] sm:$0xff]
  %v138 = vld [vmem:[%s2 + $0x260] sm:$0xff]
  %v139 = vld [vmem:[%s2 + $0x268] sm:$0xff]
  %v140 = vld [vmem:[%s2 + $0x270] sm:$0xff]
  %v141 = vld [vmem:[%s2 + $0x278] sm:$0xff]
  %v142 = vld [vmem:[%s2 + $0x280] sm:$0xff]
  %v143 = vld [vmem:[%s2 + $0x288] sm:$0xff]
  %v144 = vld [vmem:[%s2 + $0x290] sm:$0xff]
  %v145 = vld [vmem:[%s2 + $0x298] sm:$0xff]
  %v146 = vld [vmem:[%s2 + $0x2a0] sm:$0xff]
  %v147 = vld [vmem:[%s2 + $0x2a8] sm:$0xff]
  %v148 = vld [vmem:[%s2 + $0x2b0] sm:$0xff]
  %v149 = vld [vmem:[%s2 + $0x2b8] sm:$0xff]
  %v150 = vld [vmem:[%s2 + $0x2c0] sm:$0xff]
  %v151 = vld [vmem:[%s2 + $0x2c8] sm:$0xff]
  %v152 = vld [vmem:[%s2 + $0x2d0] sm:$0xff]
  %v153 = vld [vmem:[%s2 + $0x2d8] sm:$0xff]
  %v154 = vld [vmem:[%s2 + $0x2e0] sm:$0xff]
  %v155 = vld [vmem:[%s2 + $0x2e8] sm:$0xff]
  %v156 = vld [vmem:[%s2 + $0x2f0] sm:$0xff]
  %v157 = vld [vmem:[%s2 + $0x2f8] sm:$0xff]
  %v158 = vld [vmem:[%s2 + $0x300] sm:$0xff]
  %v159 = vld [vmem:[%s2 + $0x308] sm:$0xff]
  %v160 = vld [vmem:[%s2 + $0x310] sm:$0xff]
  %v161 = vld [vmem:[%s2 + $0x318] sm:$0xff]
  %v162 = vld [vmem:[%s2 + $0x320] sm:$0xff]
  %v163 = vld [vmem:[%s2 + $0x328] sm:$0xff]
  %v164 = vld [vmem:[%s2 + $0x330] sm:$0xff]
  %v165 = vld [vmem:[%s2 + $0x338] sm:$0xff]
  %v166 = vld [vmem:[%s2 + $0x340] sm:$0xff]
  %v167 = vld [vmem:[%s2 + $0x348] sm:$0xff]
  %v168 = vld [vmem:[%s2 + $0x350] sm:$0xff]
  %v169 = vld [vmem:[%s2 + $0x358] sm:$0xff]
  %v170 = vld [vmem:[%s2 + $0x360] sm:$0xff]
  %v171 = vld [vmem:[%s2 + $0x368] sm:$0xff]
  %v172 = vld [vmem:[%s2 + $0x370] sm:$0xff]
  %v173 = vld [vmem:[%s2 + $0x378] sm:$0xff]
  %v174 = vld [vmem:[%s2 + $0x380] sm:$0xff]
  %v175 = vld [vmem:[%s2 + $0x388] sm:$0xff]
  %v176 = vld [vmem:[%s2 + $0x390] sm:$0xff]
  %v177 = vld [vmem:[%s2 + $0x398] sm:$0xff]
  %v178 = vld [vmem:[%s2 + $0x3a0] sm:$0xff]
  %v179 = vld [vmem:[%s2 + $0x3a8] sm:$0xff]
  %v180 = vld [vmem:[%s2 + $0x3b0] sm:$0xff]
  %v181 = vld [vmem:[%s2 + $0x3b8] sm:$0xff]
  %v182 = vld [vmem:[%s2 + $0x3c0] sm:$0xff]
  %v183 = vld [vmem:[%s2 + $0x3c8] sm:$0xff]
  %v184 = vld [vmem:[%s2 + $0x3d0] sm:$0xff]
  %v185 = vld [vmem:[%s2 + $0x3d8] sm:$0xff]
  %v186 = vld [vmem:[%s2 + $0x3e0] sm:$0xff]
  %v187 = vld [vmem:[%s2 + $0x3e8] sm:$0xff]
  %v188 = vld [vmem:[%s2 + $0x3f0] sm:$0xff]
  %v189 = vld [vmem:[%s2 + $0x3f8] sm:$0xff]
  %v190 = vld [vmem:[%s2 + $0x400] sm:$0xff]
  %v191 = vld [vmem:[%s2 + $0x408] sm:$0xff]
  %v192 = vld [vmem:[%s2 + $0x410] sm:$0xff]
  %v193 = vld [vmem:[%s2 + $0x418] sm:$0xff]
  %v194 = vld [vmem:[%s2 + $0x420] sm:$0xff]
  %v195 = vld [vmem:[%s2 + $0x428] sm:$0xff]
  %v196 = vld [vmem:[%s2 + $0x430] sm:$0xff]
  %v197 = vld [vmem:[%s2 + $0x438] sm:$0xff]
  %v198 = vld [vmem:[%s2 + $0x440] sm:$0xff]
  %v199 = vld [vmem:[%s2 + $0x448] sm:$0xff]
  %v200 = vld [vmem:[%s2 + $0x450] sm:$0xff]
  %v201 = vld [vmem:[%s2 + $0x458] sm:$0xff]
  %v202 = vld [vmem:[%s2 + $0x460] sm:$0xff]
  %v203 = vld [vmem:[%s2 + $0x468] sm:$0xff]
  %v204 = vld [vmem:[%s2 + $0x470] sm:$0xff]
  %v205 = vld [vmem:[%s2 + $0x478] sm:$0xff]
  %v206 = vld [vmem:[%s2 + $0x480] sm:$0xff]
  %v207 = vld [vmem:[%s2 + $0x488] sm:$0xff]
  %v208 = vld [vmem:[%s2 + $0x490] sm:$0xff]
  %v209 = vld [vmem:[%s2 + $0x498] sm:$0xff]
  %v210 = vld [vmem:[%s2 + $0x4a0] sm:$0xff]
  %v211 = vld [vmem:[%s2 + $0x4a8] sm:$0xff]
  %v212 = vld [vmem:[%s2 + $0x4b0] sm:$0xff]
  %v213 = vld [vmem:[%s2 + $0x4b8] sm:$0xff]
  %v214 = vld [vmem:[%s2 + $0x4c0] sm:$0xff]
  %v215 = vld [vmem:[%s2 + $0x4c8] sm:$0xff]
  %v216 = vld [vmem:[%s2 + $0x4d0] sm:$0xff]
  %v217 = vld [vmem:[%s2 + $0x4d8] sm:$0xff]
  %v218 = vld [vmem:[%s2 + $0x4e0] sm:$0xff]
  %v219 = vld [vmem:[%s2 + $0x4e8] sm:$0xff]
  %v220 = vld [vmem:[%s2 + $0x4f0] sm:$0xff]
  %v221 = vld [vmem:[%s2 + $0x4f8] sm:$0xff]
  %v222 = vld [vmem:[%s2 + $0x500] sm:$0xff]
  %v223 = vld [vmem:[%s2 + $0x508] sm:$0xff]
  %v224 = vld [vmem:[%s2 + $0x510] sm:$0xff]
  %v225 = vld [vmem:[%s2 + $0x518] sm:$0xff]
  %v226 = vld [vmem:[%s2 + $0x520] sm:$0xff]
  %v227 = vld [vmem:[%s2 + $0x528] sm:$0xff]
  %v228 = vld [vmem:[%s2 + $0x530] sm:$0xff]
  %v229 = vld [vmem:[%s2 + $0x538] sm:$0xff]
  %v230 = vld [vmem:[%s2 + $0x540] sm:$0xff]
  %v231 = vld [vmem:[%s2 + $0x548] sm:$0xff]
  %v232 = vld [vmem:[%s2 + $0x550] sm:$0xff]
  %v233 = vld [vmem:[%s2 + $0x558] sm:$0xff]
  %v234 = vld [vmem:[%s2 + $0x560] sm:$0xff]
  %v235 = vld [vmem:[%s2 + $0x568] sm:$0xff]
  %v236 = vld [vmem:[%s2 + $0x570] sm:$0xff]
  %v237 = vld [vmem:[%s2 + $0x578] sm:$0xff]
  %v238 = vld [vmem:[%s2 + $0x580] sm:$0xff]
  %v239 = vld [vmem:[%s2 + $0x588] sm:$0xff]
  %v240 = vld [vmem:[%s2 + $0x590] sm:$0xff]
  %v241 = vld [vmem:[%s2 + $0x598] sm:$0xff]
  %v242 = vld [vmem:[%s2 + $0x5a0] sm:$0xff]
  %v243 = vld [vmem:[%s2 + $0x5a8] sm:$0xff]
  %v244 = vld [vmem:[%s2 + $0x5b0] sm:$0xff]
  %v245 = vld [vmem:[%s2 + $0x5b8] sm:$0xff]
  %v246 = vld [vmem:[%s2 + $0x5c0] sm:$0xff]
  %v247 = vld [vmem:[%s2 + $0x5c8] sm:$0xff]
  %v248 = vld [vmem:[%s2 + $0x5d0] sm:$0xff]
  %v249 = vld [vmem:[%s2 + $0x5d8] sm:$0xff]
  %v250 = vld [vmem:[%s2 + $0x5e0] sm:$0xff]
  %v251 = vld [vmem:[%s2 + $0x5e8] sm:$0xff]
  %v252 = vld [vmem:[%s2 + $0x5f0] sm:$0xff]
  %v253 = vld [vmem:[%s2 + $0x5f8] sm:$0xff]
  %v254 = vld [vmem:[%s2 + $0x600] sm:$0xff]
  %v255 = vld [vmem:[%s2 + $0x608] sm:$0xff]
  %v256 = vld [vmem:[%s2 + $0x610] sm:$0xff]
  %v257 = vld [vmem:[%s2 + $0x618] sm:$0xff]
  %v258 = vld [vmem:[%s2 + $0x620] sm:$0xff]
  %v259 = vld [vmem:[%s2 + $0x628] sm:$0xff]
  %v260 = vld [vmem:[%s2 + $0x630] sm:$0xff]
  %v261 = vld [vmem:[%s2 + $0x638] sm:$0xff]
  %v262 = vld [vmem:[%s2 + $0x640] sm:$0xff]
  %v263 = vld [vmem:[%s2 + $0x648] sm:$0xff]
  %v264 = vld [vmem:[%s2 + $0x650] sm:$0xff]
  %v265 = vld [vmem:[%s2 + $0x658] sm:$0xff]
  %v266 = vld [vmem:[%s2 + $0x660] sm:$0xff]
  %v267 = vld [vmem:[%s2 + $0x668] sm:$0xff]
  %v268 = vld [vmem:[%s2 + $0x670] sm:$0xff]
  %v269 = vld [vmem:[%s2 + $0x678] sm:$0xff]
  %v270 = vld [vmem:[%s2 + $0x680] sm:$0xff]
  %v271 = vld [vmem:[%s2 + $0x688] sm:$0xff]
  %v272 = vld [vmem:[%s2 + $0x690] sm:$0xff]
  %v273 = vld [vmem:[%s2 + $0x698] sm:$0xff]
  %v274 = vld [vmem:[%s2 + $0x6a0] sm:$0xff]
  %v275 = vld [vmem:[%s2 + $0x6a8] sm:$0xff]
  %v276 = vld [vmem:[%s2 + $0x6b0] sm:$0xff]
  %v277 = vld [vmem:[%s2 + $0x6b8] sm:$0xff]
  %v278 = vld [vmem:[%s2 + $0x6c0] sm:$0xff]
  %v279 = vld [vmem:[%s2 + $0x6c8] sm:$0xff]
  %v280 = vld [vmem:[%s2 + $0x6d0] sm:$0xff]
  %v281 = vld [vmem:[%s2 + $0x6d8] sm:$0xff]
  %v282 = vld [vmem:[%s2 + $0x6e0] sm:$0xff]
  %v283 = vld [vmem:[%s2 + $0x6e8] sm:$0xff]
  %v284 = vld [vmem:[%s2 + $0x6f0] sm:$0xff]
  %v285 = vld [vmem:[%s2 + $0x6f8] sm:$0xff]
  %v286 = vld [vmem:[%s2 + $0x700] sm:$0xff]
  %v287 = vld [vmem:[%s2 + $0x708] sm:$0xff]
  %v288 = vld [vmem:[%s2 + $0x710] sm:$0xff]
  %v289 = vld [vmem:[%s2 + $0x718] sm:$0xff]
  %v290 = vld [vmem:[%s2 + $0x720] sm:$0xff]
  %v291 = vld [vmem:[%s2 + $0x728] sm:$0xff]
  %v292 = vld [vmem:[%s2 + $0x730] sm:$0xff]
  %v293 = vld [vmem:[%s2 + $0x738] sm:$0xff]
  %v294 = vld [vmem:[%s2 + $0x740] sm:$0xff]
  %v295 = vld [vmem:[%s2 + $0x748] sm:$0xff]
  %v296 = vld [vmem:[%s2 + $0x750] sm:$0xff]
  %v297 = vld [vmem:[%s2 + $0x758] sm:$0xff]
  %v298 = vld [vmem:[%s2 + $0x760] sm:$0xff]
  %v299 = vld [vmem:[%s2 + $0x768] sm:$0xff]
  %v300 = vld [vmem:[%s2 + $0x770] sm:$0xff]
  %v301 = vld [vmem:[%s2 + $0x778] sm:$0xff]
  %v302 = vld [vmem:[%s2 + $0x780] sm:$0xff]
  %v303 = vld [vmem:[%s2 + $0x788] sm:$0xff]
  %v304 = vld [vmem:[%s2 + $0x790] sm:$0xff]
  %v305 = vld [vmem:[%s2 + $0x798] sm:$0xff]
  %v306 = vld [vmem:[%s2 + $0x7a0] sm:$0xff]
  %v307 = vld [vmem:[%s2 + $0x7a8] sm:$0xff]
  %v308 = vld [vmem:[%s2 + $0x7b0] sm:$0xff]
  %v309 = vld [vmem:[%s2 + $0x7b8] sm:$0xff]
  %v310 = vld [vmem:[%s2 + $0x7c0] sm:$0xff]
  %v311 = vld [vmem:[%s2 + $0x7c8] sm:$0xff]
  %v312 = vld [vmem:[%s2 + $0x7d0] sm:$0xff]
  %v313 = vld [vmem:[%s2 + $0x7d8] sm:$0xff]
  %v314 = vld [vmem:[%s2 + $0x7e0] sm:$0xff]
  %v315 = vld [vmem:[%s2 + $0x7e8] sm:$0xff]
  %v316 = vld [vmem:[%s2 + $0x7f0] sm:$0xff]
  %v317 = vld [vmem:[%s2 + $0x7f8] sm:$0xff]
  %v318 = vld [vmem:[%s3] sm:$0xf]
  %321 = vst [vmem:[#allocation1] ss:$4 sm:$0xff] %v60
  %s322 = scalar_lea.vmem [#allocation1], 32
  %323 = vst [vmem:[%s322] ss:$4 sm:$0xff] %v61
  %v324 = vld.sshfl [vmem:[#allocation1] sm:$0xff pattern:$0x73625140]
  %v325 = vld.sshfl [vmem:[#allocation1 + $0x8] sm:$0xff pattern:$0x73625140]
  %v326 = vld.sshfl [vmem:[#allocation1 + $0x10] sm:$0xff pattern:$0x73625140]
  %v327 = vld.sshfl [vmem:[#allocation1 + $0x18] sm:$0xff pattern:$0x73625140]
  %v328 = vld.sshfl [vmem:[#allocation1 + $0x20] sm:$0xff pattern:$0x73625140]
  %v329 = vld.sshfl [vmem:[#allocation1 + $0x28] sm:$0xff pattern:$0x73625140]
  %v330 = vld.sshfl [vmem:[#allocation1 + $0x30] sm:$0xff pattern:$0x73625140]
  %v331 = vld.sshfl [vmem:[#allocation1 + $0x38] sm:$0xff pattern:$0x73625140]
  %v340 = vpack.c.bf16 %v324, %v324
  %v341 = vpack.c.bf16 %v325, %v325
  %v342 = vpack.c.bf16 %v326, %v326
  %v343 = vpack.c.bf16 %v327, %v327
  %v344 = vpack.c.bf16 %v328, %v328
  %v345 = vpack.c.bf16 %v329, %v329
  %v346 = vpack.c.bf16 %v330, %v330
  %v347 = vpack.c.bf16 %v331, %v331
  %v349 = vperm.slane %v318, 0
  %v350 = vperm.slane %v318, 1
  %v351 = vperm.slane %v318, 2
  %v352 = vperm.slane %v318, 3
  %v613 = vunpack.c.l.b16 %v62
  %v614 = vunpack.c.h.b16 %v62
  %v615 = vunpack.c.l.b16 %v63
  %v616 = vunpack.c.h.b16 %v63
  %v617 = vunpack.c.l.b16 %v64
  %v618 = vunpack.c.h.b16 %v64
  %v619 = vunpack.c.l.b16 %v65
  %v620 = vunpack.c.h.b16 %v65
  %v621 = vunpack.c.l.b16 %v66
  %v622 = vunpack.c.h.b16 %v66
  %v623 = vunpack.c.l.b16 %v67
  %v624 = vunpack.c.h.b16 %v67
  %v625 = vunpack.c.l.b16 %v68
  %v626 = vunpack.c.h.b16 %v68
  %v627 = vunpack.c.l.b16 %v69
  %v628 = vunpack.c.h.b16 %v69
  %v629 = vunpack.c.l.b16 %v70
  %v630 = vunpack.c.h.b16 %v70
  %v631 = vunpack.c.l.b16 %v71
  %v632 = vunpack.c.h.b16 %v71
  %v633 = vunpack.c.l.b16 %v72
  %v634 = vunpack.c.h.b16 %v72
  %v635 = vunpack.c.l.b16 %v73
  %v636 = vunpack.c.h.b16 %v73
  %v637 = vunpack.c.l.b16 %v74
  %v638 = vunpack.c.h.b16 %v74
  %v639 = vunpack.c.l.b16 %v75
  %v640 = vunpack.c.h.b16 %v75
  %v641 = vunpack.c.l.b16 %v76
  %v642 = vunpack.c.h.b16 %v76
  %v643 = vunpack.c.l.b16 %v77
  %v644 = vunpack.c.h.b16 %v77
  %v645 = vunpack.c.l.b16 %v78
  %v646 = vunpack.c.h.b16 %v78
  %v647 = vunpack.c.l.b16 %v79
  %v648 = vunpack.c.h.b16 %v79
  %v649 = vunpack.c.l.b16 %v80
  %v650 = vunpack.c.h.b16 %v80
  %v651 = vunpack.c.l.b16 %v81
  %v652 = vunpack.c.h.b16 %v81
  %v653 = vunpack.c.l.b16 %v82
  %v654 = vunpack.c.h.b16 %v82
  %v655 = vunpack.c.l.b16 %v83
  %v656 = vunpack.c.h.b16 %v83
  %v657 = vunpack.c.l.b16 %v84
  %v658 = vunpack.c.h.b16 %v84
  %v659 = vunpack.c.l.b16 %v85
  %v660 = vunpack.c.h.b16 %v85
  %v661 = vunpack.c.l.b16 %v86
  %v662 = vunpack.c.h.b16 %v86
  %v663 = vunpack.c.l.b16 %v87
  %v664 = vunpack.c.h.b16 %v87
  %v665 = vunpack.c.l.b16 %v88
  %v666 = vunpack.c.h.b16 %v88
  %v667 = vunpack.c.l.b16 %v89
  %v668 = vunpack.c.h.b16 %v89
  %v669 = vunpack.c.l.b16 %v90
  %v670 = vunpack.c.h.b16 %v90
  %v671 = vunpack.c.l.b16 %v91
  %v672 = vunpack.c.h.b16 %v91
  %v673 = vunpack.c.l.b16 %v92
  %v674 = vunpack.c.h.b16 %v92
  %v675 = vunpack.c.l.b16 %v93
  %v676 = vunpack.c.h.b16 %v93
  %v677 = vunpack.c.l.b16 %v94
  %v678 = vunpack.c.h.b16 %v94
  %v679 = vunpack.c.l.b16 %v95
  %v680 = vunpack.c.h.b16 %v95
  %v681 = vunpack.c.l.b16 %v96
  %v682 = vunpack.c.h.b16 %v96
  %v683 = vunpack.c.l.b16 %v97
  %v684 = vunpack.c.h.b16 %v97
  %v685 = vunpack.c.l.b16 %v98
  %v686 = vunpack.c.h.b16 %v98
  %v687 = vunpack.c.l.b16 %v99
  %v688 = vunpack.c.h.b16 %v99
  %v689 = vunpack.c.l.b16 %v100
  %v690 = vunpack.c.h.b16 %v100
  %v691 = vunpack.c.l.b16 %v101
  %v692 = vunpack.c.h.b16 %v101
  %v693 = vunpack.c.l.b16 %v102
  %v694 = vunpack.c.h.b16 %v102
  %v695 = vunpack.c.l.b16 %v103
  %v696 = vunpack.c.h.b16 %v103
  %v697 = vunpack.c.l.b16 %v104
  %v698 = vunpack.c.h.b16 %v104
  %v699 = vunpack.c.l.b16 %v105
  %v700 = vunpack.c.h.b16 %v105
  %v701 = vunpack.c.l.b16 %v106
  %v702 = vunpack.c.h.b16 %v106
  %v703 = vunpack.c.l.b16 %v107
  %v704 = vunpack.c.h.b16 %v107
  %v705 = vunpack.c.l.b16 %v108
  %v706 = vunpack.c.h.b16 %v108
  %v707 = vunpack.c.l.b16 %v109
  %v708 = vunpack.c.h.b16 %v109
  %v709 = vunpack.c.l.b16 %v110
  %v710 = vunpack.c.h.b16 %v110
  %v711 = vunpack.c.l.b16 %v111
  %v712 = vunpack.c.h.b16 %v111
  %v713 = vunpack.c.l.b16 %v112
  %v714 = vunpack.c.h.b16 %v112
  %v715 = vunpack.c.l.b16 %v113
  %v716 = vunpack.c.h.b16 %v113
  %v717 = vunpack.c.l.b16 %v114
  %v718 = vunpack.c.h.b16 %v114
  %v719 = vunpack.c.l.b16 %v115
  %v720 = vunpack.c.h.b16 %v115
  %v721 = vunpack.c.l.b16 %v116
  %v722 = vunpack.c.h.b16 %v116
  %v723 = vunpack.c.l.b16 %v117
  %v724 = vunpack.c.h.b16 %v117
  %v725 = vunpack.c.l.b16 %v118
  %v726 = vunpack.c.h.b16 %v118
  %v727 = vunpack.c.l.b16 %v119
  %v728 = vunpack.c.h.b16 %v119
  %v729 = vunpack.c.l.b16 %v120
  %v730 = vunpack.c.h.b16 %v120
  %v731 = vunpack.c.l.b16 %v121
  %v732 = vunpack.c.h.b16 %v121
  %v733 = vunpack.c.l.b16 %v122
  %v734 = vunpack.c.h.b16 %v122
  %v735 = vunpack.c.l.b16 %v123
  %v736 = vunpack.c.h.b16 %v123
  %v737 = vunpack.c.l.b16 %v124
  %v738 = vunpack.c.h.b16 %v124
  %v739 = vunpack.c.l.b16 %v125
  %v740 = vunpack.c.h.b16 %v125
  %v741 = vunpack.c.l.b16 %v126
  %v742 = vunpack.c.h.b16 %v126
  %v743 = vunpack.c.l.b16 %v127
  %v744 = vunpack.c.h.b16 %v127
  %v745 = vunpack.c.l.b16 %v128
  %v746 = vunpack.c.h.b16 %v128
  %v747 = vunpack.c.l.b16 %v129
  %v748 = vunpack.c.h.b16 %v129
  %v749 = vunpack.c.l.b16 %v130
  %v750 = vunpack.c.h.b16 %v130
  %v751 = vunpack.c.l.b16 %v131
  %v752 = vunpack.c.h.b16 %v131
  %v753 = vunpack.c.l.b16 %v132
  %v754 = vunpack.c.h.b16 %v132
  %v755 = vunpack.c.l.b16 %v133
  %v756 = vunpack.c.h.b16 %v133
  %v757 = vunpack.c.l.b16 %v134
  %v758 = vunpack.c.h.b16 %v134
  %v759 = vunpack.c.l.b16 %v135
  %v760 = vunpack.c.h.b16 %v135
  %v761 = vunpack.c.l.b16 %v136
  %v762 = vunpack.c.h.b16 %v136
  %v763 = vunpack.c.l.b16 %v137
  %v764 = vunpack.c.h.b16 %v137
  %v765 = vunpack.c.l.b16 %v138
  %v766 = vunpack.c.h.b16 %v138
  %v767 = vunpack.c.l.b16 %v139
  %v768 = vunpack.c.h.b16 %v139
  %v769 = vunpack.c.l.b16 %v140
  %v770 = vunpack.c.h.b16 %v140
  %v771 = vunpack.c.l.b16 %v141
  %v772 = vunpack.c.h.b16 %v141
  %v773 = vunpack.c.l.b16 %v142
  %v774 = vunpack.c.h.b16 %v142
  %v775 = vunpack.c.l.b16 %v143
  %v776 = vunpack.c.h.b16 %v143
  %v777 = vunpack.c.l.b16 %v144
  %v778 = vunpack.c.h.b16 %v144
  %v779 = vunpack.c.l.b16 %v145
  %v780 = vunpack.c.h.b16 %v145
  %v781 = vunpack.c.l.b16 %v146
  %v782 = vunpack.c.h.b16 %v146
  %v783 = vunpack.c.l.b16 %v147
  %v784 = vunpack.c.h.b16 %v147
  %v785 = vunpack.c.l.b16 %v148
  %v786 = vunpack.c.h.b16 %v148
  %v787 = vunpack.c.l.b16 %v149
  %v788 = vunpack.c.h.b16 %v149
  %v789 = vunpack.c.l.b16 %v150
  %v790 = vunpack.c.h.b16 %v150
  %v791 = vunpack.c.l.b16 %v151
  %v792 = vunpack.c.h.b16 %v151
  %v793 = vunpack.c.l.b16 %v152
  %v794 = vunpack.c.h.b16 %v152
  %v795 = vunpack.c.l.b16 %v153
  %v796 = vunpack.c.h.b16 %v153
  %v797 = vunpack.c.l.b16 %v154
  %v798 = vunpack.c.h.b16 %v154
  %v799 = vunpack.c.l.b16 %v155
  %v800 = vunpack.c.h.b16 %v155
  %v801 = vunpack.c.l.b16 %v156
  %v802 = vunpack.c.h.b16 %v156
  %v803 = vunpack.c.l.b16 %v157
  %v804 = vunpack.c.h.b16 %v157
  %v805 = vunpack.c.l.b16 %v158
  %v806 = vunpack.c.h.b16 %v158
  %v807 = vunpack.c.l.b16 %v159
  %v808 = vunpack.c.h.b16 %v159
  %v809 = vunpack.c.l.b16 %v160
  %v810 = vunpack.c.h.b16 %v160
  %v811 = vunpack.c.l.b16 %v161
  %v812 = vunpack.c.h.b16 %v161
  %v813 = vunpack.c.l.b16 %v162
  %v814 = vunpack.c.h.b16 %v162
  %v815 = vunpack.c.l.b16 %v163
  %v816 = vunpack.c.h.b16 %v163
  %v817 = vunpack.c.l.b16 %v164
  %v818 = vunpack.c.h.b16 %v164
  %v819 = vunpack.c.l.b16 %v165
  %v820 = vunpack.c.h.b16 %v165
  %v821 = vunpack.c.l.b16 %v166
  %v822 = vunpack.c.h.b16 %v166
  %v823 = vunpack.c.l.b16 %v167
  %v824 = vunpack.c.h.b16 %v167
  %v825 = vunpack.c.l.b16 %v168
  %v826 = vunpack.c.h.b16 %v168
  %v827 = vunpack.c.l.b16 %v169
  %v828 = vunpack.c.h.b16 %v169
  %v829 = vunpack.c.l.b16 %v170
  %v830 = vunpack.c.h.b16 %v170
  %v831 = vunpack.c.l.b16 %v171
  %v832 = vunpack.c.h.b16 %v171
  %v833 = vunpack.c.l.b16 %v172
  %v834 = vunpack.c.h.b16 %v172
  %v835 = vunpack.c.l.b16 %v173
  %v836 = vunpack.c.h.b16 %v173
  %v837 = vunpack.c.l.b16 %v174
  %v838 = vunpack.c.h.b16 %v174
  %v839 = vunpack.c.l.b16 %v175
  %v840 = vunpack.c.h.b16 %v175
  %v841 = vunpack.c.l.b16 %v176
  %v842 = vunpack.c.h.b16 %v176
  %v843 = vunpack.c.l.b16 %v177
  %v844 = vunpack.c.h.b16 %v177
  %v845 = vunpack.c.l.b16 %v178
  %v846 = vunpack.c.h.b16 %v178
  %v847 = vunpack.c.l.b16 %v179
  %v848 = vunpack.c.h.b16 %v179
  %v849 = vunpack.c.l.b16 %v180
  %v850 = vunpack.c.h.b16 %v180
  %v851 = vunpack.c.l.b16 %v181
  %v852 = vunpack.c.h.b16 %v181
  %v853 = vunpack.c.l.b16 %v182
  %v854 = vunpack.c.h.b16 %v182
  %v855 = vunpack.c.l.b16 %v183
  %v856 = vunpack.c.h.b16 %v183
  %v857 = vunpack.c.l.b16 %v184
  %v858 = vunpack.c.h.b16 %v184
  %v859 = vunpack.c.l.b16 %v185
  %v860 = vunpack.c.h.b16 %v185
  %v861 = vunpack.c.l.b16 %v186
  %v862 = vunpack.c.h.b16 %v186
  %v863 = vunpack.c.l.b16 %v187
  %v864 = vunpack.c.h.b16 %v187
  %v865 = vunpack.c.l.b16 %v188
  %v866 = vunpack.c.h.b16 %v188
  %v867 = vunpack.c.l.b16 %v189
  %v868 = vunpack.c.h.b16 %v189
  %v869 = vunpack.c.l.b16 %v190
  %v870 = vunpack.c.h.b16 %v190
  %v871 = vunpack.c.l.b16 %v191
  %v872 = vunpack.c.h.b16 %v191
  %v873 = vunpack.c.l.b16 %v192
  %v874 = vunpack.c.h.b16 %v192
  %v875 = vunpack.c.l.b16 %v193
  %v876 = vunpack.c.h.b16 %v193
  %v877 = vunpack.c.l.b16 %v194
  %v878 = vunpack.c.h.b16 %v194
  %v879 = vunpack.c.l.b16 %v195
  %v880 = vunpack.c.h.b16 %v195
  %v881 = vunpack.c.l.b16 %v196
  %v882 = vunpack.c.h.b16 %v196
  %v883 = vunpack.c.l.b16 %v197
  %v884 = vunpack.c.h.b16 %v197
  %v885 = vunpack.c.l.b16 %v198
  %v886 = vunpack.c.h.b16 %v198
  %v887 = vunpack.c.l.b16 %v199
  %v888 = vunpack.c.h.b16 %v199
  %v889 = vunpack.c.l.b16 %v200
  %v890 = vunpack.c.h.b16 %v200
  %v891 = vunpack.c.l.b16 %v201
  %v892 = vunpack.c.h.b16 %v201
  %v893 = vunpack.c.l.b16 %v202
  %v894 = vunpack.c.h.b16 %v202
  %v895 = vunpack.c.l.b16 %v203
  %v896 = vunpack.c.h.b16 %v203
  %v897 = vunpack.c.l.b16 %v204
  %v898 = vunpack.c.h.b16 %v204
  %v899 = vunpack.c.l.b16 %v205
  %v900 = vunpack.c.h.b16 %v205
  %v901 = vunpack.c.l.b16 %v206
  %v902 = vunpack.c.h.b16 %v206
  %v903 = vunpack.c.l.b16 %v207
  %v904 = vunpack.c.h.b16 %v207
  %v905 = vunpack.c.l.b16 %v208
  %v906 = vunpack.c.h.b16 %v208
  %v907 = vunpack.c.l.b16 %v209
  %v908 = vunpack.c.h.b16 %v209
  %v909 = vunpack.c.l.b16 %v210
  %v910 = vunpack.c.h.b16 %v210
  %v911 = vunpack.c.l.b16 %v211
  %v912 = vunpack.c.h.b16 %v211
  %v913 = vunpack.c.l.b16 %v212
  %v914 = vunpack.c.h.b16 %v212
  %v915 = vunpack.c.l.b16 %v213
  %v916 = vunpack.c.h.b16 %v213
  %v917 = vunpack.c.l.b16 %v214
  %v918 = vunpack.c.h.b16 %v214
  %v919 = vunpack.c.l.b16 %v215
  %v920 = vunpack.c.h.b16 %v215
  %v921 = vunpack.c.l.b16 %v216
  %v922 = vunpack.c.h.b16 %v216
  %v923 = vunpack.c.l.b16 %v217
  %v924 = vunpack.c.h.b16 %v217
  %v925 = vunpack.c.l.b16 %v218
  %v926 = vunpack.c.h.b16 %v218
  %v927 = vunpack.c.l.b16 %v219
  %v928 = vunpack.c.h.b16 %v219
  %v929 = vunpack.c.l.b16 %v220
  %v930 = vunpack.c.h.b16 %v220
  %v931 = vunpack.c.l.b16 %v221
  %v932 = vunpack.c.h.b16 %v221
  %v933 = vunpack.c.l.b16 %v222
  %v934 = vunpack.c.h.b16 %v222
  %v935 = vunpack.c.l.b16 %v223
  %v936 = vunpack.c.h.b16 %v223
  %v937 = vunpack.c.l.b16 %v224
  %v938 = vunpack.c.h.b16 %v224
  %v939 = vunpack.c.l.b16 %v225
  %v940 = vunpack.c.h.b16 %v225
  %v941 = vunpack.c.l.b16 %v226
  %v942 = vunpack.c.h.b16 %v226
  %v943 = vunpack.c.l.b16 %v227
  %v944 = vunpack.c.h.b16 %v227
  %v945 = vunpack.c.l.b16 %v228
  %v946 = vunpack.c.h.b16 %v228
  %v947 = vunpack.c.l.b16 %v229
  %v948 = vunpack.c.h.b16 %v229
  %v949 = vunpack.c.l.b16 %v230
  %v950 = vunpack.c.h.b16 %v230
  %v951 = vunpack.c.l.b16 %v231
  %v952 = vunpack.c.h.b16 %v231
  %v953 = vunpack.c.l.b16 %v232
  %v954 = vunpack.c.h.b16 %v232
  %v955 = vunpack.c.l.b16 %v233
  %v956 = vunpack.c.h.b16 %v233
  %v957 = vunpack.c.l.b16 %v234
  %v958 = vunpack.c.h.b16 %v234
  %v959 = vunpack.c.l.b16 %v235
  %v960 = vunpack.c.h.b16 %v235
  %v961 = vunpack.c.l.b16 %v236
  %v962 = vunpack.c.h.b16 %v236
  %v963 = vunpack.c.l.b16 %v237
  %v964 = vunpack.c.h.b16 %v237
  %v965 = vunpack.c.l.b16 %v238
  %v966 = vunpack.c.h.b16 %v238
  %v967 = vunpack.c.l.b16 %v239
  %v968 = vunpack.c.h.b16 %v239
  %v969 = vunpack.c.l.b16 %v240
  %v970 = vunpack.c.h.b16 %v240
  %v971 = vunpack.c.l.b16 %v241
  %v972 = vunpack.c.h.b16 %v241
  %v973 = vunpack.c.l.b16 %v242
  %v974 = vunpack.c.h.b16 %v242
  %v975 = vunpack.c.l.b16 %v243
  %v976 = vunpack.c.h.b16 %v243
  %v977 = vunpack.c.l.b16 %v244
  %v978 = vunpack.c.h.b16 %v244
  %v979 = vunpack.c.l.b16 %v245
  %v980 = vunpack.c.h.b16 %v245
  %v981 = vunpack.c.l.b16 %v246
  %v982 = vunpack.c.h.b16 %v246
  %v983 = vunpack.c.l.b16 %v247
  %v984 = vunpack.c.h.b16 %v247
  %v985 = vunpack.c.l.b16 %v248
  %v986 = vunpack.c.h.b16 %v248
  %v987 = vunpack.c.l.b16 %v249
  %v988 = vunpack.c.h.b16 %v249
  %v989 = vunpack.c.l.b16 %v250
  %v990 = vunpack.c.h.b16 %v250
  %v991 = vunpack.c.l.b16 %v251
  %v992 = vunpack.c.h.b16 %v251
  %v993 = vunpack.c.l.b16 %v252
  %v994 = vunpack.c.h.b16 %v252
  %v995 = vunpack.c.l.b16 %v253
  %v996 = vunpack.c.h.b16 %v253
  %v997 = vunpack.c.l.b16 %v254
  %v998 = vunpack.c.h.b16 %v254
  %v999 = vunpack.c.l.b16 %v255
  %v1000 = vunpack.c.h.b16 %v255
  %v1001 = vunpack.c.l.b16 %v256
  %v1002 = vunpack.c.h.b16 %v256
  %v1003 = vunpack.c.l.b16 %v257
  %v1004 = vunpack.c.h.b16 %v257
  %v1005 = vunpack.c.l.b16 %v258
  %v1006 = vunpack.c.h.b16 %v258
  %v1007 = vunpack.c.l.b16 %v259
  %v1008 = vunpack.c.h.b16 %v259
  %v1009 = vunpack.c.l.b16 %v260
  %v1010 = vunpack.c.h.b16 %v260
  %v1011 = vunpack.c.l.b16 %v261
  %v1012 = vunpack.c.h.b16 %v261
  %v1013 = vunpack.c.l.b16 %v262
  %v1014 = vunpack.c.h.b16 %v262
  %v1015 = vunpack.c.l.b16 %v263
  %v1016 = vunpack.c.h.b16 %v263
  %v1017 = vunpack.c.l.b16 %v264
  %v1018 = vunpack.c.h.b16 %v264
  %v1019 = vunpack.c.l.b16 %v265
  %v1020 = vunpack.c.h.b16 %v265
  %v1021 = vunpack.c.l.b16 %v266
  %v1022 = vunpack.c.h.b16 %v266
  %v1023 = vunpack.c.l.b16 %v267
  %v1024 = vunpack.c.h.b16 %v267
  %v1025 = vunpack.c.l.b16 %v268
  %v1026 = vunpack.c.h.b16 %v268
  %v1027 = vunpack.c.l.b16 %v269
  %v1028 = vunpack.c.h.b16 %v269
  %v1029 = vunpack.c.l.b16 %v270
  %v1030 = vunpack.c.h.b16 %v270
  %v1031 = vunpack.c.l.b16 %v271
  %v1032 = vunpack.c.h.b16 %v271
  %v1033 = vunpack.c.l.b16 %v272
  %v1034 = vunpack.c.h.b16 %v272
  %v1035 = vunpack.c.l.b16 %v273
  %v1036 = vunpack.c.h.b16 %v273
  %v1037 = vunpack.c.l.b16 %v274
  %v1038 = vunpack.c.h.b16 %v274
  %v1039 = vunpack.c.l.b16 %v275
  %v1040 = vunpack.c.h.b16 %v275
  %v1041 = vunpack.c.l.b16 %v276
  %v1042 = vunpack.c.h.b16 %v276
  %v1043 = vunpack.c.l.b16 %v277
  %v1044 = vunpack.c.h.b16 %v277
  %v1045 = vunpack.c.l.b16 %v278
  %v1046 = vunpack.c.h.b16 %v278
  %v1047 = vunpack.c.l.b16 %v279
  %v1048 = vunpack.c.h.b16 %v279
  %v1049 = vunpack.c.l.b16 %v280
  %v1050 = vunpack.c.h.b16 %v280
  %v1051 = vunpack.c.l.b16 %v281
  %v1052 = vunpack.c.h.b16 %v281
  %v1053 = vunpack.c.l.b16 %v282
  %v1054 = vunpack.c.h.b16 %v282
  %v1055 = vunpack.c.l.b16 %v283
  %v1056 = vunpack.c.h.b16 %v283
  %v1057 = vunpack.c.l.b16 %v284
  %v1058 = vunpack.c.h.b16 %v284
  %v1059 = vunpack.c.l.b16 %v285
  %v1060 = vunpack.c.h.b16 %v285
  %v1061 = vunpack.c.l.b16 %v286
  %v1062 = vunpack.c.h.b16 %v286
  %v1063 = vunpack.c.l.b16 %v287
  %v1064 = vunpack.c.h.b16 %v287
  %v1065 = vunpack.c.l.b16 %v288
  %v1066 = vunpack.c.h.b16 %v288
  %v1067 = vunpack.c.l.b16 %v289
  %v1068 = vunpack.c.h.b16 %v289
  %v1069 = vunpack.c.l.b16 %v290
  %v1070 = vunpack.c.h.b16 %v290
  %v1071 = vunpack.c.l.b16 %v291
  %v1072 = vunpack.c.h.b16 %v291
  %v1073 = vunpack.c.l.b16 %v292
  %v1074 = vunpack.c.h.b16 %v292
  %v1075 = vunpack.c.l.b16 %v293
  %v1076 = vunpack.c.h.b16 %v293
  %v1077 = vunpack.c.l.b16 %v294
  %v1078 = vunpack.c.h.b16 %v294
  %v1079 = vunpack.c.l.b16 %v295
  %v1080 = vunpack.c.h.b16 %v295
  %v1081 = vunpack.c.l.b16 %v296
  %v1082 = vunpack.c.h.b16 %v296
  %v1083 = vunpack.c.l.b16 %v297
  %v1084 = vunpack.c.h.b16 %v297
  %v1085 = vunpack.c.l.b16 %v298
  %v1086 = vunpack.c.h.b16 %v298
  %v1087 = vunpack.c.l.b16 %v299
  %v1088 = vunpack.c.h.b16 %v299
  %v1089 = vunpack.c.l.b16 %v300
  %v1090 = vunpack.c.h.b16 %v300
  %v1091 = vunpack.c.l.b16 %v301
  %v1092 = vunpack.c.h.b16 %v301
  %v1093 = vunpack.c.l.b16 %v302
  %v1094 = vunpack.c.h.b16 %v302
  %v1095 = vunpack.c.l.b16 %v303
  %v1096 = vunpack.c.h.b16 %v303
  %v1097 = vunpack.c.l.b16 %v304
  %v1098 = vunpack.c.h.b16 %v304
  %v1099 = vunpack.c.l.b16 %v305
  %v1100 = vunpack.c.h.b16 %v305
  %v1101 = vunpack.c.l.b16 %v306
  %v1102 = vunpack.c.h.b16 %v306
  %v1103 = vunpack.c.l.b16 %v307
  %v1104 = vunpack.c.h.b16 %v307
  %v1105 = vunpack.c.l.b16 %v308
  %v1106 = vunpack.c.h.b16 %v308
  %v1107 = vunpack.c.l.b16 %v309
  %v1108 = vunpack.c.h.b16 %v309
  %v1109 = vunpack.c.l.b16 %v310
  %v1110 = vunpack.c.h.b16 %v310
  %v1111 = vunpack.c.l.b16 %v311
  %v1112 = vunpack.c.h.b16 %v311
  %v1113 = vunpack.c.l.b16 %v312
  %v1114 = vunpack.c.h.b16 %v312
  %v1115 = vunpack.c.l.b16 %v313
  %v1116 = vunpack.c.h.b16 %v313
  %v1117 = vunpack.c.l.b16 %v314
  %v1118 = vunpack.c.h.b16 %v314
  %v1119 = vunpack.c.l.b16 %v315
  %v1120 = vunpack.c.h.b16 %v315
  %v1121 = vunpack.c.l.b16 %v316
  %v1122 = vunpack.c.h.b16 %v316
  %v1123 = vunpack.c.l.b16 %v317
  %v1124 = vunpack.c.h.b16 %v317
  %v1125 = vpack.c.b16 %v617, %v613
  %v1126 = vpack.c.b16 %v618, %v614
  %v1127 = vpack.c.b16 %v619, %v615
  %v1128 = vpack.c.b16 %v620, %v616
  %v1129 = vpack.c.b16 %v625, %v621
  %v1130 = vpack.c.b16 %v626, %v622
  %v1131 = vpack.c.b16 %v627, %v623
  %v1132 = vpack.c.b16 %v628, %v624
  %v1133 = vpack.c.b16 %v633, %v629
  %v1134 = vpack.c.b16 %v634, %v630
  %v1135 = vpack.c.b16 %v635, %v631
  %v1136 = vpack.c.b16 %v636, %v632
  %v1137 = vpack.c.b16 %v641, %v637
  %v1138 = vpack.c.b16 %v642, %v638
  %v1139 = vpack.c.b16 %v643, %v639
  %v1140 = vpack.c.b16 %v644, %v640
  %v1141 = vpack.c.b16 %v649, %v645
  %v1142 = vpack.c.b16 %v650, %v646
  %v1143 = vpack.c.b16 %v651, %v647
  %v1144 = vpack.c.b16 %v652, %v648
  %v1145 = vpack.c.b16 %v657, %v653
  %v1146 = vpack.c.b16 %v658, %v654
  %v1147 = vpack.c.b16 %v659, %v655
  %v1148 = vpack.c.b16 %v660, %v656
  %v1149 = vpack.c.b16 %v665, %v661
  %v1150 = vpack.c.b16 %v666, %v662
  %v1151 = vpack.c.b16 %v667, %v663
  %v1152 = vpack.c.b16 %v668, %v664
  %v1153 = vpack.c.b16 %v673, %v669
  %v1154 = vpack.c.b16 %v674, %v670
  %v1155 = vpack.c.b16 %v675, %v671
  %v1156 = vpack.c.b16 %v676, %v672
  %v1157 = vpack.c.b16 %v681, %v677
  %v1158 = vpack.c.b16 %v682, %v678
  %v1159 = vpack.c.b16 %v683, %v679
  %v1160 = vpack.c.b16 %v684, %v680
  %v1161 = vpack.c.b16 %v689, %v685
  %v1162 = vpack.c.b16 %v690, %v686
  %v1163 = vpack.c.b16 %v691, %v687
  %v1164 = vpack.c.b16 %v692, %v688
  %v1165 = vpack.c.b16 %v697, %v693
  %v1166 = vpack.c.b16 %v698, %v694
  %v1167 = vpack.c.b16 %v699, %v695
  %v1168 = vpack.c.b16 %v700, %v696
  %v1169 = vpack.c.b16 %v705, %v701
  %v1170 = vpack.c.b16 %v706, %v702
  %v1171 = vpack.c.b16 %v707, %v703
  %v1172 = vpack.c.b16 %v708, %v704
  %v1173 = vpack.c.b16 %v713, %v709
  %v1174 = vpack.c.b16 %v714, %v710
  %v1175 = vpack.c.b16 %v715, %v711
  %v1176 = vpack.c.b16 %v716, %v712
  %v1177 = vpack.c.b16 %v721, %v717
  %v1178 = vpack.c.b16 %v722, %v718
  %v1179 = vpack.c.b16 %v723, %v719
  %v1180 = vpack.c.b16 %v724, %v720
  %v1181 = vpack.c.b16 %v729, %v725
  %v1182 = vpack.c.b16 %v730, %v726
  %v1183 = vpack.c.b16 %v731, %v727
  %v1184 = vpack.c.b16 %v732, %v728
  %v1185 = vpack.c.b16 %v737, %v733
  %v1186 = vpack.c.b16 %v738, %v734
  %v1187 = vpack.c.b16 %v739, %v735
  %v1188 = vpack.c.b16 %v740, %v736
  %v1189 = vpack.c.b16 %v745, %v741
  %v1190 = vpack.c.b16 %v746, %v742
  %v1191 = vpack.c.b16 %v747, %v743
  %v1192 = vpack.c.b16 %v748, %v744
  %v1193 = vpack.c.b16 %v753, %v749
  %v1194 = vpack.c.b16 %v754, %v750
  %v1195 = vpack.c.b16 %v755, %v751
  %v1196 = vpack.c.b16 %v756, %v752
  %v1197 = vpack.c.b16 %v761, %v757
  %v1198 = vpack.c.b16 %v762, %v758
  %v1199 = vpack.c.b16 %v763, %v759
  %v1200 = vpack.c.b16 %v764, %v760
  %v1201 = vpack.c.b16 %v769, %v765
  %v1202 = vpack.c.b16 %v770, %v766
  %v1203 = vpack.c.b16 %v771, %v767
  %v1204 = vpack.c.b16 %v772, %v768
  %v1205 = vpack.c.b16 %v777, %v773
  %v1206 = vpack.c.b16 %v778, %v774
  %v1207 = vpack.c.b16 %v779, %v775
  %v1208 = vpack.c.b16 %v780, %v776
  %v1209 = vpack.c.b16 %v785, %v781
  %v1210 = vpack.c.b16 %v786, %v782
  %v1211 = vpack.c.b16 %v787, %v783
  %v1212 = vpack.c.b16 %v788, %v784
  %v1213 = vpack.c.b16 %v793, %v789
  %v1214 = vpack.c.b16 %v794, %v790
  %v1215 = vpack.c.b16 %v795, %v791
  %v1216 = vpack.c.b16 %v796, %v792
  %v1217 = vpack.c.b16 %v801, %v797
  %v1218 = vpack.c.b16 %v802, %v798
  %v1219 = vpack.c.b16 %v803, %v799
  %v1220 = vpack.c.b16 %v804, %v800
  %v1221 = vpack.c.b16 %v809, %v805
  %v1222 = vpack.c.b16 %v810, %v806
  %v1223 = vpack.c.b16 %v811, %v807
  %v1224 = vpack.c.b16 %v812, %v808
  %v1225 = vpack.c.b16 %v817, %v813
  %v1226 = vpack.c.b16 %v818, %v814
  %v1227 = vpack.c.b16 %v819, %v815
  %v1228 = vpack.c.b16 %v820, %v816
  %v1229 = vpack.c.b16 %v825, %v821
  %v1230 = vpack.c.b16 %v826, %v822
  %v1231 = vpack.c.b16 %v827, %v823
  %v1232 = vpack.c.b16 %v828, %v824
  %v1233 = vpack.c.b16 %v833, %v829
  %v1234 = vpack.c.b16 %v834, %v830
  %v1235 = vpack.c.b16 %v835, %v831
  %v1236 = vpack.c.b16 %v836, %v832
  %v1237 = vpack.c.b16 %v841, %v837
  %v1238 = vpack.c.b16 %v842, %v838
  %v1239 = vpack.c.b16 %v843, %v839
  %v1240 = vpack.c.b16 %v844, %v840
  %v1241 = vpack.c.b16 %v849, %v845
  %v1242 = vpack.c.b16 %v850, %v846
  %v1243 = vpack.c.b16 %v851, %v847
  %v1244 = vpack.c.b16 %v852, %v848
  %v1245 = vpack.c.b16 %v857, %v853
  %v1246 = vpack.c.b16 %v858, %v854
  %v1247 = vpack.c.b16 %v859, %v855
  %v1248 = vpack.c.b16 %v860, %v856
  %v1249 = vpack.c.b16 %v865, %v861
  %v1250 = vpack.c.b16 %v866, %v862
  %v1251 = vpack.c.b16 %v867, %v863
  %v1252 = vpack.c.b16 %v868, %v864
  %v1253 = vpack.c.b16 %v873, %v869
  %v1254 = vpack.c.b16 %v874, %v870
  %v1255 = vpack.c.b16 %v875, %v871
  %v1256 = vpack.c.b16 %v876, %v872
  %v1257 = vpack.c.b16 %v881, %v877
  %v1258 = vpack.c.b16 %v882, %v878
  %v1259 = vpack.c.b16 %v883, %v879
  %v1260 = vpack.c.b16 %v884, %v880
  %v1261 = vpack.c.b16 %v889, %v885
  %v1262 = vpack.c.b16 %v890, %v886
  %v1263 = vpack.c.b16 %v891, %v887
  %v1264 = vpack.c.b16 %v892, %v888
  %v1265 = vpack.c.b16 %v897, %v893
  %v1266 = vpack.c.b16 %v898, %v894
  %v1267 = vpack.c.b16 %v899, %v895
  %v1268 = vpack.c.b16 %v900, %v896
  %v1269 = vpack.c.b16 %v905, %v901
  %v1270 = vpack.c.b16 %v906, %v902
  %v1271 = vpack.c.b16 %v907, %v903
  %v1272 = vpack.c.b16 %v908, %v904
  %v1273 = vpack.c.b16 %v913, %v909
  %v1274 = vpack.c.b16 %v914, %v910
  %v1275 = vpack.c.b16 %v915, %v911
  %v1276 = vpack.c.b16 %v916, %v912
  %v1277 = vpack.c.b16 %v921, %v917
  %v1278 = vpack.c.b16 %v922, %v918
  %v1279 = vpack.c.b16 %v923, %v919
  %v1280 = vpack.c.b16 %v924, %v920
  %v1281 = vpack.c.b16 %v929, %v925
  %v1282 = vpack.c.b16 %v930, %v926
  %v1283 = vpack.c.b16 %v931, %v927
  %v1284 = vpack.c.b16 %v932, %v928
  %v1285 = vpack.c.b16 %v937, %v933
  %v1286 = vpack.c.b16 %v938, %v934
  %v1287 = vpack.c.b16 %v939, %v935
  %v1288 = vpack.c.b16 %v940, %v936
  %v1289 = vpack.c.b16 %v945, %v941
  %v1290 = vpack.c.b16 %v946, %v942
  %v1291 = vpack.c.b16 %v947, %v943
  %v1292 = vpack.c.b16 %v948, %v944
  %v1293 = vpack.c.b16 %v953, %v949
  %v1294 = vpack.c.b16 %v954, %v950
  %v1295 = vpack.c.b16 %v955, %v951
  %v1296 = vpack.c.b16 %v956, %v952
  %v1297 = vpack.c.b16 %v961, %v957
  %v1298 = vpack.c.b16 %v962, %v958
  %v1299 = vpack.c.b16 %v963, %v959
  %v1300 = vpack.c.b16 %v964, %v960
  %v1301 = vpack.c.b16 %v969, %v965
  %v1302 = vpack.c.b16 %v970, %v966
  %v1303 = vpack.c.b16 %v971, %v967
  %v1304 = vpack.c.b16 %v972, %v968
  %v1305 = vpack.c.b16 %v977, %v973
  %v1306 = vpack.c.b16 %v978, %v974
  %v1307 = vpack.c.b16 %v979, %v975
  %v1308 = vpack.c.b16 %v980, %v976
  %v1309 = vpack.c.b16 %v985, %v981
  %v1310 = vpack.c.b16 %v986, %v982
  %v1311 = vpack.c.b16 %v987, %v983
  %v1312 = vpack.c.b16 %v988, %v984
  %v1313 = vpack.c.b16 %v993, %v989
  %v1314 = vpack.c.b16 %v994, %v990
  %v1315 = vpack.c.b16 %v995, %v991
  %v1316 = vpack.c.b16 %v996, %v992
  %v1317 = vpack.c.b16 %v1001, %v997
  %v1318 = vpack.c.b16 %v1002, %v998
  %v1319 = vpack.c.b16 %v1003, %v999
  %v1320 = vpack.c.b16 %v1004, %v1000
  %v1321 = vpack.c.b16 %v1009, %v1005
  %v1322 = vpack.c.b16 %v1010, %v1006
  %v1323 = vpack.c.b16 %v1011, %v1007
  %v1324 = vpack.c.b16 %v1012, %v1008
  %v1325 = vpack.c.b16 %v1017, %v1013
  %v1326 = vpack.c.b16 %v1018, %v1014
  %v1327 = vpack.c.b16 %v1019, %v1015
  %v1328 = vpack.c.b16 %v1020, %v1016
  %v1329 = vpack.c.b16 %v1025, %v1021
  %v1330 = vpack.c.b16 %v1026, %v1022
  %v1331 = vpack.c.b16 %v1027, %v1023
  %v1332 = vpack.c.b16 %v1028, %v1024
  %v1333 = vpack.c.b16 %v1033, %v1029
  %v1334 = vpack.c.b16 %v1034, %v1030
  %v1335 = vpack.c.b16 %v1035, %v1031
  %v1336 = vpack.c.b16 %v1036, %v1032
  %v1337 = vpack.c.b16 %v1041, %v1037
  %v1338 = vpack.c.b16 %v1042, %v1038
  %v1339 = vpack.c.b16 %v1043, %v1039
  %v1340 = vpack.c.b16 %v1044, %v1040
  %v1341 = vpack.c.b16 %v1049, %v1045
  %v1342 = vpack.c.b16 %v1050, %v1046
  %v1343 = vpack.c.b16 %v1051, %v1047
  %v1344 = vpack.c.b16 %v1052, %v1048
  %v1345 = vpack.c.b16 %v1057, %v1053
  %v1346 = vpack.c.b16 %v1058, %v1054
  %v1347 = vpack.c.b16 %v1059, %v1055
  %v1348 = vpack.c.b16 %v1060, %v1056
  %v1349 = vpack.c.b16 %v1065, %v1061
  %v1350 = vpack.c.b16 %v1066, %v1062
  %v1351 = vpack.c.b16 %v1067, %v1063
  %v1352 = vpack.c.b16 %v1068, %v1064
  %v1353 = vpack.c.b16 %v1073, %v1069
  %v1354 = vpack.c.b16 %v1074, %v1070
  %v1355 = vpack.c.b16 %v1075, %v1071
  %v1356 = vpack.c.b16 %v1076, %v1072
  %v1357 = vpack.c.b16 %v1081, %v1077
  %v1358 = vpack.c.b16 %v1082, %v1078
  %v1359 = vpack.c.b16 %v1083, %v1079
  %v1360 = vpack.c.b16 %v1084, %v1080
  %v1361 = vpack.c.b16 %v1089, %v1085
  %v1362 = vpack.c.b16 %v1090, %v1086
  %v1363 = vpack.c.b16 %v1091, %v1087
  %v1364 = vpack.c.b16 %v1092, %v1088
  %v1365 = vpack.c.b16 %v1097, %v1093
  %v1366 = vpack.c.b16 %v1098, %v1094
  %v1367 = vpack.c.b16 %v1099, %v1095
  %v1368 = vpack.c.b16 %v1100, %v1096
  %v1369 = vpack.c.b16 %v1105, %v1101
  %v1370 = vpack.c.b16 %v1106, %v1102
  %v1371 = vpack.c.b16 %v1107, %v1103
  %v1372 = vpack.c.b16 %v1108, %v1104
  %v1373 = vpack.c.b16 %v1113, %v1109
  %v1374 = vpack.c.b16 %v1114, %v1110
  %v1375 = vpack.c.b16 %v1115, %v1111
  %v1376 = vpack.c.b16 %v1116, %v1112
  %v1377 = vpack.c.b16 %v1121, %v1117
  %v1378 = vpack.c.b16 %v1122, %v1118
  %v1379 = vpack.c.b16 %v1123, %v1119
  %v1380 = vpack.c.b16 %v1124, %v1120
  %1637 = vmatpush.bf16.msra.mxu0 %v1153
  %1638 = vmatpush.bf16.msra.mxu0 %v1149
  %1639 = vmatpush.bf16.msra.mxu0 %v1145
  %1640 = vmatpush.bf16.msra.mxu0 %v1141
  %1641 = vmatpush.bf16.msra.mxu0 %v1137
  %1642 = vmatpush.bf16.msra.mxu0 %v1133
  %1643 = vmatpush.bf16.msra.mxu0 %v1129
  %1644 = vmatpush.bf16.msra.mxu0 %v1125
  %1645 = vmatmul.bf16.gmra.mxu0 %v340
  %v1646 = vpop.f32.mrf.mxu0
  %v1647 = vadd.f32 %v349, %v1646
  %v1648 = vpop.f32.mrf.mxu0
  %1649 = vdwg.mxu0
  %1650 = vmatpush.bf16.msra.mxu0 %v1185
  %1651 = vmatpush.bf16.msra.mxu0 %v1181
  %1652 = vmatpush.bf16.msra.mxu0 %v1177
  %1653 = vmatpush.bf16.msra.mxu0 %v1173
  %1654 = vmatpush.bf16.msra.mxu0 %v1169
  %1655 = vmatpush.bf16.msra.mxu0 %v1165
  %1656 = vmatpush.bf16.msra.mxu0 %v1161
  %1657 = vmatpush.bf16.msra.mxu0 %v1157
  %1658 = vmatmul.bf16.gmra.mxu0 %v341
  %v1659 = vpop.f32.mrf.mxu0
  %v1660 = vadd.f32 %v1647, %v1659
  %v1661 = vpop.f32.mrf.mxu0
  %1662 = vdwg.mxu0
  %1663 = vmatpush.bf16.msra.mxu0 %v1217
  %1664 = vmatpush.bf16.msra.mxu0 %v1213
  %1665 = vmatpush.bf16.msra.mxu0 %v1209
  %1666 = vmatpush.bf16.msra.mxu0 %v1205
  %1667 = vmatpush.bf16.msra.mxu0 %v1201
  %1668 = vmatpush.bf16.msra.mxu0 %v1197
  %1669 = vmatpush.bf16.msra.mxu0 %v1193
  %1670 = vmatpush.bf16.msra.mxu0 %v1189
  %1671 = vmatmul.bf16.gmra.mxu0 %v342
  %v1672 = vpop.f32.mrf.mxu0
  %v1673 = vadd.f32 %v1660, %v1672
  %v1674 = vpop.f32.mrf.mxu0
  %1675 = vdwg.mxu0
  %1676 = vmatpush.bf16.msra.mxu0 %v1249
  %1677 = vmatpush.bf16.msra.mxu0 %v1245
  %1678 = vmatpush.bf16.msra.mxu0 %v1241
  %1679 = vmatpush.bf16.msra.mxu0 %v1237
  %1680 = vmatpush.bf16.msra.mxu0 %v1233
  %1681 = vmatpush.bf16.msra.mxu0 %v1229
  %1682 = vmatpush.bf16.msra.mxu0 %v1225
  %1683 = vmatpush.bf16.msra.mxu0 %v1221
  %1684 = vmatmul.bf16.gmra.mxu0 %v343
  %v1685 = vpop.f32.mrf.mxu0
  %v1686 = vadd.f32 %v1673, %v1685
  %v1687 = vpop.f32.mrf.mxu0
  %1688 = vdwg.mxu0
  %1689 = vmatpush.bf16.msra.mxu0 %v1281
  %1690 = vmatpush.bf16.msra.mxu0 %v1277
  %1691 = vmatpush.bf16.msra.mxu0 %v1273
  %1692 = vmatpush.bf16.msra.mxu0 %v1269
  %1693 = vmatpush.bf16.msra.mxu0 %v1265
  %1694 = vmatpush.bf16.msra.mxu0 %v1261
  %1695 = vmatpush.bf16.msra.mxu0 %v1257
  %1696 = vmatpush.bf16.msra.mxu0 %v1253
  %1697 = vmatmul.bf16.gmra.mxu0 %v344
  %v1698 = vpop.f32.mrf.mxu0
  %v1699 = vadd.f32 %v1686, %v1698
  %v1700 = vpop.f32.mrf.mxu0
  %1701 = vdwg.mxu0
  %1702 = vmatpush.bf16.msra.mxu0 %v1313
  %1703 = vmatpush.bf16.msra.mxu0 %v1309
  %1704 = vmatpush.bf16.msra.mxu0 %v1305
  %1705 = vmatpush.bf16.msra.mxu0 %v1301
  %1706 = vmatpush.bf16.msra.mxu0 %v1297
  %1707 = vmatpush.bf16.msra.mxu0 %v1293
  %1708 = vmatpush.bf16.msra.mxu0 %v1289
  %1709 = vmatpush.bf16.msra.mxu0 %v1285
  %1710 = vmatmul.bf16.gmra.mxu0 %v345
  %v1711 = vpop.f32.mrf.mxu0
  %v1712 = vadd.f32 %v1699, %v1711
  %v1713 = vpop.f32.mrf.mxu0
  %1714 = vdwg.mxu0
  %1715 = vmatpush.bf16.msra.mxu0 %v1345
  %1716 = vmatpush.bf16.msra.mxu0 %v1341
  %1717 = vmatpush.bf16.msra.mxu0 %v1337
  %1718 = vmatpush.bf16.msra.mxu0 %v1333
  %1719 = vmatpush.bf16.msra.mxu0 %v1329
  %1720 = vmatpush.bf16.msra.mxu0 %v1325
  %1721 = vmatpush.bf16.msra.mxu0 %v1321
  %1722 = vmatpush.bf16.msra.mxu0 %v1317
  %1723 = vmatmul.bf16.gmra.mxu0 %v346
  %v1724 = vpop.f32.mrf.mxu0
  %v1725 = vadd.f32 %v1712, %v1724
  %v1726 = vpop.f32.mrf.mxu0
  %1727 = vdwg.mxu0
  %1728 = vmatpush.bf16.msra.mxu0 %v1377
  %1729 = vmatpush.bf16.msra.mxu0 %v1373
  %1730 = vmatpush.bf16.msra.mxu0 %v1369
  %1731 = vmatpush.bf16.msra.mxu0 %v1365
  %1732 = vmatpush.bf16.msra.mxu0 %v1361
  %1733 = vmatpush.bf16.msra.mxu0 %v1357
  %1734 = vmatpush.bf16.msra.mxu0 %v1353
  %1735 = vmatpush.bf16.msra.mxu0 %v1349
  %1736 = vmatmul.bf16.gmra.mxu0 %v347
  %v1737 = vpop.f32.mrf.mxu0
  %v1738 = vadd.f32 %v1725, %v1737
  %v1739 = vpop.f32.mrf.mxu0
  %1740 = vdwg.mxu0
  %1741 = vmatpush.bf16.msra.mxu0 %v1154
  %1742 = vmatpush.bf16.msra.mxu0 %v1150
  %1743 = vmatpush.bf16.msra.mxu0 %v1146
  %1744 = vmatpush.bf16.msra.mxu0 %v1142
  %1745 = vmatpush.bf16.msra.mxu0 %v1138
  %1746 = vmatpush.bf16.msra.mxu0 %v1134
  %1747 = vmatpush.bf16.msra.mxu0 %v1130
  %1748 = vmatpush.bf16.msra.mxu0 %v1126
  %1749 = vmatmul.bf16.gmra.mxu0 %v340
  %v1750 = vpop.f32.mrf.mxu0
  %v1751 = vadd.f32 %v350, %v1750
  %v1752 = vpop.f32.mrf.mxu0
  %1753 = vdwg.mxu0
  %1754 = vmatpush.bf16.msra.mxu0 %v1186
  %1755 = vmatpush.bf16.msra.mxu0 %v1182
  %1756 = vmatpush.bf16.msra.mxu0 %v1178
  %1757 = vmatpush.bf16.msra.mxu0 %v1174
  %1758 = vmatpush.bf16.msra.mxu0 %v1170
  %1759 = vmatpush.bf16.msra.mxu0 %v1166
  %1760 = vmatpush.bf16.msra.mxu0 %v1162
  %1761 = vmatpush.bf16.msra.mxu0 %v1158
  %1762 = vmatmul.bf16.gmra.mxu0 %v341
  %v1763 = vpop.f32.mrf.mxu0
  %v1764 = vadd.f32 %v1751, %v1763
  %v1765 = vpop.f32.mrf.mxu0
  %1766 = vdwg.mxu0
  %1767 = vmatpush.bf16.msra.mxu0 %v1218
  %1768 = vmatpush.bf16.msra.mxu0 %v1214
  %1769 = vmatpush.bf16.msra.mxu0 %v1210
  %1770 = vmatpush.bf16.msra.mxu0 %v1206
  %1771 = vmatpush.bf16.msra.mxu0 %v1202
  %1772 = vmatpush.bf16.msra.mxu0 %v1198
  %1773 = vmatpush.bf16.msra.mxu0 %v1194
  %1774 = vmatpush.bf16.msra.mxu0 %v1190
  %1775 = vmatmul.bf16.gmra.mxu0 %v342
  %v1776 = vpop.f32.mrf.mxu0
  %v1777 = vadd.f32 %v1764, %v1776
  %v1778 = vpop.f32.mrf.mxu0
  %1779 = vdwg.mxu0
  %1780 = vmatpush.bf16.msra.mxu0 %v1250
  %1781 = vmatpush.bf16.msra.mxu0 %v1246
  %1782 = vmatpush.bf16.msra.mxu0 %v1242
  %1783 = vmatpush.bf16.msra.mxu0 %v1238
  %1784 = vmatpush.bf16.msra.mxu0 %v1234
  %1785 = vmatpush.bf16.msra.mxu0 %v1230
  %1786 = vmatpush.bf16.msra.mxu0 %v1226
  %1787 = vmatpush.bf16.msra.mxu0 %v1222
  %1788 = vmatmul.bf16.gmra.mxu0 %v343
  %v1789 = vpop.f32.mrf.mxu0
  %v1790 = vadd.f32 %v1777, %v1789
  %v1791 = vpop.f32.mrf.mxu0
  %1792 = vdwg.mxu0
  %1793 = vmatpush.bf16.msra.mxu0 %v1282
  %1794 = vmatpush.bf16.msra.mxu0 %v1278
  %1795 = vmatpush.bf16.msra.mxu0 %v1274
  %1796 = vmatpush.bf16.msra.mxu0 %v1270
  %1797 = vmatpush.bf16.msra.mxu0 %v1266
  %1798 = vmatpush.bf16.msra.mxu0 %v1262
  %1799 = vmatpush.bf16.msra.mxu0 %v1258
  %1800 = vmatpush.bf16.msra.mxu0 %v1254
  %1801 = vmatmul.bf16.gmra.mxu0 %v344
  %v1802 = vpop.f32.mrf.mxu0
  %v1803 = vadd.f32 %v1790, %v1802
  %v1804 = vpop.f32.mrf.mxu0
  %1805 = vdwg.mxu0
  %1806 = vmatpush.bf16.msra.mxu0 %v1314
  %1807 = vmatpush.bf16.msra.mxu0 %v1310
  %1808 = vmatpush.bf16.msra.mxu0 %v1306
  %1809 = vmatpush.bf16.msra.mxu0 %v1302
  %1810 = vmatpush.bf16.msra.mxu0 %v1298
  %1811 = vmatpush.bf16.msra.mxu0 %v1294
  %1812 = vmatpush.bf16.msra.mxu0 %v1290
  %1813 = vmatpush.bf16.msra.mxu0 %v1286
  %1814 = vmatmul.bf16.gmra.mxu0 %v345
  %v1815 = vpop.f32.mrf.mxu0
  %v1816 = vadd.f32 %v1803, %v1815
  %v1817 = vpop.f32.mrf.mxu0
  %1818 = vdwg.mxu0
  %1819 = vmatpush.bf16.msra.mxu0 %v1346
  %1820 = vmatpush.bf16.msra.mxu0 %v1342
  %1821 = vmatpush.bf16.msra.mxu0 %v1338
  %1822 = vmatpush.bf16.msra.mxu0 %v1334
  %1823 = vmatpush.bf16.msra.mxu0 %v1330
  %1824 = vmatpush.bf16.msra.mxu0 %v1326
  %1825 = vmatpush.bf16.msra.mxu0 %v1322
  %1826 = vmatpush.bf16.msra.mxu0 %v1318
  %1827 = vmatmul.bf16.gmra.mxu0 %v346
  %v1828 = vpop.f32.mrf.mxu0
  %v1829 = vadd.f32 %v1816, %v1828
  %v1830 = vpop.f32.mrf.mxu0
  %1831 = vdwg.mxu0
  %1832 = vmatpush.bf16.msra.mxu0 %v1378
  %1833 = vmatpush.bf16.msra.mxu0 %v1374
  %1834 = vmatpush.bf16.msra.mxu0 %v1370
  %1835 = vmatpush.bf16.msra.mxu0 %v1366
  %1836 = vmatpush.bf16.msra.mxu0 %v1362
  %1837 = vmatpush.bf16.msra.mxu0 %v1358
  %1838 = vmatpush.bf16.msra.mxu0 %v1354
  %1839 = vmatpush.bf16.msra.mxu0 %v1350
  %1840 = vmatmul.bf16.gmra.mxu0 %v347
  %v1841 = vpop.f32.mrf.mxu0
  %v1842 = vadd.f32 %v1829, %v1841
  %v1843 = vpop.f32.mrf.mxu0
  %1844 = vdwg.mxu0
  %1845 = vmatpush.bf16.msra.mxu0 %v1155
  %1846 = vmatpush.bf16.msra.mxu0 %v1151
  %1847 = vmatpush.bf16.msra.mxu0 %v1147
  %1848 = vmatpush.bf16.msra.mxu0 %v1143
  %1849 = vmatpush.bf16.msra.mxu0 %v1139
  %1850 = vmatpush.bf16.msra.mxu0 %v1135
  %1851 = vmatpush.bf16.msra.mxu0 %v1131
  %1852 = vmatpush.bf16.msra.mxu0 %v1127
  %1853 = vmatmul.bf16.gmra.mxu0 %v340
  %v1854 = vpop.f32.mrf.mxu0
  %v1855 = vadd.f32 %v351, %v1854
  %v1856 = vpop.f32.mrf.mxu0
  %1857 = vdwg.mxu0
  %1858 = vmatpush.bf16.msra.mxu0 %v1187
  %1859 = vmatpush.bf16.msra.mxu0 %v1183
  %1860 = vmatpush.bf16.msra.mxu0 %v1179
  %1861 = vmatpush.bf16.msra.mxu0 %v1175
  %1862 = vmatpush.bf16.msra.mxu0 %v1171
  %1863 = vmatpush.bf16.msra.mxu0 %v1167
  %1864 = vmatpush.bf16.msra.mxu0 %v1163
  %1865 = vmatpush.bf16.msra.mxu0 %v1159
  %1866 = vmatmul.bf16.gmra.mxu0 %v341
  %v1867 = vpop.f32.mrf.mxu0
  %v1868 = vadd.f32 %v1855, %v1867
  %v1869 = vpop.f32.mrf.mxu0
  %1870 = vdwg.mxu0
  %1871 = vmatpush.bf16.msra.mxu0 %v1219
  %1872 = vmatpush.bf16.msra.mxu0 %v1215
  %1873 = vmatpush.bf16.msra.mxu0 %v1211
  %1874 = vmatpush.bf16.msra.mxu0 %v1207
  %1875 = vmatpush.bf16.msra.mxu0 %v1203
  %1876 = vmatpush.bf16.msra.mxu0 %v1199
  %1877 = vmatpush.bf16.msra.mxu0 %v1195
  %1878 = vmatpush.bf16.msra.mxu0 %v1191
  %1879 = vmatmul.bf16.gmra.mxu0 %v342
  %v1880 = vpop.f32.mrf.mxu0
  %v1881 = vadd.f32 %v1868, %v1880
  %v1882 = vpop.f32.mrf.mxu0
  %1883 = vdwg.mxu0
  %1884 = vmatpush.bf16.msra.mxu0 %v1251
  %1885 = vmatpush.bf16.msra.mxu0 %v1247
  %1886 = vmatpush.bf16.msra.mxu0 %v1243
  %1887 = vmatpush.bf16.msra.mxu0 %v1239
  %1888 = vmatpush.bf16.msra.mxu0 %v1235
  %1889 = vmatpush.bf16.msra.mxu0 %v1231
  %1890 = vmatpush.bf16.msra.mxu0 %v1227
  %1891 = vmatpush.bf16.msra.mxu0 %v1223
  %1892 = vmatmul.bf16.gmra.mxu0 %v343
  %v1893 = vpop.f32.mrf.mxu0
  %v1894 = vadd.f32 %v1881, %v1893
  %v1895 = vpop.f32.mrf.mxu0
  %1896 = vdwg.mxu0
  %1897 = vmatpush.bf16.msra.mxu0 %v1283
  %1898 = vmatpush.bf16.msra.mxu0 %v1279
  %1899 = vmatpush.bf16.msra.mxu0 %v1275
  %1900 = vmatpush.bf16.msra.mxu0 %v1271
  %1901 = vmatpush.bf16.msra.mxu0 %v1267
  %1902 = vmatpush.bf16.msra.mxu0 %v1263
  %1903 = vmatpush.bf16.msra.mxu0 %v1259
  %1904 = vmatpush.bf16.msra.mxu0 %v1255
  %1905 = vmatmul.bf16.gmra.mxu0 %v344
  %v1906 = vpop.f32.mrf.mxu0
  %v1907 = vadd.f32 %v1894, %v1906
  %v1908 = vpop.f32.mrf.mxu0
  %1909 = vdwg.mxu0
  %1910 = vmatpush.bf16.msra.mxu0 %v1315
  %1911 = vmatpush.bf16.msra.mxu0 %v1311
  %1912 = vmatpush.bf16.msra.mxu0 %v1307
  %1913 = vmatpush.bf16.msra.mxu0 %v1303
  %1914 = vmatpush.bf16.msra.mxu0 %v1299
  %1915 = vmatpush.bf16.msra.mxu0 %v1295
  %1916 = vmatpush.bf16.msra.mxu0 %v1291
  %1917 = vmatpush.bf16.msra.mxu0 %v1287
  %1918 = vmatmul.bf16.gmra.mxu0 %v345
  %v1919 = vpop.f32.mrf.mxu0
  %v1920 = vadd.f32 %v1907, %v1919
  %v1921 = vpop.f32.mrf.mxu0
  %1922 = vdwg.mxu0
  %1923 = vmatpush.bf16.msra.mxu0 %v1347
  %1924 = vmatpush.bf16.msra.mxu0 %v1343
  %1925 = vmatpush.bf16.msra.mxu0 %v1339
  %1926 = vmatpush.bf16.msra.mxu0 %v1335
  %1927 = vmatpush.bf16.msra.mxu0 %v1331
  %1928 = vmatpush.bf16.msra.mxu0 %v1327
  %1929 = vmatpush.bf16.msra.mxu0 %v1323
  %1930 = vmatpush.bf16.msra.mxu0 %v1319
  %1931 = vmatmul.bf16.gmra.mxu0 %v346
  %v1932 = vpop.f32.mrf.mxu0
  %v1933 = vadd.f32 %v1920, %v1932
  %v1934 = vpop.f32.mrf.mxu0
  %1935 = vdwg.mxu0
  %1936 = vmatpush.bf16.msra.mxu0 %v1379
  %1937 = vmatpush.bf16.msra.mxu0 %v1375
  %1938 = vmatpush.bf16.msra.mxu0 %v1371
  %1939 = vmatpush.bf16.msra.mxu0 %v1367
  %1940 = vmatpush.bf16.msra.mxu0 %v1363
  %1941 = vmatpush.bf16.msra.mxu0 %v1359
  %1942 = vmatpush.bf16.msra.mxu0 %v1355
  %1943 = vmatpush.bf16.msra.mxu0 %v1351
  %1944 = vmatmul.bf16.gmra.mxu0 %v347
  %v1945 = vpop.f32.mrf.mxu0
  %v1946 = vadd.f32 %v1933, %v1945
  %v1947 = vpop.f32.mrf.mxu0
  %1948 = vdwg.mxu0
  %1949 = vmatpush.bf16.msra.mxu0 %v1156
  %1950 = vmatpush.bf16.msra.mxu0 %v1152
  %1951 = vmatpush.bf16.msra.mxu0 %v1148
  %1952 = vmatpush.bf16.msra.mxu0 %v1144
  %1953 = vmatpush.bf16.msra.mxu0 %v1140
  %1954 = vmatpush.bf16.msra.mxu0 %v1136
  %1955 = vmatpush.bf16.msra.mxu0 %v1132
  %1956 = vmatpush.bf16.msra.mxu0 %v1128
  %1957 = vmatmul.bf16.gmra.mxu0 %v340
  %v1958 = vpop.f32.mrf.mxu0
  %v1959 = vadd.f32 %v352, %v1958
  %v1960 = vpop.f32.mrf.mxu0
  %1961 = vdwg.mxu0
  %1962 = vmatpush.bf16.msra.mxu0 %v1188
  %1963 = vmatpush.bf16.msra.mxu0 %v1184
  %1964 = vmatpush.bf16.msra.mxu0 %v1180
  %1965 = vmatpush.bf16.msra.mxu0 %v1176
  %1966 = vmatpush.bf16.msra.mxu0 %v1172
  %1967 = vmatpush.bf16.msra.mxu0 %v1168
  %1968 = vmatpush.bf16.msra.mxu0 %v1164
  %1969 = vmatpush.bf16.msra.mxu0 %v1160
  %1970 = vmatmul.bf16.gmra.mxu0 %v341
  %v1971 = vpop.f32.mrf.mxu0
  %v1972 = vadd.f32 %v1959, %v1971
  %v1973 = vpop.f32.mrf.mxu0
  %1974 = vdwg.mxu0
  %1975 = vmatpush.bf16.msra.mxu0 %v1220
  %1976 = vmatpush.bf16.msra.mxu0 %v1216
  %1977 = vmatpush.bf16.msra.mxu0 %v1212
  %1978 = vmatpush.bf16.msra.mxu0 %v1208
  %1979 = vmatpush.bf16.msra.mxu0 %v1204
  %1980 = vmatpush.bf16.msra.mxu0 %v1200
  %1981 = vmatpush.bf16.msra.mxu0 %v1196
  %1982 = vmatpush.bf16.msra.mxu0 %v1192
  %1983 = vmatmul.bf16.gmra.mxu0 %v342
  %v1984 = vpop.f32.mrf.mxu0
  %v1985 = vadd.f32 %v1972, %v1984
  %v1986 = vpop.f32.mrf.mxu0
  %1987 = vdwg.mxu0
  %1988 = vmatpush.bf16.msra.mxu0 %v1252
  %1989 = vmatpush.bf16.msra.mxu0 %v1248
  %1990 = vmatpush.bf16.msra.mxu0 %v1244
  %1991 = vmatpush.bf16.msra.mxu0 %v1240
  %1992 = vmatpush.bf16.msra.mxu0 %v1236
  %1993 = vmatpush.bf16.msra.mxu0 %v1232
  %1994 = vmatpush.bf16.msra.mxu0 %v1228
  %1995 = vmatpush.bf16.msra.mxu0 %v1224
  %1996 = vmatmul.bf16.gmra.mxu0 %v343
  %v1997 = vpop.f32.mrf.mxu0
  %v1998 = vadd.f32 %v1985, %v1997
  %v1999 = vpop.f32.mrf.mxu0
  %2000 = vdwg.mxu0
  %2001 = vmatpush.bf16.msra.mxu0 %v1284
  %2002 = vmatpush.bf16.msra.mxu0 %v1280
  %2003 = vmatpush.bf16.msra.mxu0 %v1276
  %2004 = vmatpush.bf16.msra.mxu0 %v1272
  %2005 = vmatpush.bf16.msra.mxu0 %v1268
  %2006 = vmatpush.bf16.msra.mxu0 %v1264
  %2007 = vmatpush.bf16.msra.mxu0 %v1260
  %2008 = vmatpush.bf16.msra.mxu0 %v1256
  %2009 = vmatmul.bf16.gmra.mxu0 %v344
  %v2010 = vpop.f32.mrf.mxu0
  %v2011 = vadd.f32 %v1998, %v2010
  %v2012 = vpop.f32.mrf.mxu0
  %2013 = vdwg.mxu0
  %2014 = vmatpush.bf16.msra.mxu0 %v1316
  %2015 = vmatpush.bf16.msra.mxu0 %v1312
  %2016 = vmatpush.bf16.msra.mxu0 %v1308
  %2017 = vmatpush.bf16.msra.mxu0 %v1304
  %2018 = vmatpush.bf16.msra.mxu0 %v1300
  %2019 = vmatpush.bf16.msra.mxu0 %v1296
  %2020 = vmatpush.bf16.msra.mxu0 %v1292
  %2021 = vmatpush.bf16.msra.mxu0 %v1288
  %2022 = vmatmul.bf16.gmra.mxu0 %v345
  %v2023 = vpop.f32.mrf.mxu0
  %v2024 = vadd.f32 %v2011, %v2023
  %v2025 = vpop.f32.mrf.mxu0
  %2026 = vdwg.mxu0
  %2027 = vmatpush.bf16.msra.mxu0 %v1348
  %2028 = vmatpush.bf16.msra.mxu0 %v1344
  %2029 = vmatpush.bf16.msra.mxu0 %v1340
  %2030 = vmatpush.bf16.msra.mxu0 %v1336
  %2031 = vmatpush.bf16.msra.mxu0 %v1332
  %2032 = vmatpush.bf16.msra.mxu0 %v1328
  %2033 = vmatpush.bf16.msra.mxu0 %v1324
  %2034 = vmatpush.bf16.msra.mxu0 %v1320
  %2035 = vmatmul.bf16.gmra.mxu0 %v346
  %v2036 = vpop.f32.mrf.mxu0
  %v2037 = vadd.f32 %v2024, %v2036
  %v2038 = vpop.f32.mrf.mxu0
  %2039 = vdwg.mxu0
  %2040 = vmatpush.bf16.msra.mxu0 %v1380
  %2041 = vmatpush.bf16.msra.mxu0 %v1376
  %2042 = vmatpush.bf16.msra.mxu0 %v1372
  %2043 = vmatpush.bf16.msra.mxu0 %v1368
  %2044 = vmatpush.bf16.msra.mxu0 %v1364
  %2045 = vmatpush.bf16.msra.mxu0 %v1360
  %2046 = vmatpush.bf16.msra.mxu0 %v1356
  %2047 = vmatpush.bf16.msra.mxu0 %v1352
  %2048 = vmatmul.bf16.gmra.mxu0 %v347
  %v2049 = vpop.f32.mrf.mxu0
  %v2050 = vadd.f32 %v2037, %v2049
  %v2051 = vpop.f32.mrf.mxu0
  %2052 = vdwg.mxu0
  %v2053 = vmax.f32 %v1738, 0.0
  %v2054 = vmax.f32 %v1842, 0.0
  %v2055 = vmax.f32 %v1946, 0.0
  %v2056 = vmax.f32 %v2050, 0.0
  %v2057 = vld [vmem:[%s4] sm:$0xff]
  %v2058 = vld [vmem:[%s4 + $0x8] sm:$0xff]
  %v2059 = vld [vmem:[%s4 + $0x10] sm:$0xff]
  %v2060 = vld [vmem:[%s4 + $0x18] sm:$0xff]
  %v2061 = vld [vmem:[%s4 + $0x20] sm:$0xff]
  %v2062 = vld [vmem:[%s4 + $0x28] sm:$0xff]
  %v2063 = vld [vmem:[%s4 + $0x30] sm:$0xff]
  %v2064 = vld [vmem:[%s4 + $0x38] sm:$0xff]
  %v2065 = vld [vmem:[%s4 + $0x40] sm:$0xff]
  %v2066 = vld [vmem:[%s4 + $0x48] sm:$0xff]
  %v2067 = vld [vmem:[%s4 + $0x50] sm:$0xff]
  %v2068 = vld [vmem:[%s4 + $0x58] sm:$0xff]
  %v2069 = vld [vmem:[%s4 + $0x60] sm:$0xff]
  %v2070 = vld [vmem:[%s4 + $0x68] sm:$0xff]
  %v2071 = vld [vmem:[%s4 + $0x70] sm:$0xff]
  %v2072 = vld [vmem:[%s4 + $0x78] sm:$0xff]
  %v2073 = vld [vmem:[%s4 + $0x80] sm:$0xff]
  %v2074 = vld [vmem:[%s4 + $0x88] sm:$0xff]
  %v2075 = vld [vmem:[%s4 + $0x90] sm:$0xff]
  %v2076 = vld [vmem:[%s4 + $0x98] sm:$0xff]
  %v2077 = vld [vmem:[%s4 + $0xa0] sm:$0xff]
  %v2078 = vld [vmem:[%s4 + $0xa8] sm:$0xff]
  %v2079 = vld [vmem:[%s4 + $0xb0] sm:$0xff]
  %v2080 = vld [vmem:[%s4 + $0xb8] sm:$0xff]
  %v2081 = vld [vmem:[%s4 + $0xc0] sm:$0xff]
  %v2082 = vld [vmem:[%s4 + $0xc8] sm:$0xff]
  %v2083 = vld [vmem:[%s4 + $0xd0] sm:$0xff]
  %v2084 = vld [vmem:[%s4 + $0xd8] sm:$0xff]
  %v2085 = vld [vmem:[%s4 + $0xe0] sm:$0xff]
  %v2086 = vld [vmem:[%s4 + $0xe8] sm:$0xff]
  %v2087 = vld [vmem:[%s4 + $0xf0] sm:$0xff]
  %v2088 = vld [vmem:[%s4 + $0xf8] sm:$0xff]
  %v2089 = vld [vmem:[%s4 + $0x100] sm:$0xff]
  %v2090 = vld [vmem:[%s4 + $0x108] sm:$0xff]
  %v2091 = vld [vmem:[%s4 + $0x110] sm:$0xff]
  %v2092 = vld [vmem:[%s4 + $0x118] sm:$0xff]
  %v2093 = vld [vmem:[%s4 + $0x120] sm:$0xff]
  %v2094 = vld [vmem:[%s4 + $0x128] sm:$0xff]
  %v2095 = vld [vmem:[%s4 + $0x130] sm:$0xff]
  %v2096 = vld [vmem:[%s4 + $0x138] sm:$0xff]
  %v2097 = vld [vmem:[%s4 + $0x140] sm:$0xff]
  %v2098 = vld [vmem:[%s4 + $0x148] sm:$0xff]
  %v2099 = vld [vmem:[%s4 + $0x150] sm:$0xff]
  %v2100 = vld [vmem:[%s4 + $0x158] sm:$0xff]
  %v2101 = vld [vmem:[%s4 + $0x160] sm:$0xff]
  %v2102 = vld [vmem:[%s4 + $0x168] sm:$0xff]
  %v2103 = vld [vmem:[%s4 + $0x170] sm:$0xff]
  %v2104 = vld [vmem:[%s4 + $0x178] sm:$0xff]
  %v2105 = vld [vmem:[%s4 + $0x180] sm:$0xff]
  %v2106 = vld [vmem:[%s4 + $0x188] sm:$0xff]
  %v2107 = vld [vmem:[%s4 + $0x190] sm:$0xff]
  %v2108 = vld [vmem:[%s4 + $0x198] sm:$0xff]
  %v2109 = vld [vmem:[%s4 + $0x1a0] sm:$0xff]
  %v2110 = vld [vmem:[%s4 + $0x1a8] sm:$0xff]
  %v2111 = vld [vmem:[%s4 + $0x1b0] sm:$0xff]
  %v2112 = vld [vmem:[%s4 + $0x1b8] sm:$0xff]
  %v2113 = vld [vmem:[%s4 + $0x1c0] sm:$0xff]
  %v2114 = vld [vmem:[%s4 + $0x1c8] sm:$0xff]
  %v2115 = vld [vmem:[%s4 + $0x1d0] sm:$0xff]
  %v2116 = vld [vmem:[%s4 + $0x1d8] sm:$0xff]
  %v2117 = vld [vmem:[%s4 + $0x1e0] sm:$0xff]
  %v2118 = vld [vmem:[%s4 + $0x1e8] sm:$0xff]
  %v2119 = vld [vmem:[%s4 + $0x1f0] sm:$0xff]
  %v2120 = vld [vmem:[%s4 + $0x1f8] sm:$0xff]
  %v2121 = vld [vmem:[%s5] sm:$0x3]
  %v2122 = vpack.c.bf16 %v2053, %v2053
  %v2123 = vpack.c.bf16 %v2054, %v2054
  %v2124 = vpack.c.bf16 %v2055, %v2055
  %v2125 = vpack.c.bf16 %v2056, %v2056
  %v2127 = vperm.slane %v2121, 0
  %v2128 = vperm.slane %v2121, 1
  %v2195 = vunpack.c.l.b16 %v2057
  %v2196 = vunpack.c.h.b16 %v2057
  %v2197 = vunpack.c.l.b16 %v2058
  %v2198 = vunpack.c.h.b16 %v2058
  %v2199 = vunpack.c.l.b16 %v2059
  %v2200 = vunpack.c.h.b16 %v2059
  %v2201 = vunpack.c.l.b16 %v2060
  %v2202 = vunpack.c.h.b16 %v2060
  %v2203 = vunpack.c.l.b16 %v2061
  %v2204 = vunpack.c.h.b16 %v2061
  %v2205 = vunpack.c.l.b16 %v2062
  %v2206 = vunpack.c.h.b16 %v2062
  %v2207 = vunpack.c.l.b16 %v2063
  %v2208 = vunpack.c.h.b16 %v2063
  %v2209 = vunpack.c.l.b16 %v2064
  %v2210 = vunpack.c.h.b16 %v2064
  %v2211 = vunpack.c.l.b16 %v2065
  %v2212 = vunpack.c.h.b16 %v2065
  %v2213 = vunpack.c.l.b16 %v2066
  %v2214 = vunpack.c.h.b16 %v2066
  %v2215 = vunpack.c.l.b16 %v2067
  %v2216 = vunpack.c.h.b16 %v2067
  %v2217 = vunpack.c.l.b16 %v2068
  %v2218 = vunpack.c.h.b16 %v2068
  %v2219 = vunpack.c.l.b16 %v2069
  %v2220 = vunpack.c.h.b16 %v2069
  %v2221 = vunpack.c.l.b16 %v2070
  %v2222 = vunpack.c.h.b16 %v2070
  %v2223 = vunpack.c.l.b16 %v2071
  %v2224 = vunpack.c.h.b16 %v2071
  %v2225 = vunpack.c.l.b16 %v2072
  %v2226 = vunpack.c.h.b16 %v2072
  %v2227 = vunpack.c.l.b16 %v2073
  %v2228 = vunpack.c.h.b16 %v2073
  %v2229 = vunpack.c.l.b16 %v2074
  %v2230 = vunpack.c.h.b16 %v2074
  %v2231 = vunpack.c.l.b16 %v2075
  %v2232 = vunpack.c.h.b16 %v2075
  %v2233 = vunpack.c.l.b16 %v2076
  %v2234 = vunpack.c.h.b16 %v2076
  %v2235 = vunpack.c.l.b16 %v2077
  %v2236 = vunpack.c.h.b16 %v2077
  %v2237 = vunpack.c.l.b16 %v2078
  %v2238 = vunpack.c.h.b16 %v2078
  %v2239 = vunpack.c.l.b16 %v2079
  %v2240 = vunpack.c.h.b16 %v2079
  %v2241 = vunpack.c.l.b16 %v2080
  %v2242 = vunpack.c.h.b16 %v2080
  %v2243 = vunpack.c.l.b16 %v2081
  %v2244 = vunpack.c.h.b16 %v2081
  %v2245 = vunpack.c.l.b16 %v2082
  %v2246 = vunpack.c.h.b16 %v2082
  %v2247 = vunpack.c.l.b16 %v2083
  %v2248 = vunpack.c.h.b16 %v2083
  %v2249 = vunpack.c.l.b16 %v2084
  %v2250 = vunpack.c.h.b16 %v2084
  %v2251 = vunpack.c.l.b16 %v2085
  %v2252 = vunpack.c.h.b16 %v2085
  %v2253 = vunpack.c.l.b16 %v2086
  %v2254 = vunpack.c.h.b16 %v2086
  %v2255 = vunpack.c.l.b16 %v2087
  %v2256 = vunpack.c.h.b16 %v2087
  %v2257 = vunpack.c.l.b16 %v2088
  %v2258 = vunpack.c.h.b16 %v2088
  %v2259 = vunpack.c.l.b16 %v2089
  %v2260 = vunpack.c.h.b16 %v2089
  %v2261 = vunpack.c.l.b16 %v2090
  %v2262 = vunpack.c.h.b16 %v2090
  %v2263 = vunpack.c.l.b16 %v2091
  %v2264 = vunpack.c.h.b16 %v2091
  %v2265 = vunpack.c.l.b16 %v2092
  %v2266 = vunpack.c.h.b16 %v2092
  %v2267 = vunpack.c.l.b16 %v2093
  %v2268 = vunpack.c.h.b16 %v2093
  %v2269 = vunpack.c.l.b16 %v2094
  %v2270 = vunpack.c.h.b16 %v2094
  %v2271 = vunpack.c.l.b16 %v2095
  %v2272 = vunpack.c.h.b16 %v2095
  %v2273 = vunpack.c.l.b16 %v2096
  %v2274 = vunpack.c.h.b16 %v2096
  %v2275 = vunpack.c.l.b16 %v2097
  %v2276 = vunpack.c.h.b16 %v2097
  %v2277 = vunpack.c.l.b16 %v2098
  %v2278 = vunpack.c.h.b16 %v2098
  %v2279 = vunpack.c.l.b16 %v2099
  %v2280 = vunpack.c.h.b16 %v2099
  %v2281 = vunpack.c.l.b16 %v2100
  %v2282 = vunpack.c.h.b16 %v2100
  %v2283 = vunpack.c.l.b16 %v2101
  %v2284 = vunpack.c.h.b16 %v2101
  %v2285 = vunpack.c.l.b16 %v2102
  %v2286 = vunpack.c.h.b16 %v2102
  %v2287 = vunpack.c.l.b16 %v2103
  %v2288 = vunpack.c.h.b16 %v2103
  %v2289 = vunpack.c.l.b16 %v2104
  %v2290 = vunpack.c.h.b16 %v2104
  %v2291 = vunpack.c.l.b16 %v2105
  %v2292 = vunpack.c.h.b16 %v2105
  %v2293 = vunpack.c.l.b16 %v2106
  %v2294 = vunpack.c.h.b16 %v2106
  %v2295 = vunpack.c.l.b16 %v2107
  %v2296 = vunpack.c.h.b16 %v2107
  %v2297 = vunpack.c.l.b16 %v2108
  %v2298 = vunpack.c.h.b16 %v2108
  %v2299 = vunpack.c.l.b16 %v2109
  %v2300 = vunpack.c.h.b16 %v2109
  %v2301 = vunpack.c.l.b16 %v2110
  %v2302 = vunpack.c.h.b16 %v2110
  %v2303 = vunpack.c.l.b16 %v2111
  %v2304 = vunpack.c.h.b16 %v2111
  %v2305 = vunpack.c.l.b16 %v2112
  %v2306 = vunpack.c.h.b16 %v2112
  %v2307 = vunpack.c.l.b16 %v2113
  %v2308 = vunpack.c.h.b16 %v2113
  %v2309 = vunpack.c.l.b16 %v2114
  %v2310 = vunpack.c.h.b16 %v2114
  %v2311 = vunpack.c.l.b16 %v2115
  %v2312 = vunpack.c.h.b16 %v2115
  %v2313 = vunpack.c.l.b16 %v2116
  %v2314 = vunpack.c.h.b16 %v2116
  %v2315 = vunpack.c.l.b16 %v2117
  %v2316 = vunpack.c.h.b16 %v2117
  %v2317 = vunpack.c.l.b16 %v2118
  %v2318 = vunpack.c.h.b16 %v2118
  %v2319 = vunpack.c.l.b16 %v2119
  %v2320 = vunpack.c.h.b16 %v2119
  %v2321 = vunpack.c.l.b16 %v2120
  %v2322 = vunpack.c.h.b16 %v2120
  %v2323 = vpack.c.b16 %v2197, %v2195
  %v2324 = vpack.c.b16 %v2198, %v2196
  %v2325 = vpack.c.b16 %v2201, %v2199
  %v2326 = vpack.c.b16 %v2202, %v2200
  %v2327 = vpack.c.b16 %v2205, %v2203
  %v2328 = vpack.c.b16 %v2206, %v2204
  %v2329 = vpack.c.b16 %v2209, %v2207
  %v2330 = vpack.c.b16 %v2210, %v2208
  %v2331 = vpack.c.b16 %v2213, %v2211
  %v2332 = vpack.c.b16 %v2214, %v2212
  %v2333 = vpack.c.b16 %v2217, %v2215
  %v2334 = vpack.c.b16 %v2218, %v2216
  %v2335 = vpack.c.b16 %v2221, %v2219
  %v2336 = vpack.c.b16 %v2222, %v2220
  %v2337 = vpack.c.b16 %v2225, %v2223
  %v2338 = vpack.c.b16 %v2226, %v2224
  %v2339 = vpack.c.b16 %v2229, %v2227
  %v2340 = vpack.c.b16 %v2230, %v2228
  %v2341 = vpack.c.b16 %v2233, %v2231
  %v2342 = vpack.c.b16 %v2234, %v2232
  %v2343 = vpack.c.b16 %v2237, %v2235
  %v2344 = vpack.c.b16 %v2238, %v2236
  %v2345 = vpack.c.b16 %v2241, %v2239
  %v2346 = vpack.c.b16 %v2242, %v2240
  %v2347 = vpack.c.b16 %v2245, %v2243
  %v2348 = vpack.c.b16 %v2246, %v2244
  %v2349 = vpack.c.b16 %v2249, %v2247
  %v2350 = vpack.c.b16 %v2250, %v2248
  %v2351 = vpack.c.b16 %v2253, %v2251
  %v2352 = vpack.c.b16 %v2254, %v2252
  %v2353 = vpack.c.b16 %v2257, %v2255
  %v2354 = vpack.c.b16 %v2258, %v2256
  %v2355 = vpack.c.b16 %v2261, %v2259
  %v2356 = vpack.c.b16 %v2262, %v2260
  %v2357 = vpack.c.b16 %v2265, %v2263
  %v2358 = vpack.c.b16 %v2266, %v2264
  %v2359 = vpack.c.b16 %v2269, %v2267
  %v2360 = vpack.c.b16 %v2270, %v2268
  %v2361 = vpack.c.b16 %v2273, %v2271
  %v2362 = vpack.c.b16 %v2274, %v2272
  %v2363 = vpack.c.b16 %v2277, %v2275
  %v2364 = vpack.c.b16 %v2278, %v2276
  %v2365 = vpack.c.b16 %v2281, %v2279
  %v2366 = vpack.c.b16 %v2282, %v2280
  %v2367 = vpack.c.b16 %v2285, %v2283
  %v2368 = vpack.c.b16 %v2286, %v2284
  %v2369 = vpack.c.b16 %v2289, %v2287
  %v2370 = vpack.c.b16 %v2290, %v2288
  %v2371 = vpack.c.b16 %v2293, %v2291
  %v2372 = vpack.c.b16 %v2294, %v2292
  %v2373 = vpack.c.b16 %v2297, %v2295
  %v2374 = vpack.c.b16 %v2298, %v2296
  %v2375 = vpack.c.b16 %v2301, %v2299
  %v2376 = vpack.c.b16 %v2302, %v2300
  %v2377 = vpack.c.b16 %v2305, %v2303
  %v2378 = vpack.c.b16 %v2306, %v2304
  %v2379 = vpack.c.b16 %v2309, %v2307
  %v2380 = vpack.c.b16 %v2310, %v2308
  %v2381 = vpack.c.b16 %v2313, %v2311
  %v2382 = vpack.c.b16 %v2314, %v2312
  %v2383 = vpack.c.b16 %v2317, %v2315
  %v2384 = vpack.c.b16 %v2318, %v2316
  %v2385 = vpack.c.b16 %v2321, %v2319
  %v2386 = vpack.c.b16 %v2322, %v2320
  %2451 = vmatpush.bf16.msra.mxu0 %v2337
  %2452 = vmatpush.bf16.msra.mxu0 %v2335
  %2453 = vmatpush.bf16.msra.mxu0 %v2333
  %2454 = vmatpush.bf16.msra.mxu0 %v2331
  %2455 = vmatpush.bf16.msra.mxu0 %v2329
  %2456 = vmatpush.bf16.msra.mxu0 %v2327
  %2457 = vmatpush.bf16.msra.mxu0 %v2325
  %2458 = vmatpush.bf16.msra.mxu0 %v2323
  %2459 = vmatmul.bf16.gmra.mxu0 %v2122
  %v2460 = vpop.f32.mrf.mxu0
  %v2461 = vadd.f32 %v2127, %v2460
  %v2462 = vpop.f32.mrf.mxu0
  %2463 = vdwg.mxu0
  %2464 = vmatpush.bf16.msra.mxu0 %v2353
  %2465 = vmatpush.bf16.msra.mxu0 %v2351
  %2466 = vmatpush.bf16.msra.mxu0 %v2349
  %2467 = vmatpush.bf16.msra.mxu0 %v2347
  %2468 = vmatpush.bf16.msra.mxu0 %v2345
  %2469 = vmatpush.bf16.msra.mxu0 %v2343
  %2470 = vmatpush.bf16.msra.mxu0 %v2341
  %2471 = vmatpush.bf16.msra.mxu0 %v2339
  %2472 = vmatmul.bf16.gmra.mxu0 %v2123
  %v2473 = vpop.f32.mrf.mxu0
  %v2474 = vadd.f32 %v2461, %v2473
  %v2475 = vpop.f32.mrf.mxu0
  %2476 = vdwg.mxu0
  %2477 = vmatpush.bf16.msra.mxu0 %v2369
  %2478 = vmatpush.bf16.msra.mxu0 %v2367
  %2479 = vmatpush.bf16.msra.mxu0 %v2365
  %2480 = vmatpush.bf16.msra.mxu0 %v2363
  %2481 = vmatpush.bf16.msra.mxu0 %v2361
  %2482 = vmatpush.bf16.msra.mxu0 %v2359
  %2483 = vmatpush.bf16.msra.mxu0 %v2357
  %2484 = vmatpush.bf16.msra.mxu0 %v2355
  %2485 = vmatmul.bf16.gmra.mxu0 %v2124
  %v2486 = vpop.f32.mrf.mxu0
  %v2487 = vadd.f32 %v2474, %v2486
  %v2488 = vpop.f32.mrf.mxu0
  %2489 = vdwg.mxu0
  %2490 = vmatpush.bf16.msra.mxu0 %v2385
  %2491 = vmatpush.bf16.msra.mxu0 %v2383
  %2492 = vmatpush.bf16.msra.mxu0 %v2381
  %2493 = vmatpush.bf16.msra.mxu0 %v2379
  %2494 = vmatpush.bf16.msra.mxu0 %v2377
  %2495 = vmatpush.bf16.msra.mxu0 %v2375
  %2496 = vmatpush.bf16.msra.mxu0 %v2373
  %2497 = vmatpush.bf16.msra.mxu0 %v2371
  %2498 = vmatmul.bf16.gmra.mxu0 %v2125
  %v2499 = vpop.f32.mrf.mxu0
  %v2500 = vadd.f32 %v2487, %v2499
  %v2501 = vpop.f32.mrf.mxu0
  %2502 = vdwg.mxu0
  %2503 = vmatpush.bf16.msra.mxu0 %v2338
  %2504 = vmatpush.bf16.msra.mxu0 %v2336
  %2505 = vmatpush.bf16.msra.mxu0 %v2334
  %2506 = vmatpush.bf16.msra.mxu0 %v2332
  %2507 = vmatpush.bf16.msra.mxu0 %v2330
  %2508 = vmatpush.bf16.msra.mxu0 %v2328
  %2509 = vmatpush.bf16.msra.mxu0 %v2326
  %2510 = vmatpush.bf16.msra.mxu0 %v2324
  %2511 = vmatmul.bf16.gmra.mxu0 %v2122
  %v2512 = vpop.f32.mrf.mxu0
  %v2513 = vadd.f32 %v2128, %v2512
  %v2514 = vpop.f32.mrf.mxu0
  %2515 = vdwg.mxu0
  %2516 = vmatpush.bf16.msra.mxu0 %v2354
  %2517 = vmatpush.bf16.msra.mxu0 %v2352
  %2518 = vmatpush.bf16.msra.mxu0 %v2350
  %2519 = vmatpush.bf16.msra.mxu0 %v2348
  %2520 = vmatpush.bf16.msra.mxu0 %v2346
  %2521 = vmatpush.bf16.msra.mxu0 %v2344
  %2522 = vmatpush.bf16.msra.mxu0 %v2342
  %2523 = vmatpush.bf16.msra.mxu0 %v2340
  %2524 = vmatmul.bf16.gmra.mxu0 %v2123
  %v2525 = vpop.f32.mrf.mxu0
  %v2526 = vadd.f32 %v2513, %v2525
  %v2527 = vpop.f32.mrf.mxu0
  %2528 = vdwg.mxu0
  %2529 = vmatpush.bf16.msra.mxu0 %v2370
  %2530 = vmatpush.bf16.msra.mxu0 %v2368
  %2531 = vmatpush.bf16.msra.mxu0 %v2366
  %2532 = vmatpush.bf16.msra.mxu0 %v2364
  %2533 = vmatpush.bf16.msra.mxu0 %v2362
  %2534 = vmatpush.bf16.msra.mxu0 %v2360
  %2535 = vmatpush.bf16.msra.mxu0 %v2358
  %2536 = vmatpush.bf16.msra.mxu0 %v2356
  %2537 = vmatmul.bf16.gmra.mxu0 %v2124
  %v2538 = vpop.f32.mrf.mxu0
  %v2539 = vadd.f32 %v2526, %v2538
  %v2540 = vpop.f32.mrf.mxu0
  %2541 = vdwg.mxu0
  %2542 = vmatpush.bf16.msra.mxu0 %v2386
  %2543 = vmatpush.bf16.msra.mxu0 %v2384
  %2544 = vmatpush.bf16.msra.mxu0 %v2382
  %2545 = vmatpush.bf16.msra.mxu0 %v2380
  %2546 = vmatpush.bf16.msra.mxu0 %v2378
  %2547 = vmatpush.bf16.msra.mxu0 %v2376
  %2548 = vmatpush.bf16.msra.mxu0 %v2374
  %2549 = vmatpush.bf16.msra.mxu0 %v2372
  %2550 = vmatmul.bf16.gmra.mxu0 %v2125
  %v2551 = vpop.f32.mrf.mxu0
  %v2552 = vadd.f32 %v2539, %v2551
  %v2553 = vpop.f32.mrf.mxu0
  %2554 = vdwg.mxu0
  %v2555 = vmax.f32 %v2500, 0.0
  %v2556 = vmax.f32 %v2552, 0.0
  %v2557 = vld [vmem:[%s6] sm:$0xf]
  %v2558 = vld [vmem:[%s6 + $0x4] sm:$0xf]
  %v2559 = vld [vmem:[%s6 + $0x8] sm:$0xf]
  %v2560 = vld [vmem:[%s6 + $0xc] sm:$0xf]
  %v2561 = vld [vmem:[%s6 + $0x10] sm:$0xf]
  %v2562 = vld [vmem:[%s6 + $0x14] sm:$0xf]
  %v2563 = vld [vmem:[%s6 + $0x18] sm:$0xf]
  %v2564 = vld [vmem:[%s6 + $0x1c] sm:$0xf]
  %v2565 = vld [vmem:[%s6 + $0x20] sm:$0xf]
  %v2566 = vld [vmem:[%s6 + $0x24] sm:$0xf]
  %v2567 = vld [vmem:[%s6 + $0x28] sm:$0xf]
  %v2568 = vld [vmem:[%s6 + $0x2c] sm:$0xf]
  %v2569 = vld [vmem:[%s6 + $0x30] sm:$0xf]
  %v2570 = vld [vmem:[%s6 + $0x34] sm:$0xf]
  %v2571 = vld [vmem:[%s6 + $0x38] sm:$0xf]
  %v2572 = vld [vmem:[%s6 + $0x3c] sm:$0xf]
  %v2573 = vld [vmem:[%s6 + $0x40] sm:$0xf]
  %v2574 = vld [vmem:[%s6 + $0x44] sm:$0xf]
  %v2575 = vld [vmem:[%s6 + $0x48] sm:$0xf]
  %v2576 = vld [vmem:[%s6 + $0x4c] sm:$0xf]
  %v2577 = vld [vmem:[%s6 + $0x50] sm:$0xf]
  %v2578 = vld [vmem:[%s6 + $0x54] sm:$0xf]
  %v2579 = vld [vmem:[%s6 + $0x58] sm:$0xf]
  %v2580 = vld [vmem:[%s6 + $0x5c] sm:$0xf]
  %v2581 = vld [vmem:[%s6 + $0x60] sm:$0xf]
  %v2582 = vld [vmem:[%s6 + $0x64] sm:$0xf]
  %v2583 = vld [vmem:[%s6 + $0x68] sm:$0xf]
  %v2584 = vld [vmem:[%s6 + $0x6c] sm:$0xf]
  %v2585 = vld [vmem:[%s6 + $0x70] sm:$0xf]
  %v2586 = vld [vmem:[%s6 + $0x74] sm:$0xf]
  %v2587 = vld [vmem:[%s6 + $0x78] sm:$0xf]
  %v2588 = vld [vmem:[%s6 + $0x7c] sm:$0xf]
  %v2589 = vld [vmem:[%s7] sm:$0x1]
  %v2590 = vpack.c.bf16 %v2555, %v2555
  %v2591 = vpack.c.bf16 %v2556, %v2556
  %v2593 = vperm.slane %v2589, 0
  %v2627 = vunpack.c.l.b16 %v2557
  %v2628 = vunpack.c.l.b16 %v2558
  %v2629 = vunpack.c.l.b16 %v2559
  %v2630 = vunpack.c.l.b16 %v2560
  %v2631 = vunpack.c.l.b16 %v2561
  %v2632 = vunpack.c.l.b16 %v2562
  %v2633 = vunpack.c.l.b16 %v2563
  %v2634 = vunpack.c.l.b16 %v2564
  %v2635 = vunpack.c.l.b16 %v2565
  %v2636 = vunpack.c.l.b16 %v2566
  %v2637 = vunpack.c.l.b16 %v2567
  %v2638 = vunpack.c.l.b16 %v2568
  %v2639 = vunpack.c.l.b16 %v2569
  %v2640 = vunpack.c.l.b16 %v2570
  %v2641 = vunpack.c.l.b16 %v2571
  %v2642 = vunpack.c.l.b16 %v2572
  %v2643 = vunpack.c.l.b16 %v2573
  %v2644 = vunpack.c.l.b16 %v2574
  %v2645 = vunpack.c.l.b16 %v2575
  %v2646 = vunpack.c.l.b16 %v2576
  %v2647 = vunpack.c.l.b16 %v2577
  %v2648 = vunpack.c.l.b16 %v2578
  %v2649 = vunpack.c.l.b16 %v2579
  %v2650 = vunpack.c.l.b16 %v2580
  %v2651 = vunpack.c.l.b16 %v2581
  %v2652 = vunpack.c.l.b16 %v2582
  %v2653 = vunpack.c.l.b16 %v2583
  %v2654 = vunpack.c.l.b16 %v2584
  %v2655 = vunpack.c.l.b16 %v2585
  %v2656 = vunpack.c.l.b16 %v2586
  %v2657 = vunpack.c.l.b16 %v2587
  %v2658 = vunpack.c.l.b16 %v2588
  %v2659 = vpack.c.b16 %v2628, %v2627
  %v2660 = vpack.c.b16 %v2630, %v2629
  %v2661 = vpack.c.b16 %v2632, %v2631
  %v2662 = vpack.c.b16 %v2634, %v2633
  %v2663 = vpack.c.b16 %v2636, %v2635
  %v2664 = vpack.c.b16 %v2638, %v2637
  %v2665 = vpack.c.b16 %v2640, %v2639
  %v2666 = vpack.c.b16 %v2642, %v2641
  %v2667 = vpack.c.b16 %v2644, %v2643
  %v2668 = vpack.c.b16 %v2646, %v2645
  %v2669 = vpack.c.b16 %v2648, %v2647
  %v2670 = vpack.c.b16 %v2650, %v2649
  %v2671 = vpack.c.b16 %v2652, %v2651
  %v2672 = vpack.c.b16 %v2654, %v2653
  %v2673 = vpack.c.b16 %v2656, %v2655
  %v2674 = vpack.c.b16 %v2658, %v2657
  %2691 = vmatpush.bf16.msra.mxu0 %v2666
  %2692 = vmatpush.bf16.msra.mxu0 %v2665
  %2693 = vmatpush.bf16.msra.mxu0 %v2664
  %2694 = vmatpush.bf16.msra.mxu0 %v2663
  %2695 = vmatpush.bf16.msra.mxu0 %v2662
  %2696 = vmatpush.bf16.msra.mxu0 %v2661
  %2697 = vmatpush.bf16.msra.mxu0 %v2660
  %2698 = vmatpush.bf16.msra.mxu0 %v2659
  %2699 = vmatmul.bf16.gmra.mxu0 %v2590
  %v2700 = vpop.f32.mrf.mxu0
  %v2701 = vadd.f32 %v2593, %v2700
  %v2702 = vpop.f32.mrf.mxu0
  %2703 = vdwg.mxu0
  %2704 = vmatpush.bf16.msra.mxu0 %v2674
  %2705 = vmatpush.bf16.msra.mxu0 %v2673
  %2706 = vmatpush.bf16.msra.mxu0 %v2672
  %2707 = vmatpush.bf16.msra.mxu0 %v2671
  %2708 = vmatpush.bf16.msra.mxu0 %v2670
  %2709 = vmatpush.bf16.msra.mxu0 %v2669
  %2710 = vmatpush.bf16.msra.mxu0 %v2668
  %2711 = vmatpush.bf16.msra.mxu0 %v2667
  %2712 = vmatmul.bf16.gmra.mxu0 %v2591
  %v2713 = vpop.f32.mrf.mxu0
  %v2714 = vadd.f32 %v2701, %v2713
  %v2715 = vpop.f32.mrf.mxu0
  %2716 = vdwg.mxu0
  %vm2717 = vcmask 25600
  %2718 = vst.msk [vmem:[%s8] sm:$0x3] %vm2717, %v2714
  // Predicated region
  $region34: #{pointnet.5} parent=0 // pred_check
    _
  $region35: #{pointnet.5} parent=0 // pred_check_branch
    %2720 = sbr.rel (0) target = $region37
  $region36: #{pointnet.5} parent=0 // pred_region
    _
  $region37: #{pointnet.5} parent=0 // pred_fallthru
    _
  // Predicated region
  $region38: #{pointnet.5} parent=0 // pred_check
    _
  $region39: #{pointnet.5} parent=0 // pred_check_branch
    %2722 = sbr.rel (0) target = $region41
  $region40: #{pointnet.5} parent=0 // pred_region
    _
  $region41: #{pointnet.5} parent=0 // pred_fallthru
    _

// kernel: pointnet.7
$region0: #{pointnet.7}
  #allocation0 [shape = 'u32[]', space=smem, size = 0x4, offset = 0x4, fixed_abs, tag = 'smem constant byte address 0x4 - core index']
  #allocation1 [shape = 'u32[72,128]{1,0:T(1,128)}', space=vmem, size = 0x9000, scoped, tag = 'internal scratch']
  %s0 = inlined_call_operand.vmem [shape: f32[2,1024], index: 0, kind: input, shape index: {}]
  %s1 = inlined_call_operand.vmem [shape: f32[1,1024], index: 1, kind: input, shape index: {}]
  %s2 = inlined_call_operand.vmem [shape: bf16[1024,512], index: 2, kind: input, shape index: {}]
  %s3 = inlined_call_operand.vmem [shape: f32[1,512], index: 3, kind: input, shape index: {}]
  %s4 = inlined_call_operand.vmem [shape: bf16[512,256], index: 4, kind: input, shape index: {}]
  %s5 = inlined_call_operand.vmem [shape: f32[1,256], index: 5, kind: input, shape index: {}]
  %s6 = inlined_call_operand.vmem [shape: bf16[256,2], index: 6, kind: input, shape index: {}]
  %s7 = inlined_call_operand.vmem [shape: f32[1,2], index: 7, kind: input, shape index: {}]
  %s8 = inlined_call_operand.hbm [shape: f32[2,2], index: 8, kind: output, shape index: {}]
  %s9 = sld [smem:[#allocation0]]
  $region42: #{pointnet.7} parent=0
    _
  %s11 = ssub.s32 1, %s9
  %s12 = scalar_select 0, %s11, %s9
  $region1: #{pointnet.7} parent=0
    #allocation2 [shape = 'u8[1024]{0}', space=vmem, size = 0x400, scoped, tag = 'output window, operand 0, single buffered']
    #allocation3 [shape = 's32[1]{0}', space=sflag, size = 0x4, scoped, tag = 'scoped memory for pointnet.7']
    %13 = vsyncpa [#allocation3], 0
    // Predicated region
    $region2: #{pointnet.7} parent=1 // pred_check
      _
    $region3: #{pointnet.7} parent=1 // pred_check_branch
      %15 = sbr.rel (0) target = $region5
    $region4: #{pointnet.7} parent=1 // pred_region
      _
    $region5: #{pointnet.7} parent=1 // pred_fallthru
      _
    // Predicated region
    $region6: #{pointnet.7} parent=1 // pred_check
      _
    $region7: #{pointnet.7} parent=1 // pred_check_branch
      %17 = sbr.rel (0) target = $region9
    $region8: #{pointnet.7} parent=1 // pred_region
      _
    $region9: #{pointnet.7} parent=1 // pred_fallthru
      _
    // Predicated region
    $region10: #{pointnet.7} parent=1 // pred_check
      _
    $region11: #{pointnet.7} parent=1 // pred_check_branch
      %19 = sbr.rel (0) target = $region13
    $region12: #{pointnet.7} parent=1 // pred_region
      _
    $region13: #{pointnet.7} parent=1 // pred_fallthru
      _
    // Predicated region
    $region14: #{pointnet.7} parent=1 // pred_check
      _
    $region15: #{pointnet.7} parent=1 // pred_check_branch
      %21 = sbr.rel (0) target = $region17
    $region16: #{pointnet.7} parent=1 // pred_region
      _
    $region17: #{pointnet.7} parent=1 // pred_fallthru
      _
    // Predicated region
    $region18: #{pointnet.7} parent=1 // pred_check
      _
    $region19: #{pointnet.7} parent=1 // pred_check_branch
      %23 = sbr.rel (0) target = $region21
    $region20: #{pointnet.7} parent=1 // pred_region
      _
    $region21: #{pointnet.7} parent=1 // pred_fallthru
      _
    // Predicated region
    $region22: #{pointnet.7} parent=1 // pred_check
      _
    $region23: #{pointnet.7} parent=1 // pred_check_branch
      %25 = sbr.rel (0) target = $region25
    $region24: #{pointnet.7} parent=1 // pred_region
      _
    $region25: #{pointnet.7} parent=1 // pred_fallthru
      _
    // Predicated region
    $region26: #{pointnet.7} parent=1 // pred_check
      _
    $region27: #{pointnet.7} parent=1 // pred_check_branch
      %27 = sbr.rel (0) target = $region29
    $region28: #{pointnet.7} parent=1 // pred_region
      _
    $region29: #{pointnet.7} parent=1 // pred_fallthru
      _
    // Predicated region
    $region30: #{pointnet.7} parent=1 // pred_check
      _
    $region31: #{pointnet.7} parent=1 // pred_check_branch
      %29 = sbr.rel (0) target = $region33
    $region32: #{pointnet.7} parent=1 // pred_region
      _
    $region33: #{pointnet.7} parent=1 // pred_fallthru
      _
    %v30 = vld [vmem:[%s0] sm:$0xff]
    %v31 = vld [vmem:[%s0 + $0x8] sm:$0xff]
    %v32 = vld [vmem:[%s1] sm:$0xff]
    %v34 = vperm.slane %v32, 0
    %v35 = vperm.slane %v32, 1
    %v36 = vperm.slane %v32, 2
    %v37 = vperm.slane %v32, 3
    %v38 = vperm.slane %v32, 4
    %v39 = vperm.slane %v32, 5
    %v40 = vperm.slane %v32, 6
    %v41 = vperm.slane %v32, 7
    %v42 = vrot.slane %v35, 6
    %v43 = vrot.slane %v36, 4
    %v44 = vrot.slane %v37, 2
    %v45 = vrot.slane %v39, 6
    %v46 = vrot.slane %v40, 4
    %v47 = vrot.slane %v41, 2
    %vm48 = vcmask 1041408
    %v49 = vsel %vm48, %v34, %v42
    %vm50 = vcmask 1045508
    %v51 = vsel %vm50, %v43, %v44
    %vm52 = vcmask 1043456
    %v53 = vsel %vm52, %v49, %v51
    %v54 = vsel %vm48, %v38, %v45
    %v55 = vsel %vm50, %v46, %v47
    %v56 = vsel %vm52, %v54, %v55
    %v59 = vadd.f32 %v30, %v53
    %v60 = vadd.f32 %v31, %v56
    %v61 = vld [vmem:[%s2] sm:$0xff]
    %v62 = vld [vmem:[%s2 + $0x8] sm:$0xff]
    %v63 = vld [vmem:[%s2 + $0x10] sm:$0xff]
    %v64 = vld [vmem:[%s2 + $0x18] sm:$0xff]
    %v65 = vld [vmem:[%s2 + $0x20] sm:$0xff]
    %v66 = vld [vmem:[%s2 + $0x28] sm:$0xff]
    %v67 = vld [vmem:[%s2 + $0x30] sm:$0xff]
    %v68 = vld [vmem:[%s2 + $0x38] sm:$0xff]
    %v69 = vld [vmem:[%s2 + $0x40] sm:$0xff]
    %v70 = vld [vmem:[%s2 + $0x48] sm:$0xff]
    %v71 = vld [vmem:[%s2 + $0x50] sm:$0xff]
    %v72 = vld [vmem:[%s2 + $0x58] sm:$0xff]
    %v73 = vld [vmem:[%s2 + $0x60] sm:$0xff]
    %v74 = vld [vmem:[%s2 + $0x68] sm:$0xff]
    %v75 = vld [vmem:[%s2 + $0x70] sm:$0xff]
    %v76 = vld [vmem:[%s2 + $0x78] sm:$0xff]
    %v77 = vld [vmem:[%s2 + $0x80] sm:$0xff]
    %v78 = vld [vmem:[%s2 + $0x88] sm:$0xff]
    %v79 = vld [vmem:[%s2 + $0x90] sm:$0xff]
    %v80 = vld [vmem:[%s2 + $0x98] sm:$0xff]
    %v81 = vld [vmem:[%s2 + $0xa0] sm:$0xff]
    %v82 = vld [vmem:[%s2 + $0xa8] sm:$0xff]
    %v83 = vld [vmem:[%s2 + $0xb0] sm:$0xff]
    %v84 = vld [vmem:[%s2 + $0xb8] sm:$0xff]
    %v85 = vld [vmem:[%s2 + $0xc0] sm:$0xff]
    %v86 = vld [vmem:[%s2 + $0xc8] sm:$0xff]
    %v87 = vld [vmem:[%s2 + $0xd0] sm:$0xff]
    %v88 = vld [vmem:[%s2 + $0xd8] sm:$0xff]
    %v89 = vld [vmem:[%s2 + $0xe0] sm:$0xff]
    %v90 = vld [vmem:[%s2 + $0xe8] sm:$0xff]
    %v91 = vld [vmem:[%s2 + $0xf0] sm:$0xff]
    %v92 = vld [vmem:[%s2 + $0xf8] sm:$0xff]
    %v93 = vld [vmem:[%s2 + $0x100] sm:$0xff]
    %v94 = vld [vmem:[%s2 + $0x108] sm:$0xff]
    %v95 = vld [vmem:[%s2 + $0x110] sm:$0xff]
    %v96 = vld [vmem:[%s2 + $0x118] sm:$0xff]
    %v97 = vld [vmem:[%s2 + $0x120] sm:$0xff]
    %v98 = vld [vmem:[%s2 + $0x128] sm:$0xff]
    %v99 = vld [vmem:[%s2 + $0x130] sm:$0xff]
    %v100 = vld [vmem:[%s2 + $0x138] sm:$0xff]
    %v101 = vld [vmem:[%s2 + $0x140] sm:$0xff]
    %v102 = vld [vmem:[%s2 + $0x148] sm:$0xff]
    %v103 = vld [vmem:[%s2 + $0x150] sm:$0xff]
    %v104 = vld [vmem:[%s2 + $0x158] sm:$0xff]
    %v105 = vld [vmem:[%s2 + $0x160] sm:$0xff]
    %v106 = vld [vmem:[%s2 + $0x168] sm:$0xff]
    %v107 = vld [vmem:[%s2 + $0x170] sm:$0xff]
    %v108 = vld [vmem:[%s2 + $0x178] sm:$0xff]
    %v109 = vld [vmem:[%s2 + $0x180] sm:$0xff]
    %v110 = vld [vmem:[%s2 + $0x188] sm:$0xff]
    %v111 = vld [vmem:[%s2 + $0x190] sm:$0xff]
    %v112 = vld [vmem:[%s2 + $0x198] sm:$0xff]
    %v113 = vld [vmem:[%s2 + $0x1a0] sm:$0xff]
    %v114 = vld [vmem:[%s2 + $0x1a8] sm:$0xff]
    %v115 = vld [vmem:[%s2 + $0x1b0] sm:$0xff]
    %v116 = vld [vmem:[%s2 + $0x1b8] sm:$0xff]
    %v117 = vld [vmem:[%s2 + $0x1c0] sm:$0xff]
    %v118 = vld [vmem:[%s2 + $0x1c8] sm:$0xff]
    %v119 = vld [vmem:[%s2 + $0x1d0] sm:$0xff]
    %v120 = vld [vmem:[%s2 + $0x1d8] sm:$0xff]
    %v121 = vld [vmem:[%s2 + $0x1e0] sm:$0xff]
    %v122 = vld [vmem:[%s2 + $0x1e8] sm:$0xff]
    %v123 = vld [vmem:[%s2 + $0x1f0] sm:$0xff]
    %v124 = vld [vmem:[%s2 + $0x1f8] sm:$0xff]
    %v125 = vld [vmem:[%s2 + $0x200] sm:$0xff]
    %v126 = vld [vmem:[%s2 + $0x208] sm:$0xff]
    %v127 = vld [vmem:[%s2 + $0x210] sm:$0xff]
    %v128 = vld [vmem:[%s2 + $0x218] sm:$0xff]
    %v129 = vld [vmem:[%s2 + $0x220] sm:$0xff]
    %v130 = vld [vmem:[%s2 + $0x228] sm:$0xff]
    %v131 = vld [vmem:[%s2 + $0x230] sm:$0xff]
    %v132 = vld [vmem:[%s2 + $0x238] sm:$0xff]
    %v133 = vld [vmem:[%s2 + $0x240] sm:$0xff]
    %v134 = vld [vmem:[%s2 + $0x248] sm:$0xff]
    %v135 = vld [vmem:[%s2 + $0x250] sm:$0xff]
    %v136 = vld [vmem:[%s2 + $0x258] sm:$0xff]
    %v137 = vld [vmem:[%s2 + $0x260] sm:$0xff]
    %v138 = vld [vmem:[%s2 + $0x268] sm:$0xff]
    %v139 = vld [vmem:[%s2 + $0x270] sm:$0xff]
    %v140 = vld [vmem:[%s2 + $0x278] sm:$0xff]
    %v141 = vld [vmem:[%s2 + $0x280] sm:$0xff]
    %v142 = vld [vmem:[%s2 + $0x288] sm:$0xff]
    %v143 = vld [vmem:[%s2 + $0x290] sm:$0xff]
    %v144 = vld [vmem:[%s2 + $0x298] sm:$0xff]
    %v145 = vld [vmem:[%s2 + $0x2a0] sm:$0xff]
    %v146 = vld [vmem:[%s2 + $0x2a8] sm:$0xff]
    %v147 = vld [vmem:[%s2 + $0x2b0] sm:$0xff]
    %v148 = vld [vmem:[%s2 + $0x2b8] sm:$0xff]
    %v149 = vld [vmem:[%s2 + $0x2c0] sm:$0xff]
    %v150 = vld [vmem:[%s2 + $0x2c8] sm:$0xff]
    %v151 = vld [vmem:[%s2 + $0x2d0] sm:$0xff]
    %v152 = vld [vmem:[%s2 + $0x2d8] sm:$0xff]
    %v153 = vld [vmem:[%s2 + $0x2e0] sm:$0xff]
    %v154 = vld [vmem:[%s2 + $0x2e8] sm:$0xff]
    %v155 = vld [vmem:[%s2 + $0x2f0] sm:$0xff]
    %v156 = vld [vmem:[%s2 + $0x2f8] sm:$0xff]
    %v157 = vld [vmem:[%s2 + $0x300] sm:$0xff]
    %v158 = vld [vmem:[%s2 + $0x308] sm:$0xff]
    %v159 = vld [vmem:[%s2 + $0x310] sm:$0xff]
    %v160 = vld [vmem:[%s2 + $0x318] sm:$0xff]
    %v161 = vld [vmem:[%s2 + $0x320] sm:$0xff]
    %v162 = vld [vmem:[%s2 + $0x328] sm:$0xff]
    %v163 = vld [vmem:[%s2 + $0x330] sm:$0xff]
    %v164 = vld [vmem:[%s2 + $0x338] sm:$0xff]
    %v165 = vld [vmem:[%s2 + $0x340] sm:$0xff]
    %v166 = vld [vmem:[%s2 + $0x348] sm:$0xff]
    %v167 = vld [vmem:[%s2 + $0x350] sm:$0xff]
    %v168 = vld [vmem:[%s2 + $0x358] sm:$0xff]
    %v169 = vld [vmem:[%s2 + $0x360] sm:$0xff]
    %v170 = vld [vmem:[%s2 + $0x368] sm:$0xff]
    %v171 = vld [vmem:[%s2 + $0x370] sm:$0xff]
    %v172 = vld [vmem:[%s2 + $0x378] sm:$0xff]
    %v173 = vld [vmem:[%s2 + $0x380] sm:$0xff]
    %v174 = vld [vmem:[%s2 + $0x388] sm:$0xff]
    %v175 = vld [vmem:[%s2 + $0x390] sm:$0xff]
    %v176 = vld [vmem:[%s2 + $0x398] sm:$0xff]
    %v177 = vld [vmem:[%s2 + $0x3a0] sm:$0xff]
    %v178 = vld [vmem:[%s2 + $0x3a8] sm:$0xff]
    %v179 = vld [vmem:[%s2 + $0x3b0] sm:$0xff]
    %v180 = vld [vmem:[%s2 + $0x3b8] sm:$0xff]
    %v181 = vld [vmem:[%s2 + $0x3c0] sm:$0xff]
    %v182 = vld [vmem:[%s2 + $0x3c8] sm:$0xff]
    %v183 = vld [vmem:[%s2 + $0x3d0] sm:$0xff]
    %v184 = vld [vmem:[%s2 + $0x3d8] sm:$0xff]
    %v185 = vld [vmem:[%s2 + $0x3e0] sm:$0xff]
    %v186 = vld [vmem:[%s2 + $0x3e8] sm:$0xff]
    %v187 = vld [vmem:[%s2 + $0x3f0] sm:$0xff]
    %v188 = vld [vmem:[%s2 + $0x3f8] sm:$0xff]
    %v189 = vld [vmem:[%s2 + $0x400] sm:$0xff]
    %v190 = vld [vmem:[%s2 + $0x408] sm:$0xff]
    %v191 = vld [vmem:[%s2 + $0x410] sm:$0xff]
    %v192 = vld [vmem:[%s2 + $0x418] sm:$0xff]
    %v193 = vld [vmem:[%s2 + $0x420] sm:$0xff]
    %v194 = vld [vmem:[%s2 + $0x428] sm:$0xff]
    %v195 = vld [vmem:[%s2 + $0x430] sm:$0xff]
    %v196 = vld [vmem:[%s2 + $0x438] sm:$0xff]
    %v197 = vld [vmem:[%s2 + $0x440] sm:$0xff]
    %v198 = vld [vmem:[%s2 + $0x448] sm:$0xff]
    %v199 = vld [vmem:[%s2 + $0x450] sm:$0xff]
    %v200 = vld [vmem:[%s2 + $0x458] sm:$0xff]
    %v201 = vld [vmem:[%s2 + $0x460] sm:$0xff]
    %v202 = vld [vmem:[%s2 + $0x468] sm:$0xff]
    %v203 = vld [vmem:[%s2 + $0x470] sm:$0xff]
    %v204 = vld [vmem:[%s2 + $0x478] sm:$0xff]
    %v205 = vld [vmem:[%s2 + $0x480] sm:$0xff]
    %v206 = vld [vmem:[%s2 + $0x488] sm:$0xff]
    %v207 = vld [vmem:[%s2 + $0x490] sm:$0xff]
    %v208 = vld [vmem:[%s2 + $0x498] sm:$0xff]
    %v209 = vld [vmem:[%s2 + $0x4a0] sm:$0xff]
    %v210 = vld [vmem:[%s2 + $0x4a8] sm:$0xff]
    %v211 = vld [vmem:[%s2 + $0x4b0] sm:$0xff]
    %v212 = vld [vmem:[%s2 + $0x4b8] sm:$0xff]
    %v213 = vld [vmem:[%s2 + $0x4c0] sm:$0xff]
    %v214 = vld [vmem:[%s2 + $0x4c8] sm:$0xff]
    %v215 = vld [vmem:[%s2 + $0x4d0] sm:$0xff]
    %v216 = vld [vmem:[%s2 + $0x4d8] sm:$0xff]
    %v217 = vld [vmem:[%s2 + $0x4e0] sm:$0xff]
    %v218 = vld [vmem:[%s2 + $0x4e8] sm:$0xff]
    %v219 = vld [vmem:[%s2 + $0x4f0] sm:$0xff]
    %v220 = vld [vmem:[%s2 + $0x4f8] sm:$0xff]
    %v221 = vld [vmem:[%s2 + $0x500] sm:$0xff]
    %v222 = vld [vmem:[%s2 + $0x508] sm:$0xff]
    %v223 = vld [vmem:[%s2 + $0x510] sm:$0xff]
    %v224 = vld [vmem:[%s2 + $0x518] sm:$0xff]
    %v225 = vld [vmem:[%s2 + $0x520] sm:$0xff]
    %v226 = vld [vmem:[%s2 + $0x528] sm:$0xff]
    %v227 = vld [vmem:[%s2 + $0x530] sm:$0xff]
    %v228 = vld [vmem:[%s2 + $0x538] sm:$0xff]
    %v229 = vld [vmem:[%s2 + $0x540] sm:$0xff]
    %v230 = vld [vmem:[%s2 + $0x548] sm:$0xff]
    %v231 = vld [vmem:[%s2 + $0x550] sm:$0xff]
    %v232 = vld [vmem:[%s2 + $0x558] sm:$0xff]
    %v233 = vld [vmem:[%s2 + $0x560] sm:$0xff]
    %v234 = vld [vmem:[%s2 + $0x568] sm:$0xff]
    %v235 = vld [vmem:[%s2 + $0x570] sm:$0xff]
    %v236 = vld [vmem:[%s2 + $0x578] sm:$0xff]
    %v237 = vld [vmem:[%s2 + $0x580] sm:$0xff]
    %v238 = vld [vmem:[%s2 + $0x588] sm:$0xff]
    %v239 = vld [vmem:[%s2 + $0x590] sm:$0xff]
    %v240 = vld [vmem:[%s2 + $0x598] sm:$0xff]
    %v241 = vld [vmem:[%s2 + $0x5a0] sm:$0xff]
    %v242 = vld [vmem:[%s2 + $0x5a8] sm:$0xff]
    %v243 = vld [vmem:[%s2 + $0x5b0] sm:$0xff]
    %v244 = vld [vmem:[%s2 + $0x5b8] sm:$0xff]
    %v245 = vld [vmem:[%s2 + $0x5c0] sm:$0xff]
    %v246 = vld [vmem:[%s2 + $0x5c8] sm:$0xff]
    %v247 = vld [vmem:[%s2 + $0x5d0] sm:$0xff]
    %v248 = vld [vmem:[%s2 + $0x5d8] sm:$0xff]
    %v249 = vld [vmem:[%s2 + $0x5e0] sm:$0xff]
    %v250 = vld [vmem:[%s2 + $0x5e8] sm:$0xff]
    %v251 = vld [vmem:[%s2 + $0x5f0] sm:$0xff]
    %v252 = vld [vmem:[%s2 + $0x5f8] sm:$0xff]
    %v253 = vld [vmem:[%s2 + $0x600] sm:$0xff]
    %v254 = vld [vmem:[%s2 + $0x608] sm:$0xff]
    %v255 = vld [vmem:[%s2 + $0x610] sm:$0xff]
    %v256 = vld [vmem:[%s2 + $0x618] sm:$0xff]
    %v257 = vld [vmem:[%s2 + $0x620] sm:$0xff]
    %v258 = vld [vmem:[%s2 + $0x628] sm:$0xff]
    %v259 = vld [vmem:[%s2 + $0x630] sm:$0xff]
    %v260 = vld [vmem:[%s2 + $0x638] sm:$0xff]
    %v261 = vld [vmem:[%s2 + $0x640] sm:$0xff]
    %v262 = vld [vmem:[%s2 + $0x648] sm:$0xff]
    %v263 = vld [vmem:[%s2 + $0x650] sm:$0xff]
    %v264 = vld [vmem:[%s2 + $0x658] sm:$0xff]
    %v265 = vld [vmem:[%s2 + $0x660] sm:$0xff]
    %v266 = vld [vmem:[%s2 + $0x668] sm:$0xff]
    %v267 = vld [vmem:[%s2 + $0x670] sm:$0xff]
    %v268 = vld [vmem:[%s2 + $0x678] sm:$0xff]
    %v269 = vld [vmem:[%s2 + $0x680] sm:$0xff]
    %v270 = vld [vmem:[%s2 + $0x688] sm:$0xff]
    %v271 = vld [vmem:[%s2 + $0x690] sm:$0xff]
    %v272 = vld [vmem:[%s2 + $0x698] sm:$0xff]
    %v273 = vld [vmem:[%s2 + $0x6a0] sm:$0xff]
    %v274 = vld [vmem:[%s2 + $0x6a8] sm:$0xff]
    %v275 = vld [vmem:[%s2 + $0x6b0] sm:$0xff]
    %v276 = vld [vmem:[%s2 + $0x6b8] sm:$0xff]
    %v277 = vld [vmem:[%s2 + $0x6c0] sm:$0xff]
    %v278 = vld [vmem:[%s2 + $0x6c8] sm:$0xff]
    %v279 = vld [vmem:[%s2 + $0x6d0] sm:$0xff]
    %v280 = vld [vmem:[%s2 + $0x6d8] sm:$0xff]
    %v281 = vld [vmem:[%s2 + $0x6e0] sm:$0xff]
    %v282 = vld [vmem:[%s2 + $0x6e8] sm:$0xff]
    %v283 = vld [vmem:[%s2 + $0x6f0] sm:$0xff]
    %v284 = vld [vmem:[%s2 + $0x6f8] sm:$0xff]
    %v285 = vld [vmem:[%s2 + $0x700] sm:$0xff]
    %v286 = vld [vmem:[%s2 + $0x708] sm:$0xff]
    %v287 = vld [vmem:[%s2 + $0x710] sm:$0xff]
    %v288 = vld [vmem:[%s2 + $0x718] sm:$0xff]
    %v289 = vld [vmem:[%s2 + $0x720] sm:$0xff]
    %v290 = vld [vmem:[%s2 + $0x728] sm:$0xff]
    %v291 = vld [vmem:[%s2 + $0x730] sm:$0xff]
    %v292 = vld [vmem:[%s2 + $0x738] sm:$0xff]
    %v293 = vld [vmem:[%s2 + $0x740] sm:$0xff]
    %v294 = vld [vmem:[%s2 + $0x748] sm:$0xff]
    %v295 = vld [vmem:[%s2 + $0x750] sm:$0xff]
    %v296 = vld [vmem:[%s2 + $0x758] sm:$0xff]
    %v297 = vld [vmem:[%s2 + $0x760] sm:$0xff]
    %v298 = vld [vmem:[%s2 + $0x768] sm:$0xff]
    %v299 = vld [vmem:[%s2 + $0x770] sm:$0xff]
    %v300 = vld [vmem:[%s2 + $0x778] sm:$0xff]
    %v301 = vld [vmem:[%s2 + $0x780] sm:$0xff]
    %v302 = vld [vmem:[%s2 + $0x788] sm:$0xff]
    %v303 = vld [vmem:[%s2 + $0x790] sm:$0xff]
    %v304 = vld [vmem:[%s2 + $0x798] sm:$0xff]
    %v305 = vld [vmem:[%s2 + $0x7a0] sm:$0xff]
    %v306 = vld [vmem:[%s2 + $0x7a8] sm:$0xff]
    %v307 = vld [vmem:[%s2 + $0x7b0] sm:$0xff]
    %v308 = vld [vmem:[%s2 + $0x7b8] sm:$0xff]
    %v309 = vld [vmem:[%s2 + $0x7c0] sm:$0xff]
    %v310 = vld [vmem:[%s2 + $0x7c8] sm:$0xff]
    %v311 = vld [vmem:[%s2 + $0x7d0] sm:$0xff]
    %v312 = vld [vmem:[%s2 + $0x7d8] sm:$0xff]
    %v313 = vld [vmem:[%s2 + $0x7e0] sm:$0xff]
    %v314 = vld [vmem:[%s2 + $0x7e8] sm:$0xff]
    %v315 = vld [vmem:[%s2 + $0x7f0] sm:$0xff]
    %v316 = vld [vmem:[%s2 + $0x7f8] sm:$0xff]
    %v317 = vld [vmem:[%s3] sm:$0xf]
    %320 = vst [vmem:[#allocation1] ss:$4 sm:$0xff] %v59
    %s321 = scalar_lea.vmem [#allocation1], 32
    %322 = vst [vmem:[%s321] ss:$4 sm:$0xff] %v60
    %v323 = vld.sshfl [vmem:[#allocation1] sm:$0xff pattern:$0x73625140]
    %v324 = vld.sshfl [vmem:[#allocation1 + $0x8] sm:$0xff pattern:$0x73625140]
    %v325 = vld.sshfl [vmem:[#allocation1 + $0x10] sm:$0xff pattern:$0x73625140]
    %v326 = vld.sshfl [vmem:[#allocation1 + $0x18] sm:$0xff pattern:$0x73625140]
    %v327 = vld.sshfl [vmem:[#allocation1 + $0x20] sm:$0xff pattern:$0x73625140]
    %v328 = vld.sshfl [vmem:[#allocation1 + $0x28] sm:$0xff pattern:$0x73625140]
    %v329 = vld.sshfl [vmem:[#allocation1 + $0x30] sm:$0xff pattern:$0x73625140]
    %v330 = vld.sshfl [vmem:[#allocation1 + $0x38] sm:$0xff pattern:$0x73625140]
    %v339 = vpack.c.bf16 %v323, %v323
    %v340 = vpack.c.bf16 %v324, %v324
    %v341 = vpack.c.bf16 %v325, %v325
    %v342 = vpack.c.bf16 %v326, %v326
    %v343 = vpack.c.bf16 %v327, %v327
    %v344 = vpack.c.bf16 %v328, %v328
    %v345 = vpack.c.bf16 %v329, %v329
    %v346 = vpack.c.bf16 %v330, %v330
    %v348 = vperm.slane %v317, 0
    %v349 = vperm.slane %v317, 1
    %v350 = vperm.slane %v317, 2
    %v351 = vperm.slane %v317, 3
    %v612 = vunpack.c.l.b16 %v61
    %v613 = vunpack.c.h.b16 %v61
    %v614 = vunpack.c.l.b16 %v62
    %v615 = vunpack.c.h.b16 %v62
    %v616 = vunpack.c.l.b16 %v63
    %v617 = vunpack.c.h.b16 %v63
    %v618 = vunpack.c.l.b16 %v64
    %v619 = vunpack.c.h.b16 %v64
    %v620 = vunpack.c.l.b16 %v65
    %v621 = vunpack.c.h.b16 %v65
    %v622 = vunpack.c.l.b16 %v66
    %v623 = vunpack.c.h.b16 %v66
    %v624 = vunpack.c.l.b16 %v67
    %v625 = vunpack.c.h.b16 %v67
    %v626 = vunpack.c.l.b16 %v68
    %v627 = vunpack.c.h.b16 %v68
    %v628 = vunpack.c.l.b16 %v69
    %v629 = vunpack.c.h.b16 %v69
    %v630 = vunpack.c.l.b16 %v70
    %v631 = vunpack.c.h.b16 %v70
    %v632 = vunpack.c.l.b16 %v71
    %v633 = vunpack.c.h.b16 %v71
    %v634 = vunpack.c.l.b16 %v72
    %v635 = vunpack.c.h.b16 %v72
    %v636 = vunpack.c.l.b16 %v73
    %v637 = vunpack.c.h.b16 %v73
    %v638 = vunpack.c.l.b16 %v74
    %v639 = vunpack.c.h.b16 %v74
    %v640 = vunpack.c.l.b16 %v75
    %v641 = vunpack.c.h.b16 %v75
    %v642 = vunpack.c.l.b16 %v76
    %v643 = vunpack.c.h.b16 %v76
    %v644 = vunpack.c.l.b16 %v77
    %v645 = vunpack.c.h.b16 %v77
    %v646 = vunpack.c.l.b16 %v78
    %v647 = vunpack.c.h.b16 %v78
    %v648 = vunpack.c.l.b16 %v79
    %v649 = vunpack.c.h.b16 %v79
    %v650 = vunpack.c.l.b16 %v80
    %v651 = vunpack.c.h.b16 %v80
    %v652 = vunpack.c.l.b16 %v81
    %v653 = vunpack.c.h.b16 %v81
    %v654 = vunpack.c.l.b16 %v82
    %v655 = vunpack.c.h.b16 %v82
    %v656 = vunpack.c.l.b16 %v83
    %v657 = vunpack.c.h.b16 %v83
    %v658 = vunpack.c.l.b16 %v84
    %v659 = vunpack.c.h.b16 %v84
    %v660 = vunpack.c.l.b16 %v85
    %v661 = vunpack.c.h.b16 %v85
    %v662 = vunpack.c.l.b16 %v86
    %v663 = vunpack.c.h.b16 %v86
    %v664 = vunpack.c.l.b16 %v87
    %v665 = vunpack.c.h.b16 %v87
    %v666 = vunpack.c.l.b16 %v88
    %v667 = vunpack.c.h.b16 %v88
    %v668 = vunpack.c.l.b16 %v89
    %v669 = vunpack.c.h.b16 %v89
    %v670 = vunpack.c.l.b16 %v90
    %v671 = vunpack.c.h.b16 %v90
    %v672 = vunpack.c.l.b16 %v91
    %v673 = vunpack.c.h.b16 %v91
    %v674 = vunpack.c.l.b16 %v92
    %v675 = vunpack.c.h.b16 %v92
    %v676 = vunpack.c.l.b16 %v93
    %v677 = vunpack.c.h.b16 %v93
    %v678 = vunpack.c.l.b16 %v94
    %v679 = vunpack.c.h.b16 %v94
    %v680 = vunpack.c.l.b16 %v95
    %v681 = vunpack.c.h.b16 %v95
    %v682 = vunpack.c.l.b16 %v96
    %v683 = vunpack.c.h.b16 %v96
    %v684 = vunpack.c.l.b16 %v97
    %v685 = vunpack.c.h.b16 %v97
    %v686 = vunpack.c.l.b16 %v98
    %v687 = vunpack.c.h.b16 %v98
    %v688 = vunpack.c.l.b16 %v99
    %v689 = vunpack.c.h.b16 %v99
    %v690 = vunpack.c.l.b16 %v100
    %v691 = vunpack.c.h.b16 %v100
    %v692 = vunpack.c.l.b16 %v101
    %v693 = vunpack.c.h.b16 %v101
    %v694 = vunpack.c.l.b16 %v102
    %v695 = vunpack.c.h.b16 %v102
    %v696 = vunpack.c.l.b16 %v103
    %v697 = vunpack.c.h.b16 %v103
    %v698 = vunpack.c.l.b16 %v104
    %v699 = vunpack.c.h.b16 %v104
    %v700 = vunpack.c.l.b16 %v105
    %v701 = vunpack.c.h.b16 %v105
    %v702 = vunpack.c.l.b16 %v106
    %v703 = vunpack.c.h.b16 %v106
    %v704 = vunpack.c.l.b16 %v107
    %v705 = vunpack.c.h.b16 %v107
    %v706 = vunpack.c.l.b16 %v108
    %v707 = vunpack.c.h.b16 %v108
    %v708 = vunpack.c.l.b16 %v109
    %v709 = vunpack.c.h.b16 %v109
    %v710 = vunpack.c.l.b16 %v110
    %v711 = vunpack.c.h.b16 %v110
    %v712 = vunpack.c.l.b16 %v111
    %v713 = vunpack.c.h.b16 %v111
    %v714 = vunpack.c.l.b16 %v112
    %v715 = vunpack.c.h.b16 %v112
    %v716 = vunpack.c.l.b16 %v113
    %v717 = vunpack.c.h.b16 %v113
    %v718 = vunpack.c.l.b16 %v114
    %v719 = vunpack.c.h.b16 %v114
    %v720 = vunpack.c.l.b16 %v115
    %v721 = vunpack.c.h.b16 %v115
    %v722 = vunpack.c.l.b16 %v116
    %v723 = vunpack.c.h.b16 %v116
    %v724 = vunpack.c.l.b16 %v117
    %v725 = vunpack.c.h.b16 %v117
    %v726 = vunpack.c.l.b16 %v118
    %v727 = vunpack.c.h.b16 %v118
    %v728 = vunpack.c.l.b16 %v119
    %v729 = vunpack.c.h.b16 %v119
    %v730 = vunpack.c.l.b16 %v120
    %v731 = vunpack.c.h.b16 %v120
    %v732 = vunpack.c.l.b16 %v121
    %v733 = vunpack.c.h.b16 %v121
    %v734 = vunpack.c.l.b16 %v122
    %v735 = vunpack.c.h.b16 %v122
    %v736 = vunpack.c.l.b16 %v123
    %v737 = vunpack.c.h.b16 %v123
    %v738 = vunpack.c.l.b16 %v124
    %v739 = vunpack.c.h.b16 %v124
    %v740 = vunpack.c.l.b16 %v125
    %v741 = vunpack.c.h.b16 %v125
    %v742 = vunpack.c.l.b16 %v126
    %v743 = vunpack.c.h.b16 %v126
    %v744 = vunpack.c.l.b16 %v127
    %v745 = vunpack.c.h.b16 %v127
    %v746 = vunpack.c.l.b16 %v128
    %v747 = vunpack.c.h.b16 %v128
    %v748 = vunpack.c.l.b16 %v129
    %v749 = vunpack.c.h.b16 %v129
    %v750 = vunpack.c.l.b16 %v130
    %v751 = vunpack.c.h.b16 %v130
    %v752 = vunpack.c.l.b16 %v131
    %v753 = vunpack.c.h.b16 %v131
    %v754 = vunpack.c.l.b16 %v132
    %v755 = vunpack.c.h.b16 %v132
    %v756 = vunpack.c.l.b16 %v133
    %v757 = vunpack.c.h.b16 %v133
    %v758 = vunpack.c.l.b16 %v134
    %v759 = vunpack.c.h.b16 %v134
    %v760 = vunpack.c.l.b16 %v135
    %v761 = vunpack.c.h.b16 %v135
    %v762 = vunpack.c.l.b16 %v136
    %v763 = vunpack.c.h.b16 %v136
    %v764 = vunpack.c.l.b16 %v137
    %v765 = vunpack.c.h.b16 %v137
    %v766 = vunpack.c.l.b16 %v138
    %v767 = vunpack.c.h.b16 %v138
    %v768 = vunpack.c.l.b16 %v139
    %v769 = vunpack.c.h.b16 %v139
    %v770 = vunpack.c.l.b16 %v140
    %v771 = vunpack.c.h.b16 %v140
    %v772 = vunpack.c.l.b16 %v141
    %v773 = vunpack.c.h.b16 %v141
    %v774 = vunpack.c.l.b16 %v142
    %v775 = vunpack.c.h.b16 %v142
    %v776 = vunpack.c.l.b16 %v143
    %v777 = vunpack.c.h.b16 %v143
    %v778 = vunpack.c.l.b16 %v144
    %v779 = vunpack.c.h.b16 %v144
    %v780 = vunpack.c.l.b16 %v145
    %v781 = vunpack.c.h.b16 %v145
    %v782 = vunpack.c.l.b16 %v146
    %v783 = vunpack.c.h.b16 %v146
    %v784 = vunpack.c.l.b16 %v147
    %v785 = vunpack.c.h.b16 %v147
    %v786 = vunpack.c.l.b16 %v148
    %v787 = vunpack.c.h.b16 %v148
    %v788 = vunpack.c.l.b16 %v149
    %v789 = vunpack.c.h.b16 %v149
    %v790 = vunpack.c.l.b16 %v150
    %v791 = vunpack.c.h.b16 %v150
    %v792 = vunpack.c.l.b16 %v151
    %v793 = vunpack.c.h.b16 %v151
    %v794 = vunpack.c.l.b16 %v152
    %v795 = vunpack.c.h.b16 %v152
    %v796 = vunpack.c.l.b16 %v153
    %v797 = vunpack.c.h.b16 %v153
    %v798 = vunpack.c.l.b16 %v154
    %v799 = vunpack.c.h.b16 %v154
    %v800 = vunpack.c.l.b16 %v155
    %v801 = vunpack.c.h.b16 %v155
    %v802 = vunpack.c.l.b16 %v156
    %v803 = vunpack.c.h.b16 %v156
    %v804 = vunpack.c.l.b16 %v157
    %v805 = vunpack.c.h.b16 %v157
    %v806 = vunpack.c.l.b16 %v158
    %v807 = vunpack.c.h.b16 %v158
    %v808 = vunpack.c.l.b16 %v159
    %v809 = vunpack.c.h.b16 %v159
    %v810 = vunpack.c.l.b16 %v160
    %v811 = vunpack.c.h.b16 %v160
    %v812 = vunpack.c.l.b16 %v161
    %v813 = vunpack.c.h.b16 %v161
    %v814 = vunpack.c.l.b16 %v162
    %v815 = vunpack.c.h.b16 %v162
    %v816 = vunpack.c.l.b16 %v163
    %v817 = vunpack.c.h.b16 %v163
    %v818 = vunpack.c.l.b16 %v164
    %v819 = vunpack.c.h.b16 %v164
    %v820 = vunpack.c.l.b16 %v165
    %v821 = vunpack.c.h.b16 %v165
    %v822 = vunpack.c.l.b16 %v166
    %v823 = vunpack.c.h.b16 %v166
    %v824 = vunpack.c.l.b16 %v167
    %v825 = vunpack.c.h.b16 %v167
    %v826 = vunpack.c.l.b16 %v168
    %v827 = vunpack.c.h.b16 %v168
    %v828 = vunpack.c.l.b16 %v169
    %v829 = vunpack.c.h.b16 %v169
    %v830 = vunpack.c.l.b16 %v170
    %v831 = vunpack.c.h.b16 %v170
    %v832 = vunpack.c.l.b16 %v171
    %v833 = vunpack.c.h.b16 %v171
    %v834 = vunpack.c.l.b16 %v172
    %v835 = vunpack.c.h.b16 %v172
    %v836 = vunpack.c.l.b16 %v173
    %v837 = vunpack.c.h.b16 %v173
    %v838 = vunpack.c.l.b16 %v174
    %v839 = vunpack.c.h.b16 %v174
    %v840 = vunpack.c.l.b16 %v175
    %v841 = vunpack.c.h.b16 %v175
    %v842 = vunpack.c.l.b16 %v176
    %v843 = vunpack.c.h.b16 %v176
    %v844 = vunpack.c.l.b16 %v177
    %v845 = vunpack.c.h.b16 %v177
    %v846 = vunpack.c.l.b16 %v178
    %v847 = vunpack.c.h.b16 %v178
    %v848 = vunpack.c.l.b16 %v179
    %v849 = vunpack.c.h.b16 %v179
    %v850 = vunpack.c.l.b16 %v180
    %v851 = vunpack.c.h.b16 %v180
    %v852 = vunpack.c.l.b16 %v181
    %v853 = vunpack.c.h.b16 %v181
    %v854 = vunpack.c.l.b16 %v182
    %v855 = vunpack.c.h.b16 %v182
    %v856 = vunpack.c.l.b16 %v183
    %v857 = vunpack.c.h.b16 %v183
    %v858 = vunpack.c.l.b16 %v184
    %v859 = vunpack.c.h.b16 %v184
    %v860 = vunpack.c.l.b16 %v185
    %v861 = vunpack.c.h.b16 %v185
    %v862 = vunpack.c.l.b16 %v186
    %v863 = vunpack.c.h.b16 %v186
    %v864 = vunpack.c.l.b16 %v187
    %v865 = vunpack.c.h.b16 %v187
    %v866 = vunpack.c.l.b16 %v188
    %v867 = vunpack.c.h.b16 %v188
    %v868 = vunpack.c.l.b16 %v189
    %v869 = vunpack.c.h.b16 %v189
    %v870 = vunpack.c.l.b16 %v190
    %v871 = vunpack.c.h.b16 %v190
    %v872 = vunpack.c.l.b16 %v191
    %v873 = vunpack.c.h.b16 %v191
    %v874 = vunpack.c.l.b16 %v192
    %v875 = vunpack.c.h.b16 %v192
    %v876 = vunpack.c.l.b16 %v193
    %v877 = vunpack.c.h.b16 %v193
    %v878 = vunpack.c.l.b16 %v194
    %v879 = vunpack.c.h.b16 %v194
    %v880 = vunpack.c.l.b16 %v195
    %v881 = vunpack.c.h.b16 %v195
    %v882 = vunpack.c.l.b16 %v196
    %v883 = vunpack.c.h.b16 %v196
    %v884 = vunpack.c.l.b16 %v197
    %v885 = vunpack.c.h.b16 %v197
    %v886 = vunpack.c.l.b16 %v198
    %v887 = vunpack.c.h.b16 %v198
    %v888 = vunpack.c.l.b16 %v199
    %v889 = vunpack.c.h.b16 %v199
    %v890 = vunpack.c.l.b16 %v200
    %v891 = vunpack.c.h.b16 %v200
    %v892 = vunpack.c.l.b16 %v201
    %v893 = vunpack.c.h.b16 %v201
    %v894 = vunpack.c.l.b16 %v202
    %v895 = vunpack.c.h.b16 %v202
    %v896 = vunpack.c.l.b16 %v203
    %v897 = vunpack.c.h.b16 %v203
    %v898 = vunpack.c.l.b16 %v204
    %v899 = vunpack.c.h.b16 %v204
    %v900 = vunpack.c.l.b16 %v205
    %v901 = vunpack.c.h.b16 %v205
    %v902 = vunpack.c.l.b16 %v206
    %v903 = vunpack.c.h.b16 %v206
    %v904 = vunpack.c.l.b16 %v207
    %v905 = vunpack.c.h.b16 %v207
    %v906 = vunpack.c.l.b16 %v208
    %v907 = vunpack.c.h.b16 %v208
    %v908 = vunpack.c.l.b16 %v209
    %v909 = vunpack.c.h.b16 %v209
    %v910 = vunpack.c.l.b16 %v210
    %v911 = vunpack.c.h.b16 %v210
    %v912 = vunpack.c.l.b16 %v211
    %v913 = vunpack.c.h.b16 %v211
    %v914 = vunpack.c.l.b16 %v212
    %v915 = vunpack.c.h.b16 %v212
    %v916 = vunpack.c.l.b16 %v213
    %v917 = vunpack.c.h.b16 %v213
    %v918 = vunpack.c.l.b16 %v214
    %v919 = vunpack.c.h.b16 %v214
    %v920 = vunpack.c.l.b16 %v215
    %v921 = vunpack.c.h.b16 %v215
    %v922 = vunpack.c.l.b16 %v216
    %v923 = vunpack.c.h.b16 %v216
    %v924 = vunpack.c.l.b16 %v217
    %v925 = vunpack.c.h.b16 %v217
    %v926 = vunpack.c.l.b16 %v218
    %v927 = vunpack.c.h.b16 %v218
    %v928 = vunpack.c.l.b16 %v219
    %v929 = vunpack.c.h.b16 %v219
    %v930 = vunpack.c.l.b16 %v220
    %v931 = vunpack.c.h.b16 %v220
    %v932 = vunpack.c.l.b16 %v221
    %v933 = vunpack.c.h.b16 %v221
    %v934 = vunpack.c.l.b16 %v222
    %v935 = vunpack.c.h.b16 %v222
    %v936 = vunpack.c.l.b16 %v223
    %v937 = vunpack.c.h.b16 %v223
    %v938 = vunpack.c.l.b16 %v224
    %v939 = vunpack.c.h.b16 %v224
    %v940 = vunpack.c.l.b16 %v225
    %v941 = vunpack.c.h.b16 %v225
    %v942 = vunpack.c.l.b16 %v226
    %v943 = vunpack.c.h.b16 %v226
    %v944 = vunpack.c.l.b16 %v227
    %v945 = vunpack.c.h.b16 %v227
    %v946 = vunpack.c.l.b16 %v228
    %v947 = vunpack.c.h.b16 %v228
    %v948 = vunpack.c.l.b16 %v229
    %v949 = vunpack.c.h.b16 %v229
    %v950 = vunpack.c.l.b16 %v230
    %v951 = vunpack.c.h.b16 %v230
    %v952 = vunpack.c.l.b16 %v231
    %v953 = vunpack.c.h.b16 %v231
    %v954 = vunpack.c.l.b16 %v232
    %v955 = vunpack.c.h.b16 %v232
    %v956 = vunpack.c.l.b16 %v233
    %v957 = vunpack.c.h.b16 %v233
    %v958 = vunpack.c.l.b16 %v234
    %v959 = vunpack.c.h.b16 %v234
    %v960 = vunpack.c.l.b16 %v235
    %v961 = vunpack.c.h.b16 %v235
    %v962 = vunpack.c.l.b16 %v236
    %v963 = vunpack.c.h.b16 %v236
    %v964 = vunpack.c.l.b16 %v237
    %v965 = vunpack.c.h.b16 %v237
    %v966 = vunpack.c.l.b16 %v238
    %v967 = vunpack.c.h.b16 %v238
    %v968 = vunpack.c.l.b16 %v239
    %v969 = vunpack.c.h.b16 %v239
    %v970 = vunpack.c.l.b16 %v240
    %v971 = vunpack.c.h.b16 %v240
    %v972 = vunpack.c.l.b16 %v241
    %v973 = vunpack.c.h.b16 %v241
    %v974 = vunpack.c.l.b16 %v242
    %v975 = vunpack.c.h.b16 %v242
    %v976 = vunpack.c.l.b16 %v243
    %v977 = vunpack.c.h.b16 %v243
    %v978 = vunpack.c.l.b16 %v244
    %v979 = vunpack.c.h.b16 %v244
    %v980 = vunpack.c.l.b16 %v245
    %v981 = vunpack.c.h.b16 %v245
    %v982 = vunpack.c.l.b16 %v246
    %v983 = vunpack.c.h.b16 %v246
    %v984 = vunpack.c.l.b16 %v247
    %v985 = vunpack.c.h.b16 %v247
    %v986 = vunpack.c.l.b16 %v248
    %v987 = vunpack.c.h.b16 %v248
    %v988 = vunpack.c.l.b16 %v249
    %v989 = vunpack.c.h.b16 %v249
    %v990 = vunpack.c.l.b16 %v250
    %v991 = vunpack.c.h.b16 %v250
    %v992 = vunpack.c.l.b16 %v251
    %v993 = vunpack.c.h.b16 %v251
    %v994 = vunpack.c.l.b16 %v252
    %v995 = vunpack.c.h.b16 %v252
    %v996 = vunpack.c.l.b16 %v253
    %v997 = vunpack.c.h.b16 %v253
    %v998 = vunpack.c.l.b16 %v254
    %v999 = vunpack.c.h.b16 %v254
    %v1000 = vunpack.c.l.b16 %v255
    %v1001 = vunpack.c.h.b16 %v255
    %v1002 = vunpack.c.l.b16 %v256
    %v1003 = vunpack.c.h.b16 %v256
    %v1004 = vunpack.c.l.b16 %v257
    %v1005 = vunpack.c.h.b16 %v257
    %v1006 = vunpack.c.l.b16 %v258
    %v1007 = vunpack.c.h.b16 %v258
    %v1008 = vunpack.c.l.b16 %v259
    %v1009 = vunpack.c.h.b16 %v259
    %v1010 = vunpack.c.l.b16 %v260
    %v1011 = vunpack.c.h.b16 %v260
    %v1012 = vunpack.c.l.b16 %v261
    %v1013 = vunpack.c.h.b16 %v261
    %v1014 = vunpack.c.l.b16 %v262
    %v1015 = vunpack.c.h.b16 %v262
    %v1016 = vunpack.c.l.b16 %v263
    %v1017 = vunpack.c.h.b16 %v263
    %v1018 = vunpack.c.l.b16 %v264
    %v1019 = vunpack.c.h.b16 %v264
    %v1020 = vunpack.c.l.b16 %v265
    %v1021 = vunpack.c.h.b16 %v265
    %v1022 = vunpack.c.l.b16 %v266
    %v1023 = vunpack.c.h.b16 %v266
    %v1024 = vunpack.c.l.b16 %v267
    %v1025 = vunpack.c.h.b16 %v267
    %v1026 = vunpack.c.l.b16 %v268
    %v1027 = vunpack.c.h.b16 %v268
    %v1028 = vunpack.c.l.b16 %v269
    %v1029 = vunpack.c.h.b16 %v269
    %v1030 = vunpack.c.l.b16 %v270
    %v1031 = vunpack.c.h.b16 %v270
    %v1032 = vunpack.c.l.b16 %v271
    %v1033 = vunpack.c.h.b16 %v271
    %v1034 = vunpack.c.l.b16 %v272
    %v1035 = vunpack.c.h.b16 %v272
    %v1036 = vunpack.c.l.b16 %v273
    %v1037 = vunpack.c.h.b16 %v273
    %v1038 = vunpack.c.l.b16 %v274
    %v1039 = vunpack.c.h.b16 %v274
    %v1040 = vunpack.c.l.b16 %v275
    %v1041 = vunpack.c.h.b16 %v275
    %v1042 = vunpack.c.l.b16 %v276
    %v1043 = vunpack.c.h.b16 %v276
    %v1044 = vunpack.c.l.b16 %v277
    %v1045 = vunpack.c.h.b16 %v277
    %v1046 = vunpack.c.l.b16 %v278
    %v1047 = vunpack.c.h.b16 %v278
    %v1048 = vunpack.c.l.b16 %v279
    %v1049 = vunpack.c.h.b16 %v279
    %v1050 = vunpack.c.l.b16 %v280
    %v1051 = vunpack.c.h.b16 %v280
    %v1052 = vunpack.c.l.b16 %v281
    %v1053 = vunpack.c.h.b16 %v281
    %v1054 = vunpack.c.l.b16 %v282
    %v1055 = vunpack.c.h.b16 %v282
    %v1056 = vunpack.c.l.b16 %v283
    %v1057 = vunpack.c.h.b16 %v283
    %v1058 = vunpack.c.l.b16 %v284
    %v1059 = vunpack.c.h.b16 %v284
    %v1060 = vunpack.c.l.b16 %v285
    %v1061 = vunpack.c.h.b16 %v285
    %v1062 = vunpack.c.l.b16 %v286
    %v1063 = vunpack.c.h.b16 %v286
    %v1064 = vunpack.c.l.b16 %v287
    %v1065 = vunpack.c.h.b16 %v287
    %v1066 = vunpack.c.l.b16 %v288
    %v1067 = vunpack.c.h.b16 %v288
    %v1068 = vunpack.c.l.b16 %v289
    %v1069 = vunpack.c.h.b16 %v289
    %v1070 = vunpack.c.l.b16 %v290
    %v1071 = vunpack.c.h.b16 %v290
    %v1072 = vunpack.c.l.b16 %v291
    %v1073 = vunpack.c.h.b16 %v291
    %v1074 = vunpack.c.l.b16 %v292
    %v1075 = vunpack.c.h.b16 %v292
    %v1076 = vunpack.c.l.b16 %v293
    %v1077 = vunpack.c.h.b16 %v293
    %v1078 = vunpack.c.l.b16 %v294
    %v1079 = vunpack.c.h.b16 %v294
    %v1080 = vunpack.c.l.b16 %v295
    %v1081 = vunpack.c.h.b16 %v295
    %v1082 = vunpack.c.l.b16 %v296
    %v1083 = vunpack.c.h.b16 %v296
    %v1084 = vunpack.c.l.b16 %v297
    %v1085 = vunpack.c.h.b16 %v297
    %v1086 = vunpack.c.l.b16 %v298
    %v1087 = vunpack.c.h.b16 %v298
    %v1088 = vunpack.c.l.b16 %v299
    %v1089 = vunpack.c.h.b16 %v299
    %v1090 = vunpack.c.l.b16 %v300
    %v1091 = vunpack.c.h.b16 %v300
    %v1092 = vunpack.c.l.b16 %v301
    %v1093 = vunpack.c.h.b16 %v301
    %v1094 = vunpack.c.l.b16 %v302
    %v1095 = vunpack.c.h.b16 %v302
    %v1096 = vunpack.c.l.b16 %v303
    %v1097 = vunpack.c.h.b16 %v303
    %v1098 = vunpack.c.l.b16 %v304
    %v1099 = vunpack.c.h.b16 %v304
    %v1100 = vunpack.c.l.b16 %v305
    %v1101 = vunpack.c.h.b16 %v305
    %v1102 = vunpack.c.l.b16 %v306
    %v1103 = vunpack.c.h.b16 %v306
    %v1104 = vunpack.c.l.b16 %v307
    %v1105 = vunpack.c.h.b16 %v307
    %v1106 = vunpack.c.l.b16 %v308
    %v1107 = vunpack.c.h.b16 %v308
    %v1108 = vunpack.c.l.b16 %v309
    %v1109 = vunpack.c.h.b16 %v309
    %v1110 = vunpack.c.l.b16 %v310
    %v1111 = vunpack.c.h.b16 %v310
    %v1112 = vunpack.c.l.b16 %v311
    %v1113 = vunpack.c.h.b16 %v311
    %v1114 = vunpack.c.l.b16 %v312
    %v1115 = vunpack.c.h.b16 %v312
    %v1116 = vunpack.c.l.b16 %v313
    %v1117 = vunpack.c.h.b16 %v313
    %v1118 = vunpack.c.l.b16 %v314
    %v1119 = vunpack.c.h.b16 %v314
    %v1120 = vunpack.c.l.b16 %v315
    %v1121 = vunpack.c.h.b16 %v315
    %v1122 = vunpack.c.l.b16 %v316
    %v1123 = vunpack.c.h.b16 %v316
    %v1124 = vpack.c.b16 %v616, %v612
    %v1125 = vpack.c.b16 %v617, %v613
    %v1126 = vpack.c.b16 %v618, %v614
    %v1127 = vpack.c.b16 %v619, %v615
    %v1128 = vpack.c.b16 %v624, %v620
    %v1129 = vpack.c.b16 %v625, %v621
    %v1130 = vpack.c.b16 %v626, %v622
    %v1131 = vpack.c.b16 %v627, %v623
    %v1132 = vpack.c.b16 %v632, %v628
    %v1133 = vpack.c.b16 %v633, %v629
    %v1134 = vpack.c.b16 %v634, %v630
    %v1135 = vpack.c.b16 %v635, %v631
    %v1136 = vpack.c.b16 %v640, %v636
    %v1137 = vpack.c.b16 %v641, %v637
    %v1138 = vpack.c.b16 %v642, %v638
    %v1139 = vpack.c.b16 %v643, %v639
    %v1140 = vpack.c.b16 %v648, %v644
    %v1141 = vpack.c.b16 %v649, %v645
    %v1142 = vpack.c.b16 %v650, %v646
    %v1143 = vpack.c.b16 %v651, %v647
    %v1144 = vpack.c.b16 %v656, %v652
    %v1145 = vpack.c.b16 %v657, %v653
    %v1146 = vpack.c.b16 %v658, %v654
    %v1147 = vpack.c.b16 %v659, %v655
    %v1148 = vpack.c.b16 %v664, %v660
    %v1149 = vpack.c.b16 %v665, %v661
    %v1150 = vpack.c.b16 %v666, %v662
    %v1151 = vpack.c.b16 %v667, %v663
    %v1152 = vpack.c.b16 %v672, %v668
    %v1153 = vpack.c.b16 %v673, %v669
    %v1154 = vpack.c.b16 %v674, %v670
    %v1155 = vpack.c.b16 %v675, %v671
    %v1156 = vpack.c.b16 %v680, %v676
    %v1157 = vpack.c.b16 %v681, %v677
    %v1158 = vpack.c.b16 %v682, %v678
    %v1159 = vpack.c.b16 %v683, %v679
    %v1160 = vpack.c.b16 %v688, %v684
    %v1161 = vpack.c.b16 %v689, %v685
    %v1162 = vpack.c.b16 %v690, %v686
    %v1163 = vpack.c.b16 %v691, %v687
    %v1164 = vpack.c.b16 %v696, %v692
    %v1165 = vpack.c.b16 %v697, %v693
    %v1166 = vpack.c.b16 %v698, %v694
    %v1167 = vpack.c.b16 %v699, %v695
    %v1168 = vpack.c.b16 %v704, %v700
    %v1169 = vpack.c.b16 %v705, %v701
    %v1170 = vpack.c.b16 %v706, %v702
    %v1171 = vpack.c.b16 %v707, %v703
    %v1172 = vpack.c.b16 %v712, %v708
    %v1173 = vpack.c.b16 %v713, %v709
    %v1174 = vpack.c.b16 %v714, %v710
    %v1175 = vpack.c.b16 %v715, %v711
    %v1176 = vpack.c.b16 %v720, %v716
    %v1177 = vpack.c.b16 %v721, %v717
    %v1178 = vpack.c.b16 %v722, %v718
    %v1179 = vpack.c.b16 %v723, %v719
    %v1180 = vpack.c.b16 %v728, %v724
    %v1181 = vpack.c.b16 %v729, %v725
    %v1182 = vpack.c.b16 %v730, %v726
    %v1183 = vpack.c.b16 %v731, %v727
    %v1184 = vpack.c.b16 %v736, %v732
    %v1185 = vpack.c.b16 %v737, %v733
    %v1186 = vpack.c.b16 %v738, %v734
    %v1187 = vpack.c.b16 %v739, %v735
    %v1188 = vpack.c.b16 %v744, %v740
    %v1189 = vpack.c.b16 %v745, %v741
    %v1190 = vpack.c.b16 %v746, %v742
    %v1191 = vpack.c.b16 %v747, %v743
    %v1192 = vpack.c.b16 %v752, %v748
    %v1193 = vpack.c.b16 %v753, %v749
    %v1194 = vpack.c.b16 %v754, %v750
    %v1195 = vpack.c.b16 %v755, %v751
    %v1196 = vpack.c.b16 %v760, %v756
    %v1197 = vpack.c.b16 %v761, %v757
    %v1198 = vpack.c.b16 %v762, %v758
    %v1199 = vpack.c.b16 %v763, %v759
    %v1200 = vpack.c.b16 %v768, %v764
    %v1201 = vpack.c.b16 %v769, %v765
    %v1202 = vpack.c.b16 %v770, %v766
    %v1203 = vpack.c.b16 %v771, %v767
    %v1204 = vpack.c.b16 %v776, %v772
    %v1205 = vpack.c.b16 %v777, %v773
    %v1206 = vpack.c.b16 %v778, %v774
    %v1207 = vpack.c.b16 %v779, %v775
    %v1208 = vpack.c.b16 %v784, %v780
    %v1209 = vpack.c.b16 %v785, %v781
    %v1210 = vpack.c.b16 %v786, %v782
    %v1211 = vpack.c.b16 %v787, %v783
    %v1212 = vpack.c.b16 %v792, %v788
    %v1213 = vpack.c.b16 %v793, %v789
    %v1214 = vpack.c.b16 %v794, %v790
    %v1215 = vpack.c.b16 %v795, %v791
    %v1216 = vpack.c.b16 %v800, %v796
    %v1217 = vpack.c.b16 %v801, %v797
    %v1218 = vpack.c.b16 %v802, %v798
    %v1219 = vpack.c.b16 %v803, %v799
    %v1220 = vpack.c.b16 %v808, %v804
    %v1221 = vpack.c.b16 %v809, %v805
    %v1222 = vpack.c.b16 %v810, %v806
    %v1223 = vpack.c.b16 %v811, %v807
    %v1224 = vpack.c.b16 %v816, %v812
    %v1225 = vpack.c.b16 %v817, %v813
    %v1226 = vpack.c.b16 %v818, %v814
    %v1227 = vpack.c.b16 %v819, %v815
    %v1228 = vpack.c.b16 %v824, %v820
    %v1229 = vpack.c.b16 %v825, %v821
    %v1230 = vpack.c.b16 %v826, %v822
    %v1231 = vpack.c.b16 %v827, %v823
    %v1232 = vpack.c.b16 %v832, %v828
    %v1233 = vpack.c.b16 %v833, %v829
    %v1234 = vpack.c.b16 %v834, %v830
    %v1235 = vpack.c.b16 %v835, %v831
    %v1236 = vpack.c.b16 %v840, %v836
    %v1237 = vpack.c.b16 %v841, %v837
    %v1238 = vpack.c.b16 %v842, %v838
    %v1239 = vpack.c.b16 %v843, %v839
    %v1240 = vpack.c.b16 %v848, %v844
    %v1241 = vpack.c.b16 %v849, %v845
    %v1242 = vpack.c.b16 %v850, %v846
    %v1243 = vpack.c.b16 %v851, %v847
    %v1244 = vpack.c.b16 %v856, %v852
    %v1245 = vpack.c.b16 %v857, %v853
    %v1246 = vpack.c.b16 %v858, %v854
    %v1247 = vpack.c.b16 %v859, %v855
    %v1248 = vpack.c.b16 %v864, %v860
    %v1249 = vpack.c.b16 %v865, %v861
    %v1250 = vpack.c.b16 %v866, %v862
    %v1251 = vpack.c.b16 %v867, %v863
    %v1252 = vpack.c.b16 %v872, %v868
    %v1253 = vpack.c.b16 %v873, %v869
    %v1254 = vpack.c.b16 %v874, %v870
    %v1255 = vpack.c.b16 %v875, %v871
    %v1256 = vpack.c.b16 %v880, %v876
    %v1257 = vpack.c.b16 %v881, %v877
    %v1258 = vpack.c.b16 %v882, %v878
    %v1259 = vpack.c.b16 %v883, %v879
    %v1260 = vpack.c.b16 %v888, %v884
    %v1261 = vpack.c.b16 %v889, %v885
    %v1262 = vpack.c.b16 %v890, %v886
    %v1263 = vpack.c.b16 %v891, %v887
    %v1264 = vpack.c.b16 %v896, %v892
    %v1265 = vpack.c.b16 %v897, %v893
    %v1266 = vpack.c.b16 %v898, %v894
    %v1267 = vpack.c.b16 %v899, %v895
    %v1268 = vpack.c.b16 %v904, %v900
    %v1269 = vpack.c.b16 %v905, %v901
    %v1270 = vpack.c.b16 %v906, %v902
    %v1271 = vpack.c.b16 %v907, %v903
    %v1272 = vpack.c.b16 %v912, %v908
    %v1273 = vpack.c.b16 %v913, %v909
    %v1274 = vpack.c.b16 %v914, %v910
    %v1275 = vpack.c.b16 %v915, %v911
    %v1276 = vpack.c.b16 %v920, %v916
    %v1277 = vpack.c.b16 %v921, %v917
    %v1278 = vpack.c.b16 %v922, %v918
    %v1279 = vpack.c.b16 %v923, %v919
    %v1280 = vpack.c.b16 %v928, %v924
    %v1281 = vpack.c.b16 %v929, %v925
    %v1282 = vpack.c.b16 %v930, %v926
    %v1283 = vpack.c.b16 %v931, %v927
    %v1284 = vpack.c.b16 %v936, %v932
    %v1285 = vpack.c.b16 %v937, %v933
    %v1286 = vpack.c.b16 %v938, %v934
    %v1287 = vpack.c.b16 %v939, %v935
    %v1288 = vpack.c.b16 %v944, %v940
    %v1289 = vpack.c.b16 %v945, %v941
    %v1290 = vpack.c.b16 %v946, %v942
    %v1291 = vpack.c.b16 %v947, %v943
    %v1292 = vpack.c.b16 %v952, %v948
    %v1293 = vpack.c.b16 %v953, %v949
    %v1294 = vpack.c.b16 %v954, %v950
    %v1295 = vpack.c.b16 %v955, %v951
    %v1296 = vpack.c.b16 %v960, %v956
    %v1297 = vpack.c.b16 %v961, %v957
    %v1298 = vpack.c.b16 %v962, %v958
    %v1299 = vpack.c.b16 %v963, %v959
    %v1300 = vpack.c.b16 %v968, %v964
    %v1301 = vpack.c.b16 %v969, %v965
    %v1302 = vpack.c.b16 %v970, %v966
    %v1303 = vpack.c.b16 %v971, %v967
    %v1304 = vpack.c.b16 %v976, %v972
    %v1305 = vpack.c.b16 %v977, %v973
    %v1306 = vpack.c.b16 %v978, %v974
    %v1307 = vpack.c.b16 %v979, %v975
    %v1308 = vpack.c.b16 %v984, %v980
    %v1309 = vpack.c.b16 %v985, %v981
    %v1310 = vpack.c.b16 %v986, %v982
    %v1311 = vpack.c.b16 %v987, %v983
    %v1312 = vpack.c.b16 %v992, %v988
    %v1313 = vpack.c.b16 %v993, %v989
    %v1314 = vpack.c.b16 %v994, %v990
    %v1315 = vpack.c.b16 %v995, %v991
    %v1316 = vpack.c.b16 %v1000, %v996
    %v1317 = vpack.c.b16 %v1001, %v997
    %v1318 = vpack.c.b16 %v1002, %v998
    %v1319 = vpack.c.b16 %v1003, %v999
    %v1320 = vpack.c.b16 %v1008, %v1004
    %v1321 = vpack.c.b16 %v1009, %v1005
    %v1322 = vpack.c.b16 %v1010, %v1006
    %v1323 = vpack.c.b16 %v1011, %v1007
    %v1324 = vpack.c.b16 %v1016, %v1012
    %v1325 = vpack.c.b16 %v1017, %v1013
    %v1326 = vpack.c.b16 %v1018, %v1014
    %v1327 = vpack.c.b16 %v1019, %v1015
    %v1328 = vpack.c.b16 %v1024, %v1020
    %v1329 = vpack.c.b16 %v1025, %v1021
    %v1330 = vpack.c.b16 %v1026, %v1022
    %v1331 = vpack.c.b16 %v1027, %v1023
    %v1332 = vpack.c.b16 %v1032, %v1028
    %v1333 = vpack.c.b16 %v1033, %v1029
    %v1334 = vpack.c.b16 %v1034, %v1030
    %v1335 = vpack.c.b16 %v1035, %v1031
    %v1336 = vpack.c.b16 %v1040, %v1036
    %v1337 = vpack.c.b16 %v1041, %v1037
    %v1338 = vpack.c.b16 %v1042, %v1038
    %v1339 = vpack.c.b16 %v1043, %v1039
    %v1340 = vpack.c.b16 %v1048, %v1044
    %v1341 = vpack.c.b16 %v1049, %v1045
    %v1342 = vpack.c.b16 %v1050, %v1046
    %v1343 = vpack.c.b16 %v1051, %v1047
    %v1344 = vpack.c.b16 %v1056, %v1052
    %v1345 = vpack.c.b16 %v1057, %v1053
    %v1346 = vpack.c.b16 %v1058, %v1054
    %v1347 = vpack.c.b16 %v1059, %v1055
    %v1348 = vpack.c.b16 %v1064, %v1060
    %v1349 = vpack.c.b16 %v1065, %v1061
    %v1350 = vpack.c.b16 %v1066, %v1062
    %v1351 = vpack.c.b16 %v1067, %v1063
    %v1352 = vpack.c.b16 %v1072, %v1068
    %v1353 = vpack.c.b16 %v1073, %v1069
    %v1354 = vpack.c.b16 %v1074, %v1070
    %v1355 = vpack.c.b16 %v1075, %v1071
    %v1356 = vpack.c.b16 %v1080, %v1076
    %v1357 = vpack.c.b16 %v1081, %v1077
    %v1358 = vpack.c.b16 %v1082, %v1078
    %v1359 = vpack.c.b16 %v1083, %v1079
    %v1360 = vpack.c.b16 %v1088, %v1084
    %v1361 = vpack.c.b16 %v1089, %v1085
    %v1362 = vpack.c.b16 %v1090, %v1086
    %v1363 = vpack.c.b16 %v1091, %v1087
    %v1364 = vpack.c.b16 %v1096, %v1092
    %v1365 = vpack.c.b16 %v1097, %v1093
    %v1366 = vpack.c.b16 %v1098, %v1094
    %v1367 = vpack.c.b16 %v1099, %v1095
    %v1368 = vpack.c.b16 %v1104, %v1100
    %v1369 = vpack.c.b16 %v1105, %v1101
    %v1370 = vpack.c.b16 %v1106, %v1102
    %v1371 = vpack.c.b16 %v1107, %v1103
    %v1372 = vpack.c.b16 %v1112, %v1108
    %v1373 = vpack.c.b16 %v1113, %v1109
    %v1374 = vpack.c.b16 %v1114, %v1110
    %v1375 = vpack.c.b16 %v1115, %v1111
    %v1376 = vpack.c.b16 %v1120, %v1116
    %v1377 = vpack.c.b16 %v1121, %v1117
    %v1378 = vpack.c.b16 %v1122, %v1118
    %v1379 = vpack.c.b16 %v1123, %v1119
    %1636 = vmatpush.bf16.msra.mxu0 %v1152
    %1637 = vmatpush.bf16.msra.mxu0 %v1148
    %1638 = vmatpush.bf16.msra.mxu0 %v1144
    %1639 = vmatpush.bf16.msra.mxu0 %v1140
    %1640 = vmatpush.bf16.msra.mxu0 %v1136
    %1641 = vmatpush.bf16.msra.mxu0 %v1132
    %1642 = vmatpush.bf16.msra.mxu0 %v1128
    %1643 = vmatpush.bf16.msra.mxu0 %v1124
    %1644 = vmatmul.bf16.gmra.mxu0 %v339
    %v1645 = vpop.f32.mrf.mxu0
    %v1646 = vadd.f32 %v348, %v1645
    %v1647 = vpop.f32.mrf.mxu0
    %1648 = vdwg.mxu0
    %1649 = vmatpush.bf16.msra.mxu0 %v1184
    %1650 = vmatpush.bf16.msra.mxu0 %v1180
    %1651 = vmatpush.bf16.msra.mxu0 %v1176
    %1652 = vmatpush.bf16.msra.mxu0 %v1172
    %1653 = vmatpush.bf16.msra.mxu0 %v1168
    %1654 = vmatpush.bf16.msra.mxu0 %v1164
    %1655 = vmatpush.bf16.msra.mxu0 %v1160
    %1656 = vmatpush.bf16.msra.mxu0 %v1156
    %1657 = vmatmul.bf16.gmra.mxu0 %v340
    %v1658 = vpop.f32.mrf.mxu0
    %v1659 = vadd.f32 %v1646, %v1658
    %v1660 = vpop.f32.mrf.mxu0
    %1661 = vdwg.mxu0
    %1662 = vmatpush.bf16.msra.mxu0 %v1216
    %1663 = vmatpush.bf16.msra.mxu0 %v1212
    %1664 = vmatpush.bf16.msra.mxu0 %v1208
    %1665 = vmatpush.bf16.msra.mxu0 %v1204
    %1666 = vmatpush.bf16.msra.mxu0 %v1200
    %1667 = vmatpush.bf16.msra.mxu0 %v1196
    %1668 = vmatpush.bf16.msra.mxu0 %v1192
    %1669 = vmatpush.bf16.msra.mxu0 %v1188
    %1670 = vmatmul.bf16.gmra.mxu0 %v341
    %v1671 = vpop.f32.mrf.mxu0
    %v1672 = vadd.f32 %v1659, %v1671
    %v1673 = vpop.f32.mrf.mxu0
    %1674 = vdwg.mxu0
    %1675 = vmatpush.bf16.msra.mxu0 %v1248
    %1676 = vmatpush.bf16.msra.mxu0 %v1244
    %1677 = vmatpush.bf16.msra.mxu0 %v1240
    %1678 = vmatpush.bf16.msra.mxu0 %v1236
    %1679 = vmatpush.bf16.msra.mxu0 %v1232
    %1680 = vmatpush.bf16.msra.mxu0 %v1228
    %1681 = vmatpush.bf16.msra.mxu0 %v1224
    %1682 = vmatpush.bf16.msra.mxu0 %v1220
    %1683 = vmatmul.bf16.gmra.mxu0 %v342
    %v1684 = vpop.f32.mrf.mxu0
    %v1685 = vadd.f32 %v1672, %v1684
    %v1686 = vpop.f32.mrf.mxu0
    %1687 = vdwg.mxu0
    %1688 = vmatpush.bf16.msra.mxu0 %v1280
    %1689 = vmatpush.bf16.msra.mxu0 %v1276
    %1690 = vmatpush.bf16.msra.mxu0 %v1272
    %1691 = vmatpush.bf16.msra.mxu0 %v1268
    %1692 = vmatpush.bf16.msra.mxu0 %v1264
    %1693 = vmatpush.bf16.msra.mxu0 %v1260
    %1694 = vmatpush.bf16.msra.mxu0 %v1256
    %1695 = vmatpush.bf16.msra.mxu0 %v1252
    %1696 = vmatmul.bf16.gmra.mxu0 %v343
    %v1697 = vpop.f32.mrf.mxu0
    %v1698 = vadd.f32 %v1685, %v1697
    %v1699 = vpop.f32.mrf.mxu0
    %1700 = vdwg.mxu0
    %1701 = vmatpush.bf16.msra.mxu0 %v1312
    %1702 = vmatpush.bf16.msra.mxu0 %v1308
    %1703 = vmatpush.bf16.msra.mxu0 %v1304
    %1704 = vmatpush.bf16.msra.mxu0 %v1300
    %1705 = vmatpush.bf16.msra.mxu0 %v1296
    %1706 = vmatpush.bf16.msra.mxu0 %v1292
    %1707 = vmatpush.bf16.msra.mxu0 %v1288
    %1708 = vmatpush.bf16.msra.mxu0 %v1284
    %1709 = vmatmul.bf16.gmra.mxu0 %v344
    %v1710 = vpop.f32.mrf.mxu0
    %v1711 = vadd.f32 %v1698, %v1710
    %v1712 = vpop.f32.mrf.mxu0
    %1713 = vdwg.mxu0
    %1714 = vmatpush.bf16.msra.mxu0 %v1344
    %1715 = vmatpush.bf16.msra.mxu0 %v1340
    %1716 = vmatpush.bf16.msra.mxu0 %v1336
    %1717 = vmatpush.bf16.msra.mxu0 %v1332
    %1718 = vmatpush.bf16.msra.mxu0 %v1328
    %1719 = vmatpush.bf16.msra.mxu0 %v1324
    %1720 = vmatpush.bf16.msra.mxu0 %v1320
    %1721 = vmatpush.bf16.msra.mxu0 %v1316
    %1722 = vmatmul.bf16.gmra.mxu0 %v345
    %v1723 = vpop.f32.mrf.mxu0
    %v1724 = vadd.f32 %v1711, %v1723
    %v1725 = vpop.f32.mrf.mxu0
    %1726 = vdwg.mxu0
    %1727 = vmatpush.bf16.msra.mxu0 %v1376
    %1728 = vmatpush.bf16.msra.mxu0 %v1372
    %1729 = vmatpush.bf16.msra.mxu0 %v1368
    %1730 = vmatpush.bf16.msra.mxu0 %v1364
    %1731 = vmatpush.bf16.msra.mxu0 %v1360
    %1732 = vmatpush.bf16.msra.mxu0 %v1356
    %1733 = vmatpush.bf16.msra.mxu0 %v1352
    %1734 = vmatpush.bf16.msra.mxu0 %v1348
    %1735 = vmatmul.bf16.gmra.mxu0 %v346
    %v1736 = vpop.f32.mrf.mxu0
    %v1737 = vadd.f32 %v1724, %v1736
    %v1738 = vpop.f32.mrf.mxu0
    %1739 = vdwg.mxu0
    %1740 = vmatpush.bf16.msra.mxu0 %v1153
    %1741 = vmatpush.bf16.msra.mxu0 %v1149
    %1742 = vmatpush.bf16.msra.mxu0 %v1145
    %1743 = vmatpush.bf16.msra.mxu0 %v1141
    %1744 = vmatpush.bf16.msra.mxu0 %v1137
    %1745 = vmatpush.bf16.msra.mxu0 %v1133
    %1746 = vmatpush.bf16.msra.mxu0 %v1129
    %1747 = vmatpush.bf16.msra.mxu0 %v1125
    %1748 = vmatmul.bf16.gmra.mxu0 %v339
    %v1749 = vpop.f32.mrf.mxu0
    %v1750 = vadd.f32 %v349, %v1749
    %v1751 = vpop.f32.mrf.mxu0
    %1752 = vdwg.mxu0
    %1753 = vmatpush.bf16.msra.mxu0 %v1185
    %1754 = vmatpush.bf16.msra.mxu0 %v1181
    %1755 = vmatpush.bf16.msra.mxu0 %v1177
    %1756 = vmatpush.bf16.msra.mxu0 %v1173
    %1757 = vmatpush.bf16.msra.mxu0 %v1169
    %1758 = vmatpush.bf16.msra.mxu0 %v1165
    %1759 = vmatpush.bf16.msra.mxu0 %v1161
    %1760 = vmatpush.bf16.msra.mxu0 %v1157
    %1761 = vmatmul.bf16.gmra.mxu0 %v340
    %v1762 = vpop.f32.mrf.mxu0
    %v1763 = vadd.f32 %v1750, %v1762
    %v1764 = vpop.f32.mrf.mxu0
    %1765 = vdwg.mxu0
    %1766 = vmatpush.bf16.msra.mxu0 %v1217
    %1767 = vmatpush.bf16.msra.mxu0 %v1213
    %1768 = vmatpush.bf16.msra.mxu0 %v1209
    %1769 = vmatpush.bf16.msra.mxu0 %v1205
    %1770 = vmatpush.bf16.msra.mxu0 %v1201
    %1771 = vmatpush.bf16.msra.mxu0 %v1197
    %1772 = vmatpush.bf16.msra.mxu0 %v1193
    %1773 = vmatpush.bf16.msra.mxu0 %v1189
    %1774 = vmatmul.bf16.gmra.mxu0 %v341
    %v1775 = vpop.f32.mrf.mxu0
    %v1776 = vadd.f32 %v1763, %v1775
    %v1777 = vpop.f32.mrf.mxu0
    %1778 = vdwg.mxu0
    %1779 = vmatpush.bf16.msra.mxu0 %v1249
    %1780 = vmatpush.bf16.msra.mxu0 %v1245
    %1781 = vmatpush.bf16.msra.mxu0 %v1241
    %1782 = vmatpush.bf16.msra.mxu0 %v1237
    %1783 = vmatpush.bf16.msra.mxu0 %v1233
    %1784 = vmatpush.bf16.msra.mxu0 %v1229
    %1785 = vmatpush.bf16.msra.mxu0 %v1225
    %1786 = vmatpush.bf16.msra.mxu0 %v1221
    %1787 = vmatmul.bf16.gmra.mxu0 %v342
    %v1788 = vpop.f32.mrf.mxu0
    %v1789 = vadd.f32 %v1776, %v1788
    %v1790 = vpop.f32.mrf.mxu0
    %1791 = vdwg.mxu0
    %1792 = vmatpush.bf16.msra.mxu0 %v1281
    %1793 = vmatpush.bf16.msra.mxu0 %v1277
    %1794 = vmatpush.bf16.msra.mxu0 %v1273
    %1795 = vmatpush.bf16.msra.mxu0 %v1269
    %1796 = vmatpush.bf16.msra.mxu0 %v1265
    %1797 = vmatpush.bf16.msra.mxu0 %v1261
    %1798 = vmatpush.bf16.msra.mxu0 %v1257
    %1799 = vmatpush.bf16.msra.mxu0 %v1253
    %1800 = vmatmul.bf16.gmra.mxu0 %v343
    %v1801 = vpop.f32.mrf.mxu0
    %v1802 = vadd.f32 %v1789, %v1801
    %v1803 = vpop.f32.mrf.mxu0
    %1804 = vdwg.mxu0
    %1805 = vmatpush.bf16.msra.mxu0 %v1313
    %1806 = vmatpush.bf16.msra.mxu0 %v1309
    %1807 = vmatpush.bf16.msra.mxu0 %v1305
    %1808 = vmatpush.bf16.msra.mxu0 %v1301
    %1809 = vmatpush.bf16.msra.mxu0 %v1297
    %1810 = vmatpush.bf16.msra.mxu0 %v1293
    %1811 = vmatpush.bf16.msra.mxu0 %v1289
    %1812 = vmatpush.bf16.msra.mxu0 %v1285
    %1813 = vmatmul.bf16.gmra.mxu0 %v344
    %v1814 = vpop.f32.mrf.mxu0
    %v1815 = vadd.f32 %v1802, %v1814
    %v1816 = vpop.f32.mrf.mxu0
    %1817 = vdwg.mxu0
    %1818 = vmatpush.bf16.msra.mxu0 %v1345
    %1819 = vmatpush.bf16.msra.mxu0 %v1341
    %1820 = vmatpush.bf16.msra.mxu0 %v1337
    %1821 = vmatpush.bf16.msra.mxu0 %v1333
    %1822 = vmatpush.bf16.msra.mxu0 %v1329
    %1823 = vmatpush.bf16.msra.mxu0 %v1325
    %1824 = vmatpush.bf16.msra.mxu0 %v1321
    %1825 = vmatpush.bf16.msra.mxu0 %v1317
    %1826 = vmatmul.bf16.gmra.mxu0 %v345
    %v1827 = vpop.f32.mrf.mxu0
    %v1828 = vadd.f32 %v1815, %v1827
    %v1829 = vpop.f32.mrf.mxu0
    %1830 = vdwg.mxu0
    %1831 = vmatpush.bf16.msra.mxu0 %v1377
    %1832 = vmatpush.bf16.msra.mxu0 %v1373
    %1833 = vmatpush.bf16.msra.mxu0 %v1369
    %1834 = vmatpush.bf16.msra.mxu0 %v1365
    %1835 = vmatpush.bf16.msra.mxu0 %v1361
    %1836 = vmatpush.bf16.msra.mxu0 %v1357
    %1837 = vmatpush.bf16.msra.mxu0 %v1353
    %1838 = vmatpush.bf16.msra.mxu0 %v1349
    %1839 = vmatmul.bf16.gmra.mxu0 %v346
    %v1840 = vpop.f32.mrf.mxu0
    %v1841 = vadd.f32 %v1828, %v1840
    %v1842 = vpop.f32.mrf.mxu0
    %1843 = vdwg.mxu0
    %1844 = vmatpush.bf16.msra.mxu0 %v1154
    %1845 = vmatpush.bf16.msra.mxu0 %v1150
    %1846 = vmatpush.bf16.msra.mxu0 %v1146
    %1847 = vmatpush.bf16.msra.mxu0 %v1142
    %1848 = vmatpush.bf16.msra.mxu0 %v1138
    %1849 = vmatpush.bf16.msra.mxu0 %v1134
    %1850 = vmatpush.bf16.msra.mxu0 %v1130
    %1851 = vmatpush.bf16.msra.mxu0 %v1126
    %1852 = vmatmul.bf16.gmra.mxu0 %v339
    %v1853 = vpop.f32.mrf.mxu0
    %v1854 = vadd.f32 %v350, %v1853
    %v1855 = vpop.f32.mrf.mxu0
    %1856 = vdwg.mxu0
    %1857 = vmatpush.bf16.msra.mxu0 %v1186
    %1858 = vmatpush.bf16.msra.mxu0 %v1182
    %1859 = vmatpush.bf16.msra.mxu0 %v1178
    %1860 = vmatpush.bf16.msra.mxu0 %v1174
    %1861 = vmatpush.bf16.msra.mxu0 %v1170
    %1862 = vmatpush.bf16.msra.mxu0 %v1166
    %1863 = vmatpush.bf16.msra.mxu0 %v1162
    %1864 = vmatpush.bf16.msra.mxu0 %v1158
    %1865 = vmatmul.bf16.gmra.mxu0 %v340
    %v1866 = vpop.f32.mrf.mxu0
    %v1867 = vadd.f32 %v1854, %v1866
    %v1868 = vpop.f32.mrf.mxu0
    %1869 = vdwg.mxu0
    %1870 = vmatpush.bf16.msra.mxu0 %v1218
    %1871 = vmatpush.bf16.msra.mxu0 %v1214
    %1872 = vmatpush.bf16.msra.mxu0 %v1210
    %1873 = vmatpush.bf16.msra.mxu0 %v1206
    %1874 = vmatpush.bf16.msra.mxu0 %v1202
    %1875 = vmatpush.bf16.msra.mxu0 %v1198
    %1876 = vmatpush.bf16.msra.mxu0 %v1194
    %1877 = vmatpush.bf16.msra.mxu0 %v1190
    %1878 = vmatmul.bf16.gmra.mxu0 %v341
    %v1879 = vpop.f32.mrf.mxu0
    %v1880 = vadd.f32 %v1867, %v1879
    %v1881 = vpop.f32.mrf.mxu0
    %1882 = vdwg.mxu0
    %1883 = vmatpush.bf16.msra.mxu0 %v1250
    %1884 = vmatpush.bf16.msra.mxu0 %v1246
    %1885 = vmatpush.bf16.msra.mxu0 %v1242
    %1886 = vmatpush.bf16.msra.mxu0 %v1238
    %1887 = vmatpush.bf16.msra.mxu0 %v1234
    %1888 = vmatpush.bf16.msra.mxu0 %v1230
    %1889 = vmatpush.bf16.msra.mxu0 %v1226
    %1890 = vmatpush.bf16.msra.mxu0 %v1222
    %1891 = vmatmul.bf16.gmra.mxu0 %v342
    %v1892 = vpop.f32.mrf.mxu0
    %v1893 = vadd.f32 %v1880, %v1892
    %v1894 = vpop.f32.mrf.mxu0
    %1895 = vdwg.mxu0
    %1896 = vmatpush.bf16.msra.mxu0 %v1282
    %1897 = vmatpush.bf16.msra.mxu0 %v1278
    %1898 = vmatpush.bf16.msra.mxu0 %v1274
    %1899 = vmatpush.bf16.msra.mxu0 %v1270
    %1900 = vmatpush.bf16.msra.mxu0 %v1266
    %1901 = vmatpush.bf16.msra.mxu0 %v1262
    %1902 = vmatpush.bf16.msra.mxu0 %v1258
    %1903 = vmatpush.bf16.msra.mxu0 %v1254
    %1904 = vmatmul.bf16.gmra.mxu0 %v343
    %v1905 = vpop.f32.mrf.mxu0
    %v1906 = vadd.f32 %v1893, %v1905
    %v1907 = vpop.f32.mrf.mxu0
    %1908 = vdwg.mxu0
    %1909 = vmatpush.bf16.msra.mxu0 %v1314
    %1910 = vmatpush.bf16.msra.mxu0 %v1310
    %1911 = vmatpush.bf16.msra.mxu0 %v1306
    %1912 = vmatpush.bf16.msra.mxu0 %v1302
    %1913 = vmatpush.bf16.msra.mxu0 %v1298
    %1914 = vmatpush.bf16.msra.mxu0 %v1294
    %1915 = vmatpush.bf16.msra.mxu0 %v1290
    %1916 = vmatpush.bf16.msra.mxu0 %v1286
    %1917 = vmatmul.bf16.gmra.mxu0 %v344
    %v1918 = vpop.f32.mrf.mxu0
    %v1919 = vadd.f32 %v1906, %v1918
    %v1920 = vpop.f32.mrf.mxu0
    %1921 = vdwg.mxu0
    %1922 = vmatpush.bf16.msra.mxu0 %v1346
    %1923 = vmatpush.bf16.msra.mxu0 %v1342
    %1924 = vmatpush.bf16.msra.mxu0 %v1338
    %1925 = vmatpush.bf16.msra.mxu0 %v1334
    %1926 = vmatpush.bf16.msra.mxu0 %v1330
    %1927 = vmatpush.bf16.msra.mxu0 %v1326
    %1928 = vmatpush.bf16.msra.mxu0 %v1322
    %1929 = vmatpush.bf16.msra.mxu0 %v1318
    %1930 = vmatmul.bf16.gmra.mxu0 %v345
    %v1931 = vpop.f32.mrf.mxu0
    %v1932 = vadd.f32 %v1919, %v1931
    %v1933 = vpop.f32.mrf.mxu0
    %1934 = vdwg.mxu0
    %1935 = vmatpush.bf16.msra.mxu0 %v1378
    %1936 = vmatpush.bf16.msra.mxu0 %v1374
    %1937 = vmatpush.bf16.msra.mxu0 %v1370
    %1938 = vmatpush.bf16.msra.mxu0 %v1366
    %1939 = vmatpush.bf16.msra.mxu0 %v1362
    %1940 = vmatpush.bf16.msra.mxu0 %v1358
    %1941 = vmatpush.bf16.msra.mxu0 %v1354
    %1942 = vmatpush.bf16.msra.mxu0 %v1350
    %1943 = vmatmul.bf16.gmra.mxu0 %v346
    %v1944 = vpop.f32.mrf.mxu0
    %v1945 = vadd.f32 %v1932, %v1944
    %v1946 = vpop.f32.mrf.mxu0
    %1947 = vdwg.mxu0
    %1948 = vmatpush.bf16.msra.mxu0 %v1155
    %1949 = vmatpush.bf16.msra.mxu0 %v1151
    %1950 = vmatpush.bf16.msra.mxu0 %v1147
    %1951 = vmatpush.bf16.msra.mxu0 %v1143
    %1952 = vmatpush.bf16.msra.mxu0 %v1139
    %1953 = vmatpush.bf16.msra.mxu0 %v1135
    %1954 = vmatpush.bf16.msra.mxu0 %v1131
    %1955 = vmatpush.bf16.msra.mxu0 %v1127
    %1956 = vmatmul.bf16.gmra.mxu0 %v339
    %v1957 = vpop.f32.mrf.mxu0
    %v1958 = vadd.f32 %v351, %v1957
    %v1959 = vpop.f32.mrf.mxu0
    %1960 = vdwg.mxu0
    %1961 = vmatpush.bf16.msra.mxu0 %v1187
    %1962 = vmatpush.bf16.msra.mxu0 %v1183
    %1963 = vmatpush.bf16.msra.mxu0 %v1179
    %1964 = vmatpush.bf16.msra.mxu0 %v1175
    %1965 = vmatpush.bf16.msra.mxu0 %v1171
    %1966 = vmatpush.bf16.msra.mxu0 %v1167
    %1967 = vmatpush.bf16.msra.mxu0 %v1163
    %1968 = vmatpush.bf16.msra.mxu0 %v1159
    %1969 = vmatmul.bf16.gmra.mxu0 %v340
    %v1970 = vpop.f32.mrf.mxu0
    %v1971 = vadd.f32 %v1958, %v1970
    %v1972 = vpop.f32.mrf.mxu0
    %1973 = vdwg.mxu0
    %1974 = vmatpush.bf16.msra.mxu0 %v1219
    %1975 = vmatpush.bf16.msra.mxu0 %v1215
    %1976 = vmatpush.bf16.msra.mxu0 %v1211
    %1977 = vmatpush.bf16.msra.mxu0 %v1207
    %1978 = vmatpush.bf16.msra.mxu0 %v1203
    %1979 = vmatpush.bf16.msra.mxu0 %v1199
    %1980 = vmatpush.bf16.msra.mxu0 %v1195
    %1981 = vmatpush.bf16.msra.mxu0 %v1191
    %1982 = vmatmul.bf16.gmra.mxu0 %v341
    %v1983 = vpop.f32.mrf.mxu0
    %v1984 = vadd.f32 %v1971, %v1983
    %v1985 = vpop.f32.mrf.mxu0
    %1986 = vdwg.mxu0
    %1987 = vmatpush.bf16.msra.mxu0 %v1251
    %1988 = vmatpush.bf16.msra.mxu0 %v1247
    %1989 = vmatpush.bf16.msra.mxu0 %v1243
    %1990 = vmatpush.bf16.msra.mxu0 %v1239
    %1991 = vmatpush.bf16.msra.mxu0 %v1235
    %1992 = vmatpush.bf16.msra.mxu0 %v1231
    %1993 = vmatpush.bf16.msra.mxu0 %v1227
    %1994 = vmatpush.bf16.msra.mxu0 %v1223
    %1995 = vmatmul.bf16.gmra.mxu0 %v342
    %v1996 = vpop.f32.mrf.mxu0
    %v1997 = vadd.f32 %v1984, %v1996
    %v1998 = vpop.f32.mrf.mxu0
    %1999 = vdwg.mxu0
    %2000 = vmatpush.bf16.msra.mxu0 %v1283
    %2001 = vmatpush.bf16.msra.mxu0 %v1279
    %2002 = vmatpush.bf16.msra.mxu0 %v1275
    %2003 = vmatpush.bf16.msra.mxu0 %v1271
    %2004 = vmatpush.bf16.msra.mxu0 %v1267
    %2005 = vmatpush.bf16.msra.mxu0 %v1263
    %2006 = vmatpush.bf16.msra.mxu0 %v1259
    %2007 = vmatpush.bf16.msra.mxu0 %v1255
    %2008 = vmatmul.bf16.gmra.mxu0 %v343
    %v2009 = vpop.f32.mrf.mxu0
    %v2010 = vadd.f32 %v1997, %v2009
    %v2011 = vpop.f32.mrf.mxu0
    %2012 = vdwg.mxu0
    %2013 = vmatpush.bf16.msra.mxu0 %v1315
    %2014 = vmatpush.bf16.msra.mxu0 %v1311
    %2015 = vmatpush.bf16.msra.mxu0 %v1307
    %2016 = vmatpush.bf16.msra.mxu0 %v1303
    %2017 = vmatpush.bf16.msra.mxu0 %v1299
    %2018 = vmatpush.bf16.msra.mxu0 %v1295
    %2019 = vmatpush.bf16.msra.mxu0 %v1291
    %2020 = vmatpush.bf16.msra.mxu0 %v1287
    %2021 = vmatmul.bf16.gmra.mxu0 %v344
    %v2022 = vpop.f32.mrf.mxu0
    %v2023 = vadd.f32 %v2010, %v2022
    %v2024 = vpop.f32.mrf.mxu0
    %2025 = vdwg.mxu0
    %2026 = vmatpush.bf16.msra.mxu0 %v1347
    %2027 = vmatpush.bf16.msra.mxu0 %v1343
    %2028 = vmatpush.bf16.msra.mxu0 %v1339
    %2029 = vmatpush.bf16.msra.mxu0 %v1335
    %2030 = vmatpush.bf16.msra.mxu0 %v1331
    %2031 = vmatpush.bf16.msra.mxu0 %v1327
    %2032 = vmatpush.bf16.msra.mxu0 %v1323
    %2033 = vmatpush.bf16.msra.mxu0 %v1319
    %2034 = vmatmul.bf16.gmra.mxu0 %v345
    %v2035 = vpop.f32.mrf.mxu0
    %v2036 = vadd.f32 %v2023, %v2035
    %v2037 = vpop.f32.mrf.mxu0
    %2038 = vdwg.mxu0
    %2039 = vmatpush.bf16.msra.mxu0 %v1379
    %2040 = vmatpush.bf16.msra.mxu0 %v1375
    %2041 = vmatpush.bf16.msra.mxu0 %v1371
    %2042 = vmatpush.bf16.msra.mxu0 %v1367
    %2043 = vmatpush.bf16.msra.mxu0 %v1363
    %2044 = vmatpush.bf16.msra.mxu0 %v1359
    %2045 = vmatpush.bf16.msra.mxu0 %v1355
    %2046 = vmatpush.bf16.msra.mxu0 %v1351
    %2047 = vmatmul.bf16.gmra.mxu0 %v346
    %v2048 = vpop.f32.mrf.mxu0
    %v2049 = vadd.f32 %v2036, %v2048
    %v2050 = vpop.f32.mrf.mxu0
    %2051 = vdwg.mxu0
    %v2052 = vmax.f32 %v1737, 0.0
    %v2053 = vmax.f32 %v1841, 0.0
    %v2054 = vmax.f32 %v1945, 0.0
    %v2055 = vmax.f32 %v2049, 0.0
    %v2056 = vld [vmem:[%s4] sm:$0xff]
    %v2057 = vld [vmem:[%s4 + $0x8] sm:$0xff]
    %v2058 = vld [vmem:[%s4 + $0x10] sm:$0xff]
    %v2059 = vld [vmem:[%s4 + $0x18] sm:$0xff]
    %v2060 = vld [vmem:[%s4 + $0x20] sm:$0xff]
    %v2061 = vld [vmem:[%s4 + $0x28] sm:$0xff]
    %v2062 = vld [vmem:[%s4 + $0x30] sm:$0xff]
    %v2063 = vld [vmem:[%s4 + $0x38] sm:$0xff]
    %v2064 = vld [vmem:[%s4 + $0x40] sm:$0xff]
    %v2065 = vld [vmem:[%s4 + $0x48] sm:$0xff]
    %v2066 = vld [vmem:[%s4 + $0x50] sm:$0xff]
    %v2067 = vld [vmem:[%s4 + $0x58] sm:$0xff]
    %v2068 = vld [vmem:[%s4 + $0x60] sm:$0xff]
    %v2069 = vld [vmem:[%s4 + $0x68] sm:$0xff]
    %v2070 = vld [vmem:[%s4 + $0x70] sm:$0xff]
    %v2071 = vld [vmem:[%s4 + $0x78] sm:$0xff]
    %v2072 = vld [vmem:[%s4 + $0x80] sm:$0xff]
    %v2073 = vld [vmem:[%s4 + $0x88] sm:$0xff]
    %v2074 = vld [vmem:[%s4 + $0x90] sm:$0xff]
    %v2075 = vld [vmem:[%s4 + $0x98] sm:$0xff]
    %v2076 = vld [vmem:[%s4 + $0xa0] sm:$0xff]
    %v2077 = vld [vmem:[%s4 + $0xa8] sm:$0xff]
    %v2078 = vld [vmem:[%s4 + $0xb0] sm:$0xff]
    %v2079 = vld [vmem:[%s4 + $0xb8] sm:$0xff]
    %v2080 = vld [vmem:[%s4 + $0xc0] sm:$0xff]
    %v2081 = vld [vmem:[%s4 + $0xc8] sm:$0xff]
    %v2082 = vld [vmem:[%s4 + $0xd0] sm:$0xff]
    %v2083 = vld [vmem:[%s4 + $0xd8] sm:$0xff]
    %v2084 = vld [vmem:[%s4 + $0xe0] sm:$0xff]
    %v2085 = vld [vmem:[%s4 + $0xe8] sm:$0xff]
    %v2086 = vld [vmem:[%s4 + $0xf0] sm:$0xff]
    %v2087 = vld [vmem:[%s4 + $0xf8] sm:$0xff]
    %v2088 = vld [vmem:[%s4 + $0x100] sm:$0xff]
    %v2089 = vld [vmem:[%s4 + $0x108] sm:$0xff]
    %v2090 = vld [vmem:[%s4 + $0x110] sm:$0xff]
    %v2091 = vld [vmem:[%s4 + $0x118] sm:$0xff]
    %v2092 = vld [vmem:[%s4 + $0x120] sm:$0xff]
    %v2093 = vld [vmem:[%s4 + $0x128] sm:$0xff]
    %v2094 = vld [vmem:[%s4 + $0x130] sm:$0xff]
    %v2095 = vld [vmem:[%s4 + $0x138] sm:$0xff]
    %v2096 = vld [vmem:[%s4 + $0x140] sm:$0xff]
    %v2097 = vld [vmem:[%s4 + $0x148] sm:$0xff]
    %v2098 = vld [vmem:[%s4 + $0x150] sm:$0xff]
    %v2099 = vld [vmem:[%s4 + $0x158] sm:$0xff]
    %v2100 = vld [vmem:[%s4 + $0x160] sm:$0xff]
    %v2101 = vld [vmem:[%s4 + $0x168] sm:$0xff]
    %v2102 = vld [vmem:[%s4 + $0x170] sm:$0xff]
    %v2103 = vld [vmem:[%s4 + $0x178] sm:$0xff]
    %v2104 = vld [vmem:[%s4 + $0x180] sm:$0xff]
    %v2105 = vld [vmem:[%s4 + $0x188] sm:$0xff]
    %v2106 = vld [vmem:[%s4 + $0x190] sm:$0xff]
    %v2107 = vld [vmem:[%s4 + $0x198] sm:$0xff]
    %v2108 = vld [vmem:[%s4 + $0x1a0] sm:$0xff]
    %v2109 = vld [vmem:[%s4 + $0x1a8] sm:$0xff]
    %v2110 = vld [vmem:[%s4 + $0x1b0] sm:$0xff]
    %v2111 = vld [vmem:[%s4 + $0x1b8] sm:$0xff]
    %v2112 = vld [vmem:[%s4 + $0x1c0] sm:$0xff]
    %v2113 = vld [vmem:[%s4 + $0x1c8] sm:$0xff]
    %v2114 = vld [vmem:[%s4 + $0x1d0] sm:$0xff]
    %v2115 = vld [vmem:[%s4 + $0x1d8] sm:$0xff]
    %v2116 = vld [vmem:[%s4 + $0x1e0] sm:$0xff]
    %v2117 = vld [vmem:[%s4 + $0x1e8] sm:$0xff]
    %v2118 = vld [vmem:[%s4 + $0x1f0] sm:$0xff]
    %v2119 = vld [vmem:[%s4 + $0x1f8] sm:$0xff]
    %v2120 = vld [vmem:[%s5] sm:$0x3]
    %v2121 = vpack.c.bf16 %v2052, %v2052
    %v2122 = vpack.c.bf16 %v2053, %v2053
    %v2123 = vpack.c.bf16 %v2054, %v2054
    %v2124 = vpack.c.bf16 %v2055, %v2055
    %v2126 = vperm.slane %v2120, 0
    %v2127 = vperm.slane %v2120, 1
    %v2194 = vunpack.c.l.b16 %v2056
    %v2195 = vunpack.c.h.b16 %v2056
    %v2196 = vunpack.c.l.b16 %v2057
    %v2197 = vunpack.c.h.b16 %v2057
    %v2198 = vunpack.c.l.b16 %v2058
    %v2199 = vunpack.c.h.b16 %v2058
    %v2200 = vunpack.c.l.b16 %v2059
    %v2201 = vunpack.c.h.b16 %v2059
    %v2202 = vunpack.c.l.b16 %v2060
    %v2203 = vunpack.c.h.b16 %v2060
    %v2204 = vunpack.c.l.b16 %v2061
    %v2205 = vunpack.c.h.b16 %v2061
    %v2206 = vunpack.c.l.b16 %v2062
    %v2207 = vunpack.c.h.b16 %v2062
    %v2208 = vunpack.c.l.b16 %v2063
    %v2209 = vunpack.c.h.b16 %v2063
    %v2210 = vunpack.c.l.b16 %v2064
    %v2211 = vunpack.c.h.b16 %v2064
    %v2212 = vunpack.c.l.b16 %v2065
    %v2213 = vunpack.c.h.b16 %v2065
    %v2214 = vunpack.c.l.b16 %v2066
    %v2215 = vunpack.c.h.b16 %v2066
    %v2216 = vunpack.c.l.b16 %v2067
    %v2217 = vunpack.c.h.b16 %v2067
    %v2218 = vunpack.c.l.b16 %v2068
    %v2219 = vunpack.c.h.b16 %v2068
    %v2220 = vunpack.c.l.b16 %v2069
    %v2221 = vunpack.c.h.b16 %v2069
    %v2222 = vunpack.c.l.b16 %v2070
    %v2223 = vunpack.c.h.b16 %v2070
    %v2224 = vunpack.c.l.b16 %v2071
    %v2225 = vunpack.c.h.b16 %v2071
    %v2226 = vunpack.c.l.b16 %v2072
    %v2227 = vunpack.c.h.b16 %v2072
    %v2228 = vunpack.c.l.b16 %v2073
    %v2229 = vunpack.c.h.b16 %v2073
    %v2230 = vunpack.c.l.b16 %v2074
    %v2231 = vunpack.c.h.b16 %v2074
    %v2232 = vunpack.c.l.b16 %v2075
    %v2233 = vunpack.c.h.b16 %v2075
    %v2234 = vunpack.c.l.b16 %v2076
    %v2235 = vunpack.c.h.b16 %v2076
    %v2236 = vunpack.c.l.b16 %v2077
    %v2237 = vunpack.c.h.b16 %v2077
    %v2238 = vunpack.c.l.b16 %v2078
    %v2239 = vunpack.c.h.b16 %v2078
    %v2240 = vunpack.c.l.b16 %v2079
    %v2241 = vunpack.c.h.b16 %v2079
    %v2242 = vunpack.c.l.b16 %v2080
    %v2243 = vunpack.c.h.b16 %v2080
    %v2244 = vunpack.c.l.b16 %v2081
    %v2245 = vunpack.c.h.b16 %v2081
    %v2246 = vunpack.c.l.b16 %v2082
    %v2247 = vunpack.c.h.b16 %v2082
    %v2248 = vunpack.c.l.b16 %v2083
    %v2249 = vunpack.c.h.b16 %v2083
    %v2250 = vunpack.c.l.b16 %v2084
    %v2251 = vunpack.c.h.b16 %v2084
    %v2252 = vunpack.c.l.b16 %v2085
    %v2253 = vunpack.c.h.b16 %v2085
    %v2254 = vunpack.c.l.b16 %v2086
    %v2255 = vunpack.c.h.b16 %v2086
    %v2256 = vunpack.c.l.b16 %v2087
    %v2257 = vunpack.c.h.b16 %v2087
    %v2258 = vunpack.c.l.b16 %v2088
    %v2259 = vunpack.c.h.b16 %v2088
    %v2260 = vunpack.c.l.b16 %v2089
    %v2261 = vunpack.c.h.b16 %v2089
    %v2262 = vunpack.c.l.b16 %v2090
    %v2263 = vunpack.c.h.b16 %v2090
    %v2264 = vunpack.c.l.b16 %v2091
    %v2265 = vunpack.c.h.b16 %v2091
    %v2266 = vunpack.c.l.b16 %v2092
    %v2267 = vunpack.c.h.b16 %v2092
    %v2268 = vunpack.c.l.b16 %v2093
    %v2269 = vunpack.c.h.b16 %v2093
    %v2270 = vunpack.c.l.b16 %v2094
    %v2271 = vunpack.c.h.b16 %v2094
    %v2272 = vunpack.c.l.b16 %v2095
    %v2273 = vunpack.c.h.b16 %v2095
    %v2274 = vunpack.c.l.b16 %v2096
    %v2275 = vunpack.c.h.b16 %v2096
    %v2276 = vunpack.c.l.b16 %v2097
    %v2277 = vunpack.c.h.b16 %v2097
    %v2278 = vunpack.c.l.b16 %v2098
    %v2279 = vunpack.c.h.b16 %v2098
    %v2280 = vunpack.c.l.b16 %v2099
    %v2281 = vunpack.c.h.b16 %v2099
    %v2282 = vunpack.c.l.b16 %v2100
    %v2283 = vunpack.c.h.b16 %v2100
    %v2284 = vunpack.c.l.b16 %v2101
    %v2285 = vunpack.c.h.b16 %v2101
    %v2286 = vunpack.c.l.b16 %v2102
    %v2287 = vunpack.c.h.b16 %v2102
    %v2288 = vunpack.c.l.b16 %v2103
    %v2289 = vunpack.c.h.b16 %v2103
    %v2290 = vunpack.c.l.b16 %v2104
    %v2291 = vunpack.c.h.b16 %v2104
    %v2292 = vunpack.c.l.b16 %v2105
    %v2293 = vunpack.c.h.b16 %v2105
    %v2294 = vunpack.c.l.b16 %v2106
    %v2295 = vunpack.c.h.b16 %v2106
    %v2296 = vunpack.c.l.b16 %v2107
    %v2297 = vunpack.c.h.b16 %v2107
    %v2298 = vunpack.c.l.b16 %v2108
    %v2299 = vunpack.c.h.b16 %v2108
    %v2300 = vunpack.c.l.b16 %v2109
    %v2301 = vunpack.c.h.b16 %v2109
    %v2302 = vunpack.c.l.b16 %v2110
    %v2303 = vunpack.c.h.b16 %v2110
    %v2304 = vunpack.c.l.b16 %v2111
    %v2305 = vunpack.c.h.b16 %v2111
    %v2306 = vunpack.c.l.b16 %v2112
    %v2307 = vunpack.c.h.b16 %v2112
    %v2308 = vunpack.c.l.b16 %v2113
    %v2309 = vunpack.c.h.b16 %v2113
    %v2310 = vunpack.c.l.b16 %v2114
    %v2311 = vunpack.c.h.b16 %v2114
    %v2312 = vunpack.c.l.b16 %v2115
    %v2313 = vunpack.c.h.b16 %v2115
    %v2314 = vunpack.c.l.b16 %v2116
    %v2315 = vunpack.c.h.b16 %v2116
    %v2316 = vunpack.c.l.b16 %v2117
    %v2317 = vunpack.c.h.b16 %v2117
    %v2318 = vunpack.c.l.b16 %v2118
    %v2319 = vunpack.c.h.b16 %v2118
    %v2320 = vunpack.c.l.b16 %v2119
    %v2321 = vunpack.c.h.b16 %v2119
    %v2322 = vpack.c.b16 %v2196, %v2194
    %v2323 = vpack.c.b16 %v2197, %v2195
    %v2324 = vpack.c.b16 %v2200, %v2198
    %v2325 = vpack.c.b16 %v2201, %v2199
    %v2326 = vpack.c.b16 %v2204, %v2202
    %v2327 = vpack.c.b16 %v2205, %v2203
    %v2328 = vpack.c.b16 %v2208, %v2206
    %v2329 = vpack.c.b16 %v2209, %v2207
    %v2330 = vpack.c.b16 %v2212, %v2210
    %v2331 = vpack.c.b16 %v2213, %v2211
    %v2332 = vpack.c.b16 %v2216, %v2214
    %v2333 = vpack.c.b16 %v2217, %v2215
    %v2334 = vpack.c.b16 %v2220, %v2218
    %v2335 = vpack.c.b16 %v2221, %v2219
    %v2336 = vpack.c.b16 %v2224, %v2222
    %v2337 = vpack.c.b16 %v2225, %v2223
    %v2338 = vpack.c.b16 %v2228, %v2226
    %v2339 = vpack.c.b16 %v2229, %v2227
    %v2340 = vpack.c.b16 %v2232, %v2230
    %v2341 = vpack.c.b16 %v2233, %v2231
    %v2342 = vpack.c.b16 %v2236, %v2234
    %v2343 = vpack.c.b16 %v2237, %v2235
    %v2344 = vpack.c.b16 %v2240, %v2238
    %v2345 = vpack.c.b16 %v2241, %v2239
    %v2346 = vpack.c.b16 %v2244, %v2242
    %v2347 = vpack.c.b16 %v2245, %v2243
    %v2348 = vpack.c.b16 %v2248, %v2246
    %v2349 = vpack.c.b16 %v2249, %v2247
    %v2350 = vpack.c.b16 %v2252, %v2250
    %v2351 = vpack.c.b16 %v2253, %v2251
    %v2352 = vpack.c.b16 %v2256, %v2254
    %v2353 = vpack.c.b16 %v2257, %v2255
    %v2354 = vpack.c.b16 %v2260, %v2258
    %v2355 = vpack.c.b16 %v2261, %v2259
    %v2356 = vpack.c.b16 %v2264, %v2262
    %v2357 = vpack.c.b16 %v2265, %v2263
    %v2358 = vpack.c.b16 %v2268, %v2266
    %v2359 = vpack.c.b16 %v2269, %v2267
    %v2360 = vpack.c.b16 %v2272, %v2270
    %v2361 = vpack.c.b16 %v2273, %v2271
    %v2362 = vpack.c.b16 %v2276, %v2274
    %v2363 = vpack.c.b16 %v2277, %v2275
    %v2364 = vpack.c.b16 %v2280, %v2278
    %v2365 = vpack.c.b16 %v2281, %v2279
    %v2366 = vpack.c.b16 %v2284, %v2282
    %v2367 = vpack.c.b16 %v2285, %v2283
    %v2368 = vpack.c.b16 %v2288, %v2286
    %v2369 = vpack.c.b16 %v2289, %v2287
    %v2370 = vpack.c.b16 %v2292, %v2290
    %v2371 = vpack.c.b16 %v2293, %v2291
    %v2372 = vpack.c.b16 %v2296, %v2294
    %v2373 = vpack.c.b16 %v2297, %v2295
    %v2374 = vpack.c.b16 %v2300, %v2298
    %v2375 = vpack.c.b16 %v2301, %v2299
    %v2376 = vpack.c.b16 %v2304, %v2302
    %v2377 = vpack.c.b16 %v2305, %v2303
    %v2378 = vpack.c.b16 %v2308, %v2306
    %v2379 = vpack.c.b16 %v2309, %v2307
    %v2380 = vpack.c.b16 %v2312, %v2310
    %v2381 = vpack.c.b16 %v2313, %v2311
    %v2382 = vpack.c.b16 %v2316, %v2314
    %v2383 = vpack.c.b16 %v2317, %v2315
    %v2384 = vpack.c.b16 %v2320, %v2318
    %v2385 = vpack.c.b16 %v2321, %v2319
    %2450 = vmatpush.bf16.msra.mxu0 %v2336
    %2451 = vmatpush.bf16.msra.mxu0 %v2334
    %2452 = vmatpush.bf16.msra.mxu0 %v2332
    %2453 = vmatpush.bf16.msra.mxu0 %v2330
    %2454 = vmatpush.bf16.msra.mxu0 %v2328
    %2455 = vmatpush.bf16.msra.mxu0 %v2326
    %2456 = vmatpush.bf16.msra.mxu0 %v2324
    %2457 = vmatpush.bf16.msra.mxu0 %v2322
    %2458 = vmatmul.bf16.gmra.mxu0 %v2121
    %v2459 = vpop.f32.mrf.mxu0
    %v2460 = vadd.f32 %v2126, %v2459
    %v2461 = vpop.f32.mrf.mxu0
    %2462 = vdwg.mxu0
    %2463 = vmatpush.bf16.msra.mxu0 %v2352
    %2464 = vmatpush.bf16.msra.mxu0 %v2350
    %2465 = vmatpush.bf16.msra.mxu0 %v2348
    %2466 = vmatpush.bf16.msra.mxu0 %v2346
    %2467 = vmatpush.bf16.msra.mxu0 %v2344
    %2468 = vmatpush.bf16.msra.mxu0 %v2342
    %2469 = vmatpush.bf16.msra.mxu0 %v2340
    %2470 = vmatpush.bf16.msra.mxu0 %v2338
    %2471 = vmatmul.bf16.gmra.mxu0 %v2122
    %v2472 = vpop.f32.mrf.mxu0
    %v2473 = vadd.f32 %v2460, %v2472
    %v2474 = vpop.f32.mrf.mxu0
    %2475 = vdwg.mxu0
    %2476 = vmatpush.bf16.msra.mxu0 %v2368
    %2477 = vmatpush.bf16.msra.mxu0 %v2366
    %2478 = vmatpush.bf16.msra.mxu0 %v2364
    %2479 = vmatpush.bf16.msra.mxu0 %v2362
    %2480 = vmatpush.bf16.msra.mxu0 %v2360
    %2481 = vmatpush.bf16.msra.mxu0 %v2358
    %2482 = vmatpush.bf16.msra.mxu0 %v2356
    %2483 = vmatpush.bf16.msra.mxu0 %v2354
    %2484 = vmatmul.bf16.gmra.mxu0 %v2123
    %v2485 = vpop.f32.mrf.mxu0
    %v2486 = vadd.f32 %v2473, %v2485
    %v2487 = vpop.f32.mrf.mxu0
    %2488 = vdwg.mxu0
    %2489 = vmatpush.bf16.msra.mxu0 %v2384
    %2490 = vmatpush.bf16.msra.mxu0 %v2382
    %2491 = vmatpush.bf16.msra.mxu0 %v2380
    %2492 = vmatpush.bf16.msra.mxu0 %v2378
    %2493 = vmatpush.bf16.msra.mxu0 %v2376
    %2494 = vmatpush.bf16.msra.mxu0 %v2374
    %2495 = vmatpush.bf16.msra.mxu0 %v2372
    %2496 = vmatpush.bf16.msra.mxu0 %v2370
    %2497 = vmatmul.bf16.gmra.mxu0 %v2124
    %v2498 = vpop.f32.mrf.mxu0
    %v2499 = vadd.f32 %v2486, %v2498
    %v2500 = vpop.f32.mrf.mxu0
    %2501 = vdwg.mxu0
    %2502 = vmatpush.bf16.msra.mxu0 %v2337
    %2503 = vmatpush.bf16.msra.mxu0 %v2335
    %2504 = vmatpush.bf16.msra.mxu0 %v2333
    %2505 = vmatpush.bf16.msra.mxu0 %v2331
    %2506 = vmatpush.bf16.msra.mxu0 %v2329
    %2507 = vmatpush.bf16.msra.mxu0 %v2327
    %2508 = vmatpush.bf16.msra.mxu0 %v2325
    %2509 = vmatpush.bf16.msra.mxu0 %v2323
    %2510 = vmatmul.bf16.gmra.mxu0 %v2121
    %v2511 = vpop.f32.mrf.mxu0
    %v2512 = vadd.f32 %v2127, %v2511
    %v2513 = vpop.f32.mrf.mxu0
    %2514 = vdwg.mxu0
    %2515 = vmatpush.bf16.msra.mxu0 %v2353
    %2516 = vmatpush.bf16.msra.mxu0 %v2351
    %2517 = vmatpush.bf16.msra.mxu0 %v2349
    %2518 = vmatpush.bf16.msra.mxu0 %v2347
    %2519 = vmatpush.bf16.msra.mxu0 %v2345
    %2520 = vmatpush.bf16.msra.mxu0 %v2343
    %2521 = vmatpush.bf16.msra.mxu0 %v2341
    %2522 = vmatpush.bf16.msra.mxu0 %v2339
    %2523 = vmatmul.bf16.gmra.mxu0 %v2122
    %v2524 = vpop.f32.mrf.mxu0
    %v2525 = vadd.f32 %v2512, %v2524
    %v2526 = vpop.f32.mrf.mxu0
    %2527 = vdwg.mxu0
    %2528 = vmatpush.bf16.msra.mxu0 %v2369
    %2529 = vmatpush.bf16.msra.mxu0 %v2367
    %2530 = vmatpush.bf16.msra.mxu0 %v2365
    %2531 = vmatpush.bf16.msra.mxu0 %v2363
    %2532 = vmatpush.bf16.msra.mxu0 %v2361
    %2533 = vmatpush.bf16.msra.mxu0 %v2359
    %2534 = vmatpush.bf16.msra.mxu0 %v2357
    %2535 = vmatpush.bf16.msra.mxu0 %v2355
    %2536 = vmatmul.bf16.gmra.mxu0 %v2123
    %v2537 = vpop.f32.mrf.mxu0
    %v2538 = vadd.f32 %v2525, %v2537
    %v2539 = vpop.f32.mrf.mxu0
    %2540 = vdwg.mxu0
    %2541 = vmatpush.bf16.msra.mxu0 %v2385
    %2542 = vmatpush.bf16.msra.mxu0 %v2383
    %2543 = vmatpush.bf16.msra.mxu0 %v2381
    %2544 = vmatpush.bf16.msra.mxu0 %v2379
    %2545 = vmatpush.bf16.msra.mxu0 %v2377
    %2546 = vmatpush.bf16.msra.mxu0 %v2375
    %2547 = vmatpush.bf16.msra.mxu0 %v2373
    %2548 = vmatpush.bf16.msra.mxu0 %v2371
    %2549 = vmatmul.bf16.gmra.mxu0 %v2124
    %v2550 = vpop.f32.mrf.mxu0
    %v2551 = vadd.f32 %v2538, %v2550
    %v2552 = vpop.f32.mrf.mxu0
    %2553 = vdwg.mxu0
    %v2554 = vmax.f32 %v2499, 0.0
    %v2555 = vmax.f32 %v2551, 0.0
    %v2556 = vld [vmem:[%s6] sm:$0xf]
    %v2557 = vld [vmem:[%s6 + $0x4] sm:$0xf]
    %v2558 = vld [vmem:[%s6 + $0x8] sm:$0xf]
    %v2559 = vld [vmem:[%s6 + $0xc] sm:$0xf]
    %v2560 = vld [vmem:[%s6 + $0x10] sm:$0xf]
    %v2561 = vld [vmem:[%s6 + $0x14] sm:$0xf]
    %v2562 = vld [vmem:[%s6 + $0x18] sm:$0xf]
    %v2563 = vld [vmem:[%s6 + $0x1c] sm:$0xf]
    %v2564 = vld [vmem:[%s6 + $0x20] sm:$0xf]
    %v2565 = vld [vmem:[%s6 + $0x24] sm:$0xf]
    %v2566 = vld [vmem:[%s6 + $0x28] sm:$0xf]
    %v2567 = vld [vmem:[%s6 + $0x2c] sm:$0xf]
    %v2568 = vld [vmem:[%s6 + $0x30] sm:$0xf]
    %v2569 = vld [vmem:[%s6 + $0x34] sm:$0xf]
    %v2570 = vld [vmem:[%s6 + $0x38] sm:$0xf]
    %v2571 = vld [vmem:[%s6 + $0x3c] sm:$0xf]
    %v2572 = vld [vmem:[%s6 + $0x40] sm:$0xf]
    %v2573 = vld [vmem:[%s6 + $0x44] sm:$0xf]
    %v2574 = vld [vmem:[%s6 + $0x48] sm:$0xf]
    %v2575 = vld [vmem:[%s6 + $0x4c] sm:$0xf]
    %v2576 = vld [vmem:[%s6 + $0x50] sm:$0xf]
    %v2577 = vld [vmem:[%s6 + $0x54] sm:$0xf]
    %v2578 = vld [vmem:[%s6 + $0x58] sm:$0xf]
    %v2579 = vld [vmem:[%s6 + $0x5c] sm:$0xf]
    %v2580 = vld [vmem:[%s6 + $0x60] sm:$0xf]
    %v2581 = vld [vmem:[%s6 + $0x64] sm:$0xf]
    %v2582 = vld [vmem:[%s6 + $0x68] sm:$0xf]
    %v2583 = vld [vmem:[%s6 + $0x6c] sm:$0xf]
    %v2584 = vld [vmem:[%s6 + $0x70] sm:$0xf]
    %v2585 = vld [vmem:[%s6 + $0x74] sm:$0xf]
    %v2586 = vld [vmem:[%s6 + $0x78] sm:$0xf]
    %v2587 = vld [vmem:[%s6 + $0x7c] sm:$0xf]
    %v2588 = vld [vmem:[%s7] sm:$0x1]
    %v2589 = vpack.c.bf16 %v2554, %v2554
    %v2590 = vpack.c.bf16 %v2555, %v2555
    %v2592 = vperm.slane %v2588, 0
    %v2626 = vunpack.c.l.b16 %v2556
    %v2627 = vunpack.c.l.b16 %v2557
    %v2628 = vunpack.c.l.b16 %v2558
    %v2629 = vunpack.c.l.b16 %v2559
    %v2630 = vunpack.c.l.b16 %v2560
    %v2631 = vunpack.c.l.b16 %v2561
    %v2632 = vunpack.c.l.b16 %v2562
    %v2633 = vunpack.c.l.b16 %v2563
    %v2634 = vunpack.c.l.b16 %v2564
    %v2635 = vunpack.c.l.b16 %v2565
    %v2636 = vunpack.c.l.b16 %v2566
    %v2637 = vunpack.c.l.b16 %v2567
    %v2638 = vunpack.c.l.b16 %v2568
    %v2639 = vunpack.c.l.b16 %v2569
    %v2640 = vunpack.c.l.b16 %v2570
    %v2641 = vunpack.c.l.b16 %v2571
    %v2642 = vunpack.c.l.b16 %v2572
    %v2643 = vunpack.c.l.b16 %v2573
    %v2644 = vunpack.c.l.b16 %v2574
    %v2645 = vunpack.c.l.b16 %v2575
    %v2646 = vunpack.c.l.b16 %v2576
    %v2647 = vunpack.c.l.b16 %v2577
    %v2648 = vunpack.c.l.b16 %v2578
    %v2649 = vunpack.c.l.b16 %v2579
    %v2650 = vunpack.c.l.b16 %v2580
    %v2651 = vunpack.c.l.b16 %v2581
    %v2652 = vunpack.c.l.b16 %v2582
    %v2653 = vunpack.c.l.b16 %v2583
    %v2654 = vunpack.c.l.b16 %v2584
    %v2655 = vunpack.c.l.b16 %v2585
    %v2656 = vunpack.c.l.b16 %v2586
    %v2657 = vunpack.c.l.b16 %v2587
    %v2658 = vpack.c.b16 %v2627, %v2626
    %v2659 = vpack.c.b16 %v2629, %v2628
    %v2660 = vpack.c.b16 %v2631, %v2630
    %v2661 = vpack.c.b16 %v2633, %v2632
    %v2662 = vpack.c.b16 %v2635, %v2634
    %v2663 = vpack.c.b16 %v2637, %v2636
    %v2664 = vpack.c.b16 %v2639, %v2638
    %v2665 = vpack.c.b16 %v2641, %v2640
    %v2666 = vpack.c.b16 %v2643, %v2642
    %v2667 = vpack.c.b16 %v2645, %v2644
    %v2668 = vpack.c.b16 %v2647, %v2646
    %v2669 = vpack.c.b16 %v2649, %v2648
    %v2670 = vpack.c.b16 %v2651, %v2650
    %v2671 = vpack.c.b16 %v2653, %v2652
    %v2672 = vpack.c.b16 %v2655, %v2654
    %v2673 = vpack.c.b16 %v2657, %v2656
    %2690 = vmatpush.bf16.msra.mxu0 %v2665
    %2691 = vmatpush.bf16.msra.mxu0 %v2664
    %2692 = vmatpush.bf16.msra.mxu0 %v2663
    %2693 = vmatpush.bf16.msra.mxu0 %v2662
    %2694 = vmatpush.bf16.msra.mxu0 %v2661
    %2695 = vmatpush.bf16.msra.mxu0 %v2660
    %2696 = vmatpush.bf16.msra.mxu0 %v2659
    %2697 = vmatpush.bf16.msra.mxu0 %v2658
    %2698 = vmatmul.bf16.gmra.mxu0 %v2589
    %v2699 = vpop.f32.mrf.mxu0
    %v2700 = vadd.f32 %v2592, %v2699
    %v2701 = vpop.f32.mrf.mxu0
    %2702 = vdwg.mxu0
    %2703 = vmatpush.bf16.msra.mxu0 %v2673
    %2704 = vmatpush.bf16.msra.mxu0 %v2672
    %2705 = vmatpush.bf16.msra.mxu0 %v2671
    %2706 = vmatpush.bf16.msra.mxu0 %v2670
    %2707 = vmatpush.bf16.msra.mxu0 %v2669
    %2708 = vmatpush.bf16.msra.mxu0 %v2668
    %2709 = vmatpush.bf16.msra.mxu0 %v2667
    %2710 = vmatpush.bf16.msra.mxu0 %v2666
    %2711 = vmatmul.bf16.gmra.mxu0 %v2590
    %v2712 = vpop.f32.mrf.mxu0
    %v2713 = vadd.f32 %v2700, %v2712
    %v2714 = vpop.f32.mrf.mxu0
    %2715 = vdwg.mxu0
    %vm2716 = vcmask 9216
    %2717 = vst.msk [vmem:[#allocation2] sm:$0x3] %vm2716, %v2713
    // Predicated region
    $region34: #{pointnet.7} parent=1 // pred_check
      _
    $region35: #{pointnet.7} parent=1 // pred_check_branch
      %2719 = sbr.rel (0) target = $region37
    $region36: #{pointnet.7} parent=1 // pred_region
      %2721 = vsyncadd [#allocation3], 0
      %s2723 = sshll.u32 [#allocation2], 4
      %s2724 = int_to_ptr.vmem [resolvable:$true] %s2723
      %s2725 = sshll.u32 %s8, 4
      %s2726 = int_to_ptr.hbm [resolvable:$true] %s2725
      %2728 = dma.vmem_to_hbm [thread:$0]  %s2724, 32, %s2726, [#allocation3]
    $region37: #{pointnet.7} parent=1 // pred_fallthru
      _
    // Predicated region
    $region38: #{pointnet.7} parent=1 // pred_check
      _
    $region39: #{pointnet.7} parent=1 // pred_check_branch
      %2730 = sbr.rel (0) target = $region41
    $region40: #{pointnet.7} parent=1 // pred_region
      %2732 = dma.done [#allocation3], 32
    $region41: #{pointnet.7} parent=1 // pred_fallthru
      _
    %2733 = vsyncpa [#allocation3], 1

</llo_original>
